<compile_context>
chip_gen: v7x
topology: tpu7x:2x2x1
jax: 0.10.0
libtpu: 0.0.40
codegen_flags: <defaults>
</compile_context>

<pallas_src>
import functools

import jax
import jax.numpy as jnp
from jax.experimental import pallas as pl
from jax.experimental.pallas import tpu as pltpu

HEAD_PAD = 128  # lane-dense padded width of the fused head output


# ----------------------------------------------------------------------------
# Pallas kernels
# ----------------------------------------------------------------------------
def matmul_lrelu_kernel(x_ref, w_ref, b_ref, o_ref):
    """out = leaky_relu(x @ w + b, 0.2); w is bf16, accumulation in f32."""
    y = jnp.dot(x_ref[...].astype(jnp.bfloat16), w_ref[...],
                preferred_element_type=jnp.float32)
    y = y + b_ref[...]
    o_ref[...] = jnp.where(y > 0, y, 0.2 * y)


def matmul_bn_lrelu_kernel(x_ref, w_ref, b_ref, g_ref, be_ref, o_ref):
    """out = leaky_relu(batchnorm(x @ w + b), 0.2) with batch statistics."""
    y = jnp.dot(x_ref[...].astype(jnp.bfloat16), w_ref[...],
                preferred_element_type=jnp.float32)
    y = y + b_ref[...]
    m = y.shape[0]                                               # static
    mean = jnp.sum(y, axis=0, keepdims=True) / m
    var = jnp.sum((y - mean) ** 2, axis=0, keepdims=True) / m    # biased (train)
    y = g_ref[...] * (y - mean) * jax.lax.rsqrt(var + 1e-5) + be_ref[...]
    o_ref[...] = jnp.where(y > 0, y, 0.2 * y)


def fc_heads_kernel(x_ref, w1_ref, b1_ref, g_ref, be_ref, wh_ref, bh_ref, o_ref):
    """Fused fc1 (Linear + BatchNorm1d + LeakyReLU) + dc/cl heads.

    wh is the 128-lane padded concatenation [wdc | wcl | 0...]; lane 0 of the
    output gets the sigmoid, the remaining lanes are raw logits (sliced on the
    host).
    """
    h = jnp.dot(x_ref[...].astype(jnp.bfloat16), w1_ref[...],
                preferred_element_type=jnp.float32)
    h = h + b1_ref[...]
    m = h.shape[0]
    mean = jnp.sum(h, axis=0, keepdims=True) / m
    var = jnp.sum((h - mean) ** 2, axis=0, keepdims=True) / m
    h = g_ref[...] * (h - mean) * jax.lax.rsqrt(var + 1e-5) + be_ref[...]
    h = jnp.where(h > 0, h, 0.2 * h)                             # LeakyReLU(0.2)

    y = jnp.dot(h.astype(jnp.bfloat16), wh_ref[...],
                preferred_element_type=jnp.float32)
    y = y + bh_ref[...]
    # sigmoid via exp + approximate reciprocal (EUP slot, otherwise idle here)
    sig = pl.reciprocal(1.0 + jnp.exp(-y), approx=True)
    lane = jax.lax.broadcasted_iota(jnp.int32, y.shape, 1)
    o_ref[...] = jnp.where(lane == 0, sig, y)


# ----------------------------------------------------------------------------
# pallas_call wrappers (single full-array block per layer; everything fits VMEM)
# ----------------------------------------------------------------------------
def _full_spec(shape):
    return pl.BlockSpec(shape, lambda i: (0,) * len(shape))


def pallas_conv_mm(cols, w, b, gamma=None, beta=None):
    M, K = cols.shape
    N = w.shape[1]
    if gamma is None:
        kernel = matmul_lrelu_kernel
        args = (cols, w, b)
        in_specs = [_full_spec((M, K)), _full_spec((K, N)), _full_spec((1, N))]
    else:
        kernel = matmul_bn_lrelu_kernel
        args = (cols, w, b, gamma, beta)
        in_specs = [_full_spec((M, K)), _full_spec((K, N)), _full_spec((1, N)),
                    _full_spec((1, N)), _full_spec((1, N))]
    return pl.pallas_call(
        kernel,
        out_shape=jax.ShapeDtypeStruct((M, N), jnp.float32),
        grid=(1,),
        in_specs=in_specs,
        out_specs=_full_spec((M, N)),
        compiler_params=pltpu.CompilerParams(dimension_semantics=("arbitrary",)),
    )(*args)


def pallas_fc_heads(x, wfc, bfc, gamma, beta, wh, bh):
    M, K = x.shape
    N = wfc.shape[1]
    H = wh.shape[1]
    return pl.pallas_call(
        fc_heads_kernel,
        out_shape=jax.ShapeDtypeStruct((M, H), jnp.float32),
        grid=(1,),
        in_specs=[_full_spec((M, K)), _full_spec((K, N)), _full_spec((1, N)),
                  _full_spec((1, N)), _full_spec((1, N)),
                  _full_spec((N, H)), _full_spec((1, H))],
        out_specs=_full_spec((M, H)),
        compiler_params=pltpu.CompilerParams(
            dimension_semantics=("arbitrary",),
            # headroom for the double-buffered bf16 fc1 weight (v5e's scoped
            # VMEM default is only 16 MiB)
            vmem_limit_bytes=32 * 1024 * 1024,
        ),
    )(x, wfc, bfc, gamma, beta, wh, bh)


# ----------------------------------------------------------------------------
# Glue: channels-last im2col (kernel (kh, kw), stride s, padding p)
# ----------------------------------------------------------------------------
def im2col_nhwc(x, kh, kw, stride, pad):
    n, h, w, c = x.shape
    xp = jnp.pad(x, ((0, 0), (pad, pad), (pad, pad), (0, 0)))
    ho = (h + 2 * pad - kh) // stride + 1
    wo = (w + 2 * pad - kw) // stride + 1
    cols = []
    for i in range(kh):
        for j in range(kw):
            cols.append(xp[:, i:i + stride * ho:stride, j:j + stride * wo:stride, :])
    patches = jnp.stack(cols, axis=3)                 # (N, Ho, Wo, kh*kw, C)
    patches = patches.reshape(n * ho * wo, kh * kw * c)
    return patches, ho, wo


# ----------------------------------------------------------------------------
# Parameters (utils.initialize_weights: N(0,0.02) weights, zero biases, BN=1/0)
# ----------------------------------------------------------------------------
def init_params(key, input_dim=1, output_dim=1, class_num=2):
    ks = jax.random.split(key, 6)
    std = 0.02

    def nrm(k, shape):
        return std * jax.random.normal(k, shape, dtype=jnp.float32)

    def conv_mat(w):
        # PyTorch (out, in, kh, kw) -> (kh, kw, in, out) -> (kh*kw*in, out),
        # matching the NHWC im2col column order.  Stored bf16; accum stays f32.
        o, i, kh, kw = w.shape
        return jnp.transpose(w, (2, 3, 1, 0)).reshape(kh * kw * i, o).astype(jnp.bfloat16)

    p = {}
    p["w1"] = conv_mat(nrm(ks[0], (16, input_dim, 4, 2)))
    p["b1"] = jnp.zeros((1, 16), jnp.float32)
    p["w2"] = conv_mat(nrm(ks[1], (32, 16, 4, 2)))
    p["b2"] = jnp.zeros((1, 32), jnp.float32)
    p["w3"] = conv_mat(nrm(ks[2], (64, 32, 4, 2)))
    p["b3"] = jnp.zeros((1, 64), jnp.float32)
    p["bn3_g"] = jnp.ones((1, 64), jnp.float32)
    p["bn3_b"] = jnp.zeros((1, 64), jnp.float32)

    # fc1 weight: PyTorch-equivalent rows ordered (C,H,W); permute once to the
    # NHWC flatten order (H,W,C) so conv3's output flattens with no transpose.
    wfc1_chw = nrm(ks[3], (64 * 8 * 4, 1024))
    wfc1 = wfc1_chw.reshape(64, 8, 4, 1024).transpose(1, 2, 0, 3).reshape(64 * 8 * 4, 1024)
    p["wfc1"] = wfc1.astype(jnp.bfloat16)
    p["bfc1"] = jnp.zeros((1, 1024), jnp.float32)
    p["bnfc_g"] = jnp.ones((1, 1024), jnp.float32)
    p["bnfc_b"] = jnp.zeros((1, 1024), jnp.float32)

    # Heads: concat dc + cl weights, zero-pad to 128 lanes for a dense store.
    wdc = nrm(ks[4], (1024, output_dim))
    wcl = nrm(ks[5], (1024, class_num))
    wh = jnp.zeros((1024, HEAD_PAD), jnp.float32)
    wh = wh.at[:, :output_dim].set(wdc)
    wh = wh.at[:, output_dim:output_dim + class_num].set(wcl)
    p["wheads"] = wh.astype(jnp.bfloat16)
    p["bheads"] = jnp.zeros((1, HEAD_PAD), jnp.float32)
    return p


# ----------------------------------------------------------------------------
# Discriminator forward
# ----------------------------------------------------------------------------
def discriminator_forward(params, x_nchw, *, output_dim=1, class_num=2):
    n = x_nchw.shape[0]
    x = jnp.transpose(x_nchw, (0, 2, 3, 1))           # NCHW -> NHWC (once)

    # conv1: Conv2d(in,16,(4,2),2,1) + LeakyReLU(0.2)
    cols, ho, wo = im2col_nhwc(x, 4, 2, 2, 1)
    x = pallas_conv_mm(cols, params["w1"], params["b1"]).reshape(n, ho, wo, 16)

    # conv2: Conv2d(16,32,(4,2),2,1) + LeakyReLU(0.2)
    cols, ho, wo = im2col_nhwc(x, 4, 2, 2, 1)
    x = pallas_conv_mm(cols, params["w2"], params["b2"]).reshape(n, ho, wo, 32)

    # conv3: Conv2d(32,64,(4,2),2,1) + BatchNorm2d(64) + LeakyReLU(0.2)
    cols, ho, wo = im2col_nhwc(x, 4, 2, 2, 1)
    x = pallas_conv_mm(cols, params["w3"], params["b3"],
                       params["bn3_g"], params["bn3_b"]).reshape(n, ho, wo, 64)

    # x.view(-1, 64*8*4): flattened in NHWC order (wfc1 rows permuted at init)
    x = x.reshape(n, ho * wo * 64)

    # fused fc1 (Linear+BN1d+LReLU) + dc (sigmoid) + cl heads, 128-lane padded
    heads = pallas_fc_heads(x, params["wfc1"], params["bfc1"],
                            params["bnfc_g"], params["bnfc_b"],
                            params["wheads"], params["bheads"])
    d = heads[:, :output_dim]
    c = heads[:, output_dim:output_dim + class_num]
    return d, c


if __name__ == "__main__":
    key = jax.random.PRNGKey(0)
    k_param, k_in = jax.random.split(key)

    params = init_params(k_param, input_dim=1, output_dim=1, class_num=2)

    # The hard-coded fc input (64 * 8 * 4) implies a (N, 1, 64, 18) NCHW input
    # under the (4,2)/stride-2/pad-1 conv geometry.
    x = jax.random.normal(k_in, (2, 1, 64, 18), dtype=jnp.float32)

    fwd = jax.jit(functools.partial(discriminator_forward,
                                    output_dim=1, class_num=2))
    d, c = fwd(params, x)
    jax.block_until_ready((d, c))

    assert d.shape == (2, 1) and c.shape == (2, 2)
    assert bool(jnp.all(jnp.isfinite(d))) and bool(jnp.all(jnp.isfinite(c)))
    print("KERNEL_OK")
</pallas_src>

<mosaic_0001>
module attributes {stable_mosaic.version = 11 : i64} {
  func.func @matmul_lrelu_kernel(%arg0: i32, %arg1: memref<640x8xf32, #tpu.memory_space<vmem>>, %arg2: memref<8x16xbf16, #tpu.memory_space<vmem>>, %arg3: memref<1x16xf32, #tpu.memory_space<vmem>>, %arg4: memref<640x16xf32, #tpu.memory_space<vmem>>) attributes {dimension_semantics = [#tpu.dimension_semantics<arbitrary>], iteration_bounds = array<i64: 1>, scalar_prefetch = 0 : i64, scratch_operands = 0 : i64, tpu.core_type = #tpu.core_type<tc>, window_params = [{pipeline_mode = #tpu.pipeline_mode<synchronous>, transform_indices = @transform_0, window_bounds = array<i64: 640, 8>}, {pipeline_mode = #tpu.pipeline_mode<synchronous>, transform_indices = @transform_1, window_bounds = array<i64: 8, 16>}, {pipeline_mode = #tpu.pipeline_mode<synchronous>, transform_indices = @transform_2, window_bounds = array<i64: 1, 16>}, {pipeline_mode = #tpu.pipeline_mode<synchronous>, transform_indices = @transform_3, window_bounds = array<i64: 640, 16>}]} {
    %c0 = arith.constant 0 : index
    %c0_0 = arith.constant 0 : index
    %0 = vector.load %arg1[%c0, %c0_0] : memref<640x8xf32, #tpu.memory_space<vmem>>, vector<640x8xf32>
    %1 = arith.truncf %0 : vector<640x8xf32> to vector<640x8xbf16>
    %c0_1 = arith.constant 0 : index
    %c0_2 = arith.constant 0 : index
    %2 = vector.load %arg2[%c0_1, %c0_2] : memref<8x16xbf16, #tpu.memory_space<vmem>>, vector<8x16xbf16>
    %cst = arith.constant dense<0.000000e+00> : vector<640x16xf32>
    %3 = tpu.matmul %1, %2, %cst {dimension_numbers = #tpu.dot_dimension_numbers<[1], [0], [0], [1], [0, 0, 1, 1], [], []>} : vector<640x8xbf16>, vector<8x16xbf16>, vector<640x16xf32> -> vector<640x16xf32>
    %c0_3 = arith.constant 0 : index
    %c0_4 = arith.constant 0 : index
    %4 = vector.load %arg3[%c0_3, %c0_4] : memref<1x16xf32, #tpu.memory_space<vmem>>, vector<1x16xf32>
    %5 = vector.broadcast %4 : vector<1x16xf32> to vector<640x16xf32>
    %6 = arith.addf %3, %5 : vector<640x16xf32>
    %cst_5 = arith.constant 0.000000e+00 : f32
    %7 = vector.broadcast %cst_5 : f32 to vector<640x16xf32>
    %8 = arith.cmpf ogt, %6, %7 : vector<640x16xf32>
    %cst_6 = arith.constant 2.000000e-01 : f32
    %9 = vector.broadcast %cst_6 : f32 to vector<640x16xf32>
    %10 = arith.mulf %9, %6 : vector<640x16xf32>
    %11 = arith.select %8, %6, %10 : vector<640x16xi1>, vector<640x16xf32>
    %c0_7 = arith.constant 0 : index
    %c0_8 = arith.constant 0 : index
    %12 = vector.load %arg4[%c0_7, %c0_8] : memref<640x16xf32, #tpu.memory_space<vmem>>, vector<640x16xf32>
    tpu.vector_store %arg4[%c0_7, %c0_8], %11 {strides = array<i32>} : memref<640x16xf32, #tpu.memory_space<vmem>>, vector<640x16xf32>,
    return
  }
  func.func @transform_0(%arg0: i32) -> (i32, i32) {
    %c0_i32 = arith.constant 0 : i32
    %c0_i32_0 = arith.constant 0 : i32
    %c0_i32_1 = arith.constant 0 : i32
    return %c0_i32, %c0_i32_0 : i32, i32
  }
  func.func @transform_1(%arg0: i32) -> (i32, i32) {
    %c0_i32 = arith.constant 0 : i32
    %c0_i32_0 = arith.constant 0 : i32
    %c0_i32_1 = arith.constant 0 : i32
    return %c0_i32, %c0_i32_0 : i32, i32
  }
  func.func @transform_2(%arg0: i32) -> (i32, i32) {
    %c0_i32 = arith.constant 0 : i32
    %c0_i32_0 = arith.constant 0 : i32
    %c0_i32_1 = arith.constant 0 : i32
    return %c0_i32, %c0_i32_0 : i32, i32
  }
  func.func @transform_3(%arg0: i32) -> (i32, i32) {
    %c0_i32 = arith.constant 0 : i32
    %c0_i32_0 = arith.constant 0 : i32
    %c0_i32_1 = arith.constant 0 : i32
    return %c0_i32, %c0_i32_0 : i32, i32
  }
}

module attributes {stable_mosaic.version = 11 : i64} {
  func.func @matmul_lrelu_kernel(%arg0: i32, %arg1: memref<192x128xf32, #tpu.memory_space<vmem>>, %arg2: memref<128x32xbf16, #tpu.memory_space<vmem>>, %arg3: memref<1x32xf32, #tpu.memory_space<vmem>>, %arg4: memref<192x32xf32, #tpu.memory_space<vmem>>) attributes {dimension_semantics = [#tpu.dimension_semantics<arbitrary>], iteration_bounds = array<i64: 1>, scalar_prefetch = 0 : i64, scratch_operands = 0 : i64, tpu.core_type = #tpu.core_type<tc>, window_params = [{pipeline_mode = #tpu.pipeline_mode<synchronous>, transform_indices = @transform_0, window_bounds = array<i64: 192, 128>}, {pipeline_mode = #tpu.pipeline_mode<synchronous>, transform_indices = @transform_1, window_bounds = array<i64: 128, 32>}, {pipeline_mode = #tpu.pipeline_mode<synchronous>, transform_indices = @transform_2, window_bounds = array<i64: 1, 32>}, {pipeline_mode = #tpu.pipeline_mode<synchronous>, transform_indices = @transform_3, window_bounds = array<i64: 192, 32>}]} {
    %c0 = arith.constant 0 : index
    %c0_0 = arith.constant 0 : index
    %0 = vector.load %arg1[%c0, %c0_0] : memref<192x128xf32, #tpu.memory_space<vmem>>, vector<192x128xf32>
    %1 = arith.truncf %0 : vector<192x128xf32> to vector<192x128xbf16>
    %c0_1 = arith.constant 0 : index
    %c0_2 = arith.constant 0 : index
    %2 = vector.load %arg2[%c0_1, %c0_2] : memref<128x32xbf16, #tpu.memory_space<vmem>>, vector<128x32xbf16>
    %cst = arith.constant dense<0.000000e+00> : vector<192x32xf32>
    %3 = tpu.matmul %1, %2, %cst {dimension_numbers = #tpu.dot_dimension_numbers<[1], [0], [0], [1], [0, 0, 1, 1], [], []>} : vector<192x128xbf16>, vector<128x32xbf16>, vector<192x32xf32> -> vector<192x32xf32>
    %c0_3 = arith.constant 0 : index
    %c0_4 = arith.constant 0 : index
    %4 = vector.load %arg3[%c0_3, %c0_4] : memref<1x32xf32, #tpu.memory_space<vmem>>, vector<1x32xf32>
    %5 = vector.broadcast %4 : vector<1x32xf32> to vector<192x32xf32>
    %6 = arith.addf %3, %5 : vector<192x32xf32>
    %cst_5 = arith.constant 0.000000e+00 : f32
    %7 = vector.broadcast %cst_5 : f32 to vector<192x32xf32>
    %8 = arith.cmpf ogt, %6, %7 : vector<192x32xf32>
    %cst_6 = arith.constant 2.000000e-01 : f32
    %9 = vector.broadcast %cst_6 : f32 to vector<192x32xf32>
    %10 = arith.mulf %9, %6 : vector<192x32xf32>
    %11 = arith.select %8, %6, %10 : vector<192x32xi1>, vector<192x32xf32>
    %c0_7 = arith.constant 0 : index
    %c0_8 = arith.constant 0 : index
    %12 = vector.load %arg4[%c0_7, %c0_8] : memref<192x32xf32, #tpu.memory_space<vmem>>, vector<192x32xf32>
    tpu.vector_store %arg4[%c0_7, %c0_8], %11 {strides = array<i32>} : memref<192x32xf32, #tpu.memory_space<vmem>>, vector<192x32xf32>,
    return
  }
  func.func @transform_0(%arg0: i32) -> (i32, i32) {
    %c0_i32 = arith.constant 0 : i32
    %c0_i32_0 = arith.constant 0 : i32
    %c0_i32_1 = arith.constant 0 : i32
    return %c0_i32, %c0_i32_0 : i32, i32
  }
  func.func @transform_1(%arg0: i32) -> (i32, i32) {
    %c0_i32 = arith.constant 0 : i32
    %c0_i32_0 = arith.constant 0 : i32
    %c0_i32_1 = arith.constant 0 : i32
    return %c0_i32, %c0_i32_0 : i32, i32
  }
  func.func @transform_2(%arg0: i32) -> (i32, i32) {
    %c0_i32 = arith.constant 0 : i32
    %c0_i32_0 = arith.constant 0 : i32
    %c0_i32_1 = arith.constant 0 : i32
    return %c0_i32, %c0_i32_0 : i32, i32
  }
  func.func @transform_3(%arg0: i32) -> (i32, i32) {
    %c0_i32 = arith.constant 0 : i32
    %c0_i32_0 = arith.constant 0 : i32
    %c0_i32_1 = arith.constant 0 : i32
    return %c0_i32, %c0_i32_0 : i32, i32
  }
}

module attributes {stable_mosaic.version = 11 : i64} {
  func.func @fc_heads_kernel(%arg0: i32, %arg1: memref<2x2048xf32, #tpu.memory_space<vmem>>, %arg2: memref<2048x1024xbf16, #tpu.memory_space<vmem>>, %arg3: memref<1x1024xf32, #tpu.memory_space<vmem>>, %arg4: memref<1x1024xf32, #tpu.memory_space<vmem>>, %arg5: memref<1x1024xf32, #tpu.memory_space<vmem>>, %arg6: memref<1024x128xbf16, #tpu.memory_space<vmem>>, %arg7: memref<1x128xf32, #tpu.memory_space<vmem>>, %arg8: memref<2x128xf32, #tpu.memory_space<vmem>>) attributes {dimension_semantics = [#tpu.dimension_semantics<arbitrary>], iteration_bounds = array<i64: 1>, scalar_prefetch = 0 : i64, scratch_operands = 0 : i64, tpu.core_type = #tpu.core_type<tc>, window_params = [{pipeline_mode = #tpu.pipeline_mode<synchronous>, transform_indices = @transform_0, window_bounds = array<i64: 2, 2048>}, {pipeline_mode = #tpu.pipeline_mode<synchronous>, transform_indices = @transform_1, window_bounds = array<i64: 2048, 1024>}, {pipeline_mode = #tpu.pipeline_mode<synchronous>, transform_indices = @transform_2, window_bounds = array<i64: 1, 1024>}, {pipeline_mode = #tpu.pipeline_mode<synchronous>, transform_indices = @transform_3, window_bounds = array<i64: 1, 1024>}, {pipeline_mode = #tpu.pipeline_mode<synchronous>, transform_indices = @transform_4, window_bounds = array<i64: 1, 1024>}, {pipeline_mode = #tpu.pipeline_mode<synchronous>, transform_indices = @transform_5, window_bounds = array<i64: 1024, 128>}, {pipeline_mode = #tpu.pipeline_mode<synchronous>, transform_indices = @transform_6, window_bounds = array<i64: 1, 128>}, {pipeline_mode = #tpu.pipeline_mode<synchronous>, transform_indices = @transform_7, window_bounds = array<i64: 2, 128>}]} {
    %c0 = arith.constant 0 : index
    %c0_0 = arith.constant 0 : index
    %0 = vector.load %arg1[%c0, %c0_0] : memref<2x2048xf32, #tpu.memory_space<vmem>>, vector<2x2048xf32>
    %1 = arith.truncf %0 : vector<2x2048xf32> to vector<2x2048xbf16>
    %c0_1 = arith.constant 0 : index
    %c0_2 = arith.constant 0 : index
    %2 = vector.load %arg2[%c0_1, %c0_2] : memref<2048x1024xbf16, #tpu.memory_space<vmem>>, vector<2048x1024xbf16>
    %cst = arith.constant dense<0.000000e+00> : vector<2x1024xf32>
    %3 = tpu.matmul %1, %2, %cst {dimension_numbers = #tpu.dot_dimension_numbers<[1], [0], [0], [1], [0, 0, 1, 1], [], []>} : vector<2x2048xbf16>, vector<2048x1024xbf16>, vector<2x1024xf32> -> vector<2x1024xf32>
    %c0_3 = arith.constant 0 : index
    %c0_4 = arith.constant 0 : index
    %4 = vector.load %arg3[%c0_3, %c0_4] : memref<1x1024xf32, #tpu.memory_space<vmem>>, vector<1x1024xf32>
    %5 = vector.broadcast %4 : vector<1x1024xf32> to vector<2x1024xf32>
    %6 = arith.addf %3, %5 : vector<2x1024xf32>
    %cst_5 = arith.constant dense<0.000000e+00> : vector<1024xf32>
    %7 = vector.multi_reduction <add>, %6, %cst_5 [0] : vector<2x1024xf32> to vector<1024xf32>
    %8 = vector.shape_cast %7 : vector<1024xf32> to vector<1x1024xf32>
    %cst_6 = arith.constant 2.000000e+00 : f32
    %9 = vector.broadcast %cst_6 : f32 to vector<1x1024xf32>
    %10 = arith.divf %8, %9 : vector<1x1024xf32>
    %11 = vector.broadcast %10 : vector<1x1024xf32> to vector<2x1024xf32>
    %12 = arith.subf %6, %11 : vector<2x1024xf32>
    %13 = arith.mulf %12, %12 : vector<2x1024xf32>
    %cst_7 = arith.constant dense<0.000000e+00> : vector<1024xf32>
    %14 = vector.multi_reduction <add>, %13, %cst_7 [0] : vector<2x1024xf32> to vector<1024xf32>
    %15 = vector.shape_cast %14 : vector<1024xf32> to vector<1x1024xf32>
    %cst_8 = arith.constant 2.000000e+00 : f32
    %16 = vector.broadcast %cst_8 : f32 to vector<1x1024xf32>
    %17 = arith.divf %15, %16 : vector<1x1024xf32>
    %c0_9 = arith.constant 0 : index
    %c0_10 = arith.constant 0 : index
    %18 = vector.load %arg4[%c0_9, %c0_10] : memref<1x1024xf32, #tpu.memory_space<vmem>>, vector<1x1024xf32>
    %19 = vector.broadcast %10 : vector<1x1024xf32> to vector<2x1024xf32>
    %20 = arith.subf %6, %19 : vector<2x1024xf32>
    %21 = vector.broadcast %18 : vector<1x1024xf32> to vector<2x1024xf32>
    %22 = arith.mulf %21, %20 : vector<2x1024xf32>
    %cst_11 = arith.constant 9.99999974E-6 : f32
    %23 = vector.broadcast %cst_11 : f32 to vector<1x1024xf32>
    %24 = arith.addf %17, %23 : vector<1x1024xf32>
    %25 = math.rsqrt %24 : vector<1x1024xf32>
    %26 = vector.broadcast %25 : vector<1x1024xf32> to vector<2x1024xf32>
    %27 = arith.mulf %22, %26 : vector<2x1024xf32>
    %c0_12 = arith.constant 0 : index
    %c0_13 = arith.constant 0 : index
    %28 = vector.load %arg5[%c0_12, %c0_13] : memref<1x1024xf32, #tpu.memory_space<vmem>>, vector<1x1024xf32>
    %29 = vector.broadcast %28 : vector<1x1024xf32> to vector<2x1024xf32>
    %30 = arith.addf %27, %29 : vector<2x1024xf32>
    %cst_14 = arith.constant 0.000000e+00 : f32
    %31 = vector.broadcast %cst_14 : f32 to vector<2x1024xf32>
    %32 = arith.cmpf ogt, %30, %31 : vector<2x1024xf32>
    %cst_15 = arith.constant 2.000000e-01 : f32
    %33 = vector.broadcast %cst_15 : f32 to vector<2x1024xf32>
    %34 = arith.mulf %33, %30 : vector<2x1024xf32>
    %35 = arith.select %32, %30, %34 : vector<2x1024xi1>, vector<2x1024xf32>
    %36 = arith.truncf %35 : vector<2x1024xf32> to vector<2x1024xbf16>
    %c0_16 = arith.constant 0 : index
    %c0_17 = arith.constant 0 : index
    %37 = vector.load %arg6[%c0_16, %c0_17] : memref<1024x128xbf16, #tpu.memory_space<vmem>>, vector<1024x128xbf16>
    %cst_18 = arith.constant dense<0.000000e+00> : vector<2x128xf32>
    %38 = tpu.matmul %36, %37, %cst_18 {dimension_numbers = #tpu.dot_dimension_numbers<[1], [0], [0], [1], [0, 0, 1, 1], [], []>} : vector<2x1024xbf16>, vector<1024x128xbf16>, vector<2x128xf32> -> vector<2x128xf32>
    %c0_19 = arith.constant 0 : index
    %c0_20 = arith.constant 0 : index
    %39 = vector.load %arg7[%c0_19, %c0_20] : memref<1x128xf32, #tpu.memory_space<vmem>>, vector<1x128xf32>
    %40 = vector.broadcast %39 : vector<1x128xf32> to vector<2x128xf32>
    %41 = arith.addf %38, %40 : vector<2x128xf32>
    %cst_21 = arith.constant 0.000000e+00 : f32
    %42 = vector.broadcast %cst_21 : f32 to vector<2x128xf32>
    %43 = arith.subf %42, %41 : vector<2x128xf32>
    %44 = math.exp %43 : vector<2x128xf32>
    %cst_22 = arith.constant 1.000000e+00 : f32
    %45 = vector.broadcast %cst_22 : f32 to vector<2x128xf32>
    %46 = arith.addf %45, %44 : vector<2x128xf32>
    %47 = tpu.reciprocal %46 {approx = true} : vector<2x128xf32> -> vector<2x128xf32>
    %48 = tpu.iota {dimensions = array<i32: 1>} : vector<2x128xi32>
    %c0_i32 = arith.constant 0 : i32
    %49 = vector.broadcast %c0_i32 : i32 to vector<2x128xi32>
    %50 = arith.cmpi eq, %48, %49 : vector<2x128xi32>
    %51 = arith.select %50, %47, %41 : vector<2x128xi1>, vector<2x128xf32>
    %c0_23 = arith.constant 0 : index
    %c0_24 = arith.constant 0 : index
    %52 = vector.load %arg8[%c0_23, %c0_24] : memref<2x128xf32, #tpu.memory_space<vmem>>, vector<2x128xf32>
    tpu.vector_store %arg8[%c0_23, %c0_24], %51 {strides = array<i32>} : memref<2x128xf32, #tpu.memory_space<vmem>>, vector<2x128xf32>,
    return
  }
  func.func @transform_0(%arg0: i32) -> (i32, i32) {
    %c0_i32 = arith.constant 0 : i32
    %c0_i32_0 = arith.constant 0 : i32
    %c0_i32_1 = arith.constant 0 : i32
    return %c0_i32, %c0_i32_0 : i32, i32
  }
  func.func @transform_1(%arg0: i32) -> (i32, i32) {
    %c0_i32 = arith.constant 0 : i32
    %c0_i32_0 = arith.constant 0 : i32
    %c0_i32_1 = arith.constant 0 : i32
    return %c0_i32, %c0_i32_0 : i32, i32
  }
  func.func @transform_2(%arg0: i32) -> (i32, i32) {
    %c0_i32 = arith.constant 0 : i32
    %c0_i32_0 = arith.constant 0 : i32
    %c0_i32_1 = arith.constant 0 : i32
    return %c0_i32, %c0_i32_0 : i32, i32
  }
  func.func @transform_3(%arg0: i32) -> (i32, i32) {
    %c0_i32 = arith.constant 0 : i32
    %c0_i32_0 = arith.constant 0 : i32
    %c0_i32_1 = arith.constant 0 : i32
    return %c0_i32, %c0_i32_0 : i32, i32
  }
  func.func @transform_4(%arg0: i32) -> (i32, i32) {
    %c0_i32 = arith.constant 0 : i32
    %c0_i32_0 = arith.constant 0 : i32
    %c0_i32_1 = arith.constant 0 : i32
    return %c0_i32, %c0_i32_0 : i32, i32
  }
  func.func @transform_5(%arg0: i32) -> (i32, i32) {
    %c0_i32 = arith.constant 0 : i32
    %c0_i32_0 = arith.constant 0 : i32
    %c0_i32_1 = arith.constant 0 : i32
    return %c0_i32, %c0_i32_0 : i32, i32
  }
  func.func @transform_6(%arg0: i32) -> (i32, i32) {
    %c0_i32 = arith.constant 0 : i32
    %c0_i32_0 = arith.constant 0 : i32
    %c0_i32_1 = arith.constant 0 : i32
    return %c0_i32, %c0_i32_0 : i32, i32
  }
  func.func @transform_7(%arg0: i32) -> (i32, i32) {
    %c0_i32 = arith.constant 0 : i32
    %c0_i32_0 = arith.constant 0 : i32
    %c0_i32_1 = arith.constant 0 : i32
    return %c0_i32, %c0_i32_0 : i32, i32
  }
}

module attributes {stable_mosaic.version = 11 : i64} {
  func.func @matmul_bn_lrelu_kernel(%arg0: i32, %arg1: memref<64x256xf32, #tpu.memory_space<vmem>>, %arg2: memref<256x64xbf16, #tpu.memory_space<vmem>>, %arg3: memref<1x64xf32, #tpu.memory_space<vmem>>, %arg4: memref<1x64xf32, #tpu.memory_space<vmem>>, %arg5: memref<1x64xf32, #tpu.memory_space<vmem>>, %arg6: memref<64x64xf32, #tpu.memory_space<vmem>>) attributes {dimension_semantics = [#tpu.dimension_semantics<arbitrary>], iteration_bounds = array<i64: 1>, scalar_prefetch = 0 : i64, scratch_operands = 0 : i64, tpu.core_type = #tpu.core_type<tc>, window_params = [{pipeline_mode = #tpu.pipeline_mode<synchronous>, transform_indices = @transform_0, window_bounds = array<i64: 64, 256>}, {pipeline_mode = #tpu.pipeline_mode<synchronous>, transform_indices = @transform_1, window_bounds = array<i64: 256, 64>}, {pipeline_mode = #tpu.pipeline_mode<synchronous>, transform_indices = @transform_2, window_bounds = array<i64: 1, 64>}, {pipeline_mode = #tpu.pipeline_mode<synchronous>, transform_indices = @transform_3, window_bounds = array<i64: 1, 64>}, {pipeline_mode = #tpu.pipeline_mode<synchronous>, transform_indices = @transform_4, window_bounds = array<i64: 1, 64>}, {pipeline_mode = #tpu.pipeline_mode<synchronous>, transform_indices = @transform_5, window_bounds = array<i64: 64, 64>}]} {
    %c0 = arith.constant 0 : index
    %c0_0 = arith.constant 0 : index
    %0 = vector.load %arg1[%c0, %c0_0] : memref<64x256xf32, #tpu.memory_space<vmem>>, vector<64x256xf32>
    %1 = arith.truncf %0 : vector<64x256xf32> to vector<64x256xbf16>
    %c0_1 = arith.constant 0 : index
    %c0_2 = arith.constant 0 : index
    %2 = vector.load %arg2[%c0_1, %c0_2] : memref<256x64xbf16, #tpu.memory_space<vmem>>, vector<256x64xbf16>
    %cst = arith.constant dense<0.000000e+00> : vector<64x64xf32>
    %3 = tpu.matmul %1, %2, %cst {dimension_numbers = #tpu.dot_dimension_numbers<[1], [0], [0], [1], [0, 0, 1, 1], [], []>} : vector<64x256xbf16>, vector<256x64xbf16>, vector<64x64xf32> -> vector<64x64xf32>
    %c0_3 = arith.constant 0 : index
    %c0_4 = arith.constant 0 : index
    %4 = vector.load %arg3[%c0_3, %c0_4] : memref<1x64xf32, #tpu.memory_space<vmem>>, vector<1x64xf32>
    %5 = vector.broadcast %4 : vector<1x64xf32> to vector<64x64xf32>
    %6 = arith.addf %3, %5 : vector<64x64xf32>
    %cst_5 = arith.constant dense<0.000000e+00> : vector<64xf32>
    %7 = vector.multi_reduction <add>, %6, %cst_5 [0] : vector<64x64xf32> to vector<64xf32>
    %8 = vector.shape_cast %7 : vector<64xf32> to vector<1x64xf32>
    %cst_6 = arith.constant 6.400000e+01 : f32
    %9 = vector.broadcast %cst_6 : f32 to vector<1x64xf32>
    %10 = arith.divf %8, %9 : vector<1x64xf32>
    %11 = vector.broadcast %10 : vector<1x64xf32> to vector<64x64xf32>
    %12 = arith.subf %6, %11 : vector<64x64xf32>
    %13 = arith.mulf %12, %12 : vector<64x64xf32>
    %cst_7 = arith.constant dense<0.000000e+00> : vector<64xf32>
    %14 = vector.multi_reduction <add>, %13, %cst_7 [0] : vector<64x64xf32> to vector<64xf32>
    %15 = vector.shape_cast %14 : vector<64xf32> to vector<1x64xf32>
    %cst_8 = arith.constant 6.400000e+01 : f32
    %16 = vector.broadcast %cst_8 : f32 to vector<1x64xf32>
    %17 = arith.divf %15, %16 : vector<1x64xf32>
    %c0_9 = arith.constant 0 : index
    %c0_10 = arith.constant 0 : index
    %18 = vector.load %arg4[%c0_9, %c0_10] : memref<1x64xf32, #tpu.memory_space<vmem>>, vector<1x64xf32>
    %19 = vector.broadcast %10 : vector<1x64xf32> to vector<64x64xf32>
    %20 = arith.subf %6, %19 : vector<64x64xf32>
    %21 = vector.broadcast %18 : vector<1x64xf32> to vector<64x64xf32>
    %22 = arith.mulf %21, %20 : vector<64x64xf32>
    %cst_11 = arith.constant 9.99999974E-6 : f32
    %23 = vector.broadcast %cst_11 : f32 to vector<1x64xf32>
    %24 = arith.addf %17, %23 : vector<1x64xf32>
    %25 = math.rsqrt %24 : vector<1x64xf32>
    %26 = vector.broadcast %25 : vector<1x64xf32> to vector<64x64xf32>
    %27 = arith.mulf %22, %26 : vector<64x64xf32>
    %c0_12 = arith.constant 0 : index
    %c0_13 = arith.constant 0 : index
    %28 = vector.load %arg5[%c0_12, %c0_13] : memref<1x64xf32, #tpu.memory_space<vmem>>, vector<1x64xf32>
    %29 = vector.broadcast %28 : vector<1x64xf32> to vector<64x64xf32>
    %30 = arith.addf %27, %29 : vector<64x64xf32>
    %cst_14 = arith.constant 0.000000e+00 : f32
    %31 = vector.broadcast %cst_14 : f32 to vector<64x64xf32>
    %32 = arith.cmpf ogt, %30, %31 : vector<64x64xf32>
    %cst_15 = arith.constant 2.000000e-01 : f32
    %33 = vector.broadcast %cst_15 : f32 to vector<64x64xf32>
    %34 = arith.mulf %33, %30 : vector<64x64xf32>
    %35 = arith.select %32, %30, %34 : vector<64x64xi1>, vector<64x64xf32>
    %c0_16 = arith.constant 0 : index
    %c0_17 = arith.constant 0 : index
    %36 = vector.load %arg6[%c0_16, %c0_17] : memref<64x64xf32, #tpu.memory_space<vmem>>, vector<64x64xf32>
    tpu.vector_store %arg6[%c0_16, %c0_17], %35 {strides = array<i32>} : memref<64x64xf32, #tpu.memory_space<vmem>>, vector<64x64xf32>,
    return
  }
  func.func @transform_0(%arg0: i32) -> (i32, i32) {
    %c0_i32 = arith.constant 0 : i32
    %c0_i32_0 = arith.constant 0 : i32
    %c0_i32_1 = arith.constant 0 : i32
    return %c0_i32, %c0_i32_0 : i32, i32
  }
  func.func @transform_1(%arg0: i32) -> (i32, i32) {
    %c0_i32 = arith.constant 0 : i32
    %c0_i32_0 = arith.constant 0 : i32
    %c0_i32_1 = arith.constant 0 : i32
    return %c0_i32, %c0_i32_0 : i32, i32
  }
  func.func @transform_2(%arg0: i32) -> (i32, i32) {
    %c0_i32 = arith.constant 0 : i32
    %c0_i32_0 = arith.constant 0 : i32
    %c0_i32_1 = arith.constant 0 : i32
    return %c0_i32, %c0_i32_0 : i32, i32
  }
  func.func @transform_3(%arg0: i32) -> (i32, i32) {
    %c0_i32 = arith.constant 0 : i32
    %c0_i32_0 = arith.constant 0 : i32
    %c0_i32_1 = arith.constant 0 : i32
    return %c0_i32, %c0_i32_0 : i32, i32
  }
  func.func @transform_4(%arg0: i32) -> (i32, i32) {
    %c0_i32 = arith.constant 0 : i32
    %c0_i32_0 = arith.constant 0 : i32
    %c0_i32_1 = arith.constant 0 : i32
    return %c0_i32, %c0_i32_0 : i32, i32
  }
  func.func @transform_5(%arg0: i32) -> (i32, i32) {
    %c0_i32 = arith.constant 0 : i32
    %c0_i32_0 = arith.constant 0 : i32
    %c0_i32_1 = arith.constant 0 : i32
    return %c0_i32, %c0_i32_0 : i32, i32
  }
}

</mosaic_0001>

<llo_original>
// kernel: discriminator_forward.4
$region0: #{discriminator_forward.4}
  #allocation0 [shape = 'u32[]', space=smem, size = 0x4, offset = 0x4, fixed_abs, tag = 'smem constant byte address 0x4 - core index']
  #allocation1 [shape = 'u32[144,128]{1,0:T(1,128)}', space=vmem, size = 0x12000, scoped, tag = 'internal scratch']
  %s0 = inlined_call_operand.vmem [shape: f32[640,8], index: 0, kind: input, shape index: {}]
  %s1 = inlined_call_operand.hbm [shape: bf16[8,16], index: 1, kind: input, shape index: {}]
  %s2 = inlined_call_operand.hbm [shape: f32[1,16], index: 2, kind: input, shape index: {}]
  %s3 = inlined_call_operand.vmem [shape: f32[640,16], index: 3, kind: output, shape index: {}]
  %s4 = sld [smem:[#allocation0]]
  $region30: #{discriminator_forward.4} parent=0
    _
  %s6 = ssub.s32 1, %s4
  %s7 = scalar_select 0, %s6, %s4
  $region1: #{discriminator_forward.4} parent=0
    #allocation2 [shape = 'u8[2048]{0}', space=vmem, size = 0x800, scoped, tag = 'input window, operand 1, single buffered']
    #allocation3 [shape = 's32[1]{0}', space=sflag, size = 0x4, scoped, tag = 'scoped memory for discriminator_forward.4']
    #allocation4 [shape = 'u8[512]{0}', space=vmem, size = 0x400, scoped, tag = 'input window, operand 2, single buffered']
    #allocation5 [shape = 's32[1]{0}', space=sflag, size = 0x4, scoped, tag = 'scoped memory for discriminator_forward.4']
    %8 = vsyncpa [#allocation3], 0
    %9 = vsyncpa [#allocation5], 0
    // Predicated region
    $region2: #{discriminator_forward.4} parent=1 // pred_check
      _
    $region3: #{discriminator_forward.4} parent=1 // pred_check_branch
      %11 = sbr.rel (0) target = $region5
    $region4: #{discriminator_forward.4} parent=1 // pred_region
      _
    $region5: #{discriminator_forward.4} parent=1 // pred_fallthru
      _
    // Predicated region
    $region6: #{discriminator_forward.4} parent=1 // pred_check
      _
    $region7: #{discriminator_forward.4} parent=1 // pred_check_branch
      %13 = sbr.rel (0) target = $region9
    $region8: #{discriminator_forward.4} parent=1 // pred_region
      %s15 = ssub.s32 64, 64
      %16 = vsyncadd [#allocation3], %s15
      %s18 = sshll.u32 [#allocation2], 4
      %s19 = int_to_ptr.vmem [resolvable:$true] %s18
      %21 = dma.hbm_to_vmem [thread:$0]  %s1, 64, %s19, [#allocation3]
    $region9: #{discriminator_forward.4} parent=1 // pred_fallthru
      _
    // Predicated region
    $region10: #{discriminator_forward.4} parent=1 // pred_check
      _
    $region11: #{discriminator_forward.4} parent=1 // pred_check_branch
      %23 = sbr.rel (0) target = $region13
    $region12: #{discriminator_forward.4} parent=1 // pred_region
      %s25 = ssub.s32 16, 16
      %26 = vsyncadd [#allocation5], %s25
      %s28 = sshll.u32 [#allocation4], 4
      %s29 = int_to_ptr.vmem [resolvable:$true] %s28
      %31 = dma.hbm_to_vmem [thread:$0]  %s2, 16, %s29, [#allocation5]
    $region13: #{discriminator_forward.4} parent=1 // pred_fallthru
      _
    // Predicated region
    $region14: #{discriminator_forward.4} parent=1 // pred_check
      _
    $region15: #{discriminator_forward.4} parent=1 // pred_check_branch
      %33 = sbr.rel (0) target = $region17
    $region16: #{discriminator_forward.4} parent=1 // pred_region
      %34 = dma.done [#allocation3], 64
    $region17: #{discriminator_forward.4} parent=1 // pred_fallthru
      _
    // Predicated region
    $region18: #{discriminator_forward.4} parent=1 // pred_check
      _
    $region19: #{discriminator_forward.4} parent=1 // pred_check_branch
      %36 = sbr.rel (0) target = $region21
    $region20: #{discriminator_forward.4} parent=1 // pred_region
      %37 = dma.done [#allocation5], 16
    $region21: #{discriminator_forward.4} parent=1 // pred_fallthru
      _
    %v39 = vld [vmem:[%s0] sm:$0xff]
    %v40 = vld [vmem:[%s0 + $0x8] sm:$0xff]
    %v41 = vld [vmem:[%s0 + $0x10] sm:$0xff]
    %v42 = vld [vmem:[%s0 + $0x18] sm:$0xff]
    %v43 = vld [vmem:[%s0 + $0x20] sm:$0xff]
    %v44 = vld [vmem:[%s0 + $0x28] sm:$0xff]
    %v45 = vld [vmem:[%s0 + $0x30] sm:$0xff]
    %v46 = vld [vmem:[%s0 + $0x38] sm:$0xff]
    %v47 = vld [vmem:[%s0 + $0x40] sm:$0xff]
    %v48 = vld [vmem:[%s0 + $0x48] sm:$0xff]
    %v49 = vld [vmem:[%s0 + $0x50] sm:$0xff]
    %v50 = vld [vmem:[%s0 + $0x58] sm:$0xff]
    %v51 = vld [vmem:[%s0 + $0x60] sm:$0xff]
    %v52 = vld [vmem:[%s0 + $0x68] sm:$0xff]
    %v53 = vld [vmem:[%s0 + $0x70] sm:$0xff]
    %v54 = vld [vmem:[%s0 + $0x78] sm:$0xff]
    %v55 = vld [vmem:[%s0 + $0x80] sm:$0xff]
    %v56 = vld [vmem:[%s0 + $0x88] sm:$0xff]
    %v57 = vld [vmem:[%s0 + $0x90] sm:$0xff]
    %v58 = vld [vmem:[%s0 + $0x98] sm:$0xff]
    %v59 = vld [vmem:[%s0 + $0xa0] sm:$0xff]
    %v60 = vld [vmem:[%s0 + $0xa8] sm:$0xff]
    %v61 = vld [vmem:[%s0 + $0xb0] sm:$0xff]
    %v62 = vld [vmem:[%s0 + $0xb8] sm:$0xff]
    %v63 = vld [vmem:[%s0 + $0xc0] sm:$0xff]
    %v64 = vld [vmem:[%s0 + $0xc8] sm:$0xff]
    %v65 = vld [vmem:[%s0 + $0xd0] sm:$0xff]
    %v66 = vld [vmem:[%s0 + $0xd8] sm:$0xff]
    %v67 = vld [vmem:[%s0 + $0xe0] sm:$0xff]
    %v68 = vld [vmem:[%s0 + $0xe8] sm:$0xff]
    %v69 = vld [vmem:[%s0 + $0xf0] sm:$0xff]
    %v70 = vld [vmem:[%s0 + $0xf8] sm:$0xff]
    %v71 = vld [vmem:[%s0 + $0x100] sm:$0xff]
    %v72 = vld [vmem:[%s0 + $0x108] sm:$0xff]
    %v73 = vld [vmem:[%s0 + $0x110] sm:$0xff]
    %v74 = vld [vmem:[%s0 + $0x118] sm:$0xff]
    %v75 = vld [vmem:[%s0 + $0x120] sm:$0xff]
    %v76 = vld [vmem:[%s0 + $0x128] sm:$0xff]
    %v77 = vld [vmem:[%s0 + $0x130] sm:$0xff]
    %v78 = vld [vmem:[%s0 + $0x138] sm:$0xff]
    %v79 = vld [vmem:[%s0 + $0x140] sm:$0xff]
    %v80 = vld [vmem:[%s0 + $0x148] sm:$0xff]
    %v81 = vld [vmem:[%s0 + $0x150] sm:$0xff]
    %v82 = vld [vmem:[%s0 + $0x158] sm:$0xff]
    %v83 = vld [vmem:[%s0 + $0x160] sm:$0xff]
    %v84 = vld [vmem:[%s0 + $0x168] sm:$0xff]
    %v85 = vld [vmem:[%s0 + $0x170] sm:$0xff]
    %v86 = vld [vmem:[%s0 + $0x178] sm:$0xff]
    %v87 = vld [vmem:[%s0 + $0x180] sm:$0xff]
    %v88 = vld [vmem:[%s0 + $0x188] sm:$0xff]
    %v89 = vld [vmem:[%s0 + $0x190] sm:$0xff]
    %v90 = vld [vmem:[%s0 + $0x198] sm:$0xff]
    %v91 = vld [vmem:[%s0 + $0x1a0] sm:$0xff]
    %v92 = vld [vmem:[%s0 + $0x1a8] sm:$0xff]
    %v93 = vld [vmem:[%s0 + $0x1b0] sm:$0xff]
    %v94 = vld [vmem:[%s0 + $0x1b8] sm:$0xff]
    %v95 = vld [vmem:[%s0 + $0x1c0] sm:$0xff]
    %v96 = vld [vmem:[%s0 + $0x1c8] sm:$0xff]
    %v97 = vld [vmem:[%s0 + $0x1d0] sm:$0xff]
    %v98 = vld [vmem:[%s0 + $0x1d8] sm:$0xff]
    %v99 = vld [vmem:[%s0 + $0x1e0] sm:$0xff]
    %v100 = vld [vmem:[%s0 + $0x1e8] sm:$0xff]
    %v101 = vld [vmem:[%s0 + $0x1f0] sm:$0xff]
    %v102 = vld [vmem:[%s0 + $0x1f8] sm:$0xff]
    %v103 = vld [vmem:[%s0 + $0x200] sm:$0xff]
    %v104 = vld [vmem:[%s0 + $0x208] sm:$0xff]
    %v105 = vld [vmem:[%s0 + $0x210] sm:$0xff]
    %v106 = vld [vmem:[%s0 + $0x218] sm:$0xff]
    %v107 = vld [vmem:[%s0 + $0x220] sm:$0xff]
    %v108 = vld [vmem:[%s0 + $0x228] sm:$0xff]
    %v109 = vld [vmem:[%s0 + $0x230] sm:$0xff]
    %v110 = vld [vmem:[%s0 + $0x238] sm:$0xff]
    %v111 = vld [vmem:[%s0 + $0x240] sm:$0xff]
    %v112 = vld [vmem:[%s0 + $0x248] sm:$0xff]
    %v113 = vld [vmem:[%s0 + $0x250] sm:$0xff]
    %v114 = vld [vmem:[%s0 + $0x258] sm:$0xff]
    %v115 = vld [vmem:[%s0 + $0x260] sm:$0xff]
    %v116 = vld [vmem:[%s0 + $0x268] sm:$0xff]
    %v117 = vld [vmem:[%s0 + $0x270] sm:$0xff]
    %v118 = vld [vmem:[%s0 + $0x278] sm:$0xff]
    %v119 = vpack.c.bf16 %v40, %v39
    %v120 = vpack.c.bf16 %v42, %v41
    %v121 = vpack.c.bf16 %v44, %v43
    %v122 = vpack.c.bf16 %v46, %v45
    %v123 = vpack.c.bf16 %v48, %v47
    %v124 = vpack.c.bf16 %v50, %v49
    %v125 = vpack.c.bf16 %v52, %v51
    %v126 = vpack.c.bf16 %v54, %v53
    %v127 = vpack.c.bf16 %v56, %v55
    %v128 = vpack.c.bf16 %v58, %v57
    %v129 = vpack.c.bf16 %v60, %v59
    %v130 = vpack.c.bf16 %v62, %v61
    %v131 = vpack.c.bf16 %v64, %v63
    %v132 = vpack.c.bf16 %v66, %v65
    %v133 = vpack.c.bf16 %v68, %v67
    %v134 = vpack.c.bf16 %v70, %v69
    %v135 = vpack.c.bf16 %v72, %v71
    %v136 = vpack.c.bf16 %v74, %v73
    %v137 = vpack.c.bf16 %v76, %v75
    %v138 = vpack.c.bf16 %v78, %v77
    %v139 = vpack.c.bf16 %v80, %v79
    %v140 = vpack.c.bf16 %v82, %v81
    %v141 = vpack.c.bf16 %v84, %v83
    %v142 = vpack.c.bf16 %v86, %v85
    %v143 = vpack.c.bf16 %v88, %v87
    %v144 = vpack.c.bf16 %v90, %v89
    %v145 = vpack.c.bf16 %v92, %v91
    %v146 = vpack.c.bf16 %v94, %v93
    %v147 = vpack.c.bf16 %v96, %v95
    %v148 = vpack.c.bf16 %v98, %v97
    %v149 = vpack.c.bf16 %v100, %v99
    %v150 = vpack.c.bf16 %v102, %v101
    %v151 = vpack.c.bf16 %v104, %v103
    %v152 = vpack.c.bf16 %v106, %v105
    %v153 = vpack.c.bf16 %v108, %v107
    %v154 = vpack.c.bf16 %v110, %v109
    %v155 = vpack.c.bf16 %v112, %v111
    %v156 = vpack.c.bf16 %v114, %v113
    %v157 = vpack.c.bf16 %v116, %v115
    %v158 = vpack.c.bf16 %v118, %v117
    %v159 = vld [vmem:[#allocation2] sm:$0xf]
    %v160 = vld [vmem:[#allocation4] sm:$0x1]
    %v162 = vlaneseq
    %v163 = vshrl.u32 %v162, 7
    %v164 = vsub.s32 0, %v163
    %v165 = vrot.slane %v160, %v164
    %vm167 = vcmask 64512
    %v169 = vsel %vm167, %v119, 0
    %v172 = vsel %vm167, %v120, 0
    %v175 = vsel %vm167, %v121, 0
    %v178 = vsel %vm167, %v122, 0
    %v181 = vsel %vm167, %v123, 0
    %v184 = vsel %vm167, %v124, 0
    %v187 = vsel %vm167, %v125, 0
    %v190 = vsel %vm167, %v126, 0
    %v193 = vsel %vm167, %v127, 0
    %v196 = vsel %vm167, %v128, 0
    %v199 = vsel %vm167, %v129, 0
    %v202 = vsel %vm167, %v130, 0
    %v205 = vsel %vm167, %v131, 0
    %v208 = vsel %vm167, %v132, 0
    %v211 = vsel %vm167, %v133, 0
    %v214 = vsel %vm167, %v134, 0
    %v217 = vsel %vm167, %v135, 0
    %v220 = vsel %vm167, %v136, 0
    %v223 = vsel %vm167, %v137, 0
    %v226 = vsel %vm167, %v138, 0
    %v229 = vsel %vm167, %v139, 0
    %v232 = vsel %vm167, %v140, 0
    %v235 = vsel %vm167, %v141, 0
    %v238 = vsel %vm167, %v142, 0
    %v241 = vsel %vm167, %v143, 0
    %v244 = vsel %vm167, %v144, 0
    %v247 = vsel %vm167, %v145, 0
    %v250 = vsel %vm167, %v146, 0
    %v253 = vsel %vm167, %v147, 0
    %v256 = vsel %vm167, %v148, 0
    %v259 = vsel %vm167, %v149, 0
    %v262 = vsel %vm167, %v150, 0
    %v265 = vsel %vm167, %v151, 0
    %v268 = vsel %vm167, %v152, 0
    %v271 = vsel %vm167, %v153, 0
    %v274 = vsel %vm167, %v154, 0
    %v277 = vsel %vm167, %v155, 0
    %v280 = vsel %vm167, %v156, 0
    %v283 = vsel %vm167, %v157, 0
    %v286 = vsel %vm167, %v158, 0
    %vm288 = vcmask 1043456
    %v290 = vsel %vm288, %v159, 0
    %292 = vmatprep.subr.bf16.mxu0 0
    %293 = vmatpush1.bf16.msra.mxu0 %v290
    %294 = vmatprep.subr.bf16.mxu0 0
    %295 = vmatpush1.bf16.msra.mxu0 0
    %296 = vmatprep.subr.bf16.mxu0 0
    %297 = vmatpush1.bf16.msra.mxu0 0
    %298 = vmatprep.subr.bf16.mxu0 0
    %299 = vmatpush1.bf16.msra.mxu0 0
    %300 = vmatprep.subr.bf16.mxu0 0
    %301 = vmatpush1.bf16.msra.mxu0 0
    %302 = vmatprep.subr.bf16.mxu0 0
    %303 = vmatpush1.bf16.msra.mxu0 0
    %304 = vmatprep.subr.bf16.mxu0 0
    %305 = vmatpush1.bf16.msra.mxu0 0
    %306 = vmatprep.subr.bf16.mxu0 0
    %307 = vmatpush1.bf16.msra.mxu0 0
    %308 = vmatprep.subr.bf16.mxu0 0
    %309 = vmatpush1.bf16.msra.mxu0 0
    %310 = vmatprep.subr.bf16.mxu0 0
    %311 = vmatpush1.bf16.msra.mxu0 0
    %312 = vmatprep.subr.bf16.mxu0 0
    %313 = vmatpush1.bf16.msra.mxu0 0
    %314 = vmatprep.subr.bf16.mxu0 0
    %315 = vmatpush1.bf16.msra.mxu0 0
    %316 = vmatprep.subr.bf16.mxu0 0
    %317 = vmatpush1.bf16.msra.mxu0 0
    %318 = vmatprep.subr.bf16.mxu0 0
    %319 = vmatpush1.bf16.msra.mxu0 0
    %320 = vmatprep.subr.bf16.mxu0 0
    %321 = vmatpush1.bf16.msra.mxu0 0
    %322 = vmatprep.subr.bf16.mxu0 0
    %323 = vmatpush1.bf16.msra.mxu0 0
    %324 = vmatprep.mubr.bf16.mxu0 0
    %325 = vmatmul.mubr.bf16.gmra.mrb[0].mxu0 %v169
    %v326 = vpop.f32.mrb[0].mxu0
    %v327 = vadd.f32 %v165, %v326
    %v328 = vpop.f32.mrb[0].mxu0
    %v329 = vpop.f32.mrb[0].mxu0
    %v330 = vadd.f32 %v165, %v329
    %v331 = vpop.f32.mrb[0].mxu0
    %332 = vmatprep.mubr.bf16.mxu0 0
    %333 = vmatmul.mubr.bf16.gmra.mrb[0].mxu0 %v172
    %v334 = vpop.f32.mrb[0].mxu0
    %v335 = vadd.f32 %v165, %v334
    %v336 = vpop.f32.mrb[0].mxu0
    %v337 = vpop.f32.mrb[0].mxu0
    %v338 = vadd.f32 %v165, %v337
    %v339 = vpop.f32.mrb[0].mxu0
    %340 = vmatprep.mubr.bf16.mxu0 0
    %341 = vmatmul.mubr.bf16.gmra.mrb[0].mxu0 %v175
    %v342 = vpop.f32.mrb[0].mxu0
    %v343 = vadd.f32 %v165, %v342
    %v344 = vpop.f32.mrb[0].mxu0
    %v345 = vpop.f32.mrb[0].mxu0
    %v346 = vadd.f32 %v165, %v345
    %v347 = vpop.f32.mrb[0].mxu0
    %348 = vmatprep.mubr.bf16.mxu0 0
    %349 = vmatmul.mubr.bf16.gmra.mrb[0].mxu0 %v178
    %v350 = vpop.f32.mrb[0].mxu0
    %v351 = vadd.f32 %v165, %v350
    %v352 = vpop.f32.mrb[0].mxu0
    %v353 = vpop.f32.mrb[0].mxu0
    %v354 = vadd.f32 %v165, %v353
    %v355 = vpop.f32.mrb[0].mxu0
    %356 = vmatprep.mubr.bf16.mxu0 0
    %357 = vmatmul.mubr.bf16.gmra.mrb[0].mxu0 %v181
    %v358 = vpop.f32.mrb[0].mxu0
    %v359 = vadd.f32 %v165, %v358
    %v360 = vpop.f32.mrb[0].mxu0
    %v361 = vpop.f32.mrb[0].mxu0
    %v362 = vadd.f32 %v165, %v361
    %v363 = vpop.f32.mrb[0].mxu0
    %364 = vmatprep.mubr.bf16.mxu0 0
    %365 = vmatmul.mubr.bf16.gmra.mrb[0].mxu0 %v184
    %v366 = vpop.f32.mrb[0].mxu0
    %v367 = vadd.f32 %v165, %v366
    %v368 = vpop.f32.mrb[0].mxu0
    %v369 = vpop.f32.mrb[0].mxu0
    %v370 = vadd.f32 %v165, %v369
    %v371 = vpop.f32.mrb[0].mxu0
    %372 = vmatprep.mubr.bf16.mxu0 0
    %373 = vmatmul.mubr.bf16.gmra.mrb[0].mxu0 %v187
    %v374 = vpop.f32.mrb[0].mxu0
    %v375 = vadd.f32 %v165, %v374
    %v376 = vpop.f32.mrb[0].mxu0
    %v377 = vpop.f32.mrb[0].mxu0
    %v378 = vadd.f32 %v165, %v377
    %v379 = vpop.f32.mrb[0].mxu0
    %380 = vmatprep.mubr.bf16.mxu0 0
    %381 = vmatmul.mubr.bf16.gmra.mrb[0].mxu0 %v190
    %v382 = vpop.f32.mrb[0].mxu0
    %v383 = vadd.f32 %v165, %v382
    %v384 = vpop.f32.mrb[0].mxu0
    %v385 = vpop.f32.mrb[0].mxu0
    %v386 = vadd.f32 %v165, %v385
    %v387 = vpop.f32.mrb[0].mxu0
    %388 = vmatprep.mubr.bf16.mxu0 0
    %389 = vmatmul.mubr.bf16.gmra.mrb[0].mxu0 %v193
    %v390 = vpop.f32.mrb[0].mxu0
    %v391 = vadd.f32 %v165, %v390
    %v392 = vpop.f32.mrb[0].mxu0
    %v393 = vpop.f32.mrb[0].mxu0
    %v394 = vadd.f32 %v165, %v393
    %v395 = vpop.f32.mrb[0].mxu0
    %396 = vmatprep.mubr.bf16.mxu0 0
    %397 = vmatmul.mubr.bf16.gmra.mrb[0].mxu0 %v196
    %v398 = vpop.f32.mrb[0].mxu0
    %v399 = vadd.f32 %v165, %v398
    %v400 = vpop.f32.mrb[0].mxu0
    %v401 = vpop.f32.mrb[0].mxu0
    %v402 = vadd.f32 %v165, %v401
    %v403 = vpop.f32.mrb[0].mxu0
    %404 = vmatprep.mubr.bf16.mxu0 0
    %405 = vmatmul.mubr.bf16.gmra.mrb[0].mxu0 %v199
    %v406 = vpop.f32.mrb[0].mxu0
    %v407 = vadd.f32 %v165, %v406
    %v408 = vpop.f32.mrb[0].mxu0
    %v409 = vpop.f32.mrb[0].mxu0
    %v410 = vadd.f32 %v165, %v409
    %v411 = vpop.f32.mrb[0].mxu0
    %412 = vmatprep.mubr.bf16.mxu0 0
    %413 = vmatmul.mubr.bf16.gmra.mrb[0].mxu0 %v202
    %v414 = vpop.f32.mrb[0].mxu0
    %v415 = vadd.f32 %v165, %v414
    %v416 = vpop.f32.mrb[0].mxu0
    %v417 = vpop.f32.mrb[0].mxu0
    %v418 = vadd.f32 %v165, %v417
    %v419 = vpop.f32.mrb[0].mxu0
    %420 = vmatprep.mubr.bf16.mxu0 0
    %421 = vmatmul.mubr.bf16.gmra.mrb[0].mxu0 %v205
    %v422 = vpop.f32.mrb[0].mxu0
    %v423 = vadd.f32 %v165, %v422
    %v424 = vpop.f32.mrb[0].mxu0
    %v425 = vpop.f32.mrb[0].mxu0
    %v426 = vadd.f32 %v165, %v425
    %v427 = vpop.f32.mrb[0].mxu0
    %428 = vmatprep.mubr.bf16.mxu0 0
    %429 = vmatmul.mubr.bf16.gmra.mrb[0].mxu0 %v208
    %v430 = vpop.f32.mrb[0].mxu0
    %v431 = vadd.f32 %v165, %v430
    %v432 = vpop.f32.mrb[0].mxu0
    %v433 = vpop.f32.mrb[0].mxu0
    %v434 = vadd.f32 %v165, %v433
    %v435 = vpop.f32.mrb[0].mxu0
    %436 = vmatprep.mubr.bf16.mxu0 0
    %437 = vmatmul.mubr.bf16.gmra.mrb[0].mxu0 %v211
    %v438 = vpop.f32.mrb[0].mxu0
    %v439 = vadd.f32 %v165, %v438
    %v440 = vpop.f32.mrb[0].mxu0
    %v441 = vpop.f32.mrb[0].mxu0
    %v442 = vadd.f32 %v165, %v441
    %v443 = vpop.f32.mrb[0].mxu0
    %444 = vmatprep.mubr.bf16.mxu0 0
    %445 = vmatmul.mubr.bf16.gmra.mrb[0].mxu0 %v214
    %v446 = vpop.f32.mrb[0].mxu0
    %v447 = vadd.f32 %v165, %v446
    %v448 = vpop.f32.mrb[0].mxu0
    %v449 = vpop.f32.mrb[0].mxu0
    %v450 = vadd.f32 %v165, %v449
    %v451 = vpop.f32.mrb[0].mxu0
    %452 = vmatprep.mubr.bf16.mxu0 0
    %453 = vmatmul.mubr.bf16.gmra.mrb[0].mxu0 %v217
    %v454 = vpop.f32.mrb[0].mxu0
    %v455 = vadd.f32 %v165, %v454
    %v456 = vpop.f32.mrb[0].mxu0
    %v457 = vpop.f32.mrb[0].mxu0
    %v458 = vadd.f32 %v165, %v457
    %v459 = vpop.f32.mrb[0].mxu0
    %460 = vmatprep.mubr.bf16.mxu0 0
    %461 = vmatmul.mubr.bf16.gmra.mrb[0].mxu0 %v220
    %v462 = vpop.f32.mrb[0].mxu0
    %v463 = vadd.f32 %v165, %v462
    %v464 = vpop.f32.mrb[0].mxu0
    %v465 = vpop.f32.mrb[0].mxu0
    %v466 = vadd.f32 %v165, %v465
    %v467 = vpop.f32.mrb[0].mxu0
    %468 = vmatprep.mubr.bf16.mxu0 0
    %469 = vmatmul.mubr.bf16.gmra.mrb[0].mxu0 %v223
    %v470 = vpop.f32.mrb[0].mxu0
    %v471 = vadd.f32 %v165, %v470
    %v472 = vpop.f32.mrb[0].mxu0
    %v473 = vpop.f32.mrb[0].mxu0
    %v474 = vadd.f32 %v165, %v473
    %v475 = vpop.f32.mrb[0].mxu0
    %476 = vmatprep.mubr.bf16.mxu0 0
    %477 = vmatmul.mubr.bf16.gmra.mrb[0].mxu0 %v226
    %v478 = vpop.f32.mrb[0].mxu0
    %v479 = vadd.f32 %v165, %v478
    %v480 = vpop.f32.mrb[0].mxu0
    %v481 = vpop.f32.mrb[0].mxu0
    %v482 = vadd.f32 %v165, %v481
    %v483 = vpop.f32.mrb[0].mxu0
    %484 = vmatprep.mubr.bf16.mxu0 0
    %485 = vmatmul.mubr.bf16.gmra.mrb[0].mxu0 %v229
    %v486 = vpop.f32.mrb[0].mxu0
    %v487 = vadd.f32 %v165, %v486
    %v488 = vpop.f32.mrb[0].mxu0
    %v489 = vpop.f32.mrb[0].mxu0
    %v490 = vadd.f32 %v165, %v489
    %v491 = vpop.f32.mrb[0].mxu0
    %492 = vmatprep.mubr.bf16.mxu0 0
    %493 = vmatmul.mubr.bf16.gmra.mrb[0].mxu0 %v232
    %v494 = vpop.f32.mrb[0].mxu0
    %v495 = vadd.f32 %v165, %v494
    %v496 = vpop.f32.mrb[0].mxu0
    %v497 = vpop.f32.mrb[0].mxu0
    %v498 = vadd.f32 %v165, %v497
    %v499 = vpop.f32.mrb[0].mxu0
    %500 = vmatprep.mubr.bf16.mxu0 0
    %501 = vmatmul.mubr.bf16.gmra.mrb[0].mxu0 %v235
    %v502 = vpop.f32.mrb[0].mxu0
    %v503 = vadd.f32 %v165, %v502
    %v504 = vpop.f32.mrb[0].mxu0
    %v505 = vpop.f32.mrb[0].mxu0
    %v506 = vadd.f32 %v165, %v505
    %v507 = vpop.f32.mrb[0].mxu0
    %508 = vmatprep.mubr.bf16.mxu0 0
    %509 = vmatmul.mubr.bf16.gmra.mrb[0].mxu0 %v238
    %v510 = vpop.f32.mrb[0].mxu0
    %v511 = vadd.f32 %v165, %v510
    %v512 = vpop.f32.mrb[0].mxu0
    %v513 = vpop.f32.mrb[0].mxu0
    %v514 = vadd.f32 %v165, %v513
    %v515 = vpop.f32.mrb[0].mxu0
    %516 = vmatprep.mubr.bf16.mxu0 0
    %517 = vmatmul.mubr.bf16.gmra.mrb[0].mxu0 %v241
    %v518 = vpop.f32.mrb[0].mxu0
    %v519 = vadd.f32 %v165, %v518
    %v520 = vpop.f32.mrb[0].mxu0
    %v521 = vpop.f32.mrb[0].mxu0
    %v522 = vadd.f32 %v165, %v521
    %v523 = vpop.f32.mrb[0].mxu0
    %524 = vmatprep.mubr.bf16.mxu0 0
    %525 = vmatmul.mubr.bf16.gmra.mrb[0].mxu0 %v244
    %v526 = vpop.f32.mrb[0].mxu0
    %v527 = vadd.f32 %v165, %v526
    %v528 = vpop.f32.mrb[0].mxu0
    %v529 = vpop.f32.mrb[0].mxu0
    %v530 = vadd.f32 %v165, %v529
    %v531 = vpop.f32.mrb[0].mxu0
    %532 = vmatprep.mubr.bf16.mxu0 0
    %533 = vmatmul.mubr.bf16.gmra.mrb[0].mxu0 %v247
    %v534 = vpop.f32.mrb[0].mxu0
    %v535 = vadd.f32 %v165, %v534
    %v536 = vpop.f32.mrb[0].mxu0
    %v537 = vpop.f32.mrb[0].mxu0
    %v538 = vadd.f32 %v165, %v537
    %v539 = vpop.f32.mrb[0].mxu0
    %540 = vmatprep.mubr.bf16.mxu0 0
    %541 = vmatmul.mubr.bf16.gmra.mrb[0].mxu0 %v250
    %v542 = vpop.f32.mrb[0].mxu0
    %v543 = vadd.f32 %v165, %v542
    %v544 = vpop.f32.mrb[0].mxu0
    %v545 = vpop.f32.mrb[0].mxu0
    %v546 = vadd.f32 %v165, %v545
    %v547 = vpop.f32.mrb[0].mxu0
    %548 = vmatprep.mubr.bf16.mxu0 0
    %549 = vmatmul.mubr.bf16.gmra.mrb[0].mxu0 %v253
    %v550 = vpop.f32.mrb[0].mxu0
    %v551 = vadd.f32 %v165, %v550
    %v552 = vpop.f32.mrb[0].mxu0
    %v553 = vpop.f32.mrb[0].mxu0
    %v554 = vadd.f32 %v165, %v553
    %v555 = vpop.f32.mrb[0].mxu0
    %556 = vmatprep.mubr.bf16.mxu0 0
    %557 = vmatmul.mubr.bf16.gmra.mrb[0].mxu0 %v256
    %v558 = vpop.f32.mrb[0].mxu0
    %v559 = vadd.f32 %v165, %v558
    %v560 = vpop.f32.mrb[0].mxu0
    %v561 = vpop.f32.mrb[0].mxu0
    %v562 = vadd.f32 %v165, %v561
    %v563 = vpop.f32.mrb[0].mxu0
    %564 = vmatprep.mubr.bf16.mxu0 0
    %565 = vmatmul.mubr.bf16.gmra.mrb[0].mxu0 %v259
    %v566 = vpop.f32.mrb[0].mxu0
    %v567 = vadd.f32 %v165, %v566
    %v568 = vpop.f32.mrb[0].mxu0
    %v569 = vpop.f32.mrb[0].mxu0
    %v570 = vadd.f32 %v165, %v569
    %v571 = vpop.f32.mrb[0].mxu0
    %572 = vmatprep.mubr.bf16.mxu0 0
    %573 = vmatmul.mubr.bf16.gmra.mrb[0].mxu0 %v262
    %v574 = vpop.f32.mrb[0].mxu0
    %v575 = vadd.f32 %v165, %v574
    %v576 = vpop.f32.mrb[0].mxu0
    %v577 = vpop.f32.mrb[0].mxu0
    %v578 = vadd.f32 %v165, %v577
    %v579 = vpop.f32.mrb[0].mxu0
    %580 = vmatprep.mubr.bf16.mxu0 0
    %581 = vmatmul.mubr.bf16.gmra.mrb[0].mxu0 %v265
    %v582 = vpop.f32.mrb[0].mxu0
    %v583 = vadd.f32 %v165, %v582
    %v584 = vpop.f32.mrb[0].mxu0
    %v585 = vpop.f32.mrb[0].mxu0
    %v586 = vadd.f32 %v165, %v585
    %v587 = vpop.f32.mrb[0].mxu0
    %588 = vmatprep.mubr.bf16.mxu0 0
    %589 = vmatmul.mubr.bf16.gmra.mrb[0].mxu0 %v268
    %v590 = vpop.f32.mrb[0].mxu0
    %v591 = vadd.f32 %v165, %v590
    %v592 = vpop.f32.mrb[0].mxu0
    %v593 = vpop.f32.mrb[0].mxu0
    %v594 = vadd.f32 %v165, %v593
    %v595 = vpop.f32.mrb[0].mxu0
    %596 = vmatprep.mubr.bf16.mxu0 0
    %597 = vmatmul.mubr.bf16.gmra.mrb[0].mxu0 %v271
    %v598 = vpop.f32.mrb[0].mxu0
    %v599 = vadd.f32 %v165, %v598
    %v600 = vpop.f32.mrb[0].mxu0
    %v601 = vpop.f32.mrb[0].mxu0
    %v602 = vadd.f32 %v165, %v601
    %v603 = vpop.f32.mrb[0].mxu0
    %604 = vmatprep.mubr.bf16.mxu0 0
    %605 = vmatmul.mubr.bf16.gmra.mrb[0].mxu0 %v274
    %v606 = vpop.f32.mrb[0].mxu0
    %v607 = vadd.f32 %v165, %v606
    %v608 = vpop.f32.mrb[0].mxu0
    %v609 = vpop.f32.mrb[0].mxu0
    %v610 = vadd.f32 %v165, %v609
    %v611 = vpop.f32.mrb[0].mxu0
    %612 = vmatprep.mubr.bf16.mxu0 0
    %613 = vmatmul.mubr.bf16.gmra.mrb[0].mxu0 %v277
    %v614 = vpop.f32.mrb[0].mxu0
    %v615 = vadd.f32 %v165, %v614
    %v616 = vpop.f32.mrb[0].mxu0
    %v617 = vpop.f32.mrb[0].mxu0
    %v618 = vadd.f32 %v165, %v617
    %v619 = vpop.f32.mrb[0].mxu0
    %620 = vmatprep.mubr.bf16.mxu0 0
    %621 = vmatmul.mubr.bf16.gmra.mrb[0].mxu0 %v280
    %v622 = vpop.f32.mrb[0].mxu0
    %v623 = vadd.f32 %v165, %v622
    %v624 = vpop.f32.mrb[0].mxu0
    %v625 = vpop.f32.mrb[0].mxu0
    %v626 = vadd.f32 %v165, %v625
    %v627 = vpop.f32.mrb[0].mxu0
    %628 = vmatprep.mubr.bf16.mxu0 0
    %629 = vmatmul.mubr.bf16.gmra.mrb[0].mxu0 %v283
    %v630 = vpop.f32.mrb[0].mxu0
    %v631 = vadd.f32 %v165, %v630
    %v632 = vpop.f32.mrb[0].mxu0
    %v633 = vpop.f32.mrb[0].mxu0
    %v634 = vadd.f32 %v165, %v633
    %v635 = vpop.f32.mrb[0].mxu0
    %636 = vmatprep.mubr.bf16.mxu0 0
    %637 = vmatmul.mubr.bf16.gmra.mrb[0].mxu0 %v286
    %v638 = vpop.f32.mrb[0].mxu0
    %v639 = vadd.f32 %v165, %v638
    %v640 = vpop.f32.mrb[0].mxu0
    %v641 = vpop.f32.mrb[0].mxu0
    %v642 = vadd.f32 %v165, %v641
    %v643 = vpop.f32.mrb[0].mxu0
    %644 = vdwg.mxu0
    %vm645 = vcmp.gt.f32.partialorder %v327, 0.0
    %vm646 = vcmp.gt.f32.partialorder %v330, 0.0
    %vm647 = vcmp.gt.f32.partialorder %v335, 0.0
    %vm648 = vcmp.gt.f32.partialorder %v338, 0.0
    %vm649 = vcmp.gt.f32.partialorder %v343, 0.0
    %vm650 = vcmp.gt.f32.partialorder %v346, 0.0
    %vm651 = vcmp.gt.f32.partialorder %v351, 0.0
    %vm652 = vcmp.gt.f32.partialorder %v354, 0.0
    %vm653 = vcmp.gt.f32.partialorder %v359, 0.0
    %vm654 = vcmp.gt.f32.partialorder %v362, 0.0
    %vm655 = vcmp.gt.f32.partialorder %v367, 0.0
    %vm656 = vcmp.gt.f32.partialorder %v370, 0.0
    %vm657 = vcmp.gt.f32.partialorder %v375, 0.0
    %vm658 = vcmp.gt.f32.partialorder %v378, 0.0
    %vm659 = vcmp.gt.f32.partialorder %v383, 0.0
    %vm660 = vcmp.gt.f32.partialorder %v386, 0.0
    %vm661 = vcmp.gt.f32.partialorder %v391, 0.0
    %vm662 = vcmp.gt.f32.partialorder %v394, 0.0
    %vm663 = vcmp.gt.f32.partialorder %v399, 0.0
    %vm664 = vcmp.gt.f32.partialorder %v402, 0.0
    %vm665 = vcmp.gt.f32.partialorder %v407, 0.0
    %vm666 = vcmp.gt.f32.partialorder %v410, 0.0
    %vm667 = vcmp.gt.f32.partialorder %v415, 0.0
    %vm668 = vcmp.gt.f32.partialorder %v418, 0.0
    %vm669 = vcmp.gt.f32.partialorder %v423, 0.0
    %vm670 = vcmp.gt.f32.partialorder %v426, 0.0
    %vm671 = vcmp.gt.f32.partialorder %v431, 0.0
    %vm672 = vcmp.gt.f32.partialorder %v434, 0.0
    %vm673 = vcmp.gt.f32.partialorder %v439, 0.0
    %vm674 = vcmp.gt.f32.partialorder %v442, 0.0
    %vm675 = vcmp.gt.f32.partialorder %v447, 0.0
    %vm676 = vcmp.gt.f32.partialorder %v450, 0.0
    %vm677 = vcmp.gt.f32.partialorder %v455, 0.0
    %vm678 = vcmp.gt.f32.partialorder %v458, 0.0
    %vm679 = vcmp.gt.f32.partialorder %v463, 0.0
    %vm680 = vcmp.gt.f32.partialorder %v466, 0.0
    %vm681 = vcmp.gt.f32.partialorder %v471, 0.0
    %vm682 = vcmp.gt.f32.partialorder %v474, 0.0
    %vm683 = vcmp.gt.f32.partialorder %v479, 0.0
    %vm684 = vcmp.gt.f32.partialorder %v482, 0.0
    %vm685 = vcmp.gt.f32.partialorder %v487, 0.0
    %vm686 = vcmp.gt.f32.partialorder %v490, 0.0
    %vm687 = vcmp.gt.f32.partialorder %v495, 0.0
    %vm688 = vcmp.gt.f32.partialorder %v498, 0.0
    %vm689 = vcmp.gt.f32.partialorder %v503, 0.0
    %vm690 = vcmp.gt.f32.partialorder %v506, 0.0
    %vm691 = vcmp.gt.f32.partialorder %v511, 0.0
    %vm692 = vcmp.gt.f32.partialorder %v514, 0.0
    %vm693 = vcmp.gt.f32.partialorder %v519, 0.0
    %vm694 = vcmp.gt.f32.partialorder %v522, 0.0
    %vm695 = vcmp.gt.f32.partialorder %v527, 0.0
    %vm696 = vcmp.gt.f32.partialorder %v530, 0.0
    %vm697 = vcmp.gt.f32.partialorder %v535, 0.0
    %vm698 = vcmp.gt.f32.partialorder %v538, 0.0
    %vm699 = vcmp.gt.f32.partialorder %v543, 0.0
    %vm700 = vcmp.gt.f32.partialorder %v546, 0.0
    %vm701 = vcmp.gt.f32.partialorder %v551, 0.0
    %vm702 = vcmp.gt.f32.partialorder %v554, 0.0
    %vm703 = vcmp.gt.f32.partialorder %v559, 0.0
    %vm704 = vcmp.gt.f32.partialorder %v562, 0.0
    %vm705 = vcmp.gt.f32.partialorder %v567, 0.0
    %vm706 = vcmp.gt.f32.partialorder %v570, 0.0
    %vm707 = vcmp.gt.f32.partialorder %v575, 0.0
    %vm708 = vcmp.gt.f32.partialorder %v578, 0.0
    %vm709 = vcmp.gt.f32.partialorder %v583, 0.0
    %vm710 = vcmp.gt.f32.partialorder %v586, 0.0
    %vm711 = vcmp.gt.f32.partialorder %v591, 0.0
    %vm712 = vcmp.gt.f32.partialorder %v594, 0.0
    %vm713 = vcmp.gt.f32.partialorder %v599, 0.0
    %vm714 = vcmp.gt.f32.partialorder %v602, 0.0
    %vm715 = vcmp.gt.f32.partialorder %v607, 0.0
    %vm716 = vcmp.gt.f32.partialorder %v610, 0.0
    %vm717 = vcmp.gt.f32.partialorder %v615, 0.0
    %vm718 = vcmp.gt.f32.partialorder %v618, 0.0
    %vm719 = vcmp.gt.f32.partialorder %v623, 0.0
    %vm720 = vcmp.gt.f32.partialorder %v626, 0.0
    %vm721 = vcmp.gt.f32.partialorder %v631, 0.0
    %vm722 = vcmp.gt.f32.partialorder %v634, 0.0
    %vm723 = vcmp.gt.f32.partialorder %v639, 0.0
    %vm724 = vcmp.gt.f32.partialorder %v642, 0.0
    %v725 = vmul.f32 %v327, 0.2
    %v726 = vmul.f32 %v330, 0.2
    %v727 = vmul.f32 %v335, 0.2
    %v728 = vmul.f32 %v338, 0.2
    %v729 = vmul.f32 %v343, 0.2
    %v730 = vmul.f32 %v346, 0.2
    %v731 = vmul.f32 %v351, 0.2
    %v732 = vmul.f32 %v354, 0.2
    %v733 = vmul.f32 %v359, 0.2
    %v734 = vmul.f32 %v362, 0.2
    %v735 = vmul.f32 %v367, 0.2
    %v736 = vmul.f32 %v370, 0.2
    %v737 = vmul.f32 %v375, 0.2
    %v738 = vmul.f32 %v378, 0.2
    %v739 = vmul.f32 %v383, 0.2
    %v740 = vmul.f32 %v386, 0.2
    %v741 = vmul.f32 %v391, 0.2
    %v742 = vmul.f32 %v394, 0.2
    %v743 = vmul.f32 %v399, 0.2
    %v744 = vmul.f32 %v402, 0.2
    %v745 = vmul.f32 %v407, 0.2
    %v746 = vmul.f32 %v410, 0.2
    %v747 = vmul.f32 %v415, 0.2
    %v748 = vmul.f32 %v418, 0.2
    %v749 = vmul.f32 %v423, 0.2
    %v750 = vmul.f32 %v426, 0.2
    %v751 = vmul.f32 %v431, 0.2
    %v752 = vmul.f32 %v434, 0.2
    %v753 = vmul.f32 %v439, 0.2
    %v754 = vmul.f32 %v442, 0.2
    %v755 = vmul.f32 %v447, 0.2
    %v756 = vmul.f32 %v450, 0.2
    %v757 = vmul.f32 %v455, 0.2
    %v758 = vmul.f32 %v458, 0.2
    %v759 = vmul.f32 %v463, 0.2
    %v760 = vmul.f32 %v466, 0.2
    %v761 = vmul.f32 %v471, 0.2
    %v762 = vmul.f32 %v474, 0.2
    %v763 = vmul.f32 %v479, 0.2
    %v764 = vmul.f32 %v482, 0.2
    %v765 = vmul.f32 %v487, 0.2
    %v766 = vmul.f32 %v490, 0.2
    %v767 = vmul.f32 %v495, 0.2
    %v768 = vmul.f32 %v498, 0.2
    %v769 = vmul.f32 %v503, 0.2
    %v770 = vmul.f32 %v506, 0.2
    %v771 = vmul.f32 %v511, 0.2
    %v772 = vmul.f32 %v514, 0.2
    %v773 = vmul.f32 %v519, 0.2
    %v774 = vmul.f32 %v522, 0.2
    %v775 = vmul.f32 %v527, 0.2
    %v776 = vmul.f32 %v530, 0.2
    %v777 = vmul.f32 %v535, 0.2
    %v778 = vmul.f32 %v538, 0.2
    %v779 = vmul.f32 %v543, 0.2
    %v780 = vmul.f32 %v546, 0.2
    %v781 = vmul.f32 %v551, 0.2
    %v782 = vmul.f32 %v554, 0.2
    %v783 = vmul.f32 %v559, 0.2
    %v784 = vmul.f32 %v562, 0.2
    %v785 = vmul.f32 %v567, 0.2
    %v786 = vmul.f32 %v570, 0.2
    %v787 = vmul.f32 %v575, 0.2
    %v788 = vmul.f32 %v578, 0.2
    %v789 = vmul.f32 %v583, 0.2
    %v790 = vmul.f32 %v586, 0.2
    %v791 = vmul.f32 %v591, 0.2
    %v792 = vmul.f32 %v594, 0.2
    %v793 = vmul.f32 %v599, 0.2
    %v794 = vmul.f32 %v602, 0.2
    %v795 = vmul.f32 %v607, 0.2
    %v796 = vmul.f32 %v610, 0.2
    %v797 = vmul.f32 %v615, 0.2
    %v798 = vmul.f32 %v618, 0.2
    %v799 = vmul.f32 %v623, 0.2
    %v800 = vmul.f32 %v626, 0.2
    %v801 = vmul.f32 %v631, 0.2
    %v802 = vmul.f32 %v634, 0.2
    %v803 = vmul.f32 %v639, 0.2
    %v804 = vmul.f32 %v642, 0.2
    %v805 = vsel %vm645, %v327, %v725
    %v806 = vsel %vm646, %v330, %v726
    %v807 = vsel %vm647, %v335, %v727
    %v808 = vsel %vm648, %v338, %v728
    %v809 = vsel %vm649, %v343, %v729
    %v810 = vsel %vm650, %v346, %v730
    %v811 = vsel %vm651, %v351, %v731
    %v812 = vsel %vm652, %v354, %v732
    %v813 = vsel %vm653, %v359, %v733
    %v814 = vsel %vm654, %v362, %v734
    %v815 = vsel %vm655, %v367, %v735
    %v816 = vsel %vm656, %v370, %v736
    %v817 = vsel %vm657, %v375, %v737
    %v818 = vsel %vm658, %v378, %v738
    %v819 = vsel %vm659, %v383, %v739
    %v820 = vsel %vm660, %v386, %v740
    %v821 = vsel %vm661, %v391, %v741
    %v822 = vsel %vm662, %v394, %v742
    %v823 = vsel %vm663, %v399, %v743
    %v824 = vsel %vm664, %v402, %v744
    %v825 = vsel %vm665, %v407, %v745
    %v826 = vsel %vm666, %v410, %v746
    %v827 = vsel %vm667, %v415, %v747
    %v828 = vsel %vm668, %v418, %v748
    %v829 = vsel %vm669, %v423, %v749
    %v830 = vsel %vm670, %v426, %v750
    %v831 = vsel %vm671, %v431, %v751
    %v832 = vsel %vm672, %v434, %v752
    %v833 = vsel %vm673, %v439, %v753
    %v834 = vsel %vm674, %v442, %v754
    %v835 = vsel %vm675, %v447, %v755
    %v836 = vsel %vm676, %v450, %v756
    %v837 = vsel %vm677, %v455, %v757
    %v838 = vsel %vm678, %v458, %v758
    %v839 = vsel %vm679, %v463, %v759
    %v840 = vsel %vm680, %v466, %v760
    %v841 = vsel %vm681, %v471, %v761
    %v842 = vsel %vm682, %v474, %v762
    %v843 = vsel %vm683, %v479, %v763
    %v844 = vsel %vm684, %v482, %v764
    %v845 = vsel %vm685, %v487, %v765
    %v846 = vsel %vm686, %v490, %v766
    %v847 = vsel %vm687, %v495, %v767
    %v848 = vsel %vm688, %v498, %v768
    %v849 = vsel %vm689, %v503, %v769
    %v850 = vsel %vm690, %v506, %v770
    %v851 = vsel %vm691, %v511, %v771
    %v852 = vsel %vm692, %v514, %v772
    %v853 = vsel %vm693, %v519, %v773
    %v854 = vsel %vm694, %v522, %v774
    %v855 = vsel %vm695, %v527, %v775
    %v856 = vsel %vm696, %v530, %v776
    %v857 = vsel %vm697, %v535, %v777
    %v858 = vsel %vm698, %v538, %v778
    %v859 = vsel %vm699, %v543, %v779
    %v860 = vsel %vm700, %v546, %v780
    %v861 = vsel %vm701, %v551, %v781
    %v862 = vsel %vm702, %v554, %v782
    %v863 = vsel %vm703, %v559, %v783
    %v864 = vsel %vm704, %v562, %v784
    %v865 = vsel %vm705, %v567, %v785
    %v866 = vsel %vm706, %v570, %v786
    %v867 = vsel %vm707, %v575, %v787
    %v868 = vsel %vm708, %v578, %v788
    %v869 = vsel %vm709, %v583, %v789
    %v870 = vsel %vm710, %v586, %v790
    %v871 = vsel %vm711, %v591, %v791
    %v872 = vsel %vm712, %v594, %v792
    %v873 = vsel %vm713, %v599, %v793
    %v874 = vsel %vm714, %v602, %v794
    %v875 = vsel %vm715, %v607, %v795
    %v876 = vsel %vm716, %v610, %v796
    %v877 = vsel %vm717, %v615, %v797
    %v878 = vsel %vm718, %v618, %v798
    %v879 = vsel %vm719, %v623, %v799
    %v880 = vsel %vm720, %v626, %v800
    %v881 = vsel %vm721, %v631, %v801
    %v882 = vsel %vm722, %v634, %v802
    %v883 = vsel %vm723, %v639, %v803
    %v884 = vsel %vm724, %v642, %v804
    %vm885 = vcmask 130048
    %886 = vst.msk [vmem:[%s3] sm:$0xff] %vm885, %v805
    %887 = vst.msk [vmem:[%s3 + $0x8] sm:$0xff] %vm885, %v806
    %888 = vst.msk [vmem:[%s3 + $0x10] sm:$0xff] %vm885, %v807
    %889 = vst.msk [vmem:[%s3 + $0x18] sm:$0xff] %vm885, %v808
    %890 = vst.msk [vmem:[%s3 + $0x20] sm:$0xff] %vm885, %v809
    %891 = vst.msk [vmem:[%s3 + $0x28] sm:$0xff] %vm885, %v810
    %892 = vst.msk [vmem:[%s3 + $0x30] sm:$0xff] %vm885, %v811
    %893 = vst.msk [vmem:[%s3 + $0x38] sm:$0xff] %vm885, %v812
    %894 = vst.msk [vmem:[%s3 + $0x40] sm:$0xff] %vm885, %v813
    %895 = vst.msk [vmem:[%s3 + $0x48] sm:$0xff] %vm885, %v814
    %896 = vst.msk [vmem:[%s3 + $0x50] sm:$0xff] %vm885, %v815
    %897 = vst.msk [vmem:[%s3 + $0x58] sm:$0xff] %vm885, %v816
    %898 = vst.msk [vmem:[%s3 + $0x60] sm:$0xff] %vm885, %v817
    %899 = vst.msk [vmem:[%s3 + $0x68] sm:$0xff] %vm885, %v818
    %900 = vst.msk [vmem:[%s3 + $0x70] sm:$0xff] %vm885, %v819
    %901 = vst.msk [vmem:[%s3 + $0x78] sm:$0xff] %vm885, %v820
    %902 = vst.msk [vmem:[%s3 + $0x80] sm:$0xff] %vm885, %v821
    %903 = vst.msk [vmem:[%s3 + $0x88] sm:$0xff] %vm885, %v822
    %904 = vst.msk [vmem:[%s3 + $0x90] sm:$0xff] %vm885, %v823
    %905 = vst.msk [vmem:[%s3 + $0x98] sm:$0xff] %vm885, %v824
    %906 = vst.msk [vmem:[%s3 + $0xa0] sm:$0xff] %vm885, %v825
    %907 = vst.msk [vmem:[%s3 + $0xa8] sm:$0xff] %vm885, %v826
    %908 = vst.msk [vmem:[%s3 + $0xb0] sm:$0xff] %vm885, %v827
    %909 = vst.msk [vmem:[%s3 + $0xb8] sm:$0xff] %vm885, %v828
    %910 = vst.msk [vmem:[%s3 + $0xc0] sm:$0xff] %vm885, %v829
    %911 = vst.msk [vmem:[%s3 + $0xc8] sm:$0xff] %vm885, %v830
    %912 = vst.msk [vmem:[%s3 + $0xd0] sm:$0xff] %vm885, %v831
    %913 = vst.msk [vmem:[%s3 + $0xd8] sm:$0xff] %vm885, %v832
    %914 = vst.msk [vmem:[%s3 + $0xe0] sm:$0xff] %vm885, %v833
    %915 = vst.msk [vmem:[%s3 + $0xe8] sm:$0xff] %vm885, %v834
    %916 = vst.msk [vmem:[%s3 + $0xf0] sm:$0xff] %vm885, %v835
    %917 = vst.msk [vmem:[%s3 + $0xf8] sm:$0xff] %vm885, %v836
    %918 = vst.msk [vmem:[%s3 + $0x100] sm:$0xff] %vm885, %v837
    %919 = vst.msk [vmem:[%s3 + $0x108] sm:$0xff] %vm885, %v838
    %920 = vst.msk [vmem:[%s3 + $0x110] sm:$0xff] %vm885, %v839
    %921 = vst.msk [vmem:[%s3 + $0x118] sm:$0xff] %vm885, %v840
    %922 = vst.msk [vmem:[%s3 + $0x120] sm:$0xff] %vm885, %v841
    %923 = vst.msk [vmem:[%s3 + $0x128] sm:$0xff] %vm885, %v842
    %924 = vst.msk [vmem:[%s3 + $0x130] sm:$0xff] %vm885, %v843
    %925 = vst.msk [vmem:[%s3 + $0x138] sm:$0xff] %vm885, %v844
    %926 = vst.msk [vmem:[%s3 + $0x140] sm:$0xff] %vm885, %v845
    %927 = vst.msk [vmem:[%s3 + $0x148] sm:$0xff] %vm885, %v846
    %928 = vst.msk [vmem:[%s3 + $0x150] sm:$0xff] %vm885, %v847
    %929 = vst.msk [vmem:[%s3 + $0x158] sm:$0xff] %vm885, %v848
    %930 = vst.msk [vmem:[%s3 + $0x160] sm:$0xff] %vm885, %v849
    %931 = vst.msk [vmem:[%s3 + $0x168] sm:$0xff] %vm885, %v850
    %932 = vst.msk [vmem:[%s3 + $0x170] sm:$0xff] %vm885, %v851
    %933 = vst.msk [vmem:[%s3 + $0x178] sm:$0xff] %vm885, %v852
    %934 = vst.msk [vmem:[%s3 + $0x180] sm:$0xff] %vm885, %v853
    %935 = vst.msk [vmem:[%s3 + $0x188] sm:$0xff] %vm885, %v854
    %936 = vst.msk [vmem:[%s3 + $0x190] sm:$0xff] %vm885, %v855
    %937 = vst.msk [vmem:[%s3 + $0x198] sm:$0xff] %vm885, %v856
    %938 = vst.msk [vmem:[%s3 + $0x1a0] sm:$0xff] %vm885, %v857
    %939 = vst.msk [vmem:[%s3 + $0x1a8] sm:$0xff] %vm885, %v858
    %940 = vst.msk [vmem:[%s3 + $0x1b0] sm:$0xff] %vm885, %v859
    %941 = vst.msk [vmem:[%s3 + $0x1b8] sm:$0xff] %vm885, %v860
    %942 = vst.msk [vmem:[%s3 + $0x1c0] sm:$0xff] %vm885, %v861
    %943 = vst.msk [vmem:[%s3 + $0x1c8] sm:$0xff] %vm885, %v862
    %944 = vst.msk [vmem:[%s3 + $0x1d0] sm:$0xff] %vm885, %v863
    %945 = vst.msk [vmem:[%s3 + $0x1d8] sm:$0xff] %vm885, %v864
    %946 = vst.msk [vmem:[%s3 + $0x1e0] sm:$0xff] %vm885, %v865
    %947 = vst.msk [vmem:[%s3 + $0x1e8] sm:$0xff] %vm885, %v866
    %948 = vst.msk [vmem:[%s3 + $0x1f0] sm:$0xff] %vm885, %v867
    %949 = vst.msk [vmem:[%s3 + $0x1f8] sm:$0xff] %vm885, %v868
    %950 = vst.msk [vmem:[%s3 + $0x200] sm:$0xff] %vm885, %v869
    %951 = vst.msk [vmem:[%s3 + $0x208] sm:$0xff] %vm885, %v870
    %952 = vst.msk [vmem:[%s3 + $0x210] sm:$0xff] %vm885, %v871
    %953 = vst.msk [vmem:[%s3 + $0x218] sm:$0xff] %vm885, %v872
    %954 = vst.msk [vmem:[%s3 + $0x220] sm:$0xff] %vm885, %v873
    %955 = vst.msk [vmem:[%s3 + $0x228] sm:$0xff] %vm885, %v874
    %956 = vst.msk [vmem:[%s3 + $0x230] sm:$0xff] %vm885, %v875
    %957 = vst.msk [vmem:[%s3 + $0x238] sm:$0xff] %vm885, %v876
    %958 = vst.msk [vmem:[%s3 + $0x240] sm:$0xff] %vm885, %v877
    %959 = vst.msk [vmem:[%s3 + $0x248] sm:$0xff] %vm885, %v878
    %960 = vst.msk [vmem:[%s3 + $0x250] sm:$0xff] %vm885, %v879
    %961 = vst.msk [vmem:[%s3 + $0x258] sm:$0xff] %vm885, %v880
    %962 = vst.msk [vmem:[%s3 + $0x260] sm:$0xff] %vm885, %v881
    %963 = vst.msk [vmem:[%s3 + $0x268] sm:$0xff] %vm885, %v882
    %964 = vst.msk [vmem:[%s3 + $0x270] sm:$0xff] %vm885, %v883
    %965 = vst.msk [vmem:[%s3 + $0x278] sm:$0xff] %vm885, %v884
    // Predicated region
    $region22: #{discriminator_forward.4} parent=1 // pred_check
      _
    $region23: #{discriminator_forward.4} parent=1 // pred_check_branch
      %967 = sbr.rel (0) target = $region25
    $region24: #{discriminator_forward.4} parent=1 // pred_region
      _
    $region25: #{discriminator_forward.4} parent=1 // pred_fallthru
      _
    // Predicated region
    $region26: #{discriminator_forward.4} parent=1 // pred_check
      _
    $region27: #{discriminator_forward.4} parent=1 // pred_check_branch
      %969 = sbr.rel (0) target = $region29
    $region28: #{discriminator_forward.4} parent=1 // pred_region
      _
    $region29: #{discriminator_forward.4} parent=1 // pred_fallthru
      _
    %970 = vsyncpa [#allocation3], 1
    %971 = vsyncpa [#allocation5], 1

// kernel: discriminator_forward.5
$region0: #{discriminator_forward.5}
  #allocation0 [shape = 'u32[]', space=smem, size = 0x4, offset = 0x4, fixed_abs, tag = 'smem constant byte address 0x4 - core index']
  #allocation1 [shape = 'u32[144,128]{1,0:T(1,128)}', space=vmem, size = 0x12000, scoped, tag = 'internal scratch']
  %s0 = inlined_call_operand.vmem [shape: f32[192,128], index: 0, kind: input, shape index: {}]
  %s1 = inlined_call_operand.vmem [shape: bf16[128,32], index: 1, kind: input, shape index: {}]
  %s2 = inlined_call_operand.vmem [shape: f32[1,32], index: 2, kind: input, shape index: {}]
  %s3 = inlined_call_operand.vmem [shape: f32[192,32], index: 3, kind: output, shape index: {}]
  %s4 = sld [smem:[#allocation0]]
  $region22: #{discriminator_forward.5} parent=0
    _
  %s6 = ssub.s32 1, %s4
  %s7 = scalar_select 0, %s6, %s4
  // Predicated region
  $region2: #{discriminator_forward.5} parent=0 // pred_check
    _
  $region3: #{discriminator_forward.5} parent=0 // pred_check_branch
    %9 = sbr.rel (0) target = $region5
  $region4: #{discriminator_forward.5} parent=0 // pred_region
    _
  $region5: #{discriminator_forward.5} parent=0 // pred_fallthru
    _
  // Predicated region
  $region6: #{discriminator_forward.5} parent=0 // pred_check
    _
  $region7: #{discriminator_forward.5} parent=0 // pred_check_branch
    %11 = sbr.rel (0) target = $region9
  $region8: #{discriminator_forward.5} parent=0 // pred_region
    _
  $region9: #{discriminator_forward.5} parent=0 // pred_fallthru
    _
  // Predicated region
  $region10: #{discriminator_forward.5} parent=0 // pred_check
    _
  $region11: #{discriminator_forward.5} parent=0 // pred_check_branch
    %13 = sbr.rel (0) target = $region13
  $region12: #{discriminator_forward.5} parent=0 // pred_region
    _
  $region13: #{discriminator_forward.5} parent=0 // pred_fallthru
    _
  %v15 = vld [vmem:[%s0] sm:$0xff]
  %v16 = vld [vmem:[%s0 + $0x8] sm:$0xff]
  %v17 = vld [vmem:[%s0 + $0x10] sm:$0xff]
  %v18 = vld [vmem:[%s0 + $0x18] sm:$0xff]
  %v19 = vld [vmem:[%s0 + $0x20] sm:$0xff]
  %v20 = vld [vmem:[%s0 + $0x28] sm:$0xff]
  %v21 = vld [vmem:[%s0 + $0x30] sm:$0xff]
  %v22 = vld [vmem:[%s0 + $0x38] sm:$0xff]
  %v23 = vld [vmem:[%s0 + $0x40] sm:$0xff]
  %v24 = vld [vmem:[%s0 + $0x48] sm:$0xff]
  %v25 = vld [vmem:[%s0 + $0x50] sm:$0xff]
  %v26 = vld [vmem:[%s0 + $0x58] sm:$0xff]
  %v27 = vld [vmem:[%s0 + $0x60] sm:$0xff]
  %v28 = vld [vmem:[%s0 + $0x68] sm:$0xff]
  %v29 = vld [vmem:[%s0 + $0x70] sm:$0xff]
  %v30 = vld [vmem:[%s0 + $0x78] sm:$0xff]
  %v31 = vld [vmem:[%s0 + $0x80] sm:$0xff]
  %v32 = vld [vmem:[%s0 + $0x88] sm:$0xff]
  %v33 = vld [vmem:[%s0 + $0x90] sm:$0xff]
  %v34 = vld [vmem:[%s0 + $0x98] sm:$0xff]
  %v35 = vld [vmem:[%s0 + $0xa0] sm:$0xff]
  %v36 = vld [vmem:[%s0 + $0xa8] sm:$0xff]
  %v37 = vld [vmem:[%s0 + $0xb0] sm:$0xff]
  %v38 = vld [vmem:[%s0 + $0xb8] sm:$0xff]
  %v39 = vpack.c.bf16 %v16, %v15
  %v40 = vpack.c.bf16 %v18, %v17
  %v41 = vpack.c.bf16 %v20, %v19
  %v42 = vpack.c.bf16 %v22, %v21
  %v43 = vpack.c.bf16 %v24, %v23
  %v44 = vpack.c.bf16 %v26, %v25
  %v45 = vpack.c.bf16 %v28, %v27
  %v46 = vpack.c.bf16 %v30, %v29
  %v47 = vpack.c.bf16 %v32, %v31
  %v48 = vpack.c.bf16 %v34, %v33
  %v49 = vpack.c.bf16 %v36, %v35
  %v50 = vpack.c.bf16 %v38, %v37
  %v51 = vld [vmem:[%s1] sm:$0xf]
  %v52 = vld [vmem:[%s1 + $0x4] sm:$0xf]
  %v53 = vld [vmem:[%s1 + $0x8] sm:$0xf]
  %v54 = vld [vmem:[%s1 + $0xc] sm:$0xf]
  %v55 = vld [vmem:[%s1 + $0x10] sm:$0xf]
  %v56 = vld [vmem:[%s1 + $0x14] sm:$0xf]
  %v57 = vld [vmem:[%s1 + $0x18] sm:$0xf]
  %v58 = vld [vmem:[%s1 + $0x1c] sm:$0xf]
  %v59 = vld [vmem:[%s1 + $0x20] sm:$0xf]
  %v60 = vld [vmem:[%s1 + $0x24] sm:$0xf]
  %v61 = vld [vmem:[%s1 + $0x28] sm:$0xf]
  %v62 = vld [vmem:[%s1 + $0x2c] sm:$0xf]
  %v63 = vld [vmem:[%s1 + $0x30] sm:$0xf]
  %v64 = vld [vmem:[%s1 + $0x34] sm:$0xf]
  %v65 = vld [vmem:[%s1 + $0x38] sm:$0xf]
  %v66 = vld [vmem:[%s1 + $0x3c] sm:$0xf]
  %v67 = vld [vmem:[%s2] sm:$0x1]
  %v69 = vlaneseq
  %v70 = vshrl.u32 %v69, 7
  %v71 = vsub.s32 0, %v70
  %v72 = vrot.slane %v67, %v71
  %v90 = vunpack.c.l.b16 %v51
  %v91 = vunpack.c.l.b16 %v52
  %v92 = vunpack.c.l.b16 %v53
  %v93 = vunpack.c.l.b16 %v54
  %v94 = vunpack.c.l.b16 %v55
  %v95 = vunpack.c.l.b16 %v56
  %v96 = vunpack.c.l.b16 %v57
  %v97 = vunpack.c.l.b16 %v58
  %v98 = vunpack.c.l.b16 %v59
  %v99 = vunpack.c.l.b16 %v60
  %v100 = vunpack.c.l.b16 %v61
  %v101 = vunpack.c.l.b16 %v62
  %v102 = vunpack.c.l.b16 %v63
  %v103 = vunpack.c.l.b16 %v64
  %v104 = vunpack.c.l.b16 %v65
  %v105 = vunpack.c.l.b16 %v66
  %v106 = vpack.c.b16 %v91, %v90
  %v107 = vpack.c.b16 %v93, %v92
  %v108 = vpack.c.b16 %v95, %v94
  %v109 = vpack.c.b16 %v97, %v96
  %v110 = vpack.c.b16 %v99, %v98
  %v111 = vpack.c.b16 %v101, %v100
  %v112 = vpack.c.b16 %v103, %v102
  %v113 = vpack.c.b16 %v105, %v104
  %122 = vmatprep.subr.bf16.mxu0 0
  %123 = vmatpush1.bf16.msra.mxu0 %v106
  %124 = vmatprep.subr.bf16.mxu0 0
  %125 = vmatpush1.bf16.msra.mxu0 %v107
  %126 = vmatprep.subr.bf16.mxu0 0
  %127 = vmatpush1.bf16.msra.mxu0 %v108
  %128 = vmatprep.subr.bf16.mxu0 0
  %129 = vmatpush1.bf16.msra.mxu0 %v109
  %130 = vmatprep.subr.bf16.mxu0 0
  %131 = vmatpush1.bf16.msra.mxu0 %v110
  %132 = vmatprep.subr.bf16.mxu0 0
  %133 = vmatpush1.bf16.msra.mxu0 %v111
  %134 = vmatprep.subr.bf16.mxu0 0
  %135 = vmatpush1.bf16.msra.mxu0 %v112
  %136 = vmatprep.subr.bf16.mxu0 0
  %137 = vmatpush1.bf16.msra.mxu0 %v113
  %138 = vmatprep.subr.bf16.mxu0 0
  %139 = vmatpush1.bf16.msra.mxu0 0
  %140 = vmatprep.subr.bf16.mxu0 0
  %141 = vmatpush1.bf16.msra.mxu0 0
  %142 = vmatprep.subr.bf16.mxu0 0
  %143 = vmatpush1.bf16.msra.mxu0 0
  %144 = vmatprep.subr.bf16.mxu0 0
  %145 = vmatpush1.bf16.msra.mxu0 0
  %146 = vmatprep.subr.bf16.mxu0 0
  %147 = vmatpush1.bf16.msra.mxu0 0
  %148 = vmatprep.subr.bf16.mxu0 0
  %149 = vmatpush1.bf16.msra.mxu0 0
  %150 = vmatprep.subr.bf16.mxu0 0
  %151 = vmatpush1.bf16.msra.mxu0 0
  %152 = vmatprep.subr.bf16.mxu0 0
  %153 = vmatpush1.bf16.msra.mxu0 0
  %154 = vmatprep.mubr.bf16.mxu0 0
  %155 = vmatmul.mubr.bf16.gmra.mrb[0].mxu0 %v39
  %v156 = vpop.f32.mrb[0].mxu0
  %v157 = vadd.f32 %v72, %v156
  %v158 = vpop.f32.mrb[0].mxu0
  %v159 = vpop.f32.mrb[0].mxu0
  %v160 = vadd.f32 %v72, %v159
  %v161 = vpop.f32.mrb[0].mxu0
  %162 = vmatprep.mubr.bf16.mxu0 0
  %163 = vmatmul.mubr.bf16.gmra.mrb[0].mxu0 %v40
  %v164 = vpop.f32.mrb[0].mxu0
  %v165 = vadd.f32 %v72, %v164
  %v166 = vpop.f32.mrb[0].mxu0
  %v167 = vpop.f32.mrb[0].mxu0
  %v168 = vadd.f32 %v72, %v167
  %v169 = vpop.f32.mrb[0].mxu0
  %170 = vmatprep.mubr.bf16.mxu0 0
  %171 = vmatmul.mubr.bf16.gmra.mrb[0].mxu0 %v41
  %v172 = vpop.f32.mrb[0].mxu0
  %v173 = vadd.f32 %v72, %v172
  %v174 = vpop.f32.mrb[0].mxu0
  %v175 = vpop.f32.mrb[0].mxu0
  %v176 = vadd.f32 %v72, %v175
  %v177 = vpop.f32.mrb[0].mxu0
  %178 = vmatprep.mubr.bf16.mxu0 0
  %179 = vmatmul.mubr.bf16.gmra.mrb[0].mxu0 %v42
  %v180 = vpop.f32.mrb[0].mxu0
  %v181 = vadd.f32 %v72, %v180
  %v182 = vpop.f32.mrb[0].mxu0
  %v183 = vpop.f32.mrb[0].mxu0
  %v184 = vadd.f32 %v72, %v183
  %v185 = vpop.f32.mrb[0].mxu0
  %186 = vmatprep.mubr.bf16.mxu0 0
  %187 = vmatmul.mubr.bf16.gmra.mrb[0].mxu0 %v43
  %v188 = vpop.f32.mrb[0].mxu0
  %v189 = vadd.f32 %v72, %v188
  %v190 = vpop.f32.mrb[0].mxu0
  %v191 = vpop.f32.mrb[0].mxu0
  %v192 = vadd.f32 %v72, %v191
  %v193 = vpop.f32.mrb[0].mxu0
  %194 = vmatprep.mubr.bf16.mxu0 0
  %195 = vmatmul.mubr.bf16.gmra.mrb[0].mxu0 %v44
  %v196 = vpop.f32.mrb[0].mxu0
  %v197 = vadd.f32 %v72, %v196
  %v198 = vpop.f32.mrb[0].mxu0
  %v199 = vpop.f32.mrb[0].mxu0
  %v200 = vadd.f32 %v72, %v199
  %v201 = vpop.f32.mrb[0].mxu0
  %202 = vmatprep.mubr.bf16.mxu0 0
  %203 = vmatmul.mubr.bf16.gmra.mrb[0].mxu0 %v45
  %v204 = vpop.f32.mrb[0].mxu0
  %v205 = vadd.f32 %v72, %v204
  %v206 = vpop.f32.mrb[0].mxu0
  %v207 = vpop.f32.mrb[0].mxu0
  %v208 = vadd.f32 %v72, %v207
  %v209 = vpop.f32.mrb[0].mxu0
  %210 = vmatprep.mubr.bf16.mxu0 0
  %211 = vmatmul.mubr.bf16.gmra.mrb[0].mxu0 %v46
  %v212 = vpop.f32.mrb[0].mxu0
  %v213 = vadd.f32 %v72, %v212
  %v214 = vpop.f32.mrb[0].mxu0
  %v215 = vpop.f32.mrb[0].mxu0
  %v216 = vadd.f32 %v72, %v215
  %v217 = vpop.f32.mrb[0].mxu0
  %218 = vmatprep.mubr.bf16.mxu0 0
  %219 = vmatmul.mubr.bf16.gmra.mrb[0].mxu0 %v47
  %v220 = vpop.f32.mrb[0].mxu0
  %v221 = vadd.f32 %v72, %v220
  %v222 = vpop.f32.mrb[0].mxu0
  %v223 = vpop.f32.mrb[0].mxu0
  %v224 = vadd.f32 %v72, %v223
  %v225 = vpop.f32.mrb[0].mxu0
  %226 = vmatprep.mubr.bf16.mxu0 0
  %227 = vmatmul.mubr.bf16.gmra.mrb[0].mxu0 %v48
  %v228 = vpop.f32.mrb[0].mxu0
  %v229 = vadd.f32 %v72, %v228
  %v230 = vpop.f32.mrb[0].mxu0
  %v231 = vpop.f32.mrb[0].mxu0
  %v232 = vadd.f32 %v72, %v231
  %v233 = vpop.f32.mrb[0].mxu0
  %234 = vmatprep.mubr.bf16.mxu0 0
  %235 = vmatmul.mubr.bf16.gmra.mrb[0].mxu0 %v49
  %v236 = vpop.f32.mrb[0].mxu0
  %v237 = vadd.f32 %v72, %v236
  %v238 = vpop.f32.mrb[0].mxu0
  %v239 = vpop.f32.mrb[0].mxu0
  %v240 = vadd.f32 %v72, %v239
  %v241 = vpop.f32.mrb[0].mxu0
  %242 = vmatprep.mubr.bf16.mxu0 0
  %243 = vmatmul.mubr.bf16.gmra.mrb[0].mxu0 %v50
  %v244 = vpop.f32.mrb[0].mxu0
  %v245 = vadd.f32 %v72, %v244
  %v246 = vpop.f32.mrb[0].mxu0
  %v247 = vpop.f32.mrb[0].mxu0
  %v248 = vadd.f32 %v72, %v247
  %v249 = vpop.f32.mrb[0].mxu0
  %250 = vdwg.mxu0
  %vm251 = vcmp.gt.f32.partialorder %v157, 0.0
  %vm252 = vcmp.gt.f32.partialorder %v160, 0.0
  %vm253 = vcmp.gt.f32.partialorder %v165, 0.0
  %vm254 = vcmp.gt.f32.partialorder %v168, 0.0
  %vm255 = vcmp.gt.f32.partialorder %v173, 0.0
  %vm256 = vcmp.gt.f32.partialorder %v176, 0.0
  %vm257 = vcmp.gt.f32.partialorder %v181, 0.0
  %vm258 = vcmp.gt.f32.partialorder %v184, 0.0
  %vm259 = vcmp.gt.f32.partialorder %v189, 0.0
  %vm260 = vcmp.gt.f32.partialorder %v192, 0.0
  %vm261 = vcmp.gt.f32.partialorder %v197, 0.0
  %vm262 = vcmp.gt.f32.partialorder %v200, 0.0
  %vm263 = vcmp.gt.f32.partialorder %v205, 0.0
  %vm264 = vcmp.gt.f32.partialorder %v208, 0.0
  %vm265 = vcmp.gt.f32.partialorder %v213, 0.0
  %vm266 = vcmp.gt.f32.partialorder %v216, 0.0
  %vm267 = vcmp.gt.f32.partialorder %v221, 0.0
  %vm268 = vcmp.gt.f32.partialorder %v224, 0.0
  %vm269 = vcmp.gt.f32.partialorder %v229, 0.0
  %vm270 = vcmp.gt.f32.partialorder %v232, 0.0
  %vm271 = vcmp.gt.f32.partialorder %v237, 0.0
  %vm272 = vcmp.gt.f32.partialorder %v240, 0.0
  %vm273 = vcmp.gt.f32.partialorder %v245, 0.0
  %vm274 = vcmp.gt.f32.partialorder %v248, 0.0
  %v275 = vmul.f32 %v157, 0.2
  %v276 = vmul.f32 %v160, 0.2
  %v277 = vmul.f32 %v165, 0.2
  %v278 = vmul.f32 %v168, 0.2
  %v279 = vmul.f32 %v173, 0.2
  %v280 = vmul.f32 %v176, 0.2
  %v281 = vmul.f32 %v181, 0.2
  %v282 = vmul.f32 %v184, 0.2
  %v283 = vmul.f32 %v189, 0.2
  %v284 = vmul.f32 %v192, 0.2
  %v285 = vmul.f32 %v197, 0.2
  %v286 = vmul.f32 %v200, 0.2
  %v287 = vmul.f32 %v205, 0.2
  %v288 = vmul.f32 %v208, 0.2
  %v289 = vmul.f32 %v213, 0.2
  %v290 = vmul.f32 %v216, 0.2
  %v291 = vmul.f32 %v221, 0.2
  %v292 = vmul.f32 %v224, 0.2
  %v293 = vmul.f32 %v229, 0.2
  %v294 = vmul.f32 %v232, 0.2
  %v295 = vmul.f32 %v237, 0.2
  %v296 = vmul.f32 %v240, 0.2
  %v297 = vmul.f32 %v245, 0.2
  %v298 = vmul.f32 %v248, 0.2
  %v299 = vsel %vm251, %v157, %v275
  %v300 = vsel %vm252, %v160, %v276
  %v301 = vsel %vm253, %v165, %v277
  %v302 = vsel %vm254, %v168, %v278
  %v303 = vsel %vm255, %v173, %v279
  %v304 = vsel %vm256, %v176, %v280
  %v305 = vsel %vm257, %v181, %v281
  %v306 = vsel %vm258, %v184, %v282
  %v307 = vsel %vm259, %v189, %v283
  %v308 = vsel %vm260, %v192, %v284
  %v309 = vsel %vm261, %v197, %v285
  %v310 = vsel %vm262, %v200, %v286
  %v311 = vsel %vm263, %v205, %v287
  %v312 = vsel %vm264, %v208, %v288
  %v313 = vsel %vm265, %v213, %v289
  %v314 = vsel %vm266, %v216, %v290
  %v315 = vsel %vm267, %v221, %v291
  %v316 = vsel %vm268, %v224, %v292
  %v317 = vsel %vm269, %v229, %v293
  %v318 = vsel %vm270, %v232, %v294
  %v319 = vsel %vm271, %v237, %v295
  %v320 = vsel %vm272, %v240, %v296
  %v321 = vsel %vm273, %v245, %v297
  %v322 = vsel %vm274, %v248, %v298
  %vm323 = vcmask 261120
  %324 = vst.msk [vmem:[%s3] sm:$0xff] %vm323, %v299
  %325 = vst.msk [vmem:[%s3 + $0x8] sm:$0xff] %vm323, %v300
  %326 = vst.msk [vmem:[%s3 + $0x10] sm:$0xff] %vm323, %v301
  %327 = vst.msk [vmem:[%s3 + $0x18] sm:$0xff] %vm323, %v302
  %328 = vst.msk [vmem:[%s3 + $0x20] sm:$0xff] %vm323, %v303
  %329 = vst.msk [vmem:[%s3 + $0x28] sm:$0xff] %vm323, %v304
  %330 = vst.msk [vmem:[%s3 + $0x30] sm:$0xff] %vm323, %v305
  %331 = vst.msk [vmem:[%s3 + $0x38] sm:$0xff] %vm323, %v306
  %332 = vst.msk [vmem:[%s3 + $0x40] sm:$0xff] %vm323, %v307
  %333 = vst.msk [vmem:[%s3 + $0x48] sm:$0xff] %vm323, %v308
  %334 = vst.msk [vmem:[%s3 + $0x50] sm:$0xff] %vm323, %v309
  %335 = vst.msk [vmem:[%s3 + $0x58] sm:$0xff] %vm323, %v310
  %336 = vst.msk [vmem:[%s3 + $0x60] sm:$0xff] %vm323, %v311
  %337 = vst.msk [vmem:[%s3 + $0x68] sm:$0xff] %vm323, %v312
  %338 = vst.msk [vmem:[%s3 + $0x70] sm:$0xff] %vm323, %v313
  %339 = vst.msk [vmem:[%s3 + $0x78] sm:$0xff] %vm323, %v314
  %340 = vst.msk [vmem:[%s3 + $0x80] sm:$0xff] %vm323, %v315
  %341 = vst.msk [vmem:[%s3 + $0x88] sm:$0xff] %vm323, %v316
  %342 = vst.msk [vmem:[%s3 + $0x90] sm:$0xff] %vm323, %v317
  %343 = vst.msk [vmem:[%s3 + $0x98] sm:$0xff] %vm323, %v318
  %344 = vst.msk [vmem:[%s3 + $0xa0] sm:$0xff] %vm323, %v319
  %345 = vst.msk [vmem:[%s3 + $0xa8] sm:$0xff] %vm323, %v320
  %346 = vst.msk [vmem:[%s3 + $0xb0] sm:$0xff] %vm323, %v321
  %347 = vst.msk [vmem:[%s3 + $0xb8] sm:$0xff] %vm323, %v322
  // Predicated region
  $region14: #{discriminator_forward.5} parent=0 // pred_check
    _
  $region15: #{discriminator_forward.5} parent=0 // pred_check_branch
    %349 = sbr.rel (0) target = $region17
  $region16: #{discriminator_forward.5} parent=0 // pred_region
    _
  $region17: #{discriminator_forward.5} parent=0 // pred_fallthru
    _
  // Predicated region
  $region18: #{discriminator_forward.5} parent=0 // pred_check
    _
  $region19: #{discriminator_forward.5} parent=0 // pred_check_branch
    %351 = sbr.rel (0) target = $region21
  $region20: #{discriminator_forward.5} parent=0 // pred_region
    _
  $region21: #{discriminator_forward.5} parent=0 // pred_fallthru
    _

// kernel: discriminator_forward.6
$region0: #{discriminator_forward.6}
  #allocation0 [shape = 'u32[]', space=smem, size = 0x4, offset = 0x4, fixed_abs, tag = 'smem constant byte address 0x4 - core index']
  #allocation1 [shape = 'u32[144,128]{1,0:T(1,128)}', space=vmem, size = 0x12000, scoped, tag = 'internal scratch']
  %s0 = inlined_call_operand.vmem [shape: f32[64,256], index: 0, kind: input, shape index: {}]
  %s1 = inlined_call_operand.vmem [shape: bf16[256,64], index: 1, kind: input, shape index: {}]
  %s2 = inlined_call_operand.vmem [shape: f32[1,64], index: 2, kind: input, shape index: {}]
  %s3 = inlined_call_operand.vmem [shape: f32[1,64], index: 3, kind: input, shape index: {}]
  %s4 = inlined_call_operand.vmem [shape: f32[1,64], index: 4, kind: input, shape index: {}]
  %s5 = inlined_call_operand.vmem [shape: f32[64,64], index: 5, kind: output, shape index: {}]
  %s6 = sld [smem:[#allocation0]]
  $region30: #{discriminator_forward.6} parent=0
    _
  %s8 = ssub.s32 1, %s6
  %s9 = scalar_select 0, %s8, %s6
  // Predicated region
  $region2: #{discriminator_forward.6} parent=0 // pred_check
    _
  $region3: #{discriminator_forward.6} parent=0 // pred_check_branch
    %11 = sbr.rel (0) target = $region5
  $region4: #{discriminator_forward.6} parent=0 // pred_region
    _
  $region5: #{discriminator_forward.6} parent=0 // pred_fallthru
    _
  // Predicated region
  $region6: #{discriminator_forward.6} parent=0 // pred_check
    _
  $region7: #{discriminator_forward.6} parent=0 // pred_check_branch
    %13 = sbr.rel (0) target = $region9
  $region8: #{discriminator_forward.6} parent=0 // pred_region
    _
  $region9: #{discriminator_forward.6} parent=0 // pred_fallthru
    _
  // Predicated region
  $region10: #{discriminator_forward.6} parent=0 // pred_check
    _
  $region11: #{discriminator_forward.6} parent=0 // pred_check_branch
    %15 = sbr.rel (0) target = $region13
  $region12: #{discriminator_forward.6} parent=0 // pred_region
    _
  $region13: #{discriminator_forward.6} parent=0 // pred_fallthru
    _
  // Predicated region
  $region14: #{discriminator_forward.6} parent=0 // pred_check
    _
  $region15: #{discriminator_forward.6} parent=0 // pred_check_branch
    %17 = sbr.rel (0) target = $region17
  $region16: #{discriminator_forward.6} parent=0 // pred_region
    _
  $region17: #{discriminator_forward.6} parent=0 // pred_fallthru
    _
  // Predicated region
  $region18: #{discriminator_forward.6} parent=0 // pred_check
    _
  $region19: #{discriminator_forward.6} parent=0 // pred_check_branch
    %19 = sbr.rel (0) target = $region21
  $region20: #{discriminator_forward.6} parent=0 // pred_region
    _
  $region21: #{discriminator_forward.6} parent=0 // pred_fallthru
    _
  %v21 = vld [vmem:[%s0] sm:$0xff]
  %v22 = vld [vmem:[%s0 + $0x8] sm:$0xff]
  %v23 = vld [vmem:[%s0 + $0x10] sm:$0xff]
  %v24 = vld [vmem:[%s0 + $0x18] sm:$0xff]
  %v25 = vld [vmem:[%s0 + $0x20] sm:$0xff]
  %v26 = vld [vmem:[%s0 + $0x28] sm:$0xff]
  %v27 = vld [vmem:[%s0 + $0x30] sm:$0xff]
  %v28 = vld [vmem:[%s0 + $0x38] sm:$0xff]
  %v29 = vld [vmem:[%s0 + $0x40] sm:$0xff]
  %v30 = vld [vmem:[%s0 + $0x48] sm:$0xff]
  %v31 = vld [vmem:[%s0 + $0x50] sm:$0xff]
  %v32 = vld [vmem:[%s0 + $0x58] sm:$0xff]
  %v33 = vld [vmem:[%s0 + $0x60] sm:$0xff]
  %v34 = vld [vmem:[%s0 + $0x68] sm:$0xff]
  %v35 = vld [vmem:[%s0 + $0x70] sm:$0xff]
  %v36 = vld [vmem:[%s0 + $0x78] sm:$0xff]
  %v37 = vpack.c.bf16 %v23, %v21
  %v38 = vpack.c.bf16 %v24, %v22
  %v39 = vpack.c.bf16 %v27, %v25
  %v40 = vpack.c.bf16 %v28, %v26
  %v41 = vpack.c.bf16 %v31, %v29
  %v42 = vpack.c.bf16 %v32, %v30
  %v43 = vpack.c.bf16 %v35, %v33
  %v44 = vpack.c.bf16 %v36, %v34
  %v45 = vld [vmem:[%s1] sm:$0xf]
  %v46 = vld [vmem:[%s1 + $0x4] sm:$0xf]
  %v47 = vld [vmem:[%s1 + $0x8] sm:$0xf]
  %v48 = vld [vmem:[%s1 + $0xc] sm:$0xf]
  %v49 = vld [vmem:[%s1 + $0x10] sm:$0xf]
  %v50 = vld [vmem:[%s1 + $0x14] sm:$0xf]
  %v51 = vld [vmem:[%s1 + $0x18] sm:$0xf]
  %v52 = vld [vmem:[%s1 + $0x1c] sm:$0xf]
  %v53 = vld [vmem:[%s1 + $0x20] sm:$0xf]
  %v54 = vld [vmem:[%s1 + $0x24] sm:$0xf]
  %v55 = vld [vmem:[%s1 + $0x28] sm:$0xf]
  %v56 = vld [vmem:[%s1 + $0x2c] sm:$0xf]
  %v57 = vld [vmem:[%s1 + $0x30] sm:$0xf]
  %v58 = vld [vmem:[%s1 + $0x34] sm:$0xf]
  %v59 = vld [vmem:[%s1 + $0x38] sm:$0xf]
  %v60 = vld [vmem:[%s1 + $0x3c] sm:$0xf]
  %v61 = vld [vmem:[%s1 + $0x40] sm:$0xf]
  %v62 = vld [vmem:[%s1 + $0x44] sm:$0xf]
  %v63 = vld [vmem:[%s1 + $0x48] sm:$0xf]
  %v64 = vld [vmem:[%s1 + $0x4c] sm:$0xf]
  %v65 = vld [vmem:[%s1 + $0x50] sm:$0xf]
  %v66 = vld [vmem:[%s1 + $0x54] sm:$0xf]
  %v67 = vld [vmem:[%s1 + $0x58] sm:$0xf]
  %v68 = vld [vmem:[%s1 + $0x5c] sm:$0xf]
  %v69 = vld [vmem:[%s1 + $0x60] sm:$0xf]
  %v70 = vld [vmem:[%s1 + $0x64] sm:$0xf]
  %v71 = vld [vmem:[%s1 + $0x68] sm:$0xf]
  %v72 = vld [vmem:[%s1 + $0x6c] sm:$0xf]
  %v73 = vld [vmem:[%s1 + $0x70] sm:$0xf]
  %v74 = vld [vmem:[%s1 + $0x74] sm:$0xf]
  %v75 = vld [vmem:[%s1 + $0x78] sm:$0xf]
  %v76 = vld [vmem:[%s1 + $0x7c] sm:$0xf]
  %v77 = vld [vmem:[%s2] sm:$0x1]
  %v79 = vlaneseq
  %v80 = vshrl.u32 %v79, 7
  %v81 = vsub.s32 0, %v80
  %v82 = vrot.slane %v77, %v81
  %v116 = vunpack.c.l.b16 %v45
  %v117 = vunpack.c.l.b16 %v46
  %v118 = vunpack.c.l.b16 %v47
  %v119 = vunpack.c.l.b16 %v48
  %v120 = vunpack.c.l.b16 %v49
  %v121 = vunpack.c.l.b16 %v50
  %v122 = vunpack.c.l.b16 %v51
  %v123 = vunpack.c.l.b16 %v52
  %v124 = vunpack.c.l.b16 %v53
  %v125 = vunpack.c.l.b16 %v54
  %v126 = vunpack.c.l.b16 %v55
  %v127 = vunpack.c.l.b16 %v56
  %v128 = vunpack.c.l.b16 %v57
  %v129 = vunpack.c.l.b16 %v58
  %v130 = vunpack.c.l.b16 %v59
  %v131 = vunpack.c.l.b16 %v60
  %v132 = vunpack.c.l.b16 %v61
  %v133 = vunpack.c.l.b16 %v62
  %v134 = vunpack.c.l.b16 %v63
  %v135 = vunpack.c.l.b16 %v64
  %v136 = vunpack.c.l.b16 %v65
  %v137 = vunpack.c.l.b16 %v66
  %v138 = vunpack.c.l.b16 %v67
  %v139 = vunpack.c.l.b16 %v68
  %v140 = vunpack.c.l.b16 %v69
  %v141 = vunpack.c.l.b16 %v70
  %v142 = vunpack.c.l.b16 %v71
  %v143 = vunpack.c.l.b16 %v72
  %v144 = vunpack.c.l.b16 %v73
  %v145 = vunpack.c.l.b16 %v74
  %v146 = vunpack.c.l.b16 %v75
  %v147 = vunpack.c.l.b16 %v76
  %v148 = vpack.c.b16 %v117, %v116
  %v149 = vpack.c.b16 %v119, %v118
  %v150 = vpack.c.b16 %v121, %v120
  %v151 = vpack.c.b16 %v123, %v122
  %v152 = vpack.c.b16 %v125, %v124
  %v153 = vpack.c.b16 %v127, %v126
  %v154 = vpack.c.b16 %v129, %v128
  %v155 = vpack.c.b16 %v131, %v130
  %v156 = vpack.c.b16 %v133, %v132
  %v157 = vpack.c.b16 %v135, %v134
  %v158 = vpack.c.b16 %v137, %v136
  %v159 = vpack.c.b16 %v139, %v138
  %v160 = vpack.c.b16 %v141, %v140
  %v161 = vpack.c.b16 %v143, %v142
  %v162 = vpack.c.b16 %v145, %v144
  %v163 = vpack.c.b16 %v147, %v146
  %180 = vmatprep.subr.bf16.mxu0 0
  %181 = vmatpush1.bf16.msra.mxu0 %v148
  %182 = vmatprep.subr.bf16.mxu0 0
  %183 = vmatpush1.bf16.msra.mxu0 %v149
  %184 = vmatprep.subr.bf16.mxu0 0
  %185 = vmatpush1.bf16.msra.mxu0 %v150
  %186 = vmatprep.subr.bf16.mxu0 0
  %187 = vmatpush1.bf16.msra.mxu0 %v151
  %188 = vmatprep.subr.bf16.mxu0 0
  %189 = vmatpush1.bf16.msra.mxu0 %v152
  %190 = vmatprep.subr.bf16.mxu0 0
  %191 = vmatpush1.bf16.msra.mxu0 %v153
  %192 = vmatprep.subr.bf16.mxu0 0
  %193 = vmatpush1.bf16.msra.mxu0 %v154
  %194 = vmatprep.subr.bf16.mxu0 0
  %195 = vmatpush1.bf16.msra.mxu0 %v155
  %196 = vmatprep.subr.bf16.mxu0 0
  %197 = vmatpush1.bf16.msra.mxu0 %v156
  %198 = vmatprep.subr.bf16.mxu0 0
  %199 = vmatpush1.bf16.msra.mxu0 %v157
  %200 = vmatprep.subr.bf16.mxu0 0
  %201 = vmatpush1.bf16.msra.mxu0 %v158
  %202 = vmatprep.subr.bf16.mxu0 0
  %203 = vmatpush1.bf16.msra.mxu0 %v159
  %204 = vmatprep.subr.bf16.mxu0 0
  %205 = vmatpush1.bf16.msra.mxu0 %v160
  %206 = vmatprep.subr.bf16.mxu0 0
  %207 = vmatpush1.bf16.msra.mxu0 %v161
  %208 = vmatprep.subr.bf16.mxu0 0
  %209 = vmatpush1.bf16.msra.mxu0 %v162
  %210 = vmatprep.subr.bf16.mxu0 0
  %211 = vmatpush1.bf16.msra.mxu0 %v163
  %212 = vmatprep.mubr.bf16.mxu0 %v38
  %213 = vmatmul.mubr.bf16.gmra.mrb[0].mxu0 %v37
  %v214 = vpop.f32.mrb[0].mxu0
  %v215 = vadd.f32 %v82, %v214
  %v216 = vpop.f32.mrb[0].mxu0
  %v217 = vpop.f32.mrb[0].mxu0
  %v218 = vadd.f32 %v82, %v217
  %v219 = vpop.f32.mrb[0].mxu0
  %220 = vmatprep.mubr.bf16.mxu0 %v40
  %221 = vmatmul.mubr.bf16.gmra.mrb[0].mxu0 %v39
  %v222 = vpop.f32.mrb[0].mxu0
  %v223 = vadd.f32 %v82, %v222
  %v224 = vpop.f32.mrb[0].mxu0
  %v225 = vpop.f32.mrb[0].mxu0
  %v226 = vadd.f32 %v82, %v225
  %v227 = vpop.f32.mrb[0].mxu0
  %228 = vmatprep.mubr.bf16.mxu0 %v42
  %229 = vmatmul.mubr.bf16.gmra.mrb[0].mxu0 %v41
  %v230 = vpop.f32.mrb[0].mxu0
  %v231 = vadd.f32 %v82, %v230
  %v232 = vpop.f32.mrb[0].mxu0
  %v233 = vpop.f32.mrb[0].mxu0
  %v234 = vadd.f32 %v82, %v233
  %v235 = vpop.f32.mrb[0].mxu0
  %236 = vmatprep.mubr.bf16.mxu0 %v44
  %237 = vmatmul.mubr.bf16.gmra.mrb[0].mxu0 %v43
  %v238 = vpop.f32.mrb[0].mxu0
  %v239 = vadd.f32 %v82, %v238
  %v240 = vpop.f32.mrb[0].mxu0
  %v241 = vpop.f32.mrb[0].mxu0
  %v242 = vadd.f32 %v82, %v241
  %v243 = vpop.f32.mrb[0].mxu0
  %244 = vdwg.mxu0
  %vm245 = vcmask 523264
  %v246 = vsel %vm245, %v215, 0.0
  %v247 = vsel %vm245, %v218, 0.0
  %v248 = vadd.f32 %v246, %v247
  %v249 = vsel %vm245, %v223, 0.0
  %v250 = vadd.f32 %v248, %v249
  %v251 = vsel %vm245, %v226, 0.0
  %v252 = vadd.f32 %v250, %v251
  %v253 = vsel %vm245, %v231, 0.0
  %v254 = vadd.f32 %v252, %v253
  %v255 = vsel %vm245, %v234, 0.0
  %v256 = vadd.f32 %v254, %v255
  %v257 = vsel %vm245, %v239, 0.0
  %v258 = vadd.f32 %v256, %v257
  %v259 = vsel %vm245, %v242, 0.0
  %v260 = vadd.f32 %v258, %v259
  %v261 = vrot.slane %v260, 4
  %v262 = vadd.f32 %v260, %v261
  %v263 = vrot.slane %v262, 2
  %v264 = vadd.f32 %v262, %v263
  %v265 = vrot.slane %v264, 1
  %v266 = vadd.f32 %v264, %v265
  %v267 = vrcp.pop 64.0
  %v268 = vmul.f32 %v266, %v267
  %v269 = vsub.f32 %v215, %v268
  %v270 = vsub.f32 %v218, %v268
  %v271 = vsub.f32 %v223, %v268
  %v272 = vsub.f32 %v226, %v268
  %v273 = vsub.f32 %v231, %v268
  %v274 = vsub.f32 %v234, %v268
  %v275 = vsub.f32 %v239, %v268
  %v276 = vsub.f32 %v242, %v268
  %v277 = vmul.f32 %v269, %v269
  %v278 = vmul.f32 %v270, %v270
  %v279 = vmul.f32 %v271, %v271
  %v280 = vmul.f32 %v272, %v272
  %v281 = vmul.f32 %v273, %v273
  %v282 = vmul.f32 %v274, %v274
  %v283 = vmul.f32 %v275, %v275
  %v284 = vmul.f32 %v276, %v276
  %v285 = vsel %vm245, %v277, 0.0
  %v286 = vsel %vm245, %v278, 0.0
  %v287 = vadd.f32 %v285, %v286
  %v288 = vsel %vm245, %v279, 0.0
  %v289 = vadd.f32 %v287, %v288
  %v290 = vsel %vm245, %v280, 0.0
  %v291 = vadd.f32 %v289, %v290
  %v292 = vsel %vm245, %v281, 0.0
  %v293 = vadd.f32 %v291, %v292
  %v294 = vsel %vm245, %v282, 0.0
  %v295 = vadd.f32 %v293, %v294
  %v296 = vsel %vm245, %v283, 0.0
  %v297 = vadd.f32 %v295, %v296
  %v298 = vsel %vm245, %v284, 0.0
  %v299 = vadd.f32 %v297, %v298
  %v300 = vrot.slane %v299, 4
  %v301 = vadd.f32 %v299, %v300
  %v302 = vrot.slane %v301, 2
  %v303 = vadd.f32 %v301, %v302
  %v304 = vrot.slane %v303, 1
  %v305 = vadd.f32 %v303, %v304
  %v306 = vmul.f32 %v305, %v267
  %v307 = vld [vmem:[%s3] sm:$0x1]
  %v309 = vlaneseq
  %v310 = vshrl.u32 %v309, 7
  %v311 = vsub.s32 0, %v310
  %v312 = vrot.slane %v307, %v311
  %v314 = vmul.f32 %v312, %v269
  %v315 = vmul.f32 %v312, %v270
  %v316 = vmul.f32 %v312, %v271
  %v317 = vmul.f32 %v312, %v272
  %v318 = vmul.f32 %v312, %v273
  %v319 = vmul.f32 %v312, %v274
  %v320 = vmul.f32 %v312, %v275
  %v321 = vmul.f32 %v312, %v276
  %v322 = vadd.f32 %v306, 1e-05
  %v323 = vrsqrt.pop %v322
  %v324 = vmul.f32 %v314, %v323
  %v325 = vmul.f32 %v315, %v323
  %v326 = vmul.f32 %v316, %v323
  %v327 = vmul.f32 %v317, %v323
  %v328 = vmul.f32 %v318, %v323
  %v329 = vmul.f32 %v319, %v323
  %v330 = vmul.f32 %v320, %v323
  %v331 = vmul.f32 %v321, %v323
  %v332 = vld [vmem:[%s4] sm:$0x1]
  %v334 = vlaneseq
  %v335 = vshrl.u32 %v334, 7
  %v336 = vsub.s32 0, %v335
  %v337 = vrot.slane %v332, %v336
  %v339 = vadd.f32 %v324, %v337
  %v340 = vadd.f32 %v325, %v337
  %v341 = vadd.f32 %v326, %v337
  %v342 = vadd.f32 %v327, %v337
  %v343 = vadd.f32 %v328, %v337
  %v344 = vadd.f32 %v329, %v337
  %v345 = vadd.f32 %v330, %v337
  %v346 = vadd.f32 %v331, %v337
  %vm347 = vcmp.gt.f32.partialorder %v339, 0.0
  %vm348 = vcmp.gt.f32.partialorder %v340, 0.0
  %vm349 = vcmp.gt.f32.partialorder %v341, 0.0
  %vm350 = vcmp.gt.f32.partialorder %v342, 0.0
  %vm351 = vcmp.gt.f32.partialorder %v343, 0.0
  %vm352 = vcmp.gt.f32.partialorder %v344, 0.0
  %vm353 = vcmp.gt.f32.partialorder %v345, 0.0
  %vm354 = vcmp.gt.f32.partialorder %v346, 0.0
  %v355 = vmul.f32 %v339, 0.2
  %v356 = vmul.f32 %v340, 0.2
  %v357 = vmul.f32 %v341, 0.2
  %v358 = vmul.f32 %v342, 0.2
  %v359 = vmul.f32 %v343, 0.2
  %v360 = vmul.f32 %v344, 0.2
  %v361 = vmul.f32 %v345, 0.2
  %v362 = vmul.f32 %v346, 0.2
  %v363 = vsel %vm347, %v339, %v355
  %v364 = vsel %vm348, %v340, %v356
  %v365 = vsel %vm349, %v341, %v357
  %v366 = vsel %vm350, %v342, %v358
  %v367 = vsel %vm351, %v343, %v359
  %v368 = vsel %vm352, %v344, %v360
  %v369 = vsel %vm353, %v345, %v361
  %v370 = vsel %vm354, %v346, %v362
  %371 = vst.msk [vmem:[%s5] sm:$0xff] %vm245, %v363
  %372 = vst.msk [vmem:[%s5 + $0x8] sm:$0xff] %vm245, %v364
  %373 = vst.msk [vmem:[%s5 + $0x10] sm:$0xff] %vm245, %v365
  %374 = vst.msk [vmem:[%s5 + $0x18] sm:$0xff] %vm245, %v366
  %375 = vst.msk [vmem:[%s5 + $0x20] sm:$0xff] %vm245, %v367
  %376 = vst.msk [vmem:[%s5 + $0x28] sm:$0xff] %vm245, %v368
  %377 = vst.msk [vmem:[%s5 + $0x30] sm:$0xff] %vm245, %v369
  %378 = vst.msk [vmem:[%s5 + $0x38] sm:$0xff] %vm245, %v370
  // Predicated region
  $region22: #{discriminator_forward.6} parent=0 // pred_check
    _
  $region23: #{discriminator_forward.6} parent=0 // pred_check_branch
    %380 = sbr.rel (0) target = $region25
  $region24: #{discriminator_forward.6} parent=0 // pred_region
    _
  $region25: #{discriminator_forward.6} parent=0 // pred_fallthru
    _
  // Predicated region
  $region26: #{discriminator_forward.6} parent=0 // pred_check
    _
  $region27: #{discriminator_forward.6} parent=0 // pred_check_branch
    %382 = sbr.rel (0) target = $region29
  $region28: #{discriminator_forward.6} parent=0 // pred_region
    _
  $region29: #{discriminator_forward.6} parent=0 // pred_fallthru
    _

// kernel: discriminator_forward.7
$region0: #{discriminator_forward.7}
  #allocation0 [shape = 'u32[]', space=smem, size = 0x4, offset = 0x4, fixed_abs, tag = 'smem constant byte address 0x4 - core index']
  #allocation1 [shape = 'u32[144,128]{1,0:T(1,128)}', space=vmem, size = 0x12000, scoped, tag = 'internal scratch']
  %s0 = inlined_call_operand.vmem [shape: f32[2,2048], index: 0, kind: input, shape index: {}]
  %s1 = inlined_call_operand.vmem [shape: bf16[2048,1024], index: 1, kind: input, shape index: {}]
  %s2 = inlined_call_operand.vmem [shape: f32[1,1024], index: 2, kind: input, shape index: {}]
  %s3 = inlined_call_operand.vmem [shape: f32[1,1024], index: 3, kind: input, shape index: {}]
  %s4 = inlined_call_operand.vmem [shape: f32[1,1024], index: 4, kind: input, shape index: {}]
  %s5 = inlined_call_operand.vmem [shape: bf16[1024,128], index: 5, kind: input, shape index: {}]
  %s6 = inlined_call_operand.vmem [shape: f32[1,128], index: 6, kind: input, shape index: {}]
  %s7 = inlined_call_operand.vmem [shape: f32[2,128], index: 7, kind: output, shape index: {}]
  %s8 = sld [smem:[#allocation0]]
  $region38: #{discriminator_forward.7} parent=0
    _
  %s10 = ssub.s32 1, %s8
  %s11 = scalar_select 0, %s10, %s8
  // Predicated region
  $region2: #{discriminator_forward.7} parent=0 // pred_check
    _
  $region3: #{discriminator_forward.7} parent=0 // pred_check_branch
    %13 = sbr.rel (0) target = $region5
  $region4: #{discriminator_forward.7} parent=0 // pred_region
    _
  $region5: #{discriminator_forward.7} parent=0 // pred_fallthru
    _
  // Predicated region
  $region6: #{discriminator_forward.7} parent=0 // pred_check
    _
  $region7: #{discriminator_forward.7} parent=0 // pred_check_branch
    %15 = sbr.rel (0) target = $region9
  $region8: #{discriminator_forward.7} parent=0 // pred_region
    _
  $region9: #{discriminator_forward.7} parent=0 // pred_fallthru
    _
  // Predicated region
  $region10: #{discriminator_forward.7} parent=0 // pred_check
    _
  $region11: #{discriminator_forward.7} parent=0 // pred_check_branch
    %17 = sbr.rel (0) target = $region13
  $region12: #{discriminator_forward.7} parent=0 // pred_region
    _
  $region13: #{discriminator_forward.7} parent=0 // pred_fallthru
    _
  // Predicated region
  $region14: #{discriminator_forward.7} parent=0 // pred_check
    _
  $region15: #{discriminator_forward.7} parent=0 // pred_check_branch
    %19 = sbr.rel (0) target = $region17
  $region16: #{discriminator_forward.7} parent=0 // pred_region
    _
  $region17: #{discriminator_forward.7} parent=0 // pred_fallthru
    _
  // Predicated region
  $region18: #{discriminator_forward.7} parent=0 // pred_check
    _
  $region19: #{discriminator_forward.7} parent=0 // pred_check_branch
    %21 = sbr.rel (0) target = $region21
  $region20: #{discriminator_forward.7} parent=0 // pred_region
    _
  $region21: #{discriminator_forward.7} parent=0 // pred_fallthru
    _
  // Predicated region
  $region22: #{discriminator_forward.7} parent=0 // pred_check
    _
  $region23: #{discriminator_forward.7} parent=0 // pred_check_branch
    %23 = sbr.rel (0) target = $region25
  $region24: #{discriminator_forward.7} parent=0 // pred_region
    _
  $region25: #{discriminator_forward.7} parent=0 // pred_fallthru
    _
  // Predicated region
  $region26: #{discriminator_forward.7} parent=0 // pred_check
    _
  $region27: #{discriminator_forward.7} parent=0 // pred_check_branch
    %25 = sbr.rel (0) target = $region29
  $region28: #{discriminator_forward.7} parent=0 // pred_region
    _
  $region29: #{discriminator_forward.7} parent=0 // pred_fallthru
    _
  %v27 = vld [vmem:[%s0] sm:$0xff]
  %v28 = vld [vmem:[%s0 + $0x8] sm:$0xff]
  %v29 = vld [vmem:[%s0 + $0x10] sm:$0xff]
  %v30 = vld [vmem:[%s0 + $0x18] sm:$0xff]
  %v35 = vcombine.high %v27, %v27
  %v37 = vunpack.c.l.s4 1983009808
  %v38 = vunpack.c.0.s8 %v37
  %v39 = vlaneseq
  %v40 = vshrl.u32 %v39, 7
  %v41 = vsub.s32 %v38, %v40
  %v42 = vrot.slane %v27, %v41
  %v44 = vunpack.c.l.s4 1983009808
  %v45 = vunpack.c.0.s8 %v44
  %v46 = vlaneseq
  %v47 = vshrl.u32 %v46, 7
  %v48 = vsub.s32 %v45, %v47
  %v49 = vrot.slane %v35, %v48
  %v50 = vcombine.high %v42, %v42
  %v51 = vcombine.high %v49, %v49
  %v52 = vcombine.high %v28, %v28
  %v54 = vunpack.c.l.s4 1983009808
  %v55 = vunpack.c.0.s8 %v54
  %v56 = vlaneseq
  %v57 = vshrl.u32 %v56, 7
  %v58 = vsub.s32 %v55, %v57
  %v59 = vrot.slane %v28, %v58
  %v61 = vunpack.c.l.s4 1983009808
  %v62 = vunpack.c.0.s8 %v61
  %v63 = vlaneseq
  %v64 = vshrl.u32 %v63, 7
  %v65 = vsub.s32 %v62, %v64
  %v66 = vrot.slane %v52, %v65
  %v67 = vcombine.high %v59, %v59
  %v68 = vcombine.high %v66, %v66
  %v69 = vcombine.high %v29, %v29
  %v71 = vunpack.c.l.s4 1983009808
  %v72 = vunpack.c.0.s8 %v71
  %v73 = vlaneseq
  %v74 = vshrl.u32 %v73, 7
  %v75 = vsub.s32 %v72, %v74
  %v76 = vrot.slane %v29, %v75
  %v78 = vunpack.c.l.s4 1983009808
  %v79 = vunpack.c.0.s8 %v78
  %v80 = vlaneseq
  %v81 = vshrl.u32 %v80, 7
  %v82 = vsub.s32 %v79, %v81
  %v83 = vrot.slane %v69, %v82
  %v84 = vcombine.high %v76, %v76
  %v85 = vcombine.high %v83, %v83
  %v86 = vcombine.high %v30, %v30
  %v88 = vunpack.c.l.s4 1983009808
  %v89 = vunpack.c.0.s8 %v88
  %v90 = vlaneseq
  %v91 = vshrl.u32 %v90, 7
  %v92 = vsub.s32 %v89, %v91
  %v93 = vrot.slane %v30, %v92
  %v95 = vunpack.c.l.s4 1983009808
  %v96 = vunpack.c.0.s8 %v95
  %v97 = vlaneseq
  %v98 = vshrl.u32 %v97, 7
  %v99 = vsub.s32 %v96, %v98
  %v100 = vrot.slane %v86, %v99
  %v101 = vcombine.high %v93, %v93
  %v102 = vcombine.high %v100, %v100
  %v119 = vpack.c.bf16 %v42, %v42
  %v120 = vpack.c.bf16 %v50, %v50
  %v121 = vpack.c.bf16 %v49, %v49
  %v122 = vpack.c.bf16 %v51, %v51
  %v123 = vpack.c.bf16 %v59, %v59
  %v124 = vpack.c.bf16 %v67, %v67
  %v125 = vpack.c.bf16 %v66, %v66
  %v126 = vpack.c.bf16 %v68, %v68
  %v127 = vpack.c.bf16 %v76, %v76
  %v128 = vpack.c.bf16 %v84, %v84
  %v129 = vpack.c.bf16 %v83, %v83
  %v130 = vpack.c.bf16 %v85, %v85
  %v131 = vpack.c.bf16 %v93, %v93
  %v132 = vpack.c.bf16 %v101, %v101
  %v133 = vpack.c.bf16 %v100, %v100
  %v134 = vpack.c.bf16 %v102, %v102
  %v135 = vld [vmem:[%s1] sm:$0xff]
  %v136 = vld [vmem:[%s1 + $0x8] sm:$0xff]
  %v137 = vld [vmem:[%s1 + $0x10] sm:$0xff]
  %v138 = vld [vmem:[%s1 + $0x18] sm:$0xff]
  %v139 = vld [vmem:[%s1 + $0x20] sm:$0xff]
  %v140 = vld [vmem:[%s1 + $0x28] sm:$0xff]
  %v141 = vld [vmem:[%s1 + $0x30] sm:$0xff]
  %v142 = vld [vmem:[%s1 + $0x38] sm:$0xff]
  %v143 = vld [vmem:[%s1 + $0x40] sm:$0xff]
  %v144 = vld [vmem:[%s1 + $0x48] sm:$0xff]
  %v145 = vld [vmem:[%s1 + $0x50] sm:$0xff]
  %v146 = vld [vmem:[%s1 + $0x58] sm:$0xff]
  %v147 = vld [vmem:[%s1 + $0x60] sm:$0xff]
  %v148 = vld [vmem:[%s1 + $0x68] sm:$0xff]
  %v149 = vld [vmem:[%s1 + $0x70] sm:$0xff]
  %v150 = vld [vmem:[%s1 + $0x78] sm:$0xff]
  %v151 = vld [vmem:[%s1 + $0x80] sm:$0xff]
  %v152 = vld [vmem:[%s1 + $0x88] sm:$0xff]
  %v153 = vld [vmem:[%s1 + $0x90] sm:$0xff]
  %v154 = vld [vmem:[%s1 + $0x98] sm:$0xff]
  %v155 = vld [vmem:[%s1 + $0xa0] sm:$0xff]
  %v156 = vld [vmem:[%s1 + $0xa8] sm:$0xff]
  %v157 = vld [vmem:[%s1 + $0xb0] sm:$0xff]
  %v158 = vld [vmem:[%s1 + $0xb8] sm:$0xff]
  %v159 = vld [vmem:[%s1 + $0xc0] sm:$0xff]
  %v160 = vld [vmem:[%s1 + $0xc8] sm:$0xff]
  %v161 = vld [vmem:[%s1 + $0xd0] sm:$0xff]
  %v162 = vld [vmem:[%s1 + $0xd8] sm:$0xff]
  %v163 = vld [vmem:[%s1 + $0xe0] sm:$0xff]
  %v164 = vld [vmem:[%s1 + $0xe8] sm:$0xff]
  %v165 = vld [vmem:[%s1 + $0xf0] sm:$0xff]
  %v166 = vld [vmem:[%s1 + $0xf8] sm:$0xff]
  %v167 = vld [vmem:[%s1 + $0x100] sm:$0xff]
  %v168 = vld [vmem:[%s1 + $0x108] sm:$0xff]
  %v169 = vld [vmem:[%s1 + $0x110] sm:$0xff]
  %v170 = vld [vmem:[%s1 + $0x118] sm:$0xff]
  %v171 = vld [vmem:[%s1 + $0x120] sm:$0xff]
  %v172 = vld [vmem:[%s1 + $0x128] sm:$0xff]
  %v173 = vld [vmem:[%s1 + $0x130] sm:$0xff]
  %v174 = vld [vmem:[%s1 + $0x138] sm:$0xff]
  %v175 = vld [vmem:[%s1 + $0x140] sm:$0xff]
  %v176 = vld [vmem:[%s1 + $0x148] sm:$0xff]
  %v177 = vld [vmem:[%s1 + $0x150] sm:$0xff]
  %v178 = vld [vmem:[%s1 + $0x158] sm:$0xff]
  %v179 = vld [vmem:[%s1 + $0x160] sm:$0xff]
  %v180 = vld [vmem:[%s1 + $0x168] sm:$0xff]
  %v181 = vld [vmem:[%s1 + $0x170] sm:$0xff]
  %v182 = vld [vmem:[%s1 + $0x178] sm:$0xff]
  %v183 = vld [vmem:[%s1 + $0x180] sm:$0xff]
  %v184 = vld [vmem:[%s1 + $0x188] sm:$0xff]
  %v185 = vld [vmem:[%s1 + $0x190] sm:$0xff]
  %v186 = vld [vmem:[%s1 + $0x198] sm:$0xff]
  %v187 = vld [vmem:[%s1 + $0x1a0] sm:$0xff]
  %v188 = vld [vmem:[%s1 + $0x1a8] sm:$0xff]
  %v189 = vld [vmem:[%s1 + $0x1b0] sm:$0xff]
  %v190 = vld [vmem:[%s1 + $0x1b8] sm:$0xff]
  %v191 = vld [vmem:[%s1 + $0x1c0] sm:$0xff]
  %v192 = vld [vmem:[%s1 + $0x1c8] sm:$0xff]
  %v193 = vld [vmem:[%s1 + $0x1d0] sm:$0xff]
  %v194 = vld [vmem:[%s1 + $0x1d8] sm:$0xff]
  %v195 = vld [vmem:[%s1 + $0x1e0] sm:$0xff]
  %v196 = vld [vmem:[%s1 + $0x1e8] sm:$0xff]
  %v197 = vld [vmem:[%s1 + $0x1f0] sm:$0xff]
  %v198 = vld [vmem:[%s1 + $0x1f8] sm:$0xff]
  %v199 = vld [vmem:[%s1 + $0x200] sm:$0xff]
  %v200 = vld [vmem:[%s1 + $0x208] sm:$0xff]
  %v201 = vld [vmem:[%s1 + $0x210] sm:$0xff]
  %v202 = vld [vmem:[%s1 + $0x218] sm:$0xff]
  %v203 = vld [vmem:[%s1 + $0x220] sm:$0xff]
  %v204 = vld [vmem:[%s1 + $0x228] sm:$0xff]
  %v205 = vld [vmem:[%s1 + $0x230] sm:$0xff]
  %v206 = vld [vmem:[%s1 + $0x238] sm:$0xff]
  %v207 = vld [vmem:[%s1 + $0x240] sm:$0xff]
  %v208 = vld [vmem:[%s1 + $0x248] sm:$0xff]
  %v209 = vld [vmem:[%s1 + $0x250] sm:$0xff]
  %v210 = vld [vmem:[%s1 + $0x258] sm:$0xff]
  %v211 = vld [vmem:[%s1 + $0x260] sm:$0xff]
  %v212 = vld [vmem:[%s1 + $0x268] sm:$0xff]
  %v213 = vld [vmem:[%s1 + $0x270] sm:$0xff]
  %v214 = vld [vmem:[%s1 + $0x278] sm:$0xff]
  %v215 = vld [vmem:[%s1 + $0x280] sm:$0xff]
  %v216 = vld [vmem:[%s1 + $0x288] sm:$0xff]
  %v217 = vld [vmem:[%s1 + $0x290] sm:$0xff]
  %v218 = vld [vmem:[%s1 + $0x298] sm:$0xff]
  %v219 = vld [vmem:[%s1 + $0x2a0] sm:$0xff]
  %v220 = vld [vmem:[%s1 + $0x2a8] sm:$0xff]
  %v221 = vld [vmem:[%s1 + $0x2b0] sm:$0xff]
  %v222 = vld [vmem:[%s1 + $0x2b8] sm:$0xff]
  %v223 = vld [vmem:[%s1 + $0x2c0] sm:$0xff]
  %v224 = vld [vmem:[%s1 + $0x2c8] sm:$0xff]
  %v225 = vld [vmem:[%s1 + $0x2d0] sm:$0xff]
  %v226 = vld [vmem:[%s1 + $0x2d8] sm:$0xff]
  %v227 = vld [vmem:[%s1 + $0x2e0] sm:$0xff]
  %v228 = vld [vmem:[%s1 + $0x2e8] sm:$0xff]
  %v229 = vld [vmem:[%s1 + $0x2f0] sm:$0xff]
  %v230 = vld [vmem:[%s1 + $0x2f8] sm:$0xff]
  %v231 = vld [vmem:[%s1 + $0x300] sm:$0xff]
  %v232 = vld [vmem:[%s1 + $0x308] sm:$0xff]
  %v233 = vld [vmem:[%s1 + $0x310] sm:$0xff]
  %v234 = vld [vmem:[%s1 + $0x318] sm:$0xff]
  %v235 = vld [vmem:[%s1 + $0x320] sm:$0xff]
  %v236 = vld [vmem:[%s1 + $0x328] sm:$0xff]
  %v237 = vld [vmem:[%s1 + $0x330] sm:$0xff]
  %v238 = vld [vmem:[%s1 + $0x338] sm:$0xff]
  %v239 = vld [vmem:[%s1 + $0x340] sm:$0xff]
  %v240 = vld [vmem:[%s1 + $0x348] sm:$0xff]
  %v241 = vld [vmem:[%s1 + $0x350] sm:$0xff]
  %v242 = vld [vmem:[%s1 + $0x358] sm:$0xff]
  %v243 = vld [vmem:[%s1 + $0x360] sm:$0xff]
  %v244 = vld [vmem:[%s1 + $0x368] sm:$0xff]
  %v245 = vld [vmem:[%s1 + $0x370] sm:$0xff]
  %v246 = vld [vmem:[%s1 + $0x378] sm:$0xff]
  %v247 = vld [vmem:[%s1 + $0x380] sm:$0xff]
  %v248 = vld [vmem:[%s1 + $0x388] sm:$0xff]
  %v249 = vld [vmem:[%s1 + $0x390] sm:$0xff]
  %v250 = vld [vmem:[%s1 + $0x398] sm:$0xff]
  %v251 = vld [vmem:[%s1 + $0x3a0] sm:$0xff]
  %v252 = vld [vmem:[%s1 + $0x3a8] sm:$0xff]
  %v253 = vld [vmem:[%s1 + $0x3b0] sm:$0xff]
  %v254 = vld [vmem:[%s1 + $0x3b8] sm:$0xff]
  %v255 = vld [vmem:[%s1 + $0x3c0] sm:$0xff]
  %v256 = vld [vmem:[%s1 + $0x3c8] sm:$0xff]
  %v257 = vld [vmem:[%s1 + $0x3d0] sm:$0xff]
  %v258 = vld [vmem:[%s1 + $0x3d8] sm:$0xff]
  %v259 = vld [vmem:[%s1 + $0x3e0] sm:$0xff]
  %v260 = vld [vmem:[%s1 + $0x3e8] sm:$0xff]
  %v261 = vld [vmem:[%s1 + $0x3f0] sm:$0xff]
  %v262 = vld [vmem:[%s1 + $0x3f8] sm:$0xff]
  %v263 = vld [vmem:[%s1 + $0x400] sm:$0xff]
  %v264 = vld [vmem:[%s1 + $0x408] sm:$0xff]
  %v265 = vld [vmem:[%s1 + $0x410] sm:$0xff]
  %v266 = vld [vmem:[%s1 + $0x418] sm:$0xff]
  %v267 = vld [vmem:[%s1 + $0x420] sm:$0xff]
  %v268 = vld [vmem:[%s1 + $0x428] sm:$0xff]
  %v269 = vld [vmem:[%s1 + $0x430] sm:$0xff]
  %v270 = vld [vmem:[%s1 + $0x438] sm:$0xff]
  %v271 = vld [vmem:[%s1 + $0x440] sm:$0xff]
  %v272 = vld [vmem:[%s1 + $0x448] sm:$0xff]
  %v273 = vld [vmem:[%s1 + $0x450] sm:$0xff]
  %v274 = vld [vmem:[%s1 + $0x458] sm:$0xff]
  %v275 = vld [vmem:[%s1 + $0x460] sm:$0xff]
  %v276 = vld [vmem:[%s1 + $0x468] sm:$0xff]
  %v277 = vld [vmem:[%s1 + $0x470] sm:$0xff]
  %v278 = vld [vmem:[%s1 + $0x478] sm:$0xff]
  %v279 = vld [vmem:[%s1 + $0x480] sm:$0xff]
  %v280 = vld [vmem:[%s1 + $0x488] sm:$0xff]
  %v281 = vld [vmem:[%s1 + $0x490] sm:$0xff]
  %v282 = vld [vmem:[%s1 + $0x498] sm:$0xff]
  %v283 = vld [vmem:[%s1 + $0x4a0] sm:$0xff]
  %v284 = vld [vmem:[%s1 + $0x4a8] sm:$0xff]
  %v285 = vld [vmem:[%s1 + $0x4b0] sm:$0xff]
  %v286 = vld [vmem:[%s1 + $0x4b8] sm:$0xff]
  %v287 = vld [vmem:[%s1 + $0x4c0] sm:$0xff]
  %v288 = vld [vmem:[%s1 + $0x4c8] sm:$0xff]
  %v289 = vld [vmem:[%s1 + $0x4d0] sm:$0xff]
  %v290 = vld [vmem:[%s1 + $0x4d8] sm:$0xff]
  %v291 = vld [vmem:[%s1 + $0x4e0] sm:$0xff]
  %v292 = vld [vmem:[%s1 + $0x4e8] sm:$0xff]
  %v293 = vld [vmem:[%s1 + $0x4f0] sm:$0xff]
  %v294 = vld [vmem:[%s1 + $0x4f8] sm:$0xff]
  %v295 = vld [vmem:[%s1 + $0x500] sm:$0xff]
  %v296 = vld [vmem:[%s1 + $0x508] sm:$0xff]
  %v297 = vld [vmem:[%s1 + $0x510] sm:$0xff]
  %v298 = vld [vmem:[%s1 + $0x518] sm:$0xff]
  %v299 = vld [vmem:[%s1 + $0x520] sm:$0xff]
  %v300 = vld [vmem:[%s1 + $0x528] sm:$0xff]
  %v301 = vld [vmem:[%s1 + $0x530] sm:$0xff]
  %v302 = vld [vmem:[%s1 + $0x538] sm:$0xff]
  %v303 = vld [vmem:[%s1 + $0x540] sm:$0xff]
  %v304 = vld [vmem:[%s1 + $0x548] sm:$0xff]
  %v305 = vld [vmem:[%s1 + $0x550] sm:$0xff]
  %v306 = vld [vmem:[%s1 + $0x558] sm:$0xff]
  %v307 = vld [vmem:[%s1 + $0x560] sm:$0xff]
  %v308 = vld [vmem:[%s1 + $0x568] sm:$0xff]
  %v309 = vld [vmem:[%s1 + $0x570] sm:$0xff]
  %v310 = vld [vmem:[%s1 + $0x578] sm:$0xff]
  %v311 = vld [vmem:[%s1 + $0x580] sm:$0xff]
  %v312 = vld [vmem:[%s1 + $0x588] sm:$0xff]
  %v313 = vld [vmem:[%s1 + $0x590] sm:$0xff]
  %v314 = vld [vmem:[%s1 + $0x598] sm:$0xff]
  %v315 = vld [vmem:[%s1 + $0x5a0] sm:$0xff]
  %v316 = vld [vmem:[%s1 + $0x5a8] sm:$0xff]
  %v317 = vld [vmem:[%s1 + $0x5b0] sm:$0xff]
  %v318 = vld [vmem:[%s1 + $0x5b8] sm:$0xff]
  %v319 = vld [vmem:[%s1 + $0x5c0] sm:$0xff]
  %v320 = vld [vmem:[%s1 + $0x5c8] sm:$0xff]
  %v321 = vld [vmem:[%s1 + $0x5d0] sm:$0xff]
  %v322 = vld [vmem:[%s1 + $0x5d8] sm:$0xff]
  %v323 = vld [vmem:[%s1 + $0x5e0] sm:$0xff]
  %v324 = vld [vmem:[%s1 + $0x5e8] sm:$0xff]
  %v325 = vld [vmem:[%s1 + $0x5f0] sm:$0xff]
  %v326 = vld [vmem:[%s1 + $0x5f8] sm:$0xff]
  %v327 = vld [vmem:[%s1 + $0x600] sm:$0xff]
  %v328 = vld [vmem:[%s1 + $0x608] sm:$0xff]
  %v329 = vld [vmem:[%s1 + $0x610] sm:$0xff]
  %v330 = vld [vmem:[%s1 + $0x618] sm:$0xff]
  %v331 = vld [vmem:[%s1 + $0x620] sm:$0xff]
  %v332 = vld [vmem:[%s1 + $0x628] sm:$0xff]
  %v333 = vld [vmem:[%s1 + $0x630] sm:$0xff]
  %v334 = vld [vmem:[%s1 + $0x638] sm:$0xff]
  %v335 = vld [vmem:[%s1 + $0x640] sm:$0xff]
  %v336 = vld [vmem:[%s1 + $0x648] sm:$0xff]
  %v337 = vld [vmem:[%s1 + $0x650] sm:$0xff]
  %v338 = vld [vmem:[%s1 + $0x658] sm:$0xff]
  %v339 = vld [vmem:[%s1 + $0x660] sm:$0xff]
  %v340 = vld [vmem:[%s1 + $0x668] sm:$0xff]
  %v341 = vld [vmem:[%s1 + $0x670] sm:$0xff]
  %v342 = vld [vmem:[%s1 + $0x678] sm:$0xff]
  %v343 = vld [vmem:[%s1 + $0x680] sm:$0xff]
  %v344 = vld [vmem:[%s1 + $0x688] sm:$0xff]
  %v345 = vld [vmem:[%s1 + $0x690] sm:$0xff]
  %v346 = vld [vmem:[%s1 + $0x698] sm:$0xff]
  %v347 = vld [vmem:[%s1 + $0x6a0] sm:$0xff]
  %v348 = vld [vmem:[%s1 + $0x6a8] sm:$0xff]
  %v349 = vld [vmem:[%s1 + $0x6b0] sm:$0xff]
  %v350 = vld [vmem:[%s1 + $0x6b8] sm:$0xff]
  %v351 = vld [vmem:[%s1 + $0x6c0] sm:$0xff]
  %v352 = vld [vmem:[%s1 + $0x6c8] sm:$0xff]
  %v353 = vld [vmem:[%s1 + $0x6d0] sm:$0xff]
  %v354 = vld [vmem:[%s1 + $0x6d8] sm:$0xff]
  %v355 = vld [vmem:[%s1 + $0x6e0] sm:$0xff]
  %v356 = vld [vmem:[%s1 + $0x6e8] sm:$0xff]
  %v357 = vld [vmem:[%s1 + $0x6f0] sm:$0xff]
  %v358 = vld [vmem:[%s1 + $0x6f8] sm:$0xff]
  %v359 = vld [vmem:[%s1 + $0x700] sm:$0xff]
  %v360 = vld [vmem:[%s1 + $0x708] sm:$0xff]
  %v361 = vld [vmem:[%s1 + $0x710] sm:$0xff]
  %v362 = vld [vmem:[%s1 + $0x718] sm:$0xff]
  %v363 = vld [vmem:[%s1 + $0x720] sm:$0xff]
  %v364 = vld [vmem:[%s1 + $0x728] sm:$0xff]
  %v365 = vld [vmem:[%s1 + $0x730] sm:$0xff]
  %v366 = vld [vmem:[%s1 + $0x738] sm:$0xff]
  %v367 = vld [vmem:[%s1 + $0x740] sm:$0xff]
  %v368 = vld [vmem:[%s1 + $0x748] sm:$0xff]
  %v369 = vld [vmem:[%s1 + $0x750] sm:$0xff]
  %v370 = vld [vmem:[%s1 + $0x758] sm:$0xff]
  %v371 = vld [vmem:[%s1 + $0x760] sm:$0xff]
  %v372 = vld [vmem:[%s1 + $0x768] sm:$0xff]
  %v373 = vld [vmem:[%s1 + $0x770] sm:$0xff]
  %v374 = vld [vmem:[%s1 + $0x778] sm:$0xff]
  %v375 = vld [vmem:[%s1 + $0x780] sm:$0xff]
  %v376 = vld [vmem:[%s1 + $0x788] sm:$0xff]
  %v377 = vld [vmem:[%s1 + $0x790] sm:$0xff]
  %v378 = vld [vmem:[%s1 + $0x798] sm:$0xff]
  %v379 = vld [vmem:[%s1 + $0x7a0] sm:$0xff]
  %v380 = vld [vmem:[%s1 + $0x7a8] sm:$0xff]
  %v381 = vld [vmem:[%s1 + $0x7b0] sm:$0xff]
  %v382 = vld [vmem:[%s1 + $0x7b8] sm:$0xff]
  %v383 = vld [vmem:[%s1 + $0x7c0] sm:$0xff]
  %v384 = vld [vmem:[%s1 + $0x7c8] sm:$0xff]
  %v385 = vld [vmem:[%s1 + $0x7d0] sm:$0xff]
  %v386 = vld [vmem:[%s1 + $0x7d8] sm:$0xff]
  %v387 = vld [vmem:[%s1 + $0x7e0] sm:$0xff]
  %v388 = vld [vmem:[%s1 + $0x7e8] sm:$0xff]
  %v389 = vld [vmem:[%s1 + $0x7f0] sm:$0xff]
  %v390 = vld [vmem:[%s1 + $0x7f8] sm:$0xff]
  %v391 = vld [vmem:[%s1 + $0x800] sm:$0xff]
  %v392 = vld [vmem:[%s1 + $0x808] sm:$0xff]
  %v393 = vld [vmem:[%s1 + $0x810] sm:$0xff]
  %v394 = vld [vmem:[%s1 + $0x818] sm:$0xff]
  %v395 = vld [vmem:[%s1 + $0x820] sm:$0xff]
  %v396 = vld [vmem:[%s1 + $0x828] sm:$0xff]
  %v397 = vld [vmem:[%s1 + $0x830] sm:$0xff]
  %v398 = vld [vmem:[%s1 + $0x838] sm:$0xff]
  %v399 = vld [vmem:[%s1 + $0x840] sm:$0xff]
  %v400 = vld [vmem:[%s1 + $0x848] sm:$0xff]
  %v401 = vld [vmem:[%s1 + $0x850] sm:$0xff]
  %v402 = vld [vmem:[%s1 + $0x858] sm:$0xff]
  %v403 = vld [vmem:[%s1 + $0x860] sm:$0xff]
  %v404 = vld [vmem:[%s1 + $0x868] sm:$0xff]
  %v405 = vld [vmem:[%s1 + $0x870] sm:$0xff]
  %v406 = vld [vmem:[%s1 + $0x878] sm:$0xff]
  %v407 = vld [vmem:[%s1 + $0x880] sm:$0xff]
  %v408 = vld [vmem:[%s1 + $0x888] sm:$0xff]
  %v409 = vld [vmem:[%s1 + $0x890] sm:$0xff]
  %v410 = vld [vmem:[%s1 + $0x898] sm:$0xff]
  %v411 = vld [vmem:[%s1 + $0x8a0] sm:$0xff]
  %v412 = vld [vmem:[%s1 + $0x8a8] sm:$0xff]
  %v413 = vld [vmem:[%s1 + $0x8b0] sm:$0xff]
  %v414 = vld [vmem:[%s1 + $0x8b8] sm:$0xff]
  %v415 = vld [vmem:[%s1 + $0x8c0] sm:$0xff]
  %v416 = vld [vmem:[%s1 + $0x8c8] sm:$0xff]
  %v417 = vld [vmem:[%s1 + $0x8d0] sm:$0xff]
  %v418 = vld [vmem:[%s1 + $0x8d8] sm:$0xff]
  %v419 = vld [vmem:[%s1 + $0x8e0] sm:$0xff]
  %v420 = vld [vmem:[%s1 + $0x8e8] sm:$0xff]
  %v421 = vld [vmem:[%s1 + $0x8f0] sm:$0xff]
  %v422 = vld [vmem:[%s1 + $0x8f8] sm:$0xff]
  %v423 = vld [vmem:[%s1 + $0x900] sm:$0xff]
  %v424 = vld [vmem:[%s1 + $0x908] sm:$0xff]
  %v425 = vld [vmem:[%s1 + $0x910] sm:$0xff]
  %v426 = vld [vmem:[%s1 + $0x918] sm:$0xff]
  %v427 = vld [vmem:[%s1 + $0x920] sm:$0xff]
  %v428 = vld [vmem:[%s1 + $0x928] sm:$0xff]
  %v429 = vld [vmem:[%s1 + $0x930] sm:$0xff]
  %v430 = vld [vmem:[%s1 + $0x938] sm:$0xff]
  %v431 = vld [vmem:[%s1 + $0x940] sm:$0xff]
  %v432 = vld [vmem:[%s1 + $0x948] sm:$0xff]
  %v433 = vld [vmem:[%s1 + $0x950] sm:$0xff]
  %v434 = vld [vmem:[%s1 + $0x958] sm:$0xff]
  %v435 = vld [vmem:[%s1 + $0x960] sm:$0xff]
  %v436 = vld [vmem:[%s1 + $0x968] sm:$0xff]
  %v437 = vld [vmem:[%s1 + $0x970] sm:$0xff]
  %v438 = vld [vmem:[%s1 + $0x978] sm:$0xff]
  %v439 = vld [vmem:[%s1 + $0x980] sm:$0xff]
  %v440 = vld [vmem:[%s1 + $0x988] sm:$0xff]
  %v441 = vld [vmem:[%s1 + $0x990] sm:$0xff]
  %v442 = vld [vmem:[%s1 + $0x998] sm:$0xff]
  %v443 = vld [vmem:[%s1 + $0x9a0] sm:$0xff]
  %v444 = vld [vmem:[%s1 + $0x9a8] sm:$0xff]
  %v445 = vld [vmem:[%s1 + $0x9b0] sm:$0xff]
  %v446 = vld [vmem:[%s1 + $0x9b8] sm:$0xff]
  %v447 = vld [vmem:[%s1 + $0x9c0] sm:$0xff]
  %v448 = vld [vmem:[%s1 + $0x9c8] sm:$0xff]
  %v449 = vld [vmem:[%s1 + $0x9d0] sm:$0xff]
  %v450 = vld [vmem:[%s1 + $0x9d8] sm:$0xff]
  %v451 = vld [vmem:[%s1 + $0x9e0] sm:$0xff]
  %v452 = vld [vmem:[%s1 + $0x9e8] sm:$0xff]
  %v453 = vld [vmem:[%s1 + $0x9f0] sm:$0xff]
  %v454 = vld [vmem:[%s1 + $0x9f8] sm:$0xff]
  %v455 = vld [vmem:[%s1 + $0xa00] sm:$0xff]
  %v456 = vld [vmem:[%s1 + $0xa08] sm:$0xff]
  %v457 = vld [vmem:[%s1 + $0xa10] sm:$0xff]
  %v458 = vld [vmem:[%s1 + $0xa18] sm:$0xff]
  %v459 = vld [vmem:[%s1 + $0xa20] sm:$0xff]
  %v460 = vld [vmem:[%s1 + $0xa28] sm:$0xff]
  %v461 = vld [vmem:[%s1 + $0xa30] sm:$0xff]
  %v462 = vld [vmem:[%s1 + $0xa38] sm:$0xff]
  %v463 = vld [vmem:[%s1 + $0xa40] sm:$0xff]
  %v464 = vld [vmem:[%s1 + $0xa48] sm:$0xff]
  %v465 = vld [vmem:[%s1 + $0xa50] sm:$0xff]
  %v466 = vld [vmem:[%s1 + $0xa58] sm:$0xff]
  %v467 = vld [vmem:[%s1 + $0xa60] sm:$0xff]
  %v468 = vld [vmem:[%s1 + $0xa68] sm:$0xff]
  %v469 = vld [vmem:[%s1 + $0xa70] sm:$0xff]
  %v470 = vld [vmem:[%s1 + $0xa78] sm:$0xff]
  %v471 = vld [vmem:[%s1 + $0xa80] sm:$0xff]
  %v472 = vld [vmem:[%s1 + $0xa88] sm:$0xff]
  %v473 = vld [vmem:[%s1 + $0xa90] sm:$0xff]
  %v474 = vld [vmem:[%s1 + $0xa98] sm:$0xff]
  %v475 = vld [vmem:[%s1 + $0xaa0] sm:$0xff]
  %v476 = vld [vmem:[%s1 + $0xaa8] sm:$0xff]
  %v477 = vld [vmem:[%s1 + $0xab0] sm:$0xff]
  %v478 = vld [vmem:[%s1 + $0xab8] sm:$0xff]
  %v479 = vld [vmem:[%s1 + $0xac0] sm:$0xff]
  %v480 = vld [vmem:[%s1 + $0xac8] sm:$0xff]
  %v481 = vld [vmem:[%s1 + $0xad0] sm:$0xff]
  %v482 = vld [vmem:[%s1 + $0xad8] sm:$0xff]
  %v483 = vld [vmem:[%s1 + $0xae0] sm:$0xff]
  %v484 = vld [vmem:[%s1 + $0xae8] sm:$0xff]
  %v485 = vld [vmem:[%s1 + $0xaf0] sm:$0xff]
  %v486 = vld [vmem:[%s1 + $0xaf8] sm:$0xff]
  %v487 = vld [vmem:[%s1 + $0xb00] sm:$0xff]
  %v488 = vld [vmem:[%s1 + $0xb08] sm:$0xff]
  %v489 = vld [vmem:[%s1 + $0xb10] sm:$0xff]
  %v490 = vld [vmem:[%s1 + $0xb18] sm:$0xff]
  %v491 = vld [vmem:[%s1 + $0xb20] sm:$0xff]
  %v492 = vld [vmem:[%s1 + $0xb28] sm:$0xff]
  %v493 = vld [vmem:[%s1 + $0xb30] sm:$0xff]
  %v494 = vld [vmem:[%s1 + $0xb38] sm:$0xff]
  %v495 = vld [vmem:[%s1 + $0xb40] sm:$0xff]
  %v496 = vld [vmem:[%s1 + $0xb48] sm:$0xff]
  %v497 = vld [vmem:[%s1 + $0xb50] sm:$0xff]
  %v498 = vld [vmem:[%s1 + $0xb58] sm:$0xff]
  %v499 = vld [vmem:[%s1 + $0xb60] sm:$0xff]
  %v500 = vld [vmem:[%s1 + $0xb68] sm:$0xff]
  %v501 = vld [vmem:[%s1 + $0xb70] sm:$0xff]
  %v502 = vld [vmem:[%s1 + $0xb78] sm:$0xff]
  %v503 = vld [vmem:[%s1 + $0xb80] sm:$0xff]
  %v504 = vld [vmem:[%s1 + $0xb88] sm:$0xff]
  %v505 = vld [vmem:[%s1 + $0xb90] sm:$0xff]
  %v506 = vld [vmem:[%s1 + $0xb98] sm:$0xff]
  %v507 = vld [vmem:[%s1 + $0xba0] sm:$0xff]
  %v508 = vld [vmem:[%s1 + $0xba8] sm:$0xff]
  %v509 = vld [vmem:[%s1 + $0xbb0] sm:$0xff]
  %v510 = vld [vmem:[%s1 + $0xbb8] sm:$0xff]
  %v511 = vld [vmem:[%s1 + $0xbc0] sm:$0xff]
  %v512 = vld [vmem:[%s1 + $0xbc8] sm:$0xff]
  %v513 = vld [vmem:[%s1 + $0xbd0] sm:$0xff]
  %v514 = vld [vmem:[%s1 + $0xbd8] sm:$0xff]
  %v515 = vld [vmem:[%s1 + $0xbe0] sm:$0xff]
  %v516 = vld [vmem:[%s1 + $0xbe8] sm:$0xff]
  %v517 = vld [vmem:[%s1 + $0xbf0] sm:$0xff]
  %v518 = vld [vmem:[%s1 + $0xbf8] sm:$0xff]
  %v519 = vld [vmem:[%s1 + $0xc00] sm:$0xff]
  %v520 = vld [vmem:[%s1 + $0xc08] sm:$0xff]
  %v521 = vld [vmem:[%s1 + $0xc10] sm:$0xff]
  %v522 = vld [vmem:[%s1 + $0xc18] sm:$0xff]
  %v523 = vld [vmem:[%s1 + $0xc20] sm:$0xff]
  %v524 = vld [vmem:[%s1 + $0xc28] sm:$0xff]
  %v525 = vld [vmem:[%s1 + $0xc30] sm:$0xff]
  %v526 = vld [vmem:[%s1 + $0xc38] sm:$0xff]
  %v527 = vld [vmem:[%s1 + $0xc40] sm:$0xff]
  %v528 = vld [vmem:[%s1 + $0xc48] sm:$0xff]
  %v529 = vld [vmem:[%s1 + $0xc50] sm:$0xff]
  %v530 = vld [vmem:[%s1 + $0xc58] sm:$0xff]
  %v531 = vld [vmem:[%s1 + $0xc60] sm:$0xff]
  %v532 = vld [vmem:[%s1 + $0xc68] sm:$0xff]
  %v533 = vld [vmem:[%s1 + $0xc70] sm:$0xff]
  %v534 = vld [vmem:[%s1 + $0xc78] sm:$0xff]
  %v535 = vld [vmem:[%s1 + $0xc80] sm:$0xff]
  %v536 = vld [vmem:[%s1 + $0xc88] sm:$0xff]
  %v537 = vld [vmem:[%s1 + $0xc90] sm:$0xff]
  %v538 = vld [vmem:[%s1 + $0xc98] sm:$0xff]
  %v539 = vld [vmem:[%s1 + $0xca0] sm:$0xff]
  %v540 = vld [vmem:[%s1 + $0xca8] sm:$0xff]
  %v541 = vld [vmem:[%s1 + $0xcb0] sm:$0xff]
  %v542 = vld [vmem:[%s1 + $0xcb8] sm:$0xff]
  %v543 = vld [vmem:[%s1 + $0xcc0] sm:$0xff]
  %v544 = vld [vmem:[%s1 + $0xcc8] sm:$0xff]
  %v545 = vld [vmem:[%s1 + $0xcd0] sm:$0xff]
  %v546 = vld [vmem:[%s1 + $0xcd8] sm:$0xff]
  %v547 = vld [vmem:[%s1 + $0xce0] sm:$0xff]
  %v548 = vld [vmem:[%s1 + $0xce8] sm:$0xff]
  %v549 = vld [vmem:[%s1 + $0xcf0] sm:$0xff]
  %v550 = vld [vmem:[%s1 + $0xcf8] sm:$0xff]
  %v551 = vld [vmem:[%s1 + $0xd00] sm:$0xff]
  %v552 = vld [vmem:[%s1 + $0xd08] sm:$0xff]
  %v553 = vld [vmem:[%s1 + $0xd10] sm:$0xff]
  %v554 = vld [vmem:[%s1 + $0xd18] sm:$0xff]
  %v555 = vld [vmem:[%s1 + $0xd20] sm:$0xff]
  %v556 = vld [vmem:[%s1 + $0xd28] sm:$0xff]
  %v557 = vld [vmem:[%s1 + $0xd30] sm:$0xff]
  %v558 = vld [vmem:[%s1 + $0xd38] sm:$0xff]
  %v559 = vld [vmem:[%s1 + $0xd40] sm:$0xff]
  %v560 = vld [vmem:[%s1 + $0xd48] sm:$0xff]
  %v561 = vld [vmem:[%s1 + $0xd50] sm:$0xff]
  %v562 = vld [vmem:[%s1 + $0xd58] sm:$0xff]
  %v563 = vld [vmem:[%s1 + $0xd60] sm:$0xff]
  %v564 = vld [vmem:[%s1 + $0xd68] sm:$0xff]
  %v565 = vld [vmem:[%s1 + $0xd70] sm:$0xff]
  %v566 = vld [vmem:[%s1 + $0xd78] sm:$0xff]
  %v567 = vld [vmem:[%s1 + $0xd80] sm:$0xff]
  %v568 = vld [vmem:[%s1 + $0xd88] sm:$0xff]
  %v569 = vld [vmem:[%s1 + $0xd90] sm:$0xff]
  %v570 = vld [vmem:[%s1 + $0xd98] sm:$0xff]
  %v571 = vld [vmem:[%s1 + $0xda0] sm:$0xff]
  %v572 = vld [vmem:[%s1 + $0xda8] sm:$0xff]
  %v573 = vld [vmem:[%s1 + $0xdb0] sm:$0xff]
  %v574 = vld [vmem:[%s1 + $0xdb8] sm:$0xff]
  %v575 = vld [vmem:[%s1 + $0xdc0] sm:$0xff]
  %v576 = vld [vmem:[%s1 + $0xdc8] sm:$0xff]
  %v577 = vld [vmem:[%s1 + $0xdd0] sm:$0xff]
  %v578 = vld [vmem:[%s1 + $0xdd8] sm:$0xff]
  %v579 = vld [vmem:[%s1 + $0xde0] sm:$0xff]
  %v580 = vld [vmem:[%s1 + $0xde8] sm:$0xff]
  %v581 = vld [vmem:[%s1 + $0xdf0] sm:$0xff]
  %v582 = vld [vmem:[%s1 + $0xdf8] sm:$0xff]
  %v583 = vld [vmem:[%s1 + $0xe00] sm:$0xff]
  %v584 = vld [vmem:[%s1 + $0xe08] sm:$0xff]
  %v585 = vld [vmem:[%s1 + $0xe10] sm:$0xff]
  %v586 = vld [vmem:[%s1 + $0xe18] sm:$0xff]
  %v587 = vld [vmem:[%s1 + $0xe20] sm:$0xff]
  %v588 = vld [vmem:[%s1 + $0xe28] sm:$0xff]
  %v589 = vld [vmem:[%s1 + $0xe30] sm:$0xff]
  %v590 = vld [vmem:[%s1 + $0xe38] sm:$0xff]
  %v591 = vld [vmem:[%s1 + $0xe40] sm:$0xff]
  %v592 = vld [vmem:[%s1 + $0xe48] sm:$0xff]
  %v593 = vld [vmem:[%s1 + $0xe50] sm:$0xff]
  %v594 = vld [vmem:[%s1 + $0xe58] sm:$0xff]
  %v595 = vld [vmem:[%s1 + $0xe60] sm:$0xff]
  %v596 = vld [vmem:[%s1 + $0xe68] sm:$0xff]
  %v597 = vld [vmem:[%s1 + $0xe70] sm:$0xff]
  %v598 = vld [vmem:[%s1 + $0xe78] sm:$0xff]
  %v599 = vld [vmem:[%s1 + $0xe80] sm:$0xff]
  %v600 = vld [vmem:[%s1 + $0xe88] sm:$0xff]
  %v601 = vld [vmem:[%s1 + $0xe90] sm:$0xff]
  %v602 = vld [vmem:[%s1 + $0xe98] sm:$0xff]
  %v603 = vld [vmem:[%s1 + $0xea0] sm:$0xff]
  %v604 = vld [vmem:[%s1 + $0xea8] sm:$0xff]
  %v605 = vld [vmem:[%s1 + $0xeb0] sm:$0xff]
  %v606 = vld [vmem:[%s1 + $0xeb8] sm:$0xff]
  %v607 = vld [vmem:[%s1 + $0xec0] sm:$0xff]
  %v608 = vld [vmem:[%s1 + $0xec8] sm:$0xff]
  %v609 = vld [vmem:[%s1 + $0xed0] sm:$0xff]
  %v610 = vld [vmem:[%s1 + $0xed8] sm:$0xff]
  %v611 = vld [vmem:[%s1 + $0xee0] sm:$0xff]
  %v612 = vld [vmem:[%s1 + $0xee8] sm:$0xff]
  %v613 = vld [vmem:[%s1 + $0xef0] sm:$0xff]
  %v614 = vld [vmem:[%s1 + $0xef8] sm:$0xff]
  %v615 = vld [vmem:[%s1 + $0xf00] sm:$0xff]
  %v616 = vld [vmem:[%s1 + $0xf08] sm:$0xff]
  %v617 = vld [vmem:[%s1 + $0xf10] sm:$0xff]
  %v618 = vld [vmem:[%s1 + $0xf18] sm:$0xff]
  %v619 = vld [vmem:[%s1 + $0xf20] sm:$0xff]
  %v620 = vld [vmem:[%s1 + $0xf28] sm:$0xff]
  %v621 = vld [vmem:[%s1 + $0xf30] sm:$0xff]
  %v622 = vld [vmem:[%s1 + $0xf38] sm:$0xff]
  %v623 = vld [vmem:[%s1 + $0xf40] sm:$0xff]
  %v624 = vld [vmem:[%s1 + $0xf48] sm:$0xff]
  %v625 = vld [vmem:[%s1 + $0xf50] sm:$0xff]
  %v626 = vld [vmem:[%s1 + $0xf58] sm:$0xff]
  %v627 = vld [vmem:[%s1 + $0xf60] sm:$0xff]
  %v628 = vld [vmem:[%s1 + $0xf68] sm:$0xff]
  %v629 = vld [vmem:[%s1 + $0xf70] sm:$0xff]
  %v630 = vld [vmem:[%s1 + $0xf78] sm:$0xff]
  %v631 = vld [vmem:[%s1 + $0xf80] sm:$0xff]
  %v632 = vld [vmem:[%s1 + $0xf88] sm:$0xff]
  %v633 = vld [vmem:[%s1 + $0xf90] sm:$0xff]
  %v634 = vld [vmem:[%s1 + $0xf98] sm:$0xff]
  %v635 = vld [vmem:[%s1 + $0xfa0] sm:$0xff]
  %v636 = vld [vmem:[%s1 + $0xfa8] sm:$0xff]
  %v637 = vld [vmem:[%s1 + $0xfb0] sm:$0xff]
  %v638 = vld [vmem:[%s1 + $0xfb8] sm:$0xff]
  %v639 = vld [vmem:[%s1 + $0xfc0] sm:$0xff]
  %v640 = vld [vmem:[%s1 + $0xfc8] sm:$0xff]
  %v641 = vld [vmem:[%s1 + $0xfd0] sm:$0xff]
  %v642 = vld [vmem:[%s1 + $0xfd8] sm:$0xff]
  %v643 = vld [vmem:[%s1 + $0xfe0] sm:$0xff]
  %v644 = vld [vmem:[%s1 + $0xfe8] sm:$0xff]
  %v645 = vld [vmem:[%s1 + $0xff0] sm:$0xff]
  %v646 = vld [vmem:[%s1 + $0xff8] sm:$0xff]
  %v647 = vld [vmem:[%s1 + $0x1000] sm:$0xff]
  %v648 = vld [vmem:[%s1 + $0x1008] sm:$0xff]
  %v649 = vld [vmem:[%s1 + $0x1010] sm:$0xff]
  %v650 = vld [vmem:[%s1 + $0x1018] sm:$0xff]
  %v651 = vld [vmem:[%s1 + $0x1020] sm:$0xff]
  %v652 = vld [vmem:[%s1 + $0x1028] sm:$0xff]
  %v653 = vld [vmem:[%s1 + $0x1030] sm:$0xff]
  %v654 = vld [vmem:[%s1 + $0x1038] sm:$0xff]
  %v655 = vld [vmem:[%s1 + $0x1040] sm:$0xff]
  %v656 = vld [vmem:[%s1 + $0x1048] sm:$0xff]
  %v657 = vld [vmem:[%s1 + $0x1050] sm:$0xff]
  %v658 = vld [vmem:[%s1 + $0x1058] sm:$0xff]
  %v659 = vld [vmem:[%s1 + $0x1060] sm:$0xff]
  %v660 = vld [vmem:[%s1 + $0x1068] sm:$0xff]
  %v661 = vld [vmem:[%s1 + $0x1070] sm:$0xff]
  %v662 = vld [vmem:[%s1 + $0x1078] sm:$0xff]
  %v663 = vld [vmem:[%s1 + $0x1080] sm:$0xff]
  %v664 = vld [vmem:[%s1 + $0x1088] sm:$0xff]
  %v665 = vld [vmem:[%s1 + $0x1090] sm:$0xff]
  %v666 = vld [vmem:[%s1 + $0x1098] sm:$0xff]
  %v667 = vld [vmem:[%s1 + $0x10a0] sm:$0xff]
  %v668 = vld [vmem:[%s1 + $0x10a8] sm:$0xff]
  %v669 = vld [vmem:[%s1 + $0x10b0] sm:$0xff]
  %v670 = vld [vmem:[%s1 + $0x10b8] sm:$0xff]
  %v671 = vld [vmem:[%s1 + $0x10c0] sm:$0xff]
  %v672 = vld [vmem:[%s1 + $0x10c8] sm:$0xff]
  %v673 = vld [vmem:[%s1 + $0x10d0] sm:$0xff]
  %v674 = vld [vmem:[%s1 + $0x10d8] sm:$0xff]
  %v675 = vld [vmem:[%s1 + $0x10e0] sm:$0xff]
  %v676 = vld [vmem:[%s1 + $0x10e8] sm:$0xff]
  %v677 = vld [vmem:[%s1 + $0x10f0] sm:$0xff]
  %v678 = vld [vmem:[%s1 + $0x10f8] sm:$0xff]
  %v679 = vld [vmem:[%s1 + $0x1100] sm:$0xff]
  %v680 = vld [vmem:[%s1 + $0x1108] sm:$0xff]
  %v681 = vld [vmem:[%s1 + $0x1110] sm:$0xff]
  %v682 = vld [vmem:[%s1 + $0x1118] sm:$0xff]
  %v683 = vld [vmem:[%s1 + $0x1120] sm:$0xff]
  %v684 = vld [vmem:[%s1 + $0x1128] sm:$0xff]
  %v685 = vld [vmem:[%s1 + $0x1130] sm:$0xff]
  %v686 = vld [vmem:[%s1 + $0x1138] sm:$0xff]
  %v687 = vld [vmem:[%s1 + $0x1140] sm:$0xff]
  %v688 = vld [vmem:[%s1 + $0x1148] sm:$0xff]
  %v689 = vld [vmem:[%s1 + $0x1150] sm:$0xff]
  %v690 = vld [vmem:[%s1 + $0x1158] sm:$0xff]
  %v691 = vld [vmem:[%s1 + $0x1160] sm:$0xff]
  %v692 = vld [vmem:[%s1 + $0x1168] sm:$0xff]
  %v693 = vld [vmem:[%s1 + $0x1170] sm:$0xff]
  %v694 = vld [vmem:[%s1 + $0x1178] sm:$0xff]
  %v695 = vld [vmem:[%s1 + $0x1180] sm:$0xff]
  %v696 = vld [vmem:[%s1 + $0x1188] sm:$0xff]
  %v697 = vld [vmem:[%s1 + $0x1190] sm:$0xff]
  %v698 = vld [vmem:[%s1 + $0x1198] sm:$0xff]
  %v699 = vld [vmem:[%s1 + $0x11a0] sm:$0xff]
  %v700 = vld [vmem:[%s1 + $0x11a8] sm:$0xff]
  %v701 = vld [vmem:[%s1 + $0x11b0] sm:$0xff]
  %v702 = vld [vmem:[%s1 + $0x11b8] sm:$0xff]
  %v703 = vld [vmem:[%s1 + $0x11c0] sm:$0xff]
  %v704 = vld [vmem:[%s1 + $0x11c8] sm:$0xff]
  %v705 = vld [vmem:[%s1 + $0x11d0] sm:$0xff]
  %v706 = vld [vmem:[%s1 + $0x11d8] sm:$0xff]
  %v707 = vld [vmem:[%s1 + $0x11e0] sm:$0xff]
  %v708 = vld [vmem:[%s1 + $0x11e8] sm:$0xff]
  %v709 = vld [vmem:[%s1 + $0x11f0] sm:$0xff]
  %v710 = vld [vmem:[%s1 + $0x11f8] sm:$0xff]
  %v711 = vld [vmem:[%s1 + $0x1200] sm:$0xff]
  %v712 = vld [vmem:[%s1 + $0x1208] sm:$0xff]
  %v713 = vld [vmem:[%s1 + $0x1210] sm:$0xff]
  %v714 = vld [vmem:[%s1 + $0x1218] sm:$0xff]
  %v715 = vld [vmem:[%s1 + $0x1220] sm:$0xff]
  %v716 = vld [vmem:[%s1 + $0x1228] sm:$0xff]
  %v717 = vld [vmem:[%s1 + $0x1230] sm:$0xff]
  %v718 = vld [vmem:[%s1 + $0x1238] sm:$0xff]
  %v719 = vld [vmem:[%s1 + $0x1240] sm:$0xff]
  %v720 = vld [vmem:[%s1 + $0x1248] sm:$0xff]
  %v721 = vld [vmem:[%s1 + $0x1250] sm:$0xff]
  %v722 = vld [vmem:[%s1 + $0x1258] sm:$0xff]
  %v723 = vld [vmem:[%s1 + $0x1260] sm:$0xff]
  %v724 = vld [vmem:[%s1 + $0x1268] sm:$0xff]
  %v725 = vld [vmem:[%s1 + $0x1270] sm:$0xff]
  %v726 = vld [vmem:[%s1 + $0x1278] sm:$0xff]
  %v727 = vld [vmem:[%s1 + $0x1280] sm:$0xff]
  %v728 = vld [vmem:[%s1 + $0x1288] sm:$0xff]
  %v729 = vld [vmem:[%s1 + $0x1290] sm:$0xff]
  %v730 = vld [vmem:[%s1 + $0x1298] sm:$0xff]
  %v731 = vld [vmem:[%s1 + $0x12a0] sm:$0xff]
  %v732 = vld [vmem:[%s1 + $0x12a8] sm:$0xff]
  %v733 = vld [vmem:[%s1 + $0x12b0] sm:$0xff]
  %v734 = vld [vmem:[%s1 + $0x12b8] sm:$0xff]
  %v735 = vld [vmem:[%s1 + $0x12c0] sm:$0xff]
  %v736 = vld [vmem:[%s1 + $0x12c8] sm:$0xff]
  %v737 = vld [vmem:[%s1 + $0x12d0] sm:$0xff]
  %v738 = vld [vmem:[%s1 + $0x12d8] sm:$0xff]
  %v739 = vld [vmem:[%s1 + $0x12e0] sm:$0xff]
  %v740 = vld [vmem:[%s1 + $0x12e8] sm:$0xff]
  %v741 = vld [vmem:[%s1 + $0x12f0] sm:$0xff]
  %v742 = vld [vmem:[%s1 + $0x12f8] sm:$0xff]
  %v743 = vld [vmem:[%s1 + $0x1300] sm:$0xff]
  %v744 = vld [vmem:[%s1 + $0x1308] sm:$0xff]
  %v745 = vld [vmem:[%s1 + $0x1310] sm:$0xff]
  %v746 = vld [vmem:[%s1 + $0x1318] sm:$0xff]
  %v747 = vld [vmem:[%s1 + $0x1320] sm:$0xff]
  %v748 = vld [vmem:[%s1 + $0x1328] sm:$0xff]
  %v749 = vld [vmem:[%s1 + $0x1330] sm:$0xff]
  %v750 = vld [vmem:[%s1 + $0x1338] sm:$0xff]
  %v751 = vld [vmem:[%s1 + $0x1340] sm:$0xff]
  %v752 = vld [vmem:[%s1 + $0x1348] sm:$0xff]
  %v753 = vld [vmem:[%s1 + $0x1350] sm:$0xff]
  %v754 = vld [vmem:[%s1 + $0x1358] sm:$0xff]
  %v755 = vld [vmem:[%s1 + $0x1360] sm:$0xff]
  %v756 = vld [vmem:[%s1 + $0x1368] sm:$0xff]
  %v757 = vld [vmem:[%s1 + $0x1370] sm:$0xff]
  %v758 = vld [vmem:[%s1 + $0x1378] sm:$0xff]
  %v759 = vld [vmem:[%s1 + $0x1380] sm:$0xff]
  %v760 = vld [vmem:[%s1 + $0x1388] sm:$0xff]
  %v761 = vld [vmem:[%s1 + $0x1390] sm:$0xff]
  %v762 = vld [vmem:[%s1 + $0x1398] sm:$0xff]
  %v763 = vld [vmem:[%s1 + $0x13a0] sm:$0xff]
  %v764 = vld [vmem:[%s1 + $0x13a8] sm:$0xff]
  %v765 = vld [vmem:[%s1 + $0x13b0] sm:$0xff]
  %v766 = vld [vmem:[%s1 + $0x13b8] sm:$0xff]
  %v767 = vld [vmem:[%s1 + $0x13c0] sm:$0xff]
  %v768 = vld [vmem:[%s1 + $0x13c8] sm:$0xff]
  %v769 = vld [vmem:[%s1 + $0x13d0] sm:$0xff]
  %v770 = vld [vmem:[%s1 + $0x13d8] sm:$0xff]
  %v771 = vld [vmem:[%s1 + $0x13e0] sm:$0xff]
  %v772 = vld [vmem:[%s1 + $0x13e8] sm:$0xff]
  %v773 = vld [vmem:[%s1 + $0x13f0] sm:$0xff]
  %v774 = vld [vmem:[%s1 + $0x13f8] sm:$0xff]
  %v775 = vld [vmem:[%s1 + $0x1400] sm:$0xff]
  %v776 = vld [vmem:[%s1 + $0x1408] sm:$0xff]
  %v777 = vld [vmem:[%s1 + $0x1410] sm:$0xff]
  %v778 = vld [vmem:[%s1 + $0x1418] sm:$0xff]
  %v779 = vld [vmem:[%s1 + $0x1420] sm:$0xff]
  %v780 = vld [vmem:[%s1 + $0x1428] sm:$0xff]
  %v781 = vld [vmem:[%s1 + $0x1430] sm:$0xff]
  %v782 = vld [vmem:[%s1 + $0x1438] sm:$0xff]
  %v783 = vld [vmem:[%s1 + $0x1440] sm:$0xff]
  %v784 = vld [vmem:[%s1 + $0x1448] sm:$0xff]
  %v785 = vld [vmem:[%s1 + $0x1450] sm:$0xff]
  %v786 = vld [vmem:[%s1 + $0x1458] sm:$0xff]
  %v787 = vld [vmem:[%s1 + $0x1460] sm:$0xff]
  %v788 = vld [vmem:[%s1 + $0x1468] sm:$0xff]
  %v789 = vld [vmem:[%s1 + $0x1470] sm:$0xff]
  %v790 = vld [vmem:[%s1 + $0x1478] sm:$0xff]
  %v791 = vld [vmem:[%s1 + $0x1480] sm:$0xff]
  %v792 = vld [vmem:[%s1 + $0x1488] sm:$0xff]
  %v793 = vld [vmem:[%s1 + $0x1490] sm:$0xff]
  %v794 = vld [vmem:[%s1 + $0x1498] sm:$0xff]
  %v795 = vld [vmem:[%s1 + $0x14a0] sm:$0xff]
  %v796 = vld [vmem:[%s1 + $0x14a8] sm:$0xff]
  %v797 = vld [vmem:[%s1 + $0x14b0] sm:$0xff]
  %v798 = vld [vmem:[%s1 + $0x14b8] sm:$0xff]
  %v799 = vld [vmem:[%s1 + $0x14c0] sm:$0xff]
  %v800 = vld [vmem:[%s1 + $0x14c8] sm:$0xff]
  %v801 = vld [vmem:[%s1 + $0x14d0] sm:$0xff]
  %v802 = vld [vmem:[%s1 + $0x14d8] sm:$0xff]
  %v803 = vld [vmem:[%s1 + $0x14e0] sm:$0xff]
  %v804 = vld [vmem:[%s1 + $0x14e8] sm:$0xff]
  %v805 = vld [vmem:[%s1 + $0x14f0] sm:$0xff]
  %v806 = vld [vmem:[%s1 + $0x14f8] sm:$0xff]
  %v807 = vld [vmem:[%s1 + $0x1500] sm:$0xff]
  %v808 = vld [vmem:[%s1 + $0x1508] sm:$0xff]
  %v809 = vld [vmem:[%s1 + $0x1510] sm:$0xff]
  %v810 = vld [vmem:[%s1 + $0x1518] sm:$0xff]
  %v811 = vld [vmem:[%s1 + $0x1520] sm:$0xff]
  %v812 = vld [vmem:[%s1 + $0x1528] sm:$0xff]
  %v813 = vld [vmem:[%s1 + $0x1530] sm:$0xff]
  %v814 = vld [vmem:[%s1 + $0x1538] sm:$0xff]
  %v815 = vld [vmem:[%s1 + $0x1540] sm:$0xff]
  %v816 = vld [vmem:[%s1 + $0x1548] sm:$0xff]
  %v817 = vld [vmem:[%s1 + $0x1550] sm:$0xff]
  %v818 = vld [vmem:[%s1 + $0x1558] sm:$0xff]
  %v819 = vld [vmem:[%s1 + $0x1560] sm:$0xff]
  %v820 = vld [vmem:[%s1 + $0x1568] sm:$0xff]
  %v821 = vld [vmem:[%s1 + $0x1570] sm:$0xff]
  %v822 = vld [vmem:[%s1 + $0x1578] sm:$0xff]
  %v823 = vld [vmem:[%s1 + $0x1580] sm:$0xff]
  %v824 = vld [vmem:[%s1 + $0x1588] sm:$0xff]
  %v825 = vld [vmem:[%s1 + $0x1590] sm:$0xff]
  %v826 = vld [vmem:[%s1 + $0x1598] sm:$0xff]
  %v827 = vld [vmem:[%s1 + $0x15a0] sm:$0xff]
  %v828 = vld [vmem:[%s1 + $0x15a8] sm:$0xff]
  %v829 = vld [vmem:[%s1 + $0x15b0] sm:$0xff]
  %v830 = vld [vmem:[%s1 + $0x15b8] sm:$0xff]
  %v831 = vld [vmem:[%s1 + $0x15c0] sm:$0xff]
  %v832 = vld [vmem:[%s1 + $0x15c8] sm:$0xff]
  %v833 = vld [vmem:[%s1 + $0x15d0] sm:$0xff]
  %v834 = vld [vmem:[%s1 + $0x15d8] sm:$0xff]
  %v835 = vld [vmem:[%s1 + $0x15e0] sm:$0xff]
  %v836 = vld [vmem:[%s1 + $0x15e8] sm:$0xff]
  %v837 = vld [vmem:[%s1 + $0x15f0] sm:$0xff]
  %v838 = vld [vmem:[%s1 + $0x15f8] sm:$0xff]
  %v839 = vld [vmem:[%s1 + $0x1600] sm:$0xff]
  %v840 = vld [vmem:[%s1 + $0x1608] sm:$0xff]
  %v841 = vld [vmem:[%s1 + $0x1610] sm:$0xff]
  %v842 = vld [vmem:[%s1 + $0x1618] sm:$0xff]
  %v843 = vld [vmem:[%s1 + $0x1620] sm:$0xff]
  %v844 = vld [vmem:[%s1 + $0x1628] sm:$0xff]
  %v845 = vld [vmem:[%s1 + $0x1630] sm:$0xff]
  %v846 = vld [vmem:[%s1 + $0x1638] sm:$0xff]
  %v847 = vld [vmem:[%s1 + $0x1640] sm:$0xff]
  %v848 = vld [vmem:[%s1 + $0x1648] sm:$0xff]
  %v849 = vld [vmem:[%s1 + $0x1650] sm:$0xff]
  %v850 = vld [vmem:[%s1 + $0x1658] sm:$0xff]
  %v851 = vld [vmem:[%s1 + $0x1660] sm:$0xff]
  %v852 = vld [vmem:[%s1 + $0x1668] sm:$0xff]
  %v853 = vld [vmem:[%s1 + $0x1670] sm:$0xff]
  %v854 = vld [vmem:[%s1 + $0x1678] sm:$0xff]
  %v855 = vld [vmem:[%s1 + $0x1680] sm:$0xff]
  %v856 = vld [vmem:[%s1 + $0x1688] sm:$0xff]
  %v857 = vld [vmem:[%s1 + $0x1690] sm:$0xff]
  %v858 = vld [vmem:[%s1 + $0x1698] sm:$0xff]
  %v859 = vld [vmem:[%s1 + $0x16a0] sm:$0xff]
  %v860 = vld [vmem:[%s1 + $0x16a8] sm:$0xff]
  %v861 = vld [vmem:[%s1 + $0x16b0] sm:$0xff]
  %v862 = vld [vmem:[%s1 + $0x16b8] sm:$0xff]
  %v863 = vld [vmem:[%s1 + $0x16c0] sm:$0xff]
  %v864 = vld [vmem:[%s1 + $0x16c8] sm:$0xff]
  %v865 = vld [vmem:[%s1 + $0x16d0] sm:$0xff]
  %v866 = vld [vmem:[%s1 + $0x16d8] sm:$0xff]
  %v867 = vld [vmem:[%s1 + $0x16e0] sm:$0xff]
  %v868 = vld [vmem:[%s1 + $0x16e8] sm:$0xff]
  %v869 = vld [vmem:[%s1 + $0x16f0] sm:$0xff]
  %v870 = vld [vmem:[%s1 + $0x16f8] sm:$0xff]
  %v871 = vld [vmem:[%s1 + $0x1700] sm:$0xff]
  %v872 = vld [vmem:[%s1 + $0x1708] sm:$0xff]
  %v873 = vld [vmem:[%s1 + $0x1710] sm:$0xff]
  %v874 = vld [vmem:[%s1 + $0x1718] sm:$0xff]
  %v875 = vld [vmem:[%s1 + $0x1720] sm:$0xff]
  %v876 = vld [vmem:[%s1 + $0x1728] sm:$0xff]
  %v877 = vld [vmem:[%s1 + $0x1730] sm:$0xff]
  %v878 = vld [vmem:[%s1 + $0x1738] sm:$0xff]
  %v879 = vld [vmem:[%s1 + $0x1740] sm:$0xff]
  %v880 = vld [vmem:[%s1 + $0x1748] sm:$0xff]
  %v881 = vld [vmem:[%s1 + $0x1750] sm:$0xff]
  %v882 = vld [vmem:[%s1 + $0x1758] sm:$0xff]
  %v883 = vld [vmem:[%s1 + $0x1760] sm:$0xff]
  %v884 = vld [vmem:[%s1 + $0x1768] sm:$0xff]
  %v885 = vld [vmem:[%s1 + $0x1770] sm:$0xff]
  %v886 = vld [vmem:[%s1 + $0x1778] sm:$0xff]
  %v887 = vld [vmem:[%s1 + $0x1780] sm:$0xff]
  %v888 = vld [vmem:[%s1 + $0x1788] sm:$0xff]
  %v889 = vld [vmem:[%s1 + $0x1790] sm:$0xff]
  %v890 = vld [vmem:[%s1 + $0x1798] sm:$0xff]
  %v891 = vld [vmem:[%s1 + $0x17a0] sm:$0xff]
  %v892 = vld [vmem:[%s1 + $0x17a8] sm:$0xff]
  %v893 = vld [vmem:[%s1 + $0x17b0] sm:$0xff]
  %v894 = vld [vmem:[%s1 + $0x17b8] sm:$0xff]
  %v895 = vld [vmem:[%s1 + $0x17c0] sm:$0xff]
  %v896 = vld [vmem:[%s1 + $0x17c8] sm:$0xff]
  %v897 = vld [vmem:[%s1 + $0x17d0] sm:$0xff]
  %v898 = vld [vmem:[%s1 + $0x17d8] sm:$0xff]
  %v899 = vld [vmem:[%s1 + $0x17e0] sm:$0xff]
  %v900 = vld [vmem:[%s1 + $0x17e8] sm:$0xff]
  %v901 = vld [vmem:[%s1 + $0x17f0] sm:$0xff]
  %v902 = vld [vmem:[%s1 + $0x17f8] sm:$0xff]
  %v903 = vld [vmem:[%s1 + $0x1800] sm:$0xff]
  %v904 = vld [vmem:[%s1 + $0x1808] sm:$0xff]
  %v905 = vld [vmem:[%s1 + $0x1810] sm:$0xff]
  %v906 = vld [vmem:[%s1 + $0x1818] sm:$0xff]
  %v907 = vld [vmem:[%s1 + $0x1820] sm:$0xff]
  %v908 = vld [vmem:[%s1 + $0x1828] sm:$0xff]
  %v909 = vld [vmem:[%s1 + $0x1830] sm:$0xff]
  %v910 = vld [vmem:[%s1 + $0x1838] sm:$0xff]
  %v911 = vld [vmem:[%s1 + $0x1840] sm:$0xff]
  %v912 = vld [vmem:[%s1 + $0x1848] sm:$0xff]
  %v913 = vld [vmem:[%s1 + $0x1850] sm:$0xff]
  %v914 = vld [vmem:[%s1 + $0x1858] sm:$0xff]
  %v915 = vld [vmem:[%s1 + $0x1860] sm:$0xff]
  %v916 = vld [vmem:[%s1 + $0x1868] sm:$0xff]
  %v917 = vld [vmem:[%s1 + $0x1870] sm:$0xff]
  %v918 = vld [vmem:[%s1 + $0x1878] sm:$0xff]
  %v919 = vld [vmem:[%s1 + $0x1880] sm:$0xff]
  %v920 = vld [vmem:[%s1 + $0x1888] sm:$0xff]
  %v921 = vld [vmem:[%s1 + $0x1890] sm:$0xff]
  %v922 = vld [vmem:[%s1 + $0x1898] sm:$0xff]
  %v923 = vld [vmem:[%s1 + $0x18a0] sm:$0xff]
  %v924 = vld [vmem:[%s1 + $0x18a8] sm:$0xff]
  %v925 = vld [vmem:[%s1 + $0x18b0] sm:$0xff]
  %v926 = vld [vmem:[%s1 + $0x18b8] sm:$0xff]
  %v927 = vld [vmem:[%s1 + $0x18c0] sm:$0xff]
  %v928 = vld [vmem:[%s1 + $0x18c8] sm:$0xff]
  %v929 = vld [vmem:[%s1 + $0x18d0] sm:$0xff]
  %v930 = vld [vmem:[%s1 + $0x18d8] sm:$0xff]
  %v931 = vld [vmem:[%s1 + $0x18e0] sm:$0xff]
  %v932 = vld [vmem:[%s1 + $0x18e8] sm:$0xff]
  %v933 = vld [vmem:[%s1 + $0x18f0] sm:$0xff]
  %v934 = vld [vmem:[%s1 + $0x18f8] sm:$0xff]
  %v935 = vld [vmem:[%s1 + $0x1900] sm:$0xff]
  %v936 = vld [vmem:[%s1 + $0x1908] sm:$0xff]
  %v937 = vld [vmem:[%s1 + $0x1910] sm:$0xff]
  %v938 = vld [vmem:[%s1 + $0x1918] sm:$0xff]
  %v939 = vld [vmem:[%s1 + $0x1920] sm:$0xff]
  %v940 = vld [vmem:[%s1 + $0x1928] sm:$0xff]
  %v941 = vld [vmem:[%s1 + $0x1930] sm:$0xff]
  %v942 = vld [vmem:[%s1 + $0x1938] sm:$0xff]
  %v943 = vld [vmem:[%s1 + $0x1940] sm:$0xff]
  %v944 = vld [vmem:[%s1 + $0x1948] sm:$0xff]
  %v945 = vld [vmem:[%s1 + $0x1950] sm:$0xff]
  %v946 = vld [vmem:[%s1 + $0x1958] sm:$0xff]
  %v947 = vld [vmem:[%s1 + $0x1960] sm:$0xff]
  %v948 = vld [vmem:[%s1 + $0x1968] sm:$0xff]
  %v949 = vld [vmem:[%s1 + $0x1970] sm:$0xff]
  %v950 = vld [vmem:[%s1 + $0x1978] sm:$0xff]
  %v951 = vld [vmem:[%s1 + $0x1980] sm:$0xff]
  %v952 = vld [vmem:[%s1 + $0x1988] sm:$0xff]
  %v953 = vld [vmem:[%s1 + $0x1990] sm:$0xff]
  %v954 = vld [vmem:[%s1 + $0x1998] sm:$0xff]
  %v955 = vld [vmem:[%s1 + $0x19a0] sm:$0xff]
  %v956 = vld [vmem:[%s1 + $0x19a8] sm:$0xff]
  %v957 = vld [vmem:[%s1 + $0x19b0] sm:$0xff]
  %v958 = vld [vmem:[%s1 + $0x19b8] sm:$0xff]
  %v959 = vld [vmem:[%s1 + $0x19c0] sm:$0xff]
  %v960 = vld [vmem:[%s1 + $0x19c8] sm:$0xff]
  %v961 = vld [vmem:[%s1 + $0x19d0] sm:$0xff]
  %v962 = vld [vmem:[%s1 + $0x19d8] sm:$0xff]
  %v963 = vld [vmem:[%s1 + $0x19e0] sm:$0xff]
  %v964 = vld [vmem:[%s1 + $0x19e8] sm:$0xff]
  %v965 = vld [vmem:[%s1 + $0x19f0] sm:$0xff]
  %v966 = vld [vmem:[%s1 + $0x19f8] sm:$0xff]
  %v967 = vld [vmem:[%s1 + $0x1a00] sm:$0xff]
  %v968 = vld [vmem:[%s1 + $0x1a08] sm:$0xff]
  %v969 = vld [vmem:[%s1 + $0x1a10] sm:$0xff]
  %v970 = vld [vmem:[%s1 + $0x1a18] sm:$0xff]
  %v971 = vld [vmem:[%s1 + $0x1a20] sm:$0xff]
  %v972 = vld [vmem:[%s1 + $0x1a28] sm:$0xff]
  %v973 = vld [vmem:[%s1 + $0x1a30] sm:$0xff]
  %v974 = vld [vmem:[%s1 + $0x1a38] sm:$0xff]
  %v975 = vld [vmem:[%s1 + $0x1a40] sm:$0xff]
  %v976 = vld [vmem:[%s1 + $0x1a48] sm:$0xff]
  %v977 = vld [vmem:[%s1 + $0x1a50] sm:$0xff]
  %v978 = vld [vmem:[%s1 + $0x1a58] sm:$0xff]
  %v979 = vld [vmem:[%s1 + $0x1a60] sm:$0xff]
  %v980 = vld [vmem:[%s1 + $0x1a68] sm:$0xff]
  %v981 = vld [vmem:[%s1 + $0x1a70] sm:$0xff]
  %v982 = vld [vmem:[%s1 + $0x1a78] sm:$0xff]
  %v983 = vld [vmem:[%s1 + $0x1a80] sm:$0xff]
  %v984 = vld [vmem:[%s1 + $0x1a88] sm:$0xff]
  %v985 = vld [vmem:[%s1 + $0x1a90] sm:$0xff]
  %v986 = vld [vmem:[%s1 + $0x1a98] sm:$0xff]
  %v987 = vld [vmem:[%s1 + $0x1aa0] sm:$0xff]
  %v988 = vld [vmem:[%s1 + $0x1aa8] sm:$0xff]
  %v989 = vld [vmem:[%s1 + $0x1ab0] sm:$0xff]
  %v990 = vld [vmem:[%s1 + $0x1ab8] sm:$0xff]
  %v991 = vld [vmem:[%s1 + $0x1ac0] sm:$0xff]
  %v992 = vld [vmem:[%s1 + $0x1ac8] sm:$0xff]
  %v993 = vld [vmem:[%s1 + $0x1ad0] sm:$0xff]
  %v994 = vld [vmem:[%s1 + $0x1ad8] sm:$0xff]
  %v995 = vld [vmem:[%s1 + $0x1ae0] sm:$0xff]
  %v996 = vld [vmem:[%s1 + $0x1ae8] sm:$0xff]
  %v997 = vld [vmem:[%s1 + $0x1af0] sm:$0xff]
  %v998 = vld [vmem:[%s1 + $0x1af8] sm:$0xff]
  %v999 = vld [vmem:[%s1 + $0x1b00] sm:$0xff]
  %v1000 = vld [vmem:[%s1 + $0x1b08] sm:$0xff]
  %v1001 = vld [vmem:[%s1 + $0x1b10] sm:$0xff]
  %v1002 = vld [vmem:[%s1 + $0x1b18] sm:$0xff]
  %v1003 = vld [vmem:[%s1 + $0x1b20] sm:$0xff]
  %v1004 = vld [vmem:[%s1 + $0x1b28] sm:$0xff]
  %v1005 = vld [vmem:[%s1 + $0x1b30] sm:$0xff]
  %v1006 = vld [vmem:[%s1 + $0x1b38] sm:$0xff]
  %v1007 = vld [vmem:[%s1 + $0x1b40] sm:$0xff]
  %v1008 = vld [vmem:[%s1 + $0x1b48] sm:$0xff]
  %v1009 = vld [vmem:[%s1 + $0x1b50] sm:$0xff]
  %v1010 = vld [vmem:[%s1 + $0x1b58] sm:$0xff]
  %v1011 = vld [vmem:[%s1 + $0x1b60] sm:$0xff]
  %v1012 = vld [vmem:[%s1 + $0x1b68] sm:$0xff]
  %v1013 = vld [vmem:[%s1 + $0x1b70] sm:$0xff]
  %v1014 = vld [vmem:[%s1 + $0x1b78] sm:$0xff]
  %v1015 = vld [vmem:[%s1 + $0x1b80] sm:$0xff]
  %v1016 = vld [vmem:[%s1 + $0x1b88] sm:$0xff]
  %v1017 = vld [vmem:[%s1 + $0x1b90] sm:$0xff]
  %v1018 = vld [vmem:[%s1 + $0x1b98] sm:$0xff]
  %v1019 = vld [vmem:[%s1 + $0x1ba0] sm:$0xff]
  %v1020 = vld [vmem:[%s1 + $0x1ba8] sm:$0xff]
  %v1021 = vld [vmem:[%s1 + $0x1bb0] sm:$0xff]
  %v1022 = vld [vmem:[%s1 + $0x1bb8] sm:$0xff]
  %v1023 = vld [vmem:[%s1 + $0x1bc0] sm:$0xff]
  %v1024 = vld [vmem:[%s1 + $0x1bc8] sm:$0xff]
  %v1025 = vld [vmem:[%s1 + $0x1bd0] sm:$0xff]
  %v1026 = vld [vmem:[%s1 + $0x1bd8] sm:$0xff]
  %v1027 = vld [vmem:[%s1 + $0x1be0] sm:$0xff]
  %v1028 = vld [vmem:[%s1 + $0x1be8] sm:$0xff]
  %v1029 = vld [vmem:[%s1 + $0x1bf0] sm:$0xff]
  %v1030 = vld [vmem:[%s1 + $0x1bf8] sm:$0xff]
  %v1031 = vld [vmem:[%s1 + $0x1c00] sm:$0xff]
  %v1032 = vld [vmem:[%s1 + $0x1c08] sm:$0xff]
  %v1033 = vld [vmem:[%s1 + $0x1c10] sm:$0xff]
  %v1034 = vld [vmem:[%s1 + $0x1c18] sm:$0xff]
  %v1035 = vld [vmem:[%s1 + $0x1c20] sm:$0xff]
  %v1036 = vld [vmem:[%s1 + $0x1c28] sm:$0xff]
  %v1037 = vld [vmem:[%s1 + $0x1c30] sm:$0xff]
  %v1038 = vld [vmem:[%s1 + $0x1c38] sm:$0xff]
  %v1039 = vld [vmem:[%s1 + $0x1c40] sm:$0xff]
  %v1040 = vld [vmem:[%s1 + $0x1c48] sm:$0xff]
  %v1041 = vld [vmem:[%s1 + $0x1c50] sm:$0xff]
  %v1042 = vld [vmem:[%s1 + $0x1c58] sm:$0xff]
  %v1043 = vld [vmem:[%s1 + $0x1c60] sm:$0xff]
  %v1044 = vld [vmem:[%s1 + $0x1c68] sm:$0xff]
  %v1045 = vld [vmem:[%s1 + $0x1c70] sm:$0xff]
  %v1046 = vld [vmem:[%s1 + $0x1c78] sm:$0xff]
  %v1047 = vld [vmem:[%s1 + $0x1c80] sm:$0xff]
  %v1048 = vld [vmem:[%s1 + $0x1c88] sm:$0xff]
  %v1049 = vld [vmem:[%s1 + $0x1c90] sm:$0xff]
  %v1050 = vld [vmem:[%s1 + $0x1c98] sm:$0xff]
  %v1051 = vld [vmem:[%s1 + $0x1ca0] sm:$0xff]
  %v1052 = vld [vmem:[%s1 + $0x1ca8] sm:$0xff]
  %v1053 = vld [vmem:[%s1 + $0x1cb0] sm:$0xff]
  %v1054 = vld [vmem:[%s1 + $0x1cb8] sm:$0xff]
  %v1055 = vld [vmem:[%s1 + $0x1cc0] sm:$0xff]
  %v1056 = vld [vmem:[%s1 + $0x1cc8] sm:$0xff]
  %v1057 = vld [vmem:[%s1 + $0x1cd0] sm:$0xff]
  %v1058 = vld [vmem:[%s1 + $0x1cd8] sm:$0xff]
  %v1059 = vld [vmem:[%s1 + $0x1ce0] sm:$0xff]
  %v1060 = vld [vmem:[%s1 + $0x1ce8] sm:$0xff]
  %v1061 = vld [vmem:[%s1 + $0x1cf0] sm:$0xff]
  %v1062 = vld [vmem:[%s1 + $0x1cf8] sm:$0xff]
  %v1063 = vld [vmem:[%s1 + $0x1d00] sm:$0xff]
  %v1064 = vld [vmem:[%s1 + $0x1d08] sm:$0xff]
  %v1065 = vld [vmem:[%s1 + $0x1d10] sm:$0xff]
  %v1066 = vld [vmem:[%s1 + $0x1d18] sm:$0xff]
  %v1067 = vld [vmem:[%s1 + $0x1d20] sm:$0xff]
  %v1068 = vld [vmem:[%s1 + $0x1d28] sm:$0xff]
  %v1069 = vld [vmem:[%s1 + $0x1d30] sm:$0xff]
  %v1070 = vld [vmem:[%s1 + $0x1d38] sm:$0xff]
  %v1071 = vld [vmem:[%s1 + $0x1d40] sm:$0xff]
  %v1072 = vld [vmem:[%s1 + $0x1d48] sm:$0xff]
  %v1073 = vld [vmem:[%s1 + $0x1d50] sm:$0xff]
  %v1074 = vld [vmem:[%s1 + $0x1d58] sm:$0xff]
  %v1075 = vld [vmem:[%s1 + $0x1d60] sm:$0xff]
  %v1076 = vld [vmem:[%s1 + $0x1d68] sm:$0xff]
  %v1077 = vld [vmem:[%s1 + $0x1d70] sm:$0xff]
  %v1078 = vld [vmem:[%s1 + $0x1d78] sm:$0xff]
  %v1079 = vld [vmem:[%s1 + $0x1d80] sm:$0xff]
  %v1080 = vld [vmem:[%s1 + $0x1d88] sm:$0xff]
  %v1081 = vld [vmem:[%s1 + $0x1d90] sm:$0xff]
  %v1082 = vld [vmem:[%s1 + $0x1d98] sm:$0xff]
  %v1083 = vld [vmem:[%s1 + $0x1da0] sm:$0xff]
  %v1084 = vld [vmem:[%s1 + $0x1da8] sm:$0xff]
  %v1085 = vld [vmem:[%s1 + $0x1db0] sm:$0xff]
  %v1086 = vld [vmem:[%s1 + $0x1db8] sm:$0xff]
  %v1087 = vld [vmem:[%s1 + $0x1dc0] sm:$0xff]
  %v1088 = vld [vmem:[%s1 + $0x1dc8] sm:$0xff]
  %v1089 = vld [vmem:[%s1 + $0x1dd0] sm:$0xff]
  %v1090 = vld [vmem:[%s1 + $0x1dd8] sm:$0xff]
  %v1091 = vld [vmem:[%s1 + $0x1de0] sm:$0xff]
  %v1092 = vld [vmem:[%s1 + $0x1de8] sm:$0xff]
  %v1093 = vld [vmem:[%s1 + $0x1df0] sm:$0xff]
  %v1094 = vld [vmem:[%s1 + $0x1df8] sm:$0xff]
  %v1095 = vld [vmem:[%s1 + $0x1e00] sm:$0xff]
  %v1096 = vld [vmem:[%s1 + $0x1e08] sm:$0xff]
  %v1097 = vld [vmem:[%s1 + $0x1e10] sm:$0xff]
  %v1098 = vld [vmem:[%s1 + $0x1e18] sm:$0xff]
  %v1099 = vld [vmem:[%s1 + $0x1e20] sm:$0xff]
  %v1100 = vld [vmem:[%s1 + $0x1e28] sm:$0xff]
  %v1101 = vld [vmem:[%s1 + $0x1e30] sm:$0xff]
  %v1102 = vld [vmem:[%s1 + $0x1e38] sm:$0xff]
  %v1103 = vld [vmem:[%s1 + $0x1e40] sm:$0xff]
  %v1104 = vld [vmem:[%s1 + $0x1e48] sm:$0xff]
  %v1105 = vld [vmem:[%s1 + $0x1e50] sm:$0xff]
  %v1106 = vld [vmem:[%s1 + $0x1e58] sm:$0xff]
  %v1107 = vld [vmem:[%s1 + $0x1e60] sm:$0xff]
  %v1108 = vld [vmem:[%s1 + $0x1e68] sm:$0xff]
  %v1109 = vld [vmem:[%s1 + $0x1e70] sm:$0xff]
  %v1110 = vld [vmem:[%s1 + $0x1e78] sm:$0xff]
  %v1111 = vld [vmem:[%s1 + $0x1e80] sm:$0xff]
  %v1112 = vld [vmem:[%s1 + $0x1e88] sm:$0xff]
  %v1113 = vld [vmem:[%s1 + $0x1e90] sm:$0xff]
  %v1114 = vld [vmem:[%s1 + $0x1e98] sm:$0xff]
  %v1115 = vld [vmem:[%s1 + $0x1ea0] sm:$0xff]
  %v1116 = vld [vmem:[%s1 + $0x1ea8] sm:$0xff]
  %v1117 = vld [vmem:[%s1 + $0x1eb0] sm:$0xff]
  %v1118 = vld [vmem:[%s1 + $0x1eb8] sm:$0xff]
  %v1119 = vld [vmem:[%s1 + $0x1ec0] sm:$0xff]
  %v1120 = vld [vmem:[%s1 + $0x1ec8] sm:$0xff]
  %v1121 = vld [vmem:[%s1 + $0x1ed0] sm:$0xff]
  %v1122 = vld [vmem:[%s1 + $0x1ed8] sm:$0xff]
  %v1123 = vld [vmem:[%s1 + $0x1ee0] sm:$0xff]
  %v1124 = vld [vmem:[%s1 + $0x1ee8] sm:$0xff]
  %v1125 = vld [vmem:[%s1 + $0x1ef0] sm:$0xff]
  %v1126 = vld [vmem:[%s1 + $0x1ef8] sm:$0xff]
  %v1127 = vld [vmem:[%s1 + $0x1f00] sm:$0xff]
  %v1128 = vld [vmem:[%s1 + $0x1f08] sm:$0xff]
  %v1129 = vld [vmem:[%s1 + $0x1f10] sm:$0xff]
  %v1130 = vld [vmem:[%s1 + $0x1f18] sm:$0xff]
  %v1131 = vld [vmem:[%s1 + $0x1f20] sm:$0xff]
  %v1132 = vld [vmem:[%s1 + $0x1f28] sm:$0xff]
  %v1133 = vld [vmem:[%s1 + $0x1f30] sm:$0xff]
  %v1134 = vld [vmem:[%s1 + $0x1f38] sm:$0xff]
  %v1135 = vld [vmem:[%s1 + $0x1f40] sm:$0xff]
  %v1136 = vld [vmem:[%s1 + $0x1f48] sm:$0xff]
  %v1137 = vld [vmem:[%s1 + $0x1f50] sm:$0xff]
  %v1138 = vld [vmem:[%s1 + $0x1f58] sm:$0xff]
  %v1139 = vld [vmem:[%s1 + $0x1f60] sm:$0xff]
  %v1140 = vld [vmem:[%s1 + $0x1f68] sm:$0xff]
  %v1141 = vld [vmem:[%s1 + $0x1f70] sm:$0xff]
  %v1142 = vld [vmem:[%s1 + $0x1f78] sm:$0xff]
  %v1143 = vld [vmem:[%s1 + $0x1f80] sm:$0xff]
  %v1144 = vld [vmem:[%s1 + $0x1f88] sm:$0xff]
  %v1145 = vld [vmem:[%s1 + $0x1f90] sm:$0xff]
  %v1146 = vld [vmem:[%s1 + $0x1f98] sm:$0xff]
  %v1147 = vld [vmem:[%s1 + $0x1fa0] sm:$0xff]
  %v1148 = vld [vmem:[%s1 + $0x1fa8] sm:$0xff]
  %v1149 = vld [vmem:[%s1 + $0x1fb0] sm:$0xff]
  %v1150 = vld [vmem:[%s1 + $0x1fb8] sm:$0xff]
  %v1151 = vld [vmem:[%s1 + $0x1fc0] sm:$0xff]
  %v1152 = vld [vmem:[%s1 + $0x1fc8] sm:$0xff]
  %v1153 = vld [vmem:[%s1 + $0x1fd0] sm:$0xff]
  %v1154 = vld [vmem:[%s1 + $0x1fd8] sm:$0xff]
  %v1155 = vld [vmem:[%s1 + $0x1fe0] sm:$0xff]
  %v1156 = vld [vmem:[%s1 + $0x1fe8] sm:$0xff]
  %v1157 = vld [vmem:[%s1 + $0x1ff0] sm:$0xff]
  %v1158 = vld [vmem:[%s1 + $0x1ff8] sm:$0xff]
  %v1159 = vld [vmem:[%s2] sm:$0xff]
  %v1161 = vlaneseq
  %v1162 = vshrl.u32 %v1161, 7
  %v1163 = vsub.s32 0, %v1162
  %v1164 = vrot.slane %v1159, %v1163
  %v1165 = vlaneseq
  %v1166 = vshrl.u32 %v1165, 7
  %v1167 = vsub.s32 1, %v1166
  %v1168 = vrot.slane %v1159, %v1167
  %v1169 = vlaneseq
  %v1170 = vshrl.u32 %v1169, 7
  %v1171 = vsub.s32 2, %v1170
  %v1172 = vrot.slane %v1159, %v1171
  %v1173 = vlaneseq
  %v1174 = vshrl.u32 %v1173, 7
  %v1175 = vsub.s32 3, %v1174
  %v1176 = vrot.slane %v1159, %v1175
  %v1177 = vlaneseq
  %v1178 = vshrl.u32 %v1177, 7
  %v1179 = vsub.s32 4, %v1178
  %v1180 = vrot.slane %v1159, %v1179
  %v1181 = vlaneseq
  %v1182 = vshrl.u32 %v1181, 7
  %v1183 = vsub.s32 5, %v1182
  %v1184 = vrot.slane %v1159, %v1183
  %v1185 = vlaneseq
  %v1186 = vshrl.u32 %v1185, 7
  %v1187 = vsub.s32 6, %v1186
  %v1188 = vrot.slane %v1159, %v1187
  %v1189 = vlaneseq
  %v1190 = vshrl.u32 %v1189, 7
  %v1191 = vsub.s32 7, %v1190
  %v1192 = vrot.slane %v1159, %v1191
  %v2225 = vunpack.c.l.b16 %v135
  %v2226 = vunpack.c.h.b16 %v135
  %v2227 = vunpack.c.l.b16 %v136
  %v2228 = vunpack.c.h.b16 %v136
  %v2229 = vunpack.c.l.b16 %v137
  %v2230 = vunpack.c.h.b16 %v137
  %v2231 = vunpack.c.l.b16 %v138
  %v2232 = vunpack.c.h.b16 %v138
  %v2233 = vunpack.c.l.b16 %v139
  %v2234 = vunpack.c.h.b16 %v139
  %v2235 = vunpack.c.l.b16 %v140
  %v2236 = vunpack.c.h.b16 %v140
  %v2237 = vunpack.c.l.b16 %v141
  %v2238 = vunpack.c.h.b16 %v141
  %v2239 = vunpack.c.l.b16 %v142
  %v2240 = vunpack.c.h.b16 %v142
  %v2241 = vunpack.c.l.b16 %v143
  %v2242 = vunpack.c.h.b16 %v143
  %v2243 = vunpack.c.l.b16 %v144
  %v2244 = vunpack.c.h.b16 %v144
  %v2245 = vunpack.c.l.b16 %v145
  %v2246 = vunpack.c.h.b16 %v145
  %v2247 = vunpack.c.l.b16 %v146
  %v2248 = vunpack.c.h.b16 %v146
  %v2249 = vunpack.c.l.b16 %v147
  %v2250 = vunpack.c.h.b16 %v147
  %v2251 = vunpack.c.l.b16 %v148
  %v2252 = vunpack.c.h.b16 %v148
  %v2253 = vunpack.c.l.b16 %v149
  %v2254 = vunpack.c.h.b16 %v149
  %v2255 = vunpack.c.l.b16 %v150
  %v2256 = vunpack.c.h.b16 %v150
  %v2257 = vunpack.c.l.b16 %v151
  %v2258 = vunpack.c.h.b16 %v151
  %v2259 = vunpack.c.l.b16 %v152
  %v2260 = vunpack.c.h.b16 %v152
  %v2261 = vunpack.c.l.b16 %v153
  %v2262 = vunpack.c.h.b16 %v153
  %v2263 = vunpack.c.l.b16 %v154
  %v2264 = vunpack.c.h.b16 %v154
  %v2265 = vunpack.c.l.b16 %v155
  %v2266 = vunpack.c.h.b16 %v155
  %v2267 = vunpack.c.l.b16 %v156
  %v2268 = vunpack.c.h.b16 %v156
  %v2269 = vunpack.c.l.b16 %v157
  %v2270 = vunpack.c.h.b16 %v157
  %v2271 = vunpack.c.l.b16 %v158
  %v2272 = vunpack.c.h.b16 %v158
  %v2273 = vunpack.c.l.b16 %v159
  %v2274 = vunpack.c.h.b16 %v159
  %v2275 = vunpack.c.l.b16 %v160
  %v2276 = vunpack.c.h.b16 %v160
  %v2277 = vunpack.c.l.b16 %v161
  %v2278 = vunpack.c.h.b16 %v161
  %v2279 = vunpack.c.l.b16 %v162
  %v2280 = vunpack.c.h.b16 %v162
  %v2281 = vunpack.c.l.b16 %v163
  %v2282 = vunpack.c.h.b16 %v163
  %v2283 = vunpack.c.l.b16 %v164
  %v2284 = vunpack.c.h.b16 %v164
  %v2285 = vunpack.c.l.b16 %v165
  %v2286 = vunpack.c.h.b16 %v165
  %v2287 = vunpack.c.l.b16 %v166
  %v2288 = vunpack.c.h.b16 %v166
  %v2289 = vunpack.c.l.b16 %v167
  %v2290 = vunpack.c.h.b16 %v167
  %v2291 = vunpack.c.l.b16 %v168
  %v2292 = vunpack.c.h.b16 %v168
  %v2293 = vunpack.c.l.b16 %v169
  %v2294 = vunpack.c.h.b16 %v169
  %v2295 = vunpack.c.l.b16 %v170
  %v2296 = vunpack.c.h.b16 %v170
  %v2297 = vunpack.c.l.b16 %v171
  %v2298 = vunpack.c.h.b16 %v171
  %v2299 = vunpack.c.l.b16 %v172
  %v2300 = vunpack.c.h.b16 %v172
  %v2301 = vunpack.c.l.b16 %v173
  %v2302 = vunpack.c.h.b16 %v173
  %v2303 = vunpack.c.l.b16 %v174
  %v2304 = vunpack.c.h.b16 %v174
  %v2305 = vunpack.c.l.b16 %v175
  %v2306 = vunpack.c.h.b16 %v175
  %v2307 = vunpack.c.l.b16 %v176
  %v2308 = vunpack.c.h.b16 %v176
  %v2309 = vunpack.c.l.b16 %v177
  %v2310 = vunpack.c.h.b16 %v177
  %v2311 = vunpack.c.l.b16 %v178
  %v2312 = vunpack.c.h.b16 %v178
  %v2313 = vunpack.c.l.b16 %v179
  %v2314 = vunpack.c.h.b16 %v179
  %v2315 = vunpack.c.l.b16 %v180
  %v2316 = vunpack.c.h.b16 %v180
  %v2317 = vunpack.c.l.b16 %v181
  %v2318 = vunpack.c.h.b16 %v181
  %v2319 = vunpack.c.l.b16 %v182
  %v2320 = vunpack.c.h.b16 %v182
  %v2321 = vunpack.c.l.b16 %v183
  %v2322 = vunpack.c.h.b16 %v183
  %v2323 = vunpack.c.l.b16 %v184
  %v2324 = vunpack.c.h.b16 %v184
  %v2325 = vunpack.c.l.b16 %v185
  %v2326 = vunpack.c.h.b16 %v185
  %v2327 = vunpack.c.l.b16 %v186
  %v2328 = vunpack.c.h.b16 %v186
  %v2329 = vunpack.c.l.b16 %v187
  %v2330 = vunpack.c.h.b16 %v187
  %v2331 = vunpack.c.l.b16 %v188
  %v2332 = vunpack.c.h.b16 %v188
  %v2333 = vunpack.c.l.b16 %v189
  %v2334 = vunpack.c.h.b16 %v189
  %v2335 = vunpack.c.l.b16 %v190
  %v2336 = vunpack.c.h.b16 %v190
  %v2337 = vunpack.c.l.b16 %v191
  %v2338 = vunpack.c.h.b16 %v191
  %v2339 = vunpack.c.l.b16 %v192
  %v2340 = vunpack.c.h.b16 %v192
  %v2341 = vunpack.c.l.b16 %v193
  %v2342 = vunpack.c.h.b16 %v193
  %v2343 = vunpack.c.l.b16 %v194
  %v2344 = vunpack.c.h.b16 %v194
  %v2345 = vunpack.c.l.b16 %v195
  %v2346 = vunpack.c.h.b16 %v195
  %v2347 = vunpack.c.l.b16 %v196
  %v2348 = vunpack.c.h.b16 %v196
  %v2349 = vunpack.c.l.b16 %v197
  %v2350 = vunpack.c.h.b16 %v197
  %v2351 = vunpack.c.l.b16 %v198
  %v2352 = vunpack.c.h.b16 %v198
  %v2353 = vunpack.c.l.b16 %v199
  %v2354 = vunpack.c.h.b16 %v199
  %v2355 = vunpack.c.l.b16 %v200
  %v2356 = vunpack.c.h.b16 %v200
  %v2357 = vunpack.c.l.b16 %v201
  %v2358 = vunpack.c.h.b16 %v201
  %v2359 = vunpack.c.l.b16 %v202
  %v2360 = vunpack.c.h.b16 %v202
  %v2361 = vunpack.c.l.b16 %v203
  %v2362 = vunpack.c.h.b16 %v203
  %v2363 = vunpack.c.l.b16 %v204
  %v2364 = vunpack.c.h.b16 %v204
  %v2365 = vunpack.c.l.b16 %v205
  %v2366 = vunpack.c.h.b16 %v205
  %v2367 = vunpack.c.l.b16 %v206
  %v2368 = vunpack.c.h.b16 %v206
  %v2369 = vunpack.c.l.b16 %v207
  %v2370 = vunpack.c.h.b16 %v207
  %v2371 = vunpack.c.l.b16 %v208
  %v2372 = vunpack.c.h.b16 %v208
  %v2373 = vunpack.c.l.b16 %v209
  %v2374 = vunpack.c.h.b16 %v209
  %v2375 = vunpack.c.l.b16 %v210
  %v2376 = vunpack.c.h.b16 %v210
  %v2377 = vunpack.c.l.b16 %v211
  %v2378 = vunpack.c.h.b16 %v211
  %v2379 = vunpack.c.l.b16 %v212
  %v2380 = vunpack.c.h.b16 %v212
  %v2381 = vunpack.c.l.b16 %v213
  %v2382 = vunpack.c.h.b16 %v213
  %v2383 = vunpack.c.l.b16 %v214
  %v2384 = vunpack.c.h.b16 %v214
  %v2385 = vunpack.c.l.b16 %v215
  %v2386 = vunpack.c.h.b16 %v215
  %v2387 = vunpack.c.l.b16 %v216
  %v2388 = vunpack.c.h.b16 %v216
  %v2389 = vunpack.c.l.b16 %v217
  %v2390 = vunpack.c.h.b16 %v217
  %v2391 = vunpack.c.l.b16 %v218
  %v2392 = vunpack.c.h.b16 %v218
  %v2393 = vunpack.c.l.b16 %v219
  %v2394 = vunpack.c.h.b16 %v219
  %v2395 = vunpack.c.l.b16 %v220
  %v2396 = vunpack.c.h.b16 %v220
  %v2397 = vunpack.c.l.b16 %v221
  %v2398 = vunpack.c.h.b16 %v221
  %v2399 = vunpack.c.l.b16 %v222
  %v2400 = vunpack.c.h.b16 %v222
  %v2401 = vunpack.c.l.b16 %v223
  %v2402 = vunpack.c.h.b16 %v223
  %v2403 = vunpack.c.l.b16 %v224
  %v2404 = vunpack.c.h.b16 %v224
  %v2405 = vunpack.c.l.b16 %v225
  %v2406 = vunpack.c.h.b16 %v225
  %v2407 = vunpack.c.l.b16 %v226
  %v2408 = vunpack.c.h.b16 %v226
  %v2409 = vunpack.c.l.b16 %v227
  %v2410 = vunpack.c.h.b16 %v227
  %v2411 = vunpack.c.l.b16 %v228
  %v2412 = vunpack.c.h.b16 %v228
  %v2413 = vunpack.c.l.b16 %v229
  %v2414 = vunpack.c.h.b16 %v229
  %v2415 = vunpack.c.l.b16 %v230
  %v2416 = vunpack.c.h.b16 %v230
  %v2417 = vunpack.c.l.b16 %v231
  %v2418 = vunpack.c.h.b16 %v231
  %v2419 = vunpack.c.l.b16 %v232
  %v2420 = vunpack.c.h.b16 %v232
  %v2421 = vunpack.c.l.b16 %v233
  %v2422 = vunpack.c.h.b16 %v233
  %v2423 = vunpack.c.l.b16 %v234
  %v2424 = vunpack.c.h.b16 %v234
  %v2425 = vunpack.c.l.b16 %v235
  %v2426 = vunpack.c.h.b16 %v235
  %v2427 = vunpack.c.l.b16 %v236
  %v2428 = vunpack.c.h.b16 %v236
  %v2429 = vunpack.c.l.b16 %v237
  %v2430 = vunpack.c.h.b16 %v237
  %v2431 = vunpack.c.l.b16 %v238
  %v2432 = vunpack.c.h.b16 %v238
  %v2433 = vunpack.c.l.b16 %v239
  %v2434 = vunpack.c.h.b16 %v239
  %v2435 = vunpack.c.l.b16 %v240
  %v2436 = vunpack.c.h.b16 %v240
  %v2437 = vunpack.c.l.b16 %v241
  %v2438 = vunpack.c.h.b16 %v241
  %v2439 = vunpack.c.l.b16 %v242
  %v2440 = vunpack.c.h.b16 %v242
  %v2441 = vunpack.c.l.b16 %v243
  %v2442 = vunpack.c.h.b16 %v243
  %v2443 = vunpack.c.l.b16 %v244
  %v2444 = vunpack.c.h.b16 %v244
  %v2445 = vunpack.c.l.b16 %v245
  %v2446 = vunpack.c.h.b16 %v245
  %v2447 = vunpack.c.l.b16 %v246
  %v2448 = vunpack.c.h.b16 %v246
  %v2449 = vunpack.c.l.b16 %v247
  %v2450 = vunpack.c.h.b16 %v247
  %v2451 = vunpack.c.l.b16 %v248
  %v2452 = vunpack.c.h.b16 %v248
  %v2453 = vunpack.c.l.b16 %v249
  %v2454 = vunpack.c.h.b16 %v249
  %v2455 = vunpack.c.l.b16 %v250
  %v2456 = vunpack.c.h.b16 %v250
  %v2457 = vunpack.c.l.b16 %v251
  %v2458 = vunpack.c.h.b16 %v251
  %v2459 = vunpack.c.l.b16 %v252
  %v2460 = vunpack.c.h.b16 %v252
  %v2461 = vunpack.c.l.b16 %v253
  %v2462 = vunpack.c.h.b16 %v253
  %v2463 = vunpack.c.l.b16 %v254
  %v2464 = vunpack.c.h.b16 %v254
  %v2465 = vunpack.c.l.b16 %v255
  %v2466 = vunpack.c.h.b16 %v255
  %v2467 = vunpack.c.l.b16 %v256
  %v2468 = vunpack.c.h.b16 %v256
  %v2469 = vunpack.c.l.b16 %v257
  %v2470 = vunpack.c.h.b16 %v257
  %v2471 = vunpack.c.l.b16 %v258
  %v2472 = vunpack.c.h.b16 %v258
  %v2473 = vunpack.c.l.b16 %v259
  %v2474 = vunpack.c.h.b16 %v259
  %v2475 = vunpack.c.l.b16 %v260
  %v2476 = vunpack.c.h.b16 %v260
  %v2477 = vunpack.c.l.b16 %v261
  %v2478 = vunpack.c.h.b16 %v261
  %v2479 = vunpack.c.l.b16 %v262
  %v2480 = vunpack.c.h.b16 %v262
  %v2481 = vunpack.c.l.b16 %v263
  %v2482 = vunpack.c.h.b16 %v263
  %v2483 = vunpack.c.l.b16 %v264
  %v2484 = vunpack.c.h.b16 %v264
  %v2485 = vunpack.c.l.b16 %v265
  %v2486 = vunpack.c.h.b16 %v265
  %v2487 = vunpack.c.l.b16 %v266
  %v2488 = vunpack.c.h.b16 %v266
  %v2489 = vunpack.c.l.b16 %v267
  %v2490 = vunpack.c.h.b16 %v267
  %v2491 = vunpack.c.l.b16 %v268
  %v2492 = vunpack.c.h.b16 %v268
  %v2493 = vunpack.c.l.b16 %v269
  %v2494 = vunpack.c.h.b16 %v269
  %v2495 = vunpack.c.l.b16 %v270
  %v2496 = vunpack.c.h.b16 %v270
  %v2497 = vunpack.c.l.b16 %v271
  %v2498 = vunpack.c.h.b16 %v271
  %v2499 = vunpack.c.l.b16 %v272
  %v2500 = vunpack.c.h.b16 %v272
  %v2501 = vunpack.c.l.b16 %v273
  %v2502 = vunpack.c.h.b16 %v273
  %v2503 = vunpack.c.l.b16 %v274
  %v2504 = vunpack.c.h.b16 %v274
  %v2505 = vunpack.c.l.b16 %v275
  %v2506 = vunpack.c.h.b16 %v275
  %v2507 = vunpack.c.l.b16 %v276
  %v2508 = vunpack.c.h.b16 %v276
  %v2509 = vunpack.c.l.b16 %v277
  %v2510 = vunpack.c.h.b16 %v277
  %v2511 = vunpack.c.l.b16 %v278
  %v2512 = vunpack.c.h.b16 %v278
  %v2513 = vunpack.c.l.b16 %v279
  %v2514 = vunpack.c.h.b16 %v279
  %v2515 = vunpack.c.l.b16 %v280
  %v2516 = vunpack.c.h.b16 %v280
  %v2517 = vunpack.c.l.b16 %v281
  %v2518 = vunpack.c.h.b16 %v281
  %v2519 = vunpack.c.l.b16 %v282
  %v2520 = vunpack.c.h.b16 %v282
  %v2521 = vunpack.c.l.b16 %v283
  %v2522 = vunpack.c.h.b16 %v283
  %v2523 = vunpack.c.l.b16 %v284
  %v2524 = vunpack.c.h.b16 %v284
  %v2525 = vunpack.c.l.b16 %v285
  %v2526 = vunpack.c.h.b16 %v285
  %v2527 = vunpack.c.l.b16 %v286
  %v2528 = vunpack.c.h.b16 %v286
  %v2529 = vunpack.c.l.b16 %v287
  %v2530 = vunpack.c.h.b16 %v287
  %v2531 = vunpack.c.l.b16 %v288
  %v2532 = vunpack.c.h.b16 %v288
  %v2533 = vunpack.c.l.b16 %v289
  %v2534 = vunpack.c.h.b16 %v289
  %v2535 = vunpack.c.l.b16 %v290
  %v2536 = vunpack.c.h.b16 %v290
  %v2537 = vunpack.c.l.b16 %v291
  %v2538 = vunpack.c.h.b16 %v291
  %v2539 = vunpack.c.l.b16 %v292
  %v2540 = vunpack.c.h.b16 %v292
  %v2541 = vunpack.c.l.b16 %v293
  %v2542 = vunpack.c.h.b16 %v293
  %v2543 = vunpack.c.l.b16 %v294
  %v2544 = vunpack.c.h.b16 %v294
  %v2545 = vunpack.c.l.b16 %v295
  %v2546 = vunpack.c.h.b16 %v295
  %v2547 = vunpack.c.l.b16 %v296
  %v2548 = vunpack.c.h.b16 %v296
  %v2549 = vunpack.c.l.b16 %v297
  %v2550 = vunpack.c.h.b16 %v297
  %v2551 = vunpack.c.l.b16 %v298
  %v2552 = vunpack.c.h.b16 %v298
  %v2553 = vunpack.c.l.b16 %v299
  %v2554 = vunpack.c.h.b16 %v299
  %v2555 = vunpack.c.l.b16 %v300
  %v2556 = vunpack.c.h.b16 %v300
  %v2557 = vunpack.c.l.b16 %v301
  %v2558 = vunpack.c.h.b16 %v301
  %v2559 = vunpack.c.l.b16 %v302
  %v2560 = vunpack.c.h.b16 %v302
  %v2561 = vunpack.c.l.b16 %v303
  %v2562 = vunpack.c.h.b16 %v303
  %v2563 = vunpack.c.l.b16 %v304
  %v2564 = vunpack.c.h.b16 %v304
  %v2565 = vunpack.c.l.b16 %v305
  %v2566 = vunpack.c.h.b16 %v305
  %v2567 = vunpack.c.l.b16 %v306
  %v2568 = vunpack.c.h.b16 %v306
  %v2569 = vunpack.c.l.b16 %v307
  %v2570 = vunpack.c.h.b16 %v307
  %v2571 = vunpack.c.l.b16 %v308
  %v2572 = vunpack.c.h.b16 %v308
  %v2573 = vunpack.c.l.b16 %v309
  %v2574 = vunpack.c.h.b16 %v309
  %v2575 = vunpack.c.l.b16 %v310
  %v2576 = vunpack.c.h.b16 %v310
  %v2577 = vunpack.c.l.b16 %v311
  %v2578 = vunpack.c.h.b16 %v311
  %v2579 = vunpack.c.l.b16 %v312
  %v2580 = vunpack.c.h.b16 %v312
  %v2581 = vunpack.c.l.b16 %v313
  %v2582 = vunpack.c.h.b16 %v313
  %v2583 = vunpack.c.l.b16 %v314
  %v2584 = vunpack.c.h.b16 %v314
  %v2585 = vunpack.c.l.b16 %v315
  %v2586 = vunpack.c.h.b16 %v315
  %v2587 = vunpack.c.l.b16 %v316
  %v2588 = vunpack.c.h.b16 %v316
  %v2589 = vunpack.c.l.b16 %v317
  %v2590 = vunpack.c.h.b16 %v317
  %v2591 = vunpack.c.l.b16 %v318
  %v2592 = vunpack.c.h.b16 %v318
  %v2593 = vunpack.c.l.b16 %v319
  %v2594 = vunpack.c.h.b16 %v319
  %v2595 = vunpack.c.l.b16 %v320
  %v2596 = vunpack.c.h.b16 %v320
  %v2597 = vunpack.c.l.b16 %v321
  %v2598 = vunpack.c.h.b16 %v321
  %v2599 = vunpack.c.l.b16 %v322
  %v2600 = vunpack.c.h.b16 %v322
  %v2601 = vunpack.c.l.b16 %v323
  %v2602 = vunpack.c.h.b16 %v323
  %v2603 = vunpack.c.l.b16 %v324
  %v2604 = vunpack.c.h.b16 %v324
  %v2605 = vunpack.c.l.b16 %v325
  %v2606 = vunpack.c.h.b16 %v325
  %v2607 = vunpack.c.l.b16 %v326
  %v2608 = vunpack.c.h.b16 %v326
  %v2609 = vunpack.c.l.b16 %v327
  %v2610 = vunpack.c.h.b16 %v327
  %v2611 = vunpack.c.l.b16 %v328
  %v2612 = vunpack.c.h.b16 %v328
  %v2613 = vunpack.c.l.b16 %v329
  %v2614 = vunpack.c.h.b16 %v329
  %v2615 = vunpack.c.l.b16 %v330
  %v2616 = vunpack.c.h.b16 %v330
  %v2617 = vunpack.c.l.b16 %v331
  %v2618 = vunpack.c.h.b16 %v331
  %v2619 = vunpack.c.l.b16 %v332
  %v2620 = vunpack.c.h.b16 %v332
  %v2621 = vunpack.c.l.b16 %v333
  %v2622 = vunpack.c.h.b16 %v333
  %v2623 = vunpack.c.l.b16 %v334
  %v2624 = vunpack.c.h.b16 %v334
  %v2625 = vunpack.c.l.b16 %v335
  %v2626 = vunpack.c.h.b16 %v335
  %v2627 = vunpack.c.l.b16 %v336
  %v2628 = vunpack.c.h.b16 %v336
  %v2629 = vunpack.c.l.b16 %v337
  %v2630 = vunpack.c.h.b16 %v337
  %v2631 = vunpack.c.l.b16 %v338
  %v2632 = vunpack.c.h.b16 %v338
  %v2633 = vunpack.c.l.b16 %v339
  %v2634 = vunpack.c.h.b16 %v339
  %v2635 = vunpack.c.l.b16 %v340
  %v2636 = vunpack.c.h.b16 %v340
  %v2637 = vunpack.c.l.b16 %v341
  %v2638 = vunpack.c.h.b16 %v341
  %v2639 = vunpack.c.l.b16 %v342
  %v2640 = vunpack.c.h.b16 %v342
  %v2641 = vunpack.c.l.b16 %v343
  %v2642 = vunpack.c.h.b16 %v343
  %v2643 = vunpack.c.l.b16 %v344
  %v2644 = vunpack.c.h.b16 %v344
  %v2645 = vunpack.c.l.b16 %v345
  %v2646 = vunpack.c.h.b16 %v345
  %v2647 = vunpack.c.l.b16 %v346
  %v2648 = vunpack.c.h.b16 %v346
  %v2649 = vunpack.c.l.b16 %v347
  %v2650 = vunpack.c.h.b16 %v347
  %v2651 = vunpack.c.l.b16 %v348
  %v2652 = vunpack.c.h.b16 %v348
  %v2653 = vunpack.c.l.b16 %v349
  %v2654 = vunpack.c.h.b16 %v349
  %v2655 = vunpack.c.l.b16 %v350
  %v2656 = vunpack.c.h.b16 %v350
  %v2657 = vunpack.c.l.b16 %v351
  %v2658 = vunpack.c.h.b16 %v351
  %v2659 = vunpack.c.l.b16 %v352
  %v2660 = vunpack.c.h.b16 %v352
  %v2661 = vunpack.c.l.b16 %v353
  %v2662 = vunpack.c.h.b16 %v353
  %v2663 = vunpack.c.l.b16 %v354
  %v2664 = vunpack.c.h.b16 %v354
  %v2665 = vunpack.c.l.b16 %v355
  %v2666 = vunpack.c.h.b16 %v355
  %v2667 = vunpack.c.l.b16 %v356
  %v2668 = vunpack.c.h.b16 %v356
  %v2669 = vunpack.c.l.b16 %v357
  %v2670 = vunpack.c.h.b16 %v357
  %v2671 = vunpack.c.l.b16 %v358
  %v2672 = vunpack.c.h.b16 %v358
  %v2673 = vunpack.c.l.b16 %v359
  %v2674 = vunpack.c.h.b16 %v359
  %v2675 = vunpack.c.l.b16 %v360
  %v2676 = vunpack.c.h.b16 %v360
  %v2677 = vunpack.c.l.b16 %v361
  %v2678 = vunpack.c.h.b16 %v361
  %v2679 = vunpack.c.l.b16 %v362
  %v2680 = vunpack.c.h.b16 %v362
  %v2681 = vunpack.c.l.b16 %v363
  %v2682 = vunpack.c.h.b16 %v363
  %v2683 = vunpack.c.l.b16 %v364
  %v2684 = vunpack.c.h.b16 %v364
  %v2685 = vunpack.c.l.b16 %v365
  %v2686 = vunpack.c.h.b16 %v365
  %v2687 = vunpack.c.l.b16 %v366
  %v2688 = vunpack.c.h.b16 %v366
  %v2689 = vunpack.c.l.b16 %v367
  %v2690 = vunpack.c.h.b16 %v367
  %v2691 = vunpack.c.l.b16 %v368
  %v2692 = vunpack.c.h.b16 %v368
  %v2693 = vunpack.c.l.b16 %v369
  %v2694 = vunpack.c.h.b16 %v369
  %v2695 = vunpack.c.l.b16 %v370
  %v2696 = vunpack.c.h.b16 %v370
  %v2697 = vunpack.c.l.b16 %v371
  %v2698 = vunpack.c.h.b16 %v371
  %v2699 = vunpack.c.l.b16 %v372
  %v2700 = vunpack.c.h.b16 %v372
  %v2701 = vunpack.c.l.b16 %v373
  %v2702 = vunpack.c.h.b16 %v373
  %v2703 = vunpack.c.l.b16 %v374
  %v2704 = vunpack.c.h.b16 %v374
  %v2705 = vunpack.c.l.b16 %v375
  %v2706 = vunpack.c.h.b16 %v375
  %v2707 = vunpack.c.l.b16 %v376
  %v2708 = vunpack.c.h.b16 %v376
  %v2709 = vunpack.c.l.b16 %v377
  %v2710 = vunpack.c.h.b16 %v377
  %v2711 = vunpack.c.l.b16 %v378
  %v2712 = vunpack.c.h.b16 %v378
  %v2713 = vunpack.c.l.b16 %v379
  %v2714 = vunpack.c.h.b16 %v379
  %v2715 = vunpack.c.l.b16 %v380
  %v2716 = vunpack.c.h.b16 %v380
  %v2717 = vunpack.c.l.b16 %v381
  %v2718 = vunpack.c.h.b16 %v381
  %v2719 = vunpack.c.l.b16 %v382
  %v2720 = vunpack.c.h.b16 %v382
  %v2721 = vunpack.c.l.b16 %v383
  %v2722 = vunpack.c.h.b16 %v383
  %v2723 = vunpack.c.l.b16 %v384
  %v2724 = vunpack.c.h.b16 %v384
  %v2725 = vunpack.c.l.b16 %v385
  %v2726 = vunpack.c.h.b16 %v385
  %v2727 = vunpack.c.l.b16 %v386
  %v2728 = vunpack.c.h.b16 %v386
  %v2729 = vunpack.c.l.b16 %v387
  %v2730 = vunpack.c.h.b16 %v387
  %v2731 = vunpack.c.l.b16 %v388
  %v2732 = vunpack.c.h.b16 %v388
  %v2733 = vunpack.c.l.b16 %v389
  %v2734 = vunpack.c.h.b16 %v389
  %v2735 = vunpack.c.l.b16 %v390
  %v2736 = vunpack.c.h.b16 %v390
  %v2737 = vunpack.c.l.b16 %v391
  %v2738 = vunpack.c.h.b16 %v391
  %v2739 = vunpack.c.l.b16 %v392
  %v2740 = vunpack.c.h.b16 %v392
  %v2741 = vunpack.c.l.b16 %v393
  %v2742 = vunpack.c.h.b16 %v393
  %v2743 = vunpack.c.l.b16 %v394
  %v2744 = vunpack.c.h.b16 %v394
  %v2745 = vunpack.c.l.b16 %v395
  %v2746 = vunpack.c.h.b16 %v395
  %v2747 = vunpack.c.l.b16 %v396
  %v2748 = vunpack.c.h.b16 %v396
  %v2749 = vunpack.c.l.b16 %v397
  %v2750 = vunpack.c.h.b16 %v397
  %v2751 = vunpack.c.l.b16 %v398
  %v2752 = vunpack.c.h.b16 %v398
  %v2753 = vunpack.c.l.b16 %v399
  %v2754 = vunpack.c.h.b16 %v399
  %v2755 = vunpack.c.l.b16 %v400
  %v2756 = vunpack.c.h.b16 %v400
  %v2757 = vunpack.c.l.b16 %v401
  %v2758 = vunpack.c.h.b16 %v401
  %v2759 = vunpack.c.l.b16 %v402
  %v2760 = vunpack.c.h.b16 %v402
  %v2761 = vunpack.c.l.b16 %v403
  %v2762 = vunpack.c.h.b16 %v403
  %v2763 = vunpack.c.l.b16 %v404
  %v2764 = vunpack.c.h.b16 %v404
  %v2765 = vunpack.c.l.b16 %v405
  %v2766 = vunpack.c.h.b16 %v405
  %v2767 = vunpack.c.l.b16 %v406
  %v2768 = vunpack.c.h.b16 %v406
  %v2769 = vunpack.c.l.b16 %v407
  %v2770 = vunpack.c.h.b16 %v407
  %v2771 = vunpack.c.l.b16 %v408
  %v2772 = vunpack.c.h.b16 %v408
  %v2773 = vunpack.c.l.b16 %v409
  %v2774 = vunpack.c.h.b16 %v409
  %v2775 = vunpack.c.l.b16 %v410
  %v2776 = vunpack.c.h.b16 %v410
  %v2777 = vunpack.c.l.b16 %v411
  %v2778 = vunpack.c.h.b16 %v411
  %v2779 = vunpack.c.l.b16 %v412
  %v2780 = vunpack.c.h.b16 %v412
  %v2781 = vunpack.c.l.b16 %v413
  %v2782 = vunpack.c.h.b16 %v413
  %v2783 = vunpack.c.l.b16 %v414
  %v2784 = vunpack.c.h.b16 %v414
  %v2785 = vunpack.c.l.b16 %v415
  %v2786 = vunpack.c.h.b16 %v415
  %v2787 = vunpack.c.l.b16 %v416
  %v2788 = vunpack.c.h.b16 %v416
  %v2789 = vunpack.c.l.b16 %v417
  %v2790 = vunpack.c.h.b16 %v417
  %v2791 = vunpack.c.l.b16 %v418
  %v2792 = vunpack.c.h.b16 %v418
  %v2793 = vunpack.c.l.b16 %v419
  %v2794 = vunpack.c.h.b16 %v419
  %v2795 = vunpack.c.l.b16 %v420
  %v2796 = vunpack.c.h.b16 %v420
  %v2797 = vunpack.c.l.b16 %v421
  %v2798 = vunpack.c.h.b16 %v421
  %v2799 = vunpack.c.l.b16 %v422
  %v2800 = vunpack.c.h.b16 %v422
  %v2801 = vunpack.c.l.b16 %v423
  %v2802 = vunpack.c.h.b16 %v423
  %v2803 = vunpack.c.l.b16 %v424
  %v2804 = vunpack.c.h.b16 %v424
  %v2805 = vunpack.c.l.b16 %v425
  %v2806 = vunpack.c.h.b16 %v425
  %v2807 = vunpack.c.l.b16 %v426
  %v2808 = vunpack.c.h.b16 %v426
  %v2809 = vunpack.c.l.b16 %v427
  %v2810 = vunpack.c.h.b16 %v427
  %v2811 = vunpack.c.l.b16 %v428
  %v2812 = vunpack.c.h.b16 %v428
  %v2813 = vunpack.c.l.b16 %v429
  %v2814 = vunpack.c.h.b16 %v429
  %v2815 = vunpack.c.l.b16 %v430
  %v2816 = vunpack.c.h.b16 %v430
  %v2817 = vunpack.c.l.b16 %v431
  %v2818 = vunpack.c.h.b16 %v431
  %v2819 = vunpack.c.l.b16 %v432
  %v2820 = vunpack.c.h.b16 %v432
  %v2821 = vunpack.c.l.b16 %v433
  %v2822 = vunpack.c.h.b16 %v433
  %v2823 = vunpack.c.l.b16 %v434
  %v2824 = vunpack.c.h.b16 %v434
  %v2825 = vunpack.c.l.b16 %v435
  %v2826 = vunpack.c.h.b16 %v435
  %v2827 = vunpack.c.l.b16 %v436
  %v2828 = vunpack.c.h.b16 %v436
  %v2829 = vunpack.c.l.b16 %v437
  %v2830 = vunpack.c.h.b16 %v437
  %v2831 = vunpack.c.l.b16 %v438
  %v2832 = vunpack.c.h.b16 %v438
  %v2833 = vunpack.c.l.b16 %v439
  %v2834 = vunpack.c.h.b16 %v439
  %v2835 = vunpack.c.l.b16 %v440
  %v2836 = vunpack.c.h.b16 %v440
  %v2837 = vunpack.c.l.b16 %v441
  %v2838 = vunpack.c.h.b16 %v441
  %v2839 = vunpack.c.l.b16 %v442
  %v2840 = vunpack.c.h.b16 %v442
  %v2841 = vunpack.c.l.b16 %v443
  %v2842 = vunpack.c.h.b16 %v443
  %v2843 = vunpack.c.l.b16 %v444
  %v2844 = vunpack.c.h.b16 %v444
  %v2845 = vunpack.c.l.b16 %v445
  %v2846 = vunpack.c.h.b16 %v445
  %v2847 = vunpack.c.l.b16 %v446
  %v2848 = vunpack.c.h.b16 %v446
  %v2849 = vunpack.c.l.b16 %v447
  %v2850 = vunpack.c.h.b16 %v447
  %v2851 = vunpack.c.l.b16 %v448
  %v2852 = vunpack.c.h.b16 %v448
  %v2853 = vunpack.c.l.b16 %v449
  %v2854 = vunpack.c.h.b16 %v449
  %v2855 = vunpack.c.l.b16 %v450
  %v2856 = vunpack.c.h.b16 %v450
  %v2857 = vunpack.c.l.b16 %v451
  %v2858 = vunpack.c.h.b16 %v451
  %v2859 = vunpack.c.l.b16 %v452
  %v2860 = vunpack.c.h.b16 %v452
  %v2861 = vunpack.c.l.b16 %v453
  %v2862 = vunpack.c.h.b16 %v453
  %v2863 = vunpack.c.l.b16 %v454
  %v2864 = vunpack.c.h.b16 %v454
  %v2865 = vunpack.c.l.b16 %v455
  %v2866 = vunpack.c.h.b16 %v455
  %v2867 = vunpack.c.l.b16 %v456
  %v2868 = vunpack.c.h.b16 %v456
  %v2869 = vunpack.c.l.b16 %v457
  %v2870 = vunpack.c.h.b16 %v457
  %v2871 = vunpack.c.l.b16 %v458
  %v2872 = vunpack.c.h.b16 %v458
  %v2873 = vunpack.c.l.b16 %v459
  %v2874 = vunpack.c.h.b16 %v459
  %v2875 = vunpack.c.l.b16 %v460
  %v2876 = vunpack.c.h.b16 %v460
  %v2877 = vunpack.c.l.b16 %v461
  %v2878 = vunpack.c.h.b16 %v461
  %v2879 = vunpack.c.l.b16 %v462
  %v2880 = vunpack.c.h.b16 %v462
  %v2881 = vunpack.c.l.b16 %v463
  %v2882 = vunpack.c.h.b16 %v463
  %v2883 = vunpack.c.l.b16 %v464
  %v2884 = vunpack.c.h.b16 %v464
  %v2885 = vunpack.c.l.b16 %v465
  %v2886 = vunpack.c.h.b16 %v465
  %v2887 = vunpack.c.l.b16 %v466
  %v2888 = vunpack.c.h.b16 %v466
  %v2889 = vunpack.c.l.b16 %v467
  %v2890 = vunpack.c.h.b16 %v467
  %v2891 = vunpack.c.l.b16 %v468
  %v2892 = vunpack.c.h.b16 %v468
  %v2893 = vunpack.c.l.b16 %v469
  %v2894 = vunpack.c.h.b16 %v469
  %v2895 = vunpack.c.l.b16 %v470
  %v2896 = vunpack.c.h.b16 %v470
  %v2897 = vunpack.c.l.b16 %v471
  %v2898 = vunpack.c.h.b16 %v471
  %v2899 = vunpack.c.l.b16 %v472
  %v2900 = vunpack.c.h.b16 %v472
  %v2901 = vunpack.c.l.b16 %v473
  %v2902 = vunpack.c.h.b16 %v473
  %v2903 = vunpack.c.l.b16 %v474
  %v2904 = vunpack.c.h.b16 %v474
  %v2905 = vunpack.c.l.b16 %v475
  %v2906 = vunpack.c.h.b16 %v475
  %v2907 = vunpack.c.l.b16 %v476
  %v2908 = vunpack.c.h.b16 %v476
  %v2909 = vunpack.c.l.b16 %v477
  %v2910 = vunpack.c.h.b16 %v477
  %v2911 = vunpack.c.l.b16 %v478
  %v2912 = vunpack.c.h.b16 %v478
  %v2913 = vunpack.c.l.b16 %v479
  %v2914 = vunpack.c.h.b16 %v479
  %v2915 = vunpack.c.l.b16 %v480
  %v2916 = vunpack.c.h.b16 %v480
  %v2917 = vunpack.c.l.b16 %v481
  %v2918 = vunpack.c.h.b16 %v481
  %v2919 = vunpack.c.l.b16 %v482
  %v2920 = vunpack.c.h.b16 %v482
  %v2921 = vunpack.c.l.b16 %v483
  %v2922 = vunpack.c.h.b16 %v483
  %v2923 = vunpack.c.l.b16 %v484
  %v2924 = vunpack.c.h.b16 %v484
  %v2925 = vunpack.c.l.b16 %v485
  %v2926 = vunpack.c.h.b16 %v485
  %v2927 = vunpack.c.l.b16 %v486
  %v2928 = vunpack.c.h.b16 %v486
  %v2929 = vunpack.c.l.b16 %v487
  %v2930 = vunpack.c.h.b16 %v487
  %v2931 = vunpack.c.l.b16 %v488
  %v2932 = vunpack.c.h.b16 %v488
  %v2933 = vunpack.c.l.b16 %v489
  %v2934 = vunpack.c.h.b16 %v489
  %v2935 = vunpack.c.l.b16 %v490
  %v2936 = vunpack.c.h.b16 %v490
  %v2937 = vunpack.c.l.b16 %v491
  %v2938 = vunpack.c.h.b16 %v491
  %v2939 = vunpack.c.l.b16 %v492
  %v2940 = vunpack.c.h.b16 %v492
  %v2941 = vunpack.c.l.b16 %v493
  %v2942 = vunpack.c.h.b16 %v493
  %v2943 = vunpack.c.l.b16 %v494
  %v2944 = vunpack.c.h.b16 %v494
  %v2945 = vunpack.c.l.b16 %v495
  %v2946 = vunpack.c.h.b16 %v495
  %v2947 = vunpack.c.l.b16 %v496
  %v2948 = vunpack.c.h.b16 %v496
  %v2949 = vunpack.c.l.b16 %v497
  %v2950 = vunpack.c.h.b16 %v497
  %v2951 = vunpack.c.l.b16 %v498
  %v2952 = vunpack.c.h.b16 %v498
  %v2953 = vunpack.c.l.b16 %v499
  %v2954 = vunpack.c.h.b16 %v499
  %v2955 = vunpack.c.l.b16 %v500
  %v2956 = vunpack.c.h.b16 %v500
  %v2957 = vunpack.c.l.b16 %v501
  %v2958 = vunpack.c.h.b16 %v501
  %v2959 = vunpack.c.l.b16 %v502
  %v2960 = vunpack.c.h.b16 %v502
  %v2961 = vunpack.c.l.b16 %v503
  %v2962 = vunpack.c.h.b16 %v503
  %v2963 = vunpack.c.l.b16 %v504
  %v2964 = vunpack.c.h.b16 %v504
  %v2965 = vunpack.c.l.b16 %v505
  %v2966 = vunpack.c.h.b16 %v505
  %v2967 = vunpack.c.l.b16 %v506
  %v2968 = vunpack.c.h.b16 %v506
  %v2969 = vunpack.c.l.b16 %v507
  %v2970 = vunpack.c.h.b16 %v507
  %v2971 = vunpack.c.l.b16 %v508
  %v2972 = vunpack.c.h.b16 %v508
  %v2973 = vunpack.c.l.b16 %v509
  %v2974 = vunpack.c.h.b16 %v509
  %v2975 = vunpack.c.l.b16 %v510
  %v2976 = vunpack.c.h.b16 %v510
  %v2977 = vunpack.c.l.b16 %v511
  %v2978 = vunpack.c.h.b16 %v511
  %v2979 = vunpack.c.l.b16 %v512
  %v2980 = vunpack.c.h.b16 %v512
  %v2981 = vunpack.c.l.b16 %v513
  %v2982 = vunpack.c.h.b16 %v513
  %v2983 = vunpack.c.l.b16 %v514
  %v2984 = vunpack.c.h.b16 %v514
  %v2985 = vunpack.c.l.b16 %v515
  %v2986 = vunpack.c.h.b16 %v515
  %v2987 = vunpack.c.l.b16 %v516
  %v2988 = vunpack.c.h.b16 %v516
  %v2989 = vunpack.c.l.b16 %v517
  %v2990 = vunpack.c.h.b16 %v517
  %v2991 = vunpack.c.l.b16 %v518
  %v2992 = vunpack.c.h.b16 %v518
  %v2993 = vunpack.c.l.b16 %v519
  %v2994 = vunpack.c.h.b16 %v519
  %v2995 = vunpack.c.l.b16 %v520
  %v2996 = vunpack.c.h.b16 %v520
  %v2997 = vunpack.c.l.b16 %v521
  %v2998 = vunpack.c.h.b16 %v521
  %v2999 = vunpack.c.l.b16 %v522
  %v3000 = vunpack.c.h.b16 %v522
  %v3001 = vunpack.c.l.b16 %v523
  %v3002 = vunpack.c.h.b16 %v523
  %v3003 = vunpack.c.l.b16 %v524
  %v3004 = vunpack.c.h.b16 %v524
  %v3005 = vunpack.c.l.b16 %v525
  %v3006 = vunpack.c.h.b16 %v525
  %v3007 = vunpack.c.l.b16 %v526
  %v3008 = vunpack.c.h.b16 %v526
  %v3009 = vunpack.c.l.b16 %v527
  %v3010 = vunpack.c.h.b16 %v527
  %v3011 = vunpack.c.l.b16 %v528
  %v3012 = vunpack.c.h.b16 %v528
  %v3013 = vunpack.c.l.b16 %v529
  %v3014 = vunpack.c.h.b16 %v529
  %v3015 = vunpack.c.l.b16 %v530
  %v3016 = vunpack.c.h.b16 %v530
  %v3017 = vunpack.c.l.b16 %v531
  %v3018 = vunpack.c.h.b16 %v531
  %v3019 = vunpack.c.l.b16 %v532
  %v3020 = vunpack.c.h.b16 %v532
  %v3021 = vunpack.c.l.b16 %v533
  %v3022 = vunpack.c.h.b16 %v533
  %v3023 = vunpack.c.l.b16 %v534
  %v3024 = vunpack.c.h.b16 %v534
  %v3025 = vunpack.c.l.b16 %v535
  %v3026 = vunpack.c.h.b16 %v535
  %v3027 = vunpack.c.l.b16 %v536
  %v3028 = vunpack.c.h.b16 %v536
  %v3029 = vunpack.c.l.b16 %v537
  %v3030 = vunpack.c.h.b16 %v537
  %v3031 = vunpack.c.l.b16 %v538
  %v3032 = vunpack.c.h.b16 %v538
  %v3033 = vunpack.c.l.b16 %v539
  %v3034 = vunpack.c.h.b16 %v539
  %v3035 = vunpack.c.l.b16 %v540
  %v3036 = vunpack.c.h.b16 %v540
  %v3037 = vunpack.c.l.b16 %v541
  %v3038 = vunpack.c.h.b16 %v541
  %v3039 = vunpack.c.l.b16 %v542
  %v3040 = vunpack.c.h.b16 %v542
  %v3041 = vunpack.c.l.b16 %v543
  %v3042 = vunpack.c.h.b16 %v543
  %v3043 = vunpack.c.l.b16 %v544
  %v3044 = vunpack.c.h.b16 %v544
  %v3045 = vunpack.c.l.b16 %v545
  %v3046 = vunpack.c.h.b16 %v545
  %v3047 = vunpack.c.l.b16 %v546
  %v3048 = vunpack.c.h.b16 %v546
  %v3049 = vunpack.c.l.b16 %v547
  %v3050 = vunpack.c.h.b16 %v547
  %v3051 = vunpack.c.l.b16 %v548
  %v3052 = vunpack.c.h.b16 %v548
  %v3053 = vunpack.c.l.b16 %v549
  %v3054 = vunpack.c.h.b16 %v549
  %v3055 = vunpack.c.l.b16 %v550
  %v3056 = vunpack.c.h.b16 %v550
  %v3057 = vunpack.c.l.b16 %v551
  %v3058 = vunpack.c.h.b16 %v551
  %v3059 = vunpack.c.l.b16 %v552
  %v3060 = vunpack.c.h.b16 %v552
  %v3061 = vunpack.c.l.b16 %v553
  %v3062 = vunpack.c.h.b16 %v553
  %v3063 = vunpack.c.l.b16 %v554
  %v3064 = vunpack.c.h.b16 %v554
  %v3065 = vunpack.c.l.b16 %v555
  %v3066 = vunpack.c.h.b16 %v555
  %v3067 = vunpack.c.l.b16 %v556
  %v3068 = vunpack.c.h.b16 %v556
  %v3069 = vunpack.c.l.b16 %v557
  %v3070 = vunpack.c.h.b16 %v557
  %v3071 = vunpack.c.l.b16 %v558
  %v3072 = vunpack.c.h.b16 %v558
  %v3073 = vunpack.c.l.b16 %v559
  %v3074 = vunpack.c.h.b16 %v559
  %v3075 = vunpack.c.l.b16 %v560
  %v3076 = vunpack.c.h.b16 %v560
  %v3077 = vunpack.c.l.b16 %v561
  %v3078 = vunpack.c.h.b16 %v561
  %v3079 = vunpack.c.l.b16 %v562
  %v3080 = vunpack.c.h.b16 %v562
  %v3081 = vunpack.c.l.b16 %v563
  %v3082 = vunpack.c.h.b16 %v563
  %v3083 = vunpack.c.l.b16 %v564
  %v3084 = vunpack.c.h.b16 %v564
  %v3085 = vunpack.c.l.b16 %v565
  %v3086 = vunpack.c.h.b16 %v565
  %v3087 = vunpack.c.l.b16 %v566
  %v3088 = vunpack.c.h.b16 %v566
  %v3089 = vunpack.c.l.b16 %v567
  %v3090 = vunpack.c.h.b16 %v567
  %v3091 = vunpack.c.l.b16 %v568
  %v3092 = vunpack.c.h.b16 %v568
  %v3093 = vunpack.c.l.b16 %v569
  %v3094 = vunpack.c.h.b16 %v569
  %v3095 = vunpack.c.l.b16 %v570
  %v3096 = vunpack.c.h.b16 %v570
  %v3097 = vunpack.c.l.b16 %v571
  %v3098 = vunpack.c.h.b16 %v571
  %v3099 = vunpack.c.l.b16 %v572
  %v3100 = vunpack.c.h.b16 %v572
  %v3101 = vunpack.c.l.b16 %v573
  %v3102 = vunpack.c.h.b16 %v573
  %v3103 = vunpack.c.l.b16 %v574
  %v3104 = vunpack.c.h.b16 %v574
  %v3105 = vunpack.c.l.b16 %v575
  %v3106 = vunpack.c.h.b16 %v575
  %v3107 = vunpack.c.l.b16 %v576
  %v3108 = vunpack.c.h.b16 %v576
  %v3109 = vunpack.c.l.b16 %v577
  %v3110 = vunpack.c.h.b16 %v577
  %v3111 = vunpack.c.l.b16 %v578
  %v3112 = vunpack.c.h.b16 %v578
  %v3113 = vunpack.c.l.b16 %v579
  %v3114 = vunpack.c.h.b16 %v579
  %v3115 = vunpack.c.l.b16 %v580
  %v3116 = vunpack.c.h.b16 %v580
  %v3117 = vunpack.c.l.b16 %v581
  %v3118 = vunpack.c.h.b16 %v581
  %v3119 = vunpack.c.l.b16 %v582
  %v3120 = vunpack.c.h.b16 %v582
  %v3121 = vunpack.c.l.b16 %v583
  %v3122 = vunpack.c.h.b16 %v583
  %v3123 = vunpack.c.l.b16 %v584
  %v3124 = vunpack.c.h.b16 %v584
  %v3125 = vunpack.c.l.b16 %v585
  %v3126 = vunpack.c.h.b16 %v585
  %v3127 = vunpack.c.l.b16 %v586
  %v3128 = vunpack.c.h.b16 %v586
  %v3129 = vunpack.c.l.b16 %v587
  %v3130 = vunpack.c.h.b16 %v587
  %v3131 = vunpack.c.l.b16 %v588
  %v3132 = vunpack.c.h.b16 %v588
  %v3133 = vunpack.c.l.b16 %v589
  %v3134 = vunpack.c.h.b16 %v589
  %v3135 = vunpack.c.l.b16 %v590
  %v3136 = vunpack.c.h.b16 %v590
  %v3137 = vunpack.c.l.b16 %v591
  %v3138 = vunpack.c.h.b16 %v591
  %v3139 = vunpack.c.l.b16 %v592
  %v3140 = vunpack.c.h.b16 %v592
  %v3141 = vunpack.c.l.b16 %v593
  %v3142 = vunpack.c.h.b16 %v593
  %v3143 = vunpack.c.l.b16 %v594
  %v3144 = vunpack.c.h.b16 %v594
  %v3145 = vunpack.c.l.b16 %v595
  %v3146 = vunpack.c.h.b16 %v595
  %v3147 = vunpack.c.l.b16 %v596
  %v3148 = vunpack.c.h.b16 %v596
  %v3149 = vunpack.c.l.b16 %v597
  %v3150 = vunpack.c.h.b16 %v597
  %v3151 = vunpack.c.l.b16 %v598
  %v3152 = vunpack.c.h.b16 %v598
  %v3153 = vunpack.c.l.b16 %v599
  %v3154 = vunpack.c.h.b16 %v599
  %v3155 = vunpack.c.l.b16 %v600
  %v3156 = vunpack.c.h.b16 %v600
  %v3157 = vunpack.c.l.b16 %v601
  %v3158 = vunpack.c.h.b16 %v601
  %v3159 = vunpack.c.l.b16 %v602
  %v3160 = vunpack.c.h.b16 %v602
  %v3161 = vunpack.c.l.b16 %v603
  %v3162 = vunpack.c.h.b16 %v603
  %v3163 = vunpack.c.l.b16 %v604
  %v3164 = vunpack.c.h.b16 %v604
  %v3165 = vunpack.c.l.b16 %v605
  %v3166 = vunpack.c.h.b16 %v605
  %v3167 = vunpack.c.l.b16 %v606
  %v3168 = vunpack.c.h.b16 %v606
  %v3169 = vunpack.c.l.b16 %v607
  %v3170 = vunpack.c.h.b16 %v607
  %v3171 = vunpack.c.l.b16 %v608
  %v3172 = vunpack.c.h.b16 %v608
  %v3173 = vunpack.c.l.b16 %v609
  %v3174 = vunpack.c.h.b16 %v609
  %v3175 = vunpack.c.l.b16 %v610
  %v3176 = vunpack.c.h.b16 %v610
  %v3177 = vunpack.c.l.b16 %v611
  %v3178 = vunpack.c.h.b16 %v611
  %v3179 = vunpack.c.l.b16 %v612
  %v3180 = vunpack.c.h.b16 %v612
  %v3181 = vunpack.c.l.b16 %v613
  %v3182 = vunpack.c.h.b16 %v613
  %v3183 = vunpack.c.l.b16 %v614
  %v3184 = vunpack.c.h.b16 %v614
  %v3185 = vunpack.c.l.b16 %v615
  %v3186 = vunpack.c.h.b16 %v615
  %v3187 = vunpack.c.l.b16 %v616
  %v3188 = vunpack.c.h.b16 %v616
  %v3189 = vunpack.c.l.b16 %v617
  %v3190 = vunpack.c.h.b16 %v617
  %v3191 = vunpack.c.l.b16 %v618
  %v3192 = vunpack.c.h.b16 %v618
  %v3193 = vunpack.c.l.b16 %v619
  %v3194 = vunpack.c.h.b16 %v619
  %v3195 = vunpack.c.l.b16 %v620
  %v3196 = vunpack.c.h.b16 %v620
  %v3197 = vunpack.c.l.b16 %v621
  %v3198 = vunpack.c.h.b16 %v621
  %v3199 = vunpack.c.l.b16 %v622
  %v3200 = vunpack.c.h.b16 %v622
  %v3201 = vunpack.c.l.b16 %v623
  %v3202 = vunpack.c.h.b16 %v623
  %v3203 = vunpack.c.l.b16 %v624
  %v3204 = vunpack.c.h.b16 %v624
  %v3205 = vunpack.c.l.b16 %v625
  %v3206 = vunpack.c.h.b16 %v625
  %v3207 = vunpack.c.l.b16 %v626
  %v3208 = vunpack.c.h.b16 %v626
  %v3209 = vunpack.c.l.b16 %v627
  %v3210 = vunpack.c.h.b16 %v627
  %v3211 = vunpack.c.l.b16 %v628
  %v3212 = vunpack.c.h.b16 %v628
  %v3213 = vunpack.c.l.b16 %v629
  %v3214 = vunpack.c.h.b16 %v629
  %v3215 = vunpack.c.l.b16 %v630
  %v3216 = vunpack.c.h.b16 %v630
  %v3217 = vunpack.c.l.b16 %v631
  %v3218 = vunpack.c.h.b16 %v631
  %v3219 = vunpack.c.l.b16 %v632
  %v3220 = vunpack.c.h.b16 %v632
  %v3221 = vunpack.c.l.b16 %v633
  %v3222 = vunpack.c.h.b16 %v633
  %v3223 = vunpack.c.l.b16 %v634
  %v3224 = vunpack.c.h.b16 %v634
  %v3225 = vunpack.c.l.b16 %v635
  %v3226 = vunpack.c.h.b16 %v635
  %v3227 = vunpack.c.l.b16 %v636
  %v3228 = vunpack.c.h.b16 %v636
  %v3229 = vunpack.c.l.b16 %v637
  %v3230 = vunpack.c.h.b16 %v637
  %v3231 = vunpack.c.l.b16 %v638
  %v3232 = vunpack.c.h.b16 %v638
  %v3233 = vunpack.c.l.b16 %v639
  %v3234 = vunpack.c.h.b16 %v639
  %v3235 = vunpack.c.l.b16 %v640
  %v3236 = vunpack.c.h.b16 %v640
  %v3237 = vunpack.c.l.b16 %v641
  %v3238 = vunpack.c.h.b16 %v641
  %v3239 = vunpack.c.l.b16 %v642
  %v3240 = vunpack.c.h.b16 %v642
  %v3241 = vunpack.c.l.b16 %v643
  %v3242 = vunpack.c.h.b16 %v643
  %v3243 = vunpack.c.l.b16 %v644
  %v3244 = vunpack.c.h.b16 %v644
  %v3245 = vunpack.c.l.b16 %v645
  %v3246 = vunpack.c.h.b16 %v645
  %v3247 = vunpack.c.l.b16 %v646
  %v3248 = vunpack.c.h.b16 %v646
  %v3249 = vunpack.c.l.b16 %v647
  %v3250 = vunpack.c.h.b16 %v647
  %v3251 = vunpack.c.l.b16 %v648
  %v3252 = vunpack.c.h.b16 %v648
  %v3253 = vunpack.c.l.b16 %v649
  %v3254 = vunpack.c.h.b16 %v649
  %v3255 = vunpack.c.l.b16 %v650
  %v3256 = vunpack.c.h.b16 %v650
  %v3257 = vunpack.c.l.b16 %v651
  %v3258 = vunpack.c.h.b16 %v651
  %v3259 = vunpack.c.l.b16 %v652
  %v3260 = vunpack.c.h.b16 %v652
  %v3261 = vunpack.c.l.b16 %v653
  %v3262 = vunpack.c.h.b16 %v653
  %v3263 = vunpack.c.l.b16 %v654
  %v3264 = vunpack.c.h.b16 %v654
  %v3265 = vunpack.c.l.b16 %v655
  %v3266 = vunpack.c.h.b16 %v655
  %v3267 = vunpack.c.l.b16 %v656
  %v3268 = vunpack.c.h.b16 %v656
  %v3269 = vunpack.c.l.b16 %v657
  %v3270 = vunpack.c.h.b16 %v657
  %v3271 = vunpack.c.l.b16 %v658
  %v3272 = vunpack.c.h.b16 %v658
  %v3273 = vunpack.c.l.b16 %v659
  %v3274 = vunpack.c.h.b16 %v659
  %v3275 = vunpack.c.l.b16 %v660
  %v3276 = vunpack.c.h.b16 %v660
  %v3277 = vunpack.c.l.b16 %v661
  %v3278 = vunpack.c.h.b16 %v661
  %v3279 = vunpack.c.l.b16 %v662
  %v3280 = vunpack.c.h.b16 %v662
  %v3281 = vunpack.c.l.b16 %v663
  %v3282 = vunpack.c.h.b16 %v663
  %v3283 = vunpack.c.l.b16 %v664
  %v3284 = vunpack.c.h.b16 %v664
  %v3285 = vunpack.c.l.b16 %v665
  %v3286 = vunpack.c.h.b16 %v665
  %v3287 = vunpack.c.l.b16 %v666
  %v3288 = vunpack.c.h.b16 %v666
  %v3289 = vunpack.c.l.b16 %v667
  %v3290 = vunpack.c.h.b16 %v667
  %v3291 = vunpack.c.l.b16 %v668
  %v3292 = vunpack.c.h.b16 %v668
  %v3293 = vunpack.c.l.b16 %v669
  %v3294 = vunpack.c.h.b16 %v669
  %v3295 = vunpack.c.l.b16 %v670
  %v3296 = vunpack.c.h.b16 %v670
  %v3297 = vunpack.c.l.b16 %v671
  %v3298 = vunpack.c.h.b16 %v671
  %v3299 = vunpack.c.l.b16 %v672
  %v3300 = vunpack.c.h.b16 %v672
  %v3301 = vunpack.c.l.b16 %v673
  %v3302 = vunpack.c.h.b16 %v673
  %v3303 = vunpack.c.l.b16 %v674
  %v3304 = vunpack.c.h.b16 %v674
  %v3305 = vunpack.c.l.b16 %v675
  %v3306 = vunpack.c.h.b16 %v675
  %v3307 = vunpack.c.l.b16 %v676
  %v3308 = vunpack.c.h.b16 %v676
  %v3309 = vunpack.c.l.b16 %v677
  %v3310 = vunpack.c.h.b16 %v677
  %v3311 = vunpack.c.l.b16 %v678
  %v3312 = vunpack.c.h.b16 %v678
  %v3313 = vunpack.c.l.b16 %v679
  %v3314 = vunpack.c.h.b16 %v679
  %v3315 = vunpack.c.l.b16 %v680
  %v3316 = vunpack.c.h.b16 %v680
  %v3317 = vunpack.c.l.b16 %v681
  %v3318 = vunpack.c.h.b16 %v681
  %v3319 = vunpack.c.l.b16 %v682
  %v3320 = vunpack.c.h.b16 %v682
  %v3321 = vunpack.c.l.b16 %v683
  %v3322 = vunpack.c.h.b16 %v683
  %v3323 = vunpack.c.l.b16 %v684
  %v3324 = vunpack.c.h.b16 %v684
  %v3325 = vunpack.c.l.b16 %v685
  %v3326 = vunpack.c.h.b16 %v685
  %v3327 = vunpack.c.l.b16 %v686
  %v3328 = vunpack.c.h.b16 %v686
  %v3329 = vunpack.c.l.b16 %v687
  %v3330 = vunpack.c.h.b16 %v687
  %v3331 = vunpack.c.l.b16 %v688
  %v3332 = vunpack.c.h.b16 %v688
  %v3333 = vunpack.c.l.b16 %v689
  %v3334 = vunpack.c.h.b16 %v689
  %v3335 = vunpack.c.l.b16 %v690
  %v3336 = vunpack.c.h.b16 %v690
  %v3337 = vunpack.c.l.b16 %v691
  %v3338 = vunpack.c.h.b16 %v691
  %v3339 = vunpack.c.l.b16 %v692
  %v3340 = vunpack.c.h.b16 %v692
  %v3341 = vunpack.c.l.b16 %v693
  %v3342 = vunpack.c.h.b16 %v693
  %v3343 = vunpack.c.l.b16 %v694
  %v3344 = vunpack.c.h.b16 %v694
  %v3345 = vunpack.c.l.b16 %v695
  %v3346 = vunpack.c.h.b16 %v695
  %v3347 = vunpack.c.l.b16 %v696
  %v3348 = vunpack.c.h.b16 %v696
  %v3349 = vunpack.c.l.b16 %v697
  %v3350 = vunpack.c.h.b16 %v697
  %v3351 = vunpack.c.l.b16 %v698
  %v3352 = vunpack.c.h.b16 %v698
  %v3353 = vunpack.c.l.b16 %v699
  %v3354 = vunpack.c.h.b16 %v699
  %v3355 = vunpack.c.l.b16 %v700
  %v3356 = vunpack.c.h.b16 %v700
  %v3357 = vunpack.c.l.b16 %v701
  %v3358 = vunpack.c.h.b16 %v701
  %v3359 = vunpack.c.l.b16 %v702
  %v3360 = vunpack.c.h.b16 %v702
  %v3361 = vunpack.c.l.b16 %v703
  %v3362 = vunpack.c.h.b16 %v703
  %v3363 = vunpack.c.l.b16 %v704
  %v3364 = vunpack.c.h.b16 %v704
  %v3365 = vunpack.c.l.b16 %v705
  %v3366 = vunpack.c.h.b16 %v705
  %v3367 = vunpack.c.l.b16 %v706
  %v3368 = vunpack.c.h.b16 %v706
  %v3369 = vunpack.c.l.b16 %v707
  %v3370 = vunpack.c.h.b16 %v707
  %v3371 = vunpack.c.l.b16 %v708
  %v3372 = vunpack.c.h.b16 %v708
  %v3373 = vunpack.c.l.b16 %v709
  %v3374 = vunpack.c.h.b16 %v709
  %v3375 = vunpack.c.l.b16 %v710
  %v3376 = vunpack.c.h.b16 %v710
  %v3377 = vunpack.c.l.b16 %v711
  %v3378 = vunpack.c.h.b16 %v711
  %v3379 = vunpack.c.l.b16 %v712
  %v3380 = vunpack.c.h.b16 %v712
  %v3381 = vunpack.c.l.b16 %v713
  %v3382 = vunpack.c.h.b16 %v713
  %v3383 = vunpack.c.l.b16 %v714
  %v3384 = vunpack.c.h.b16 %v714
  %v3385 = vunpack.c.l.b16 %v715
  %v3386 = vunpack.c.h.b16 %v715
  %v3387 = vunpack.c.l.b16 %v716
  %v3388 = vunpack.c.h.b16 %v716
  %v3389 = vunpack.c.l.b16 %v717
  %v3390 = vunpack.c.h.b16 %v717
  %v3391 = vunpack.c.l.b16 %v718
  %v3392 = vunpack.c.h.b16 %v718
  %v3393 = vunpack.c.l.b16 %v719
  %v3394 = vunpack.c.h.b16 %v719
  %v3395 = vunpack.c.l.b16 %v720
  %v3396 = vunpack.c.h.b16 %v720
  %v3397 = vunpack.c.l.b16 %v721
  %v3398 = vunpack.c.h.b16 %v721
  %v3399 = vunpack.c.l.b16 %v722
  %v3400 = vunpack.c.h.b16 %v722
  %v3401 = vunpack.c.l.b16 %v723
  %v3402 = vunpack.c.h.b16 %v723
  %v3403 = vunpack.c.l.b16 %v724
  %v3404 = vunpack.c.h.b16 %v724
  %v3405 = vunpack.c.l.b16 %v725
  %v3406 = vunpack.c.h.b16 %v725
  %v3407 = vunpack.c.l.b16 %v726
  %v3408 = vunpack.c.h.b16 %v726
  %v3409 = vunpack.c.l.b16 %v727
  %v3410 = vunpack.c.h.b16 %v727
  %v3411 = vunpack.c.l.b16 %v728
  %v3412 = vunpack.c.h.b16 %v728
  %v3413 = vunpack.c.l.b16 %v729
  %v3414 = vunpack.c.h.b16 %v729
  %v3415 = vunpack.c.l.b16 %v730
  %v3416 = vunpack.c.h.b16 %v730
  %v3417 = vunpack.c.l.b16 %v731
  %v3418 = vunpack.c.h.b16 %v731
  %v3419 = vunpack.c.l.b16 %v732
  %v3420 = vunpack.c.h.b16 %v732
  %v3421 = vunpack.c.l.b16 %v733
  %v3422 = vunpack.c.h.b16 %v733
  %v3423 = vunpack.c.l.b16 %v734
  %v3424 = vunpack.c.h.b16 %v734
  %v3425 = vunpack.c.l.b16 %v735
  %v3426 = vunpack.c.h.b16 %v735
  %v3427 = vunpack.c.l.b16 %v736
  %v3428 = vunpack.c.h.b16 %v736
  %v3429 = vunpack.c.l.b16 %v737
  %v3430 = vunpack.c.h.b16 %v737
  %v3431 = vunpack.c.l.b16 %v738
  %v3432 = vunpack.c.h.b16 %v738
  %v3433 = vunpack.c.l.b16 %v739
  %v3434 = vunpack.c.h.b16 %v739
  %v3435 = vunpack.c.l.b16 %v740
  %v3436 = vunpack.c.h.b16 %v740
  %v3437 = vunpack.c.l.b16 %v741
  %v3438 = vunpack.c.h.b16 %v741
  %v3439 = vunpack.c.l.b16 %v742
  %v3440 = vunpack.c.h.b16 %v742
  %v3441 = vunpack.c.l.b16 %v743
  %v3442 = vunpack.c.h.b16 %v743
  %v3443 = vunpack.c.l.b16 %v744
  %v3444 = vunpack.c.h.b16 %v744
  %v3445 = vunpack.c.l.b16 %v745
  %v3446 = vunpack.c.h.b16 %v745
  %v3447 = vunpack.c.l.b16 %v746
  %v3448 = vunpack.c.h.b16 %v746
  %v3449 = vunpack.c.l.b16 %v747
  %v3450 = vunpack.c.h.b16 %v747
  %v3451 = vunpack.c.l.b16 %v748
  %v3452 = vunpack.c.h.b16 %v748
  %v3453 = vunpack.c.l.b16 %v749
  %v3454 = vunpack.c.h.b16 %v749
  %v3455 = vunpack.c.l.b16 %v750
  %v3456 = vunpack.c.h.b16 %v750
  %v3457 = vunpack.c.l.b16 %v751
  %v3458 = vunpack.c.h.b16 %v751
  %v3459 = vunpack.c.l.b16 %v752
  %v3460 = vunpack.c.h.b16 %v752
  %v3461 = vunpack.c.l.b16 %v753
  %v3462 = vunpack.c.h.b16 %v753
  %v3463 = vunpack.c.l.b16 %v754
  %v3464 = vunpack.c.h.b16 %v754
  %v3465 = vunpack.c.l.b16 %v755
  %v3466 = vunpack.c.h.b16 %v755
  %v3467 = vunpack.c.l.b16 %v756
  %v3468 = vunpack.c.h.b16 %v756
  %v3469 = vunpack.c.l.b16 %v757
  %v3470 = vunpack.c.h.b16 %v757
  %v3471 = vunpack.c.l.b16 %v758
  %v3472 = vunpack.c.h.b16 %v758
  %v3473 = vunpack.c.l.b16 %v759
  %v3474 = vunpack.c.h.b16 %v759
  %v3475 = vunpack.c.l.b16 %v760
  %v3476 = vunpack.c.h.b16 %v760
  %v3477 = vunpack.c.l.b16 %v761
  %v3478 = vunpack.c.h.b16 %v761
  %v3479 = vunpack.c.l.b16 %v762
  %v3480 = vunpack.c.h.b16 %v762
  %v3481 = vunpack.c.l.b16 %v763
  %v3482 = vunpack.c.h.b16 %v763
  %v3483 = vunpack.c.l.b16 %v764
  %v3484 = vunpack.c.h.b16 %v764
  %v3485 = vunpack.c.l.b16 %v765
  %v3486 = vunpack.c.h.b16 %v765
  %v3487 = vunpack.c.l.b16 %v766
  %v3488 = vunpack.c.h.b16 %v766
  %v3489 = vunpack.c.l.b16 %v767
  %v3490 = vunpack.c.h.b16 %v767
  %v3491 = vunpack.c.l.b16 %v768
  %v3492 = vunpack.c.h.b16 %v768
  %v3493 = vunpack.c.l.b16 %v769
  %v3494 = vunpack.c.h.b16 %v769
  %v3495 = vunpack.c.l.b16 %v770
  %v3496 = vunpack.c.h.b16 %v770
  %v3497 = vunpack.c.l.b16 %v771
  %v3498 = vunpack.c.h.b16 %v771
  %v3499 = vunpack.c.l.b16 %v772
  %v3500 = vunpack.c.h.b16 %v772
  %v3501 = vunpack.c.l.b16 %v773
  %v3502 = vunpack.c.h.b16 %v773
  %v3503 = vunpack.c.l.b16 %v774
  %v3504 = vunpack.c.h.b16 %v774
  %v3505 = vunpack.c.l.b16 %v775
  %v3506 = vunpack.c.h.b16 %v775
  %v3507 = vunpack.c.l.b16 %v776
  %v3508 = vunpack.c.h.b16 %v776
  %v3509 = vunpack.c.l.b16 %v777
  %v3510 = vunpack.c.h.b16 %v777
  %v3511 = vunpack.c.l.b16 %v778
  %v3512 = vunpack.c.h.b16 %v778
  %v3513 = vunpack.c.l.b16 %v779
  %v3514 = vunpack.c.h.b16 %v779
  %v3515 = vunpack.c.l.b16 %v780
  %v3516 = vunpack.c.h.b16 %v780
  %v3517 = vunpack.c.l.b16 %v781
  %v3518 = vunpack.c.h.b16 %v781
  %v3519 = vunpack.c.l.b16 %v782
  %v3520 = vunpack.c.h.b16 %v782
  %v3521 = vunpack.c.l.b16 %v783
  %v3522 = vunpack.c.h.b16 %v783
  %v3523 = vunpack.c.l.b16 %v784
  %v3524 = vunpack.c.h.b16 %v784
  %v3525 = vunpack.c.l.b16 %v785
  %v3526 = vunpack.c.h.b16 %v785
  %v3527 = vunpack.c.l.b16 %v786
  %v3528 = vunpack.c.h.b16 %v786
  %v3529 = vunpack.c.l.b16 %v787
  %v3530 = vunpack.c.h.b16 %v787
  %v3531 = vunpack.c.l.b16 %v788
  %v3532 = vunpack.c.h.b16 %v788
  %v3533 = vunpack.c.l.b16 %v789
  %v3534 = vunpack.c.h.b16 %v789
  %v3535 = vunpack.c.l.b16 %v790
  %v3536 = vunpack.c.h.b16 %v790
  %v3537 = vunpack.c.l.b16 %v791
  %v3538 = vunpack.c.h.b16 %v791
  %v3539 = vunpack.c.l.b16 %v792
  %v3540 = vunpack.c.h.b16 %v792
  %v3541 = vunpack.c.l.b16 %v793
  %v3542 = vunpack.c.h.b16 %v793
  %v3543 = vunpack.c.l.b16 %v794
  %v3544 = vunpack.c.h.b16 %v794
  %v3545 = vunpack.c.l.b16 %v795
  %v3546 = vunpack.c.h.b16 %v795
  %v3547 = vunpack.c.l.b16 %v796
  %v3548 = vunpack.c.h.b16 %v796
  %v3549 = vunpack.c.l.b16 %v797
  %v3550 = vunpack.c.h.b16 %v797
  %v3551 = vunpack.c.l.b16 %v798
  %v3552 = vunpack.c.h.b16 %v798
  %v3553 = vunpack.c.l.b16 %v799
  %v3554 = vunpack.c.h.b16 %v799
  %v3555 = vunpack.c.l.b16 %v800
  %v3556 = vunpack.c.h.b16 %v800
  %v3557 = vunpack.c.l.b16 %v801
  %v3558 = vunpack.c.h.b16 %v801
  %v3559 = vunpack.c.l.b16 %v802
  %v3560 = vunpack.c.h.b16 %v802
  %v3561 = vunpack.c.l.b16 %v803
  %v3562 = vunpack.c.h.b16 %v803
  %v3563 = vunpack.c.l.b16 %v804
  %v3564 = vunpack.c.h.b16 %v804
  %v3565 = vunpack.c.l.b16 %v805
  %v3566 = vunpack.c.h.b16 %v805
  %v3567 = vunpack.c.l.b16 %v806
  %v3568 = vunpack.c.h.b16 %v806
  %v3569 = vunpack.c.l.b16 %v807
  %v3570 = vunpack.c.h.b16 %v807
  %v3571 = vunpack.c.l.b16 %v808
  %v3572 = vunpack.c.h.b16 %v808
  %v3573 = vunpack.c.l.b16 %v809
  %v3574 = vunpack.c.h.b16 %v809
  %v3575 = vunpack.c.l.b16 %v810
  %v3576 = vunpack.c.h.b16 %v810
  %v3577 = vunpack.c.l.b16 %v811
  %v3578 = vunpack.c.h.b16 %v811
  %v3579 = vunpack.c.l.b16 %v812
  %v3580 = vunpack.c.h.b16 %v812
  %v3581 = vunpack.c.l.b16 %v813
  %v3582 = vunpack.c.h.b16 %v813
  %v3583 = vunpack.c.l.b16 %v814
  %v3584 = vunpack.c.h.b16 %v814
  %v3585 = vunpack.c.l.b16 %v815
  %v3586 = vunpack.c.h.b16 %v815
  %v3587 = vunpack.c.l.b16 %v816
  %v3588 = vunpack.c.h.b16 %v816
  %v3589 = vunpack.c.l.b16 %v817
  %v3590 = vunpack.c.h.b16 %v817
  %v3591 = vunpack.c.l.b16 %v818
  %v3592 = vunpack.c.h.b16 %v818
  %v3593 = vunpack.c.l.b16 %v819
  %v3594 = vunpack.c.h.b16 %v819
  %v3595 = vunpack.c.l.b16 %v820
  %v3596 = vunpack.c.h.b16 %v820
  %v3597 = vunpack.c.l.b16 %v821
  %v3598 = vunpack.c.h.b16 %v821
  %v3599 = vunpack.c.l.b16 %v822
  %v3600 = vunpack.c.h.b16 %v822
  %v3601 = vunpack.c.l.b16 %v823
  %v3602 = vunpack.c.h.b16 %v823
  %v3603 = vunpack.c.l.b16 %v824
  %v3604 = vunpack.c.h.b16 %v824
  %v3605 = vunpack.c.l.b16 %v825
  %v3606 = vunpack.c.h.b16 %v825
  %v3607 = vunpack.c.l.b16 %v826
  %v3608 = vunpack.c.h.b16 %v826
  %v3609 = vunpack.c.l.b16 %v827
  %v3610 = vunpack.c.h.b16 %v827
  %v3611 = vunpack.c.l.b16 %v828
  %v3612 = vunpack.c.h.b16 %v828
  %v3613 = vunpack.c.l.b16 %v829
  %v3614 = vunpack.c.h.b16 %v829
  %v3615 = vunpack.c.l.b16 %v830
  %v3616 = vunpack.c.h.b16 %v830
  %v3617 = vunpack.c.l.b16 %v831
  %v3618 = vunpack.c.h.b16 %v831
  %v3619 = vunpack.c.l.b16 %v832
  %v3620 = vunpack.c.h.b16 %v832
  %v3621 = vunpack.c.l.b16 %v833
  %v3622 = vunpack.c.h.b16 %v833
  %v3623 = vunpack.c.l.b16 %v834
  %v3624 = vunpack.c.h.b16 %v834
  %v3625 = vunpack.c.l.b16 %v835
  %v3626 = vunpack.c.h.b16 %v835
  %v3627 = vunpack.c.l.b16 %v836
  %v3628 = vunpack.c.h.b16 %v836
  %v3629 = vunpack.c.l.b16 %v837
  %v3630 = vunpack.c.h.b16 %v837
  %v3631 = vunpack.c.l.b16 %v838
  %v3632 = vunpack.c.h.b16 %v838
  %v3633 = vunpack.c.l.b16 %v839
  %v3634 = vunpack.c.h.b16 %v839
  %v3635 = vunpack.c.l.b16 %v840
  %v3636 = vunpack.c.h.b16 %v840
  %v3637 = vunpack.c.l.b16 %v841
  %v3638 = vunpack.c.h.b16 %v841
  %v3639 = vunpack.c.l.b16 %v842
  %v3640 = vunpack.c.h.b16 %v842
  %v3641 = vunpack.c.l.b16 %v843
  %v3642 = vunpack.c.h.b16 %v843
  %v3643 = vunpack.c.l.b16 %v844
  %v3644 = vunpack.c.h.b16 %v844
  %v3645 = vunpack.c.l.b16 %v845
  %v3646 = vunpack.c.h.b16 %v845
  %v3647 = vunpack.c.l.b16 %v846
  %v3648 = vunpack.c.h.b16 %v846
  %v3649 = vunpack.c.l.b16 %v847
  %v3650 = vunpack.c.h.b16 %v847
  %v3651 = vunpack.c.l.b16 %v848
  %v3652 = vunpack.c.h.b16 %v848
  %v3653 = vunpack.c.l.b16 %v849
  %v3654 = vunpack.c.h.b16 %v849
  %v3655 = vunpack.c.l.b16 %v850
  %v3656 = vunpack.c.h.b16 %v850
  %v3657 = vunpack.c.l.b16 %v851
  %v3658 = vunpack.c.h.b16 %v851
  %v3659 = vunpack.c.l.b16 %v852
  %v3660 = vunpack.c.h.b16 %v852
  %v3661 = vunpack.c.l.b16 %v853
  %v3662 = vunpack.c.h.b16 %v853
  %v3663 = vunpack.c.l.b16 %v854
  %v3664 = vunpack.c.h.b16 %v854
  %v3665 = vunpack.c.l.b16 %v855
  %v3666 = vunpack.c.h.b16 %v855
  %v3667 = vunpack.c.l.b16 %v856
  %v3668 = vunpack.c.h.b16 %v856
  %v3669 = vunpack.c.l.b16 %v857
  %v3670 = vunpack.c.h.b16 %v857
  %v3671 = vunpack.c.l.b16 %v858
  %v3672 = vunpack.c.h.b16 %v858
  %v3673 = vunpack.c.l.b16 %v859
  %v3674 = vunpack.c.h.b16 %v859
  %v3675 = vunpack.c.l.b16 %v860
  %v3676 = vunpack.c.h.b16 %v860
  %v3677 = vunpack.c.l.b16 %v861
  %v3678 = vunpack.c.h.b16 %v861
  %v3679 = vunpack.c.l.b16 %v862
  %v3680 = vunpack.c.h.b16 %v862
  %v3681 = vunpack.c.l.b16 %v863
  %v3682 = vunpack.c.h.b16 %v863
  %v3683 = vunpack.c.l.b16 %v864
  %v3684 = vunpack.c.h.b16 %v864
  %v3685 = vunpack.c.l.b16 %v865
  %v3686 = vunpack.c.h.b16 %v865
  %v3687 = vunpack.c.l.b16 %v866
  %v3688 = vunpack.c.h.b16 %v866
  %v3689 = vunpack.c.l.b16 %v867
  %v3690 = vunpack.c.h.b16 %v867
  %v3691 = vunpack.c.l.b16 %v868
  %v3692 = vunpack.c.h.b16 %v868
  %v3693 = vunpack.c.l.b16 %v869
  %v3694 = vunpack.c.h.b16 %v869
  %v3695 = vunpack.c.l.b16 %v870
  %v3696 = vunpack.c.h.b16 %v870
  %v3697 = vunpack.c.l.b16 %v871
  %v3698 = vunpack.c.h.b16 %v871
  %v3699 = vunpack.c.l.b16 %v872
  %v3700 = vunpack.c.h.b16 %v872
  %v3701 = vunpack.c.l.b16 %v873
  %v3702 = vunpack.c.h.b16 %v873
  %v3703 = vunpack.c.l.b16 %v874
  %v3704 = vunpack.c.h.b16 %v874
  %v3705 = vunpack.c.l.b16 %v875
  %v3706 = vunpack.c.h.b16 %v875
  %v3707 = vunpack.c.l.b16 %v876
  %v3708 = vunpack.c.h.b16 %v876
  %v3709 = vunpack.c.l.b16 %v877
  %v3710 = vunpack.c.h.b16 %v877
  %v3711 = vunpack.c.l.b16 %v878
  %v3712 = vunpack.c.h.b16 %v878
  %v3713 = vunpack.c.l.b16 %v879
  %v3714 = vunpack.c.h.b16 %v879
  %v3715 = vunpack.c.l.b16 %v880
  %v3716 = vunpack.c.h.b16 %v880
  %v3717 = vunpack.c.l.b16 %v881
  %v3718 = vunpack.c.h.b16 %v881
  %v3719 = vunpack.c.l.b16 %v882
  %v3720 = vunpack.c.h.b16 %v882
  %v3721 = vunpack.c.l.b16 %v883
  %v3722 = vunpack.c.h.b16 %v883
  %v3723 = vunpack.c.l.b16 %v884
  %v3724 = vunpack.c.h.b16 %v884
  %v3725 = vunpack.c.l.b16 %v885
  %v3726 = vunpack.c.h.b16 %v885
  %v3727 = vunpack.c.l.b16 %v886
  %v3728 = vunpack.c.h.b16 %v886
  %v3729 = vunpack.c.l.b16 %v887
  %v3730 = vunpack.c.h.b16 %v887
  %v3731 = vunpack.c.l.b16 %v888
  %v3732 = vunpack.c.h.b16 %v888
  %v3733 = vunpack.c.l.b16 %v889
  %v3734 = vunpack.c.h.b16 %v889
  %v3735 = vunpack.c.l.b16 %v890
  %v3736 = vunpack.c.h.b16 %v890
  %v3737 = vunpack.c.l.b16 %v891
  %v3738 = vunpack.c.h.b16 %v891
  %v3739 = vunpack.c.l.b16 %v892
  %v3740 = vunpack.c.h.b16 %v892
  %v3741 = vunpack.c.l.b16 %v893
  %v3742 = vunpack.c.h.b16 %v893
  %v3743 = vunpack.c.l.b16 %v894
  %v3744 = vunpack.c.h.b16 %v894
  %v3745 = vunpack.c.l.b16 %v895
  %v3746 = vunpack.c.h.b16 %v895
  %v3747 = vunpack.c.l.b16 %v896
  %v3748 = vunpack.c.h.b16 %v896
  %v3749 = vunpack.c.l.b16 %v897
  %v3750 = vunpack.c.h.b16 %v897
  %v3751 = vunpack.c.l.b16 %v898
  %v3752 = vunpack.c.h.b16 %v898
  %v3753 = vunpack.c.l.b16 %v899
  %v3754 = vunpack.c.h.b16 %v899
  %v3755 = vunpack.c.l.b16 %v900
  %v3756 = vunpack.c.h.b16 %v900
  %v3757 = vunpack.c.l.b16 %v901
  %v3758 = vunpack.c.h.b16 %v901
  %v3759 = vunpack.c.l.b16 %v902
  %v3760 = vunpack.c.h.b16 %v902
  %v3761 = vunpack.c.l.b16 %v903
  %v3762 = vunpack.c.h.b16 %v903
  %v3763 = vunpack.c.l.b16 %v904
  %v3764 = vunpack.c.h.b16 %v904
  %v3765 = vunpack.c.l.b16 %v905
  %v3766 = vunpack.c.h.b16 %v905
  %v3767 = vunpack.c.l.b16 %v906
  %v3768 = vunpack.c.h.b16 %v906
  %v3769 = vunpack.c.l.b16 %v907
  %v3770 = vunpack.c.h.b16 %v907
  %v3771 = vunpack.c.l.b16 %v908
  %v3772 = vunpack.c.h.b16 %v908
  %v3773 = vunpack.c.l.b16 %v909
  %v3774 = vunpack.c.h.b16 %v909
  %v3775 = vunpack.c.l.b16 %v910
  %v3776 = vunpack.c.h.b16 %v910
  %v3777 = vunpack.c.l.b16 %v911
  %v3778 = vunpack.c.h.b16 %v911
  %v3779 = vunpack.c.l.b16 %v912
  %v3780 = vunpack.c.h.b16 %v912
  %v3781 = vunpack.c.l.b16 %v913
  %v3782 = vunpack.c.h.b16 %v913
  %v3783 = vunpack.c.l.b16 %v914
  %v3784 = vunpack.c.h.b16 %v914
  %v3785 = vunpack.c.l.b16 %v915
  %v3786 = vunpack.c.h.b16 %v915
  %v3787 = vunpack.c.l.b16 %v916
  %v3788 = vunpack.c.h.b16 %v916
  %v3789 = vunpack.c.l.b16 %v917
  %v3790 = vunpack.c.h.b16 %v917
  %v3791 = vunpack.c.l.b16 %v918
  %v3792 = vunpack.c.h.b16 %v918
  %v3793 = vunpack.c.l.b16 %v919
  %v3794 = vunpack.c.h.b16 %v919
  %v3795 = vunpack.c.l.b16 %v920
  %v3796 = vunpack.c.h.b16 %v920
  %v3797 = vunpack.c.l.b16 %v921
  %v3798 = vunpack.c.h.b16 %v921
  %v3799 = vunpack.c.l.b16 %v922
  %v3800 = vunpack.c.h.b16 %v922
  %v3801 = vunpack.c.l.b16 %v923
  %v3802 = vunpack.c.h.b16 %v923
  %v3803 = vunpack.c.l.b16 %v924
  %v3804 = vunpack.c.h.b16 %v924
  %v3805 = vunpack.c.l.b16 %v925
  %v3806 = vunpack.c.h.b16 %v925
  %v3807 = vunpack.c.l.b16 %v926
  %v3808 = vunpack.c.h.b16 %v926
  %v3809 = vunpack.c.l.b16 %v927
  %v3810 = vunpack.c.h.b16 %v927
  %v3811 = vunpack.c.l.b16 %v928
  %v3812 = vunpack.c.h.b16 %v928
  %v3813 = vunpack.c.l.b16 %v929
  %v3814 = vunpack.c.h.b16 %v929
  %v3815 = vunpack.c.l.b16 %v930
  %v3816 = vunpack.c.h.b16 %v930
  %v3817 = vunpack.c.l.b16 %v931
  %v3818 = vunpack.c.h.b16 %v931
  %v3819 = vunpack.c.l.b16 %v932
  %v3820 = vunpack.c.h.b16 %v932
  %v3821 = vunpack.c.l.b16 %v933
  %v3822 = vunpack.c.h.b16 %v933
  %v3823 = vunpack.c.l.b16 %v934
  %v3824 = vunpack.c.h.b16 %v934
  %v3825 = vunpack.c.l.b16 %v935
  %v3826 = vunpack.c.h.b16 %v935
  %v3827 = vunpack.c.l.b16 %v936
  %v3828 = vunpack.c.h.b16 %v936
  %v3829 = vunpack.c.l.b16 %v937
  %v3830 = vunpack.c.h.b16 %v937
  %v3831 = vunpack.c.l.b16 %v938
  %v3832 = vunpack.c.h.b16 %v938
  %v3833 = vunpack.c.l.b16 %v939
  %v3834 = vunpack.c.h.b16 %v939
  %v3835 = vunpack.c.l.b16 %v940
  %v3836 = vunpack.c.h.b16 %v940
  %v3837 = vunpack.c.l.b16 %v941
  %v3838 = vunpack.c.h.b16 %v941
  %v3839 = vunpack.c.l.b16 %v942
  %v3840 = vunpack.c.h.b16 %v942
  %v3841 = vunpack.c.l.b16 %v943
  %v3842 = vunpack.c.h.b16 %v943
  %v3843 = vunpack.c.l.b16 %v944
  %v3844 = vunpack.c.h.b16 %v944
  %v3845 = vunpack.c.l.b16 %v945
  %v3846 = vunpack.c.h.b16 %v945
  %v3847 = vunpack.c.l.b16 %v946
  %v3848 = vunpack.c.h.b16 %v946
  %v3849 = vunpack.c.l.b16 %v947
  %v3850 = vunpack.c.h.b16 %v947
  %v3851 = vunpack.c.l.b16 %v948
  %v3852 = vunpack.c.h.b16 %v948
  %v3853 = vunpack.c.l.b16 %v949
  %v3854 = vunpack.c.h.b16 %v949
  %v3855 = vunpack.c.l.b16 %v950
  %v3856 = vunpack.c.h.b16 %v950
  %v3857 = vunpack.c.l.b16 %v951
  %v3858 = vunpack.c.h.b16 %v951
  %v3859 = vunpack.c.l.b16 %v952
  %v3860 = vunpack.c.h.b16 %v952
  %v3861 = vunpack.c.l.b16 %v953
  %v3862 = vunpack.c.h.b16 %v953
  %v3863 = vunpack.c.l.b16 %v954
  %v3864 = vunpack.c.h.b16 %v954
  %v3865 = vunpack.c.l.b16 %v955
  %v3866 = vunpack.c.h.b16 %v955
  %v3867 = vunpack.c.l.b16 %v956
  %v3868 = vunpack.c.h.b16 %v956
  %v3869 = vunpack.c.l.b16 %v957
  %v3870 = vunpack.c.h.b16 %v957
  %v3871 = vunpack.c.l.b16 %v958
  %v3872 = vunpack.c.h.b16 %v958
  %v3873 = vunpack.c.l.b16 %v959
  %v3874 = vunpack.c.h.b16 %v959
  %v3875 = vunpack.c.l.b16 %v960
  %v3876 = vunpack.c.h.b16 %v960
  %v3877 = vunpack.c.l.b16 %v961
  %v3878 = vunpack.c.h.b16 %v961
  %v3879 = vunpack.c.l.b16 %v962
  %v3880 = vunpack.c.h.b16 %v962
  %v3881 = vunpack.c.l.b16 %v963
  %v3882 = vunpack.c.h.b16 %v963
  %v3883 = vunpack.c.l.b16 %v964
  %v3884 = vunpack.c.h.b16 %v964
  %v3885 = vunpack.c.l.b16 %v965
  %v3886 = vunpack.c.h.b16 %v965
  %v3887 = vunpack.c.l.b16 %v966
  %v3888 = vunpack.c.h.b16 %v966
  %v3889 = vunpack.c.l.b16 %v967
  %v3890 = vunpack.c.h.b16 %v967
  %v3891 = vunpack.c.l.b16 %v968
  %v3892 = vunpack.c.h.b16 %v968
  %v3893 = vunpack.c.l.b16 %v969
  %v3894 = vunpack.c.h.b16 %v969
  %v3895 = vunpack.c.l.b16 %v970
  %v3896 = vunpack.c.h.b16 %v970
  %v3897 = vunpack.c.l.b16 %v971
  %v3898 = vunpack.c.h.b16 %v971
  %v3899 = vunpack.c.l.b16 %v972
  %v3900 = vunpack.c.h.b16 %v972
  %v3901 = vunpack.c.l.b16 %v973
  %v3902 = vunpack.c.h.b16 %v973
  %v3903 = vunpack.c.l.b16 %v974
  %v3904 = vunpack.c.h.b16 %v974
  %v3905 = vunpack.c.l.b16 %v975
  %v3906 = vunpack.c.h.b16 %v975
  %v3907 = vunpack.c.l.b16 %v976
  %v3908 = vunpack.c.h.b16 %v976
  %v3909 = vunpack.c.l.b16 %v977
  %v3910 = vunpack.c.h.b16 %v977
  %v3911 = vunpack.c.l.b16 %v978
  %v3912 = vunpack.c.h.b16 %v978
  %v3913 = vunpack.c.l.b16 %v979
  %v3914 = vunpack.c.h.b16 %v979
  %v3915 = vunpack.c.l.b16 %v980
  %v3916 = vunpack.c.h.b16 %v980
  %v3917 = vunpack.c.l.b16 %v981
  %v3918 = vunpack.c.h.b16 %v981
  %v3919 = vunpack.c.l.b16 %v982
  %v3920 = vunpack.c.h.b16 %v982
  %v3921 = vunpack.c.l.b16 %v983
  %v3922 = vunpack.c.h.b16 %v983
  %v3923 = vunpack.c.l.b16 %v984
  %v3924 = vunpack.c.h.b16 %v984
  %v3925 = vunpack.c.l.b16 %v985
  %v3926 = vunpack.c.h.b16 %v985
  %v3927 = vunpack.c.l.b16 %v986
  %v3928 = vunpack.c.h.b16 %v986
  %v3929 = vunpack.c.l.b16 %v987
  %v3930 = vunpack.c.h.b16 %v987
  %v3931 = vunpack.c.l.b16 %v988
  %v3932 = vunpack.c.h.b16 %v988
  %v3933 = vunpack.c.l.b16 %v989
  %v3934 = vunpack.c.h.b16 %v989
  %v3935 = vunpack.c.l.b16 %v990
  %v3936 = vunpack.c.h.b16 %v990
  %v3937 = vunpack.c.l.b16 %v991
  %v3938 = vunpack.c.h.b16 %v991
  %v3939 = vunpack.c.l.b16 %v992
  %v3940 = vunpack.c.h.b16 %v992
  %v3941 = vunpack.c.l.b16 %v993
  %v3942 = vunpack.c.h.b16 %v993
  %v3943 = vunpack.c.l.b16 %v994
  %v3944 = vunpack.c.h.b16 %v994
  %v3945 = vunpack.c.l.b16 %v995
  %v3946 = vunpack.c.h.b16 %v995
  %v3947 = vunpack.c.l.b16 %v996
  %v3948 = vunpack.c.h.b16 %v996
  %v3949 = vunpack.c.l.b16 %v997
  %v3950 = vunpack.c.h.b16 %v997
  %v3951 = vunpack.c.l.b16 %v998
  %v3952 = vunpack.c.h.b16 %v998
  %v3953 = vunpack.c.l.b16 %v999
  %v3954 = vunpack.c.h.b16 %v999
  %v3955 = vunpack.c.l.b16 %v1000
  %v3956 = vunpack.c.h.b16 %v1000
  %v3957 = vunpack.c.l.b16 %v1001
  %v3958 = vunpack.c.h.b16 %v1001
  %v3959 = vunpack.c.l.b16 %v1002
  %v3960 = vunpack.c.h.b16 %v1002
  %v3961 = vunpack.c.l.b16 %v1003
  %v3962 = vunpack.c.h.b16 %v1003
  %v3963 = vunpack.c.l.b16 %v1004
  %v3964 = vunpack.c.h.b16 %v1004
  %v3965 = vunpack.c.l.b16 %v1005
  %v3966 = vunpack.c.h.b16 %v1005
  %v3967 = vunpack.c.l.b16 %v1006
  %v3968 = vunpack.c.h.b16 %v1006
  %v3969 = vunpack.c.l.b16 %v1007
  %v3970 = vunpack.c.h.b16 %v1007
  %v3971 = vunpack.c.l.b16 %v1008
  %v3972 = vunpack.c.h.b16 %v1008
  %v3973 = vunpack.c.l.b16 %v1009
  %v3974 = vunpack.c.h.b16 %v1009
  %v3975 = vunpack.c.l.b16 %v1010
  %v3976 = vunpack.c.h.b16 %v1010
  %v3977 = vunpack.c.l.b16 %v1011
  %v3978 = vunpack.c.h.b16 %v1011
  %v3979 = vunpack.c.l.b16 %v1012
  %v3980 = vunpack.c.h.b16 %v1012
  %v3981 = vunpack.c.l.b16 %v1013
  %v3982 = vunpack.c.h.b16 %v1013
  %v3983 = vunpack.c.l.b16 %v1014
  %v3984 = vunpack.c.h.b16 %v1014
  %v3985 = vunpack.c.l.b16 %v1015
  %v3986 = vunpack.c.h.b16 %v1015
  %v3987 = vunpack.c.l.b16 %v1016
  %v3988 = vunpack.c.h.b16 %v1016
  %v3989 = vunpack.c.l.b16 %v1017
  %v3990 = vunpack.c.h.b16 %v1017
  %v3991 = vunpack.c.l.b16 %v1018
  %v3992 = vunpack.c.h.b16 %v1018
  %v3993 = vunpack.c.l.b16 %v1019
  %v3994 = vunpack.c.h.b16 %v1019
  %v3995 = vunpack.c.l.b16 %v1020
  %v3996 = vunpack.c.h.b16 %v1020
  %v3997 = vunpack.c.l.b16 %v1021
  %v3998 = vunpack.c.h.b16 %v1021
  %v3999 = vunpack.c.l.b16 %v1022
  %v4000 = vunpack.c.h.b16 %v1022
  %v4001 = vunpack.c.l.b16 %v1023
  %v4002 = vunpack.c.h.b16 %v1023
  %v4003 = vunpack.c.l.b16 %v1024
  %v4004 = vunpack.c.h.b16 %v1024
  %v4005 = vunpack.c.l.b16 %v1025
  %v4006 = vunpack.c.h.b16 %v1025
  %v4007 = vunpack.c.l.b16 %v1026
  %v4008 = vunpack.c.h.b16 %v1026
  %v4009 = vunpack.c.l.b16 %v1027
  %v4010 = vunpack.c.h.b16 %v1027
  %v4011 = vunpack.c.l.b16 %v1028
  %v4012 = vunpack.c.h.b16 %v1028
  %v4013 = vunpack.c.l.b16 %v1029
  %v4014 = vunpack.c.h.b16 %v1029
  %v4015 = vunpack.c.l.b16 %v1030
  %v4016 = vunpack.c.h.b16 %v1030
  %v4017 = vunpack.c.l.b16 %v1031
  %v4018 = vunpack.c.h.b16 %v1031
  %v4019 = vunpack.c.l.b16 %v1032
  %v4020 = vunpack.c.h.b16 %v1032
  %v4021 = vunpack.c.l.b16 %v1033
  %v4022 = vunpack.c.h.b16 %v1033
  %v4023 = vunpack.c.l.b16 %v1034
  %v4024 = vunpack.c.h.b16 %v1034
  %v4025 = vunpack.c.l.b16 %v1035
  %v4026 = vunpack.c.h.b16 %v1035
  %v4027 = vunpack.c.l.b16 %v1036
  %v4028 = vunpack.c.h.b16 %v1036
  %v4029 = vunpack.c.l.b16 %v1037
  %v4030 = vunpack.c.h.b16 %v1037
  %v4031 = vunpack.c.l.b16 %v1038
  %v4032 = vunpack.c.h.b16 %v1038
  %v4033 = vunpack.c.l.b16 %v1039
  %v4034 = vunpack.c.h.b16 %v1039
  %v4035 = vunpack.c.l.b16 %v1040
  %v4036 = vunpack.c.h.b16 %v1040
  %v4037 = vunpack.c.l.b16 %v1041
  %v4038 = vunpack.c.h.b16 %v1041
  %v4039 = vunpack.c.l.b16 %v1042
  %v4040 = vunpack.c.h.b16 %v1042
  %v4041 = vunpack.c.l.b16 %v1043
  %v4042 = vunpack.c.h.b16 %v1043
  %v4043 = vunpack.c.l.b16 %v1044
  %v4044 = vunpack.c.h.b16 %v1044
  %v4045 = vunpack.c.l.b16 %v1045
  %v4046 = vunpack.c.h.b16 %v1045
  %v4047 = vunpack.c.l.b16 %v1046
  %v4048 = vunpack.c.h.b16 %v1046
  %v4049 = vunpack.c.l.b16 %v1047
  %v4050 = vunpack.c.h.b16 %v1047
  %v4051 = vunpack.c.l.b16 %v1048
  %v4052 = vunpack.c.h.b16 %v1048
  %v4053 = vunpack.c.l.b16 %v1049
  %v4054 = vunpack.c.h.b16 %v1049
  %v4055 = vunpack.c.l.b16 %v1050
  %v4056 = vunpack.c.h.b16 %v1050
  %v4057 = vunpack.c.l.b16 %v1051
  %v4058 = vunpack.c.h.b16 %v1051
  %v4059 = vunpack.c.l.b16 %v1052
  %v4060 = vunpack.c.h.b16 %v1052
  %v4061 = vunpack.c.l.b16 %v1053
  %v4062 = vunpack.c.h.b16 %v1053
  %v4063 = vunpack.c.l.b16 %v1054
  %v4064 = vunpack.c.h.b16 %v1054
  %v4065 = vunpack.c.l.b16 %v1055
  %v4066 = vunpack.c.h.b16 %v1055
  %v4067 = vunpack.c.l.b16 %v1056
  %v4068 = vunpack.c.h.b16 %v1056
  %v4069 = vunpack.c.l.b16 %v1057
  %v4070 = vunpack.c.h.b16 %v1057
  %v4071 = vunpack.c.l.b16 %v1058
  %v4072 = vunpack.c.h.b16 %v1058
  %v4073 = vunpack.c.l.b16 %v1059
  %v4074 = vunpack.c.h.b16 %v1059
  %v4075 = vunpack.c.l.b16 %v1060
  %v4076 = vunpack.c.h.b16 %v1060
  %v4077 = vunpack.c.l.b16 %v1061
  %v4078 = vunpack.c.h.b16 %v1061
  %v4079 = vunpack.c.l.b16 %v1062
  %v4080 = vunpack.c.h.b16 %v1062
  %v4081 = vunpack.c.l.b16 %v1063
  %v4082 = vunpack.c.h.b16 %v1063
  %v4083 = vunpack.c.l.b16 %v1064
  %v4084 = vunpack.c.h.b16 %v1064
  %v4085 = vunpack.c.l.b16 %v1065
  %v4086 = vunpack.c.h.b16 %v1065
  %v4087 = vunpack.c.l.b16 %v1066
  %v4088 = vunpack.c.h.b16 %v1066
  %v4089 = vunpack.c.l.b16 %v1067
  %v4090 = vunpack.c.h.b16 %v1067
  %v4091 = vunpack.c.l.b16 %v1068
  %v4092 = vunpack.c.h.b16 %v1068
  %v4093 = vunpack.c.l.b16 %v1069
  %v4094 = vunpack.c.h.b16 %v1069
  %v4095 = vunpack.c.l.b16 %v1070
  %v4096 = vunpack.c.h.b16 %v1070
  %v4097 = vunpack.c.l.b16 %v1071
  %v4098 = vunpack.c.h.b16 %v1071
  %v4099 = vunpack.c.l.b16 %v1072
  %v4100 = vunpack.c.h.b16 %v1072
  %v4101 = vunpack.c.l.b16 %v1073
  %v4102 = vunpack.c.h.b16 %v1073
  %v4103 = vunpack.c.l.b16 %v1074
  %v4104 = vunpack.c.h.b16 %v1074
  %v4105 = vunpack.c.l.b16 %v1075
  %v4106 = vunpack.c.h.b16 %v1075
  %v4107 = vunpack.c.l.b16 %v1076
  %v4108 = vunpack.c.h.b16 %v1076
  %v4109 = vunpack.c.l.b16 %v1077
  %v4110 = vunpack.c.h.b16 %v1077
  %v4111 = vunpack.c.l.b16 %v1078
  %v4112 = vunpack.c.h.b16 %v1078
  %v4113 = vunpack.c.l.b16 %v1079
  %v4114 = vunpack.c.h.b16 %v1079
  %v4115 = vunpack.c.l.b16 %v1080
  %v4116 = vunpack.c.h.b16 %v1080
  %v4117 = vunpack.c.l.b16 %v1081
  %v4118 = vunpack.c.h.b16 %v1081
  %v4119 = vunpack.c.l.b16 %v1082
  %v4120 = vunpack.c.h.b16 %v1082
  %v4121 = vunpack.c.l.b16 %v1083
  %v4122 = vunpack.c.h.b16 %v1083
  %v4123 = vunpack.c.l.b16 %v1084
  %v4124 = vunpack.c.h.b16 %v1084
  %v4125 = vunpack.c.l.b16 %v1085
  %v4126 = vunpack.c.h.b16 %v1085
  %v4127 = vunpack.c.l.b16 %v1086
  %v4128 = vunpack.c.h.b16 %v1086
  %v4129 = vunpack.c.l.b16 %v1087
  %v4130 = vunpack.c.h.b16 %v1087
  %v4131 = vunpack.c.l.b16 %v1088
  %v4132 = vunpack.c.h.b16 %v1088
  %v4133 = vunpack.c.l.b16 %v1089
  %v4134 = vunpack.c.h.b16 %v1089
  %v4135 = vunpack.c.l.b16 %v1090
  %v4136 = vunpack.c.h.b16 %v1090
  %v4137 = vunpack.c.l.b16 %v1091
  %v4138 = vunpack.c.h.b16 %v1091
  %v4139 = vunpack.c.l.b16 %v1092
  %v4140 = vunpack.c.h.b16 %v1092
  %v4141 = vunpack.c.l.b16 %v1093
  %v4142 = vunpack.c.h.b16 %v1093
  %v4143 = vunpack.c.l.b16 %v1094
  %v4144 = vunpack.c.h.b16 %v1094
  %v4145 = vunpack.c.l.b16 %v1095
  %v4146 = vunpack.c.h.b16 %v1095
  %v4147 = vunpack.c.l.b16 %v1096
  %v4148 = vunpack.c.h.b16 %v1096
  %v4149 = vunpack.c.l.b16 %v1097
  %v4150 = vunpack.c.h.b16 %v1097
  %v4151 = vunpack.c.l.b16 %v1098
  %v4152 = vunpack.c.h.b16 %v1098
  %v4153 = vunpack.c.l.b16 %v1099
  %v4154 = vunpack.c.h.b16 %v1099
  %v4155 = vunpack.c.l.b16 %v1100
  %v4156 = vunpack.c.h.b16 %v1100
  %v4157 = vunpack.c.l.b16 %v1101
  %v4158 = vunpack.c.h.b16 %v1101
  %v4159 = vunpack.c.l.b16 %v1102
  %v4160 = vunpack.c.h.b16 %v1102
  %v4161 = vunpack.c.l.b16 %v1103
  %v4162 = vunpack.c.h.b16 %v1103
  %v4163 = vunpack.c.l.b16 %v1104
  %v4164 = vunpack.c.h.b16 %v1104
  %v4165 = vunpack.c.l.b16 %v1105
  %v4166 = vunpack.c.h.b16 %v1105
  %v4167 = vunpack.c.l.b16 %v1106
  %v4168 = vunpack.c.h.b16 %v1106
  %v4169 = vunpack.c.l.b16 %v1107
  %v4170 = vunpack.c.h.b16 %v1107
  %v4171 = vunpack.c.l.b16 %v1108
  %v4172 = vunpack.c.h.b16 %v1108
  %v4173 = vunpack.c.l.b16 %v1109
  %v4174 = vunpack.c.h.b16 %v1109
  %v4175 = vunpack.c.l.b16 %v1110
  %v4176 = vunpack.c.h.b16 %v1110
  %v4177 = vunpack.c.l.b16 %v1111
  %v4178 = vunpack.c.h.b16 %v1111
  %v4179 = vunpack.c.l.b16 %v1112
  %v4180 = vunpack.c.h.b16 %v1112
  %v4181 = vunpack.c.l.b16 %v1113
  %v4182 = vunpack.c.h.b16 %v1113
  %v4183 = vunpack.c.l.b16 %v1114
  %v4184 = vunpack.c.h.b16 %v1114
  %v4185 = vunpack.c.l.b16 %v1115
  %v4186 = vunpack.c.h.b16 %v1115
  %v4187 = vunpack.c.l.b16 %v1116
  %v4188 = vunpack.c.h.b16 %v1116
  %v4189 = vunpack.c.l.b16 %v1117
  %v4190 = vunpack.c.h.b16 %v1117
  %v4191 = vunpack.c.l.b16 %v1118
  %v4192 = vunpack.c.h.b16 %v1118
  %v4193 = vunpack.c.l.b16 %v1119
  %v4194 = vunpack.c.h.b16 %v1119
  %v4195 = vunpack.c.l.b16 %v1120
  %v4196 = vunpack.c.h.b16 %v1120
  %v4197 = vunpack.c.l.b16 %v1121
  %v4198 = vunpack.c.h.b16 %v1121
  %v4199 = vunpack.c.l.b16 %v1122
  %v4200 = vunpack.c.h.b16 %v1122
  %v4201 = vunpack.c.l.b16 %v1123
  %v4202 = vunpack.c.h.b16 %v1123
  %v4203 = vunpack.c.l.b16 %v1124
  %v4204 = vunpack.c.h.b16 %v1124
  %v4205 = vunpack.c.l.b16 %v1125
  %v4206 = vunpack.c.h.b16 %v1125
  %v4207 = vunpack.c.l.b16 %v1126
  %v4208 = vunpack.c.h.b16 %v1126
  %v4209 = vunpack.c.l.b16 %v1127
  %v4210 = vunpack.c.h.b16 %v1127
  %v4211 = vunpack.c.l.b16 %v1128
  %v4212 = vunpack.c.h.b16 %v1128
  %v4213 = vunpack.c.l.b16 %v1129
  %v4214 = vunpack.c.h.b16 %v1129
  %v4215 = vunpack.c.l.b16 %v1130
  %v4216 = vunpack.c.h.b16 %v1130
  %v4217 = vunpack.c.l.b16 %v1131
  %v4218 = vunpack.c.h.b16 %v1131
  %v4219 = vunpack.c.l.b16 %v1132
  %v4220 = vunpack.c.h.b16 %v1132
  %v4221 = vunpack.c.l.b16 %v1133
  %v4222 = vunpack.c.h.b16 %v1133
  %v4223 = vunpack.c.l.b16 %v1134
  %v4224 = vunpack.c.h.b16 %v1134
  %v4225 = vunpack.c.l.b16 %v1135
  %v4226 = vunpack.c.h.b16 %v1135
  %v4227 = vunpack.c.l.b16 %v1136
  %v4228 = vunpack.c.h.b16 %v1136
  %v4229 = vunpack.c.l.b16 %v1137
  %v4230 = vunpack.c.h.b16 %v1137
  %v4231 = vunpack.c.l.b16 %v1138
  %v4232 = vunpack.c.h.b16 %v1138
  %v4233 = vunpack.c.l.b16 %v1139
  %v4234 = vunpack.c.h.b16 %v1139
  %v4235 = vunpack.c.l.b16 %v1140
  %v4236 = vunpack.c.h.b16 %v1140
  %v4237 = vunpack.c.l.b16 %v1141
  %v4238 = vunpack.c.h.b16 %v1141
  %v4239 = vunpack.c.l.b16 %v1142
  %v4240 = vunpack.c.h.b16 %v1142
  %v4241 = vunpack.c.l.b16 %v1143
  %v4242 = vunpack.c.h.b16 %v1143
  %v4243 = vunpack.c.l.b16 %v1144
  %v4244 = vunpack.c.h.b16 %v1144
  %v4245 = vunpack.c.l.b16 %v1145
  %v4246 = vunpack.c.h.b16 %v1145
  %v4247 = vunpack.c.l.b16 %v1146
  %v4248 = vunpack.c.h.b16 %v1146
  %v4249 = vunpack.c.l.b16 %v1147
  %v4250 = vunpack.c.h.b16 %v1147
  %v4251 = vunpack.c.l.b16 %v1148
  %v4252 = vunpack.c.h.b16 %v1148
  %v4253 = vunpack.c.l.b16 %v1149
  %v4254 = vunpack.c.h.b16 %v1149
  %v4255 = vunpack.c.l.b16 %v1150
  %v4256 = vunpack.c.h.b16 %v1150
  %v4257 = vunpack.c.l.b16 %v1151
  %v4258 = vunpack.c.h.b16 %v1151
  %v4259 = vunpack.c.l.b16 %v1152
  %v4260 = vunpack.c.h.b16 %v1152
  %v4261 = vunpack.c.l.b16 %v1153
  %v4262 = vunpack.c.h.b16 %v1153
  %v4263 = vunpack.c.l.b16 %v1154
  %v4264 = vunpack.c.h.b16 %v1154
  %v4265 = vunpack.c.l.b16 %v1155
  %v4266 = vunpack.c.h.b16 %v1155
  %v4267 = vunpack.c.l.b16 %v1156
  %v4268 = vunpack.c.h.b16 %v1156
  %v4269 = vunpack.c.l.b16 %v1157
  %v4270 = vunpack.c.h.b16 %v1157
  %v4271 = vunpack.c.l.b16 %v1158
  %v4272 = vunpack.c.h.b16 %v1158
  %v4273 = vpack.c.b16 %v2233, %v2225
  %v4274 = vpack.c.b16 %v2234, %v2226
  %v4275 = vpack.c.b16 %v2235, %v2227
  %v4276 = vpack.c.b16 %v2236, %v2228
  %v4277 = vpack.c.b16 %v2237, %v2229
  %v4278 = vpack.c.b16 %v2238, %v2230
  %v4279 = vpack.c.b16 %v2239, %v2231
  %v4280 = vpack.c.b16 %v2240, %v2232
  %v4281 = vpack.c.b16 %v2249, %v2241
  %v4282 = vpack.c.b16 %v2250, %v2242
  %v4283 = vpack.c.b16 %v2251, %v2243
  %v4284 = vpack.c.b16 %v2252, %v2244
  %v4285 = vpack.c.b16 %v2253, %v2245
  %v4286 = vpack.c.b16 %v2254, %v2246
  %v4287 = vpack.c.b16 %v2255, %v2247
  %v4288 = vpack.c.b16 %v2256, %v2248
  %v4289 = vpack.c.b16 %v2265, %v2257
  %v4290 = vpack.c.b16 %v2266, %v2258
  %v4291 = vpack.c.b16 %v2267, %v2259
  %v4292 = vpack.c.b16 %v2268, %v2260
  %v4293 = vpack.c.b16 %v2269, %v2261
  %v4294 = vpack.c.b16 %v2270, %v2262
  %v4295 = vpack.c.b16 %v2271, %v2263
  %v4296 = vpack.c.b16 %v2272, %v2264
  %v4297 = vpack.c.b16 %v2281, %v2273
  %v4298 = vpack.c.b16 %v2282, %v2274
  %v4299 = vpack.c.b16 %v2283, %v2275
  %v4300 = vpack.c.b16 %v2284, %v2276
  %v4301 = vpack.c.b16 %v2285, %v2277
  %v4302 = vpack.c.b16 %v2286, %v2278
  %v4303 = vpack.c.b16 %v2287, %v2279
  %v4304 = vpack.c.b16 %v2288, %v2280
  %v4305 = vpack.c.b16 %v2297, %v2289
  %v4306 = vpack.c.b16 %v2298, %v2290
  %v4307 = vpack.c.b16 %v2299, %v2291
  %v4308 = vpack.c.b16 %v2300, %v2292
  %v4309 = vpack.c.b16 %v2301, %v2293
  %v4310 = vpack.c.b16 %v2302, %v2294
  %v4311 = vpack.c.b16 %v2303, %v2295
  %v4312 = vpack.c.b16 %v2304, %v2296
  %v4313 = vpack.c.b16 %v2313, %v2305
  %v4314 = vpack.c.b16 %v2314, %v2306
  %v4315 = vpack.c.b16 %v2315, %v2307
  %v4316 = vpack.c.b16 %v2316, %v2308
  %v4317 = vpack.c.b16 %v2317, %v2309
  %v4318 = vpack.c.b16 %v2318, %v2310
  %v4319 = vpack.c.b16 %v2319, %v2311
  %v4320 = vpack.c.b16 %v2320, %v2312
  %v4321 = vpack.c.b16 %v2329, %v2321
  %v4322 = vpack.c.b16 %v2330, %v2322
  %v4323 = vpack.c.b16 %v2331, %v2323
  %v4324 = vpack.c.b16 %v2332, %v2324
  %v4325 = vpack.c.b16 %v2333, %v2325
  %v4326 = vpack.c.b16 %v2334, %v2326
  %v4327 = vpack.c.b16 %v2335, %v2327
  %v4328 = vpack.c.b16 %v2336, %v2328
  %v4329 = vpack.c.b16 %v2345, %v2337
  %v4330 = vpack.c.b16 %v2346, %v2338
  %v4331 = vpack.c.b16 %v2347, %v2339
  %v4332 = vpack.c.b16 %v2348, %v2340
  %v4333 = vpack.c.b16 %v2349, %v2341
  %v4334 = vpack.c.b16 %v2350, %v2342
  %v4335 = vpack.c.b16 %v2351, %v2343
  %v4336 = vpack.c.b16 %v2352, %v2344
  %v4337 = vpack.c.b16 %v2361, %v2353
  %v4338 = vpack.c.b16 %v2362, %v2354
  %v4339 = vpack.c.b16 %v2363, %v2355
  %v4340 = vpack.c.b16 %v2364, %v2356
  %v4341 = vpack.c.b16 %v2365, %v2357
  %v4342 = vpack.c.b16 %v2366, %v2358
  %v4343 = vpack.c.b16 %v2367, %v2359
  %v4344 = vpack.c.b16 %v2368, %v2360
  %v4345 = vpack.c.b16 %v2377, %v2369
  %v4346 = vpack.c.b16 %v2378, %v2370
  %v4347 = vpack.c.b16 %v2379, %v2371
  %v4348 = vpack.c.b16 %v2380, %v2372
  %v4349 = vpack.c.b16 %v2381, %v2373
  %v4350 = vpack.c.b16 %v2382, %v2374
  %v4351 = vpack.c.b16 %v2383, %v2375
  %v4352 = vpack.c.b16 %v2384, %v2376
  %v4353 = vpack.c.b16 %v2393, %v2385
  %v4354 = vpack.c.b16 %v2394, %v2386
  %v4355 = vpack.c.b16 %v2395, %v2387
  %v4356 = vpack.c.b16 %v2396, %v2388
  %v4357 = vpack.c.b16 %v2397, %v2389
  %v4358 = vpack.c.b16 %v2398, %v2390
  %v4359 = vpack.c.b16 %v2399, %v2391
  %v4360 = vpack.c.b16 %v2400, %v2392
  %v4361 = vpack.c.b16 %v2409, %v2401
  %v4362 = vpack.c.b16 %v2410, %v2402
  %v4363 = vpack.c.b16 %v2411, %v2403
  %v4364 = vpack.c.b16 %v2412, %v2404
  %v4365 = vpack.c.b16 %v2413, %v2405
  %v4366 = vpack.c.b16 %v2414, %v2406
  %v4367 = vpack.c.b16 %v2415, %v2407
  %v4368 = vpack.c.b16 %v2416, %v2408
  %v4369 = vpack.c.b16 %v2425, %v2417
  %v4370 = vpack.c.b16 %v2426, %v2418
  %v4371 = vpack.c.b16 %v2427, %v2419
  %v4372 = vpack.c.b16 %v2428, %v2420
  %v4373 = vpack.c.b16 %v2429, %v2421
  %v4374 = vpack.c.b16 %v2430, %v2422
  %v4375 = vpack.c.b16 %v2431, %v2423
  %v4376 = vpack.c.b16 %v2432, %v2424
  %v4377 = vpack.c.b16 %v2441, %v2433
  %v4378 = vpack.c.b16 %v2442, %v2434
  %v4379 = vpack.c.b16 %v2443, %v2435
  %v4380 = vpack.c.b16 %v2444, %v2436
  %v4381 = vpack.c.b16 %v2445, %v2437
  %v4382 = vpack.c.b16 %v2446, %v2438
  %v4383 = vpack.c.b16 %v2447, %v2439
  %v4384 = vpack.c.b16 %v2448, %v2440
  %v4385 = vpack.c.b16 %v2457, %v2449
  %v4386 = vpack.c.b16 %v2458, %v2450
  %v4387 = vpack.c.b16 %v2459, %v2451
  %v4388 = vpack.c.b16 %v2460, %v2452
  %v4389 = vpack.c.b16 %v2461, %v2453
  %v4390 = vpack.c.b16 %v2462, %v2454
  %v4391 = vpack.c.b16 %v2463, %v2455
  %v4392 = vpack.c.b16 %v2464, %v2456
  %v4393 = vpack.c.b16 %v2473, %v2465
  %v4394 = vpack.c.b16 %v2474, %v2466
  %v4395 = vpack.c.b16 %v2475, %v2467
  %v4396 = vpack.c.b16 %v2476, %v2468
  %v4397 = vpack.c.b16 %v2477, %v2469
  %v4398 = vpack.c.b16 %v2478, %v2470
  %v4399 = vpack.c.b16 %v2479, %v2471
  %v4400 = vpack.c.b16 %v2480, %v2472
  %v4401 = vpack.c.b16 %v2489, %v2481
  %v4402 = vpack.c.b16 %v2490, %v2482
  %v4403 = vpack.c.b16 %v2491, %v2483
  %v4404 = vpack.c.b16 %v2492, %v2484
  %v4405 = vpack.c.b16 %v2493, %v2485
  %v4406 = vpack.c.b16 %v2494, %v2486
  %v4407 = vpack.c.b16 %v2495, %v2487
  %v4408 = vpack.c.b16 %v2496, %v2488
  %v4409 = vpack.c.b16 %v2505, %v2497
  %v4410 = vpack.c.b16 %v2506, %v2498
  %v4411 = vpack.c.b16 %v2507, %v2499
  %v4412 = vpack.c.b16 %v2508, %v2500
  %v4413 = vpack.c.b16 %v2509, %v2501
  %v4414 = vpack.c.b16 %v2510, %v2502
  %v4415 = vpack.c.b16 %v2511, %v2503
  %v4416 = vpack.c.b16 %v2512, %v2504
  %v4417 = vpack.c.b16 %v2521, %v2513
  %v4418 = vpack.c.b16 %v2522, %v2514
  %v4419 = vpack.c.b16 %v2523, %v2515
  %v4420 = vpack.c.b16 %v2524, %v2516
  %v4421 = vpack.c.b16 %v2525, %v2517
  %v4422 = vpack.c.b16 %v2526, %v2518
  %v4423 = vpack.c.b16 %v2527, %v2519
  %v4424 = vpack.c.b16 %v2528, %v2520
  %v4425 = vpack.c.b16 %v2537, %v2529
  %v4426 = vpack.c.b16 %v2538, %v2530
  %v4427 = vpack.c.b16 %v2539, %v2531
  %v4428 = vpack.c.b16 %v2540, %v2532
  %v4429 = vpack.c.b16 %v2541, %v2533
  %v4430 = vpack.c.b16 %v2542, %v2534
  %v4431 = vpack.c.b16 %v2543, %v2535
  %v4432 = vpack.c.b16 %v2544, %v2536
  %v4433 = vpack.c.b16 %v2553, %v2545
  %v4434 = vpack.c.b16 %v2554, %v2546
  %v4435 = vpack.c.b16 %v2555, %v2547
  %v4436 = vpack.c.b16 %v2556, %v2548
  %v4437 = vpack.c.b16 %v2557, %v2549
  %v4438 = vpack.c.b16 %v2558, %v2550
  %v4439 = vpack.c.b16 %v2559, %v2551
  %v4440 = vpack.c.b16 %v2560, %v2552
  %v4441 = vpack.c.b16 %v2569, %v2561
  %v4442 = vpack.c.b16 %v2570, %v2562
  %v4443 = vpack.c.b16 %v2571, %v2563
  %v4444 = vpack.c.b16 %v2572, %v2564
  %v4445 = vpack.c.b16 %v2573, %v2565
  %v4446 = vpack.c.b16 %v2574, %v2566
  %v4447 = vpack.c.b16 %v2575, %v2567
  %v4448 = vpack.c.b16 %v2576, %v2568
  %v4449 = vpack.c.b16 %v2585, %v2577
  %v4450 = vpack.c.b16 %v2586, %v2578
  %v4451 = vpack.c.b16 %v2587, %v2579
  %v4452 = vpack.c.b16 %v2588, %v2580
  %v4453 = vpack.c.b16 %v2589, %v2581
  %v4454 = vpack.c.b16 %v2590, %v2582
  %v4455 = vpack.c.b16 %v2591, %v2583
  %v4456 = vpack.c.b16 %v2592, %v2584
  %v4457 = vpack.c.b16 %v2601, %v2593
  %v4458 = vpack.c.b16 %v2602, %v2594
  %v4459 = vpack.c.b16 %v2603, %v2595
  %v4460 = vpack.c.b16 %v2604, %v2596
  %v4461 = vpack.c.b16 %v2605, %v2597
  %v4462 = vpack.c.b16 %v2606, %v2598
  %v4463 = vpack.c.b16 %v2607, %v2599
  %v4464 = vpack.c.b16 %v2608, %v2600
  %v4465 = vpack.c.b16 %v2617, %v2609
  %v4466 = vpack.c.b16 %v2618, %v2610
  %v4467 = vpack.c.b16 %v2619, %v2611
  %v4468 = vpack.c.b16 %v2620, %v2612
  %v4469 = vpack.c.b16 %v2621, %v2613
  %v4470 = vpack.c.b16 %v2622, %v2614
  %v4471 = vpack.c.b16 %v2623, %v2615
  %v4472 = vpack.c.b16 %v2624, %v2616
  %v4473 = vpack.c.b16 %v2633, %v2625
  %v4474 = vpack.c.b16 %v2634, %v2626
  %v4475 = vpack.c.b16 %v2635, %v2627
  %v4476 = vpack.c.b16 %v2636, %v2628
  %v4477 = vpack.c.b16 %v2637, %v2629
  %v4478 = vpack.c.b16 %v2638, %v2630
  %v4479 = vpack.c.b16 %v2639, %v2631
  %v4480 = vpack.c.b16 %v2640, %v2632
  %v4481 = vpack.c.b16 %v2649, %v2641
  %v4482 = vpack.c.b16 %v2650, %v2642
  %v4483 = vpack.c.b16 %v2651, %v2643
  %v4484 = vpack.c.b16 %v2652, %v2644
  %v4485 = vpack.c.b16 %v2653, %v2645
  %v4486 = vpack.c.b16 %v2654, %v2646
  %v4487 = vpack.c.b16 %v2655, %v2647
  %v4488 = vpack.c.b16 %v2656, %v2648
  %v4489 = vpack.c.b16 %v2665, %v2657
  %v4490 = vpack.c.b16 %v2666, %v2658
  %v4491 = vpack.c.b16 %v2667, %v2659
  %v4492 = vpack.c.b16 %v2668, %v2660
  %v4493 = vpack.c.b16 %v2669, %v2661
  %v4494 = vpack.c.b16 %v2670, %v2662
  %v4495 = vpack.c.b16 %v2671, %v2663
  %v4496 = vpack.c.b16 %v2672, %v2664
  %v4497 = vpack.c.b16 %v2681, %v2673
  %v4498 = vpack.c.b16 %v2682, %v2674
  %v4499 = vpack.c.b16 %v2683, %v2675
  %v4500 = vpack.c.b16 %v2684, %v2676
  %v4501 = vpack.c.b16 %v2685, %v2677
  %v4502 = vpack.c.b16 %v2686, %v2678
  %v4503 = vpack.c.b16 %v2687, %v2679
  %v4504 = vpack.c.b16 %v2688, %v2680
  %v4505 = vpack.c.b16 %v2697, %v2689
  %v4506 = vpack.c.b16 %v2698, %v2690
  %v4507 = vpack.c.b16 %v2699, %v2691
  %v4508 = vpack.c.b16 %v2700, %v2692
  %v4509 = vpack.c.b16 %v2701, %v2693
  %v4510 = vpack.c.b16 %v2702, %v2694
  %v4511 = vpack.c.b16 %v2703, %v2695
  %v4512 = vpack.c.b16 %v2704, %v2696
  %v4513 = vpack.c.b16 %v2713, %v2705
  %v4514 = vpack.c.b16 %v2714, %v2706
  %v4515 = vpack.c.b16 %v2715, %v2707
  %v4516 = vpack.c.b16 %v2716, %v2708
  %v4517 = vpack.c.b16 %v2717, %v2709
  %v4518 = vpack.c.b16 %v2718, %v2710
  %v4519 = vpack.c.b16 %v2719, %v2711
  %v4520 = vpack.c.b16 %v2720, %v2712
  %v4521 = vpack.c.b16 %v2729, %v2721
  %v4522 = vpack.c.b16 %v2730, %v2722
  %v4523 = vpack.c.b16 %v2731, %v2723
  %v4524 = vpack.c.b16 %v2732, %v2724
  %v4525 = vpack.c.b16 %v2733, %v2725
  %v4526 = vpack.c.b16 %v2734, %v2726
  %v4527 = vpack.c.b16 %v2735, %v2727
  %v4528 = vpack.c.b16 %v2736, %v2728
  %v4529 = vpack.c.b16 %v2745, %v2737
  %v4530 = vpack.c.b16 %v2746, %v2738
  %v4531 = vpack.c.b16 %v2747, %v2739
  %v4532 = vpack.c.b16 %v2748, %v2740
  %v4533 = vpack.c.b16 %v2749, %v2741
  %v4534 = vpack.c.b16 %v2750, %v2742
  %v4535 = vpack.c.b16 %v2751, %v2743
  %v4536 = vpack.c.b16 %v2752, %v2744
  %v4537 = vpack.c.b16 %v2761, %v2753
  %v4538 = vpack.c.b16 %v2762, %v2754
  %v4539 = vpack.c.b16 %v2763, %v2755
  %v4540 = vpack.c.b16 %v2764, %v2756
  %v4541 = vpack.c.b16 %v2765, %v2757
  %v4542 = vpack.c.b16 %v2766, %v2758
  %v4543 = vpack.c.b16 %v2767, %v2759
  %v4544 = vpack.c.b16 %v2768, %v2760
  %v4545 = vpack.c.b16 %v2777, %v2769
  %v4546 = vpack.c.b16 %v2778, %v2770
  %v4547 = vpack.c.b16 %v2779, %v2771
  %v4548 = vpack.c.b16 %v2780, %v2772
  %v4549 = vpack.c.b16 %v2781, %v2773
  %v4550 = vpack.c.b16 %v2782, %v2774
  %v4551 = vpack.c.b16 %v2783, %v2775
  %v4552 = vpack.c.b16 %v2784, %v2776
  %v4553 = vpack.c.b16 %v2793, %v2785
  %v4554 = vpack.c.b16 %v2794, %v2786
  %v4555 = vpack.c.b16 %v2795, %v2787
  %v4556 = vpack.c.b16 %v2796, %v2788
  %v4557 = vpack.c.b16 %v2797, %v2789
  %v4558 = vpack.c.b16 %v2798, %v2790
  %v4559 = vpack.c.b16 %v2799, %v2791
  %v4560 = vpack.c.b16 %v2800, %v2792
  %v4561 = vpack.c.b16 %v2809, %v2801
  %v4562 = vpack.c.b16 %v2810, %v2802
  %v4563 = vpack.c.b16 %v2811, %v2803
  %v4564 = vpack.c.b16 %v2812, %v2804
  %v4565 = vpack.c.b16 %v2813, %v2805
  %v4566 = vpack.c.b16 %v2814, %v2806
  %v4567 = vpack.c.b16 %v2815, %v2807
  %v4568 = vpack.c.b16 %v2816, %v2808
  %v4569 = vpack.c.b16 %v2825, %v2817
  %v4570 = vpack.c.b16 %v2826, %v2818
  %v4571 = vpack.c.b16 %v2827, %v2819
  %v4572 = vpack.c.b16 %v2828, %v2820
  %v4573 = vpack.c.b16 %v2829, %v2821
  %v4574 = vpack.c.b16 %v2830, %v2822
  %v4575 = vpack.c.b16 %v2831, %v2823
  %v4576 = vpack.c.b16 %v2832, %v2824
  %v4577 = vpack.c.b16 %v2841, %v2833
  %v4578 = vpack.c.b16 %v2842, %v2834
  %v4579 = vpack.c.b16 %v2843, %v2835
  %v4580 = vpack.c.b16 %v2844, %v2836
  %v4581 = vpack.c.b16 %v2845, %v2837
  %v4582 = vpack.c.b16 %v2846, %v2838
  %v4583 = vpack.c.b16 %v2847, %v2839
  %v4584 = vpack.c.b16 %v2848, %v2840
  %v4585 = vpack.c.b16 %v2857, %v2849
  %v4586 = vpack.c.b16 %v2858, %v2850
  %v4587 = vpack.c.b16 %v2859, %v2851
  %v4588 = vpack.c.b16 %v2860, %v2852
  %v4589 = vpack.c.b16 %v2861, %v2853
  %v4590 = vpack.c.b16 %v2862, %v2854
  %v4591 = vpack.c.b16 %v2863, %v2855
  %v4592 = vpack.c.b16 %v2864, %v2856
  %v4593 = vpack.c.b16 %v2873, %v2865
  %v4594 = vpack.c.b16 %v2874, %v2866
  %v4595 = vpack.c.b16 %v2875, %v2867
  %v4596 = vpack.c.b16 %v2876, %v2868
  %v4597 = vpack.c.b16 %v2877, %v2869
  %v4598 = vpack.c.b16 %v2878, %v2870
  %v4599 = vpack.c.b16 %v2879, %v2871
  %v4600 = vpack.c.b16 %v2880, %v2872
  %v4601 = vpack.c.b16 %v2889, %v2881
  %v4602 = vpack.c.b16 %v2890, %v2882
  %v4603 = vpack.c.b16 %v2891, %v2883
  %v4604 = vpack.c.b16 %v2892, %v2884
  %v4605 = vpack.c.b16 %v2893, %v2885
  %v4606 = vpack.c.b16 %v2894, %v2886
  %v4607 = vpack.c.b16 %v2895, %v2887
  %v4608 = vpack.c.b16 %v2896, %v2888
  %v4609 = vpack.c.b16 %v2905, %v2897
  %v4610 = vpack.c.b16 %v2906, %v2898
  %v4611 = vpack.c.b16 %v2907, %v2899
  %v4612 = vpack.c.b16 %v2908, %v2900
  %v4613 = vpack.c.b16 %v2909, %v2901
  %v4614 = vpack.c.b16 %v2910, %v2902
  %v4615 = vpack.c.b16 %v2911, %v2903
  %v4616 = vpack.c.b16 %v2912, %v2904
  %v4617 = vpack.c.b16 %v2921, %v2913
  %v4618 = vpack.c.b16 %v2922, %v2914
  %v4619 = vpack.c.b16 %v2923, %v2915
  %v4620 = vpack.c.b16 %v2924, %v2916
  %v4621 = vpack.c.b16 %v2925, %v2917
  %v4622 = vpack.c.b16 %v2926, %v2918
  %v4623 = vpack.c.b16 %v2927, %v2919
  %v4624 = vpack.c.b16 %v2928, %v2920
  %v4625 = vpack.c.b16 %v2937, %v2929
  %v4626 = vpack.c.b16 %v2938, %v2930
  %v4627 = vpack.c.b16 %v2939, %v2931
  %v4628 = vpack.c.b16 %v2940, %v2932
  %v4629 = vpack.c.b16 %v2941, %v2933
  %v4630 = vpack.c.b16 %v2942, %v2934
  %v4631 = vpack.c.b16 %v2943, %v2935
  %v4632 = vpack.c.b16 %v2944, %v2936
  %v4633 = vpack.c.b16 %v2953, %v2945
  %v4634 = vpack.c.b16 %v2954, %v2946
  %v4635 = vpack.c.b16 %v2955, %v2947
  %v4636 = vpack.c.b16 %v2956, %v2948
  %v4637 = vpack.c.b16 %v2957, %v2949
  %v4638 = vpack.c.b16 %v2958, %v2950
  %v4639 = vpack.c.b16 %v2959, %v2951
  %v4640 = vpack.c.b16 %v2960, %v2952
  %v4641 = vpack.c.b16 %v2969, %v2961
  %v4642 = vpack.c.b16 %v2970, %v2962
  %v4643 = vpack.c.b16 %v2971, %v2963
  %v4644 = vpack.c.b16 %v2972, %v2964
  %v4645 = vpack.c.b16 %v2973, %v2965
  %v4646 = vpack.c.b16 %v2974, %v2966
  %v4647 = vpack.c.b16 %v2975, %v2967
  %v4648 = vpack.c.b16 %v2976, %v2968
  %v4649 = vpack.c.b16 %v2985, %v2977
  %v4650 = vpack.c.b16 %v2986, %v2978
  %v4651 = vpack.c.b16 %v2987, %v2979
  %v4652 = vpack.c.b16 %v2988, %v2980
  %v4653 = vpack.c.b16 %v2989, %v2981
  %v4654 = vpack.c.b16 %v2990, %v2982
  %v4655 = vpack.c.b16 %v2991, %v2983
  %v4656 = vpack.c.b16 %v2992, %v2984
  %v4657 = vpack.c.b16 %v3001, %v2993
  %v4658 = vpack.c.b16 %v3002, %v2994
  %v4659 = vpack.c.b16 %v3003, %v2995
  %v4660 = vpack.c.b16 %v3004, %v2996
  %v4661 = vpack.c.b16 %v3005, %v2997
  %v4662 = vpack.c.b16 %v3006, %v2998
  %v4663 = vpack.c.b16 %v3007, %v2999
  %v4664 = vpack.c.b16 %v3008, %v3000
  %v4665 = vpack.c.b16 %v3017, %v3009
  %v4666 = vpack.c.b16 %v3018, %v3010
  %v4667 = vpack.c.b16 %v3019, %v3011
  %v4668 = vpack.c.b16 %v3020, %v3012
  %v4669 = vpack.c.b16 %v3021, %v3013
  %v4670 = vpack.c.b16 %v3022, %v3014
  %v4671 = vpack.c.b16 %v3023, %v3015
  %v4672 = vpack.c.b16 %v3024, %v3016
  %v4673 = vpack.c.b16 %v3033, %v3025
  %v4674 = vpack.c.b16 %v3034, %v3026
  %v4675 = vpack.c.b16 %v3035, %v3027
  %v4676 = vpack.c.b16 %v3036, %v3028
  %v4677 = vpack.c.b16 %v3037, %v3029
  %v4678 = vpack.c.b16 %v3038, %v3030
  %v4679 = vpack.c.b16 %v3039, %v3031
  %v4680 = vpack.c.b16 %v3040, %v3032
  %v4681 = vpack.c.b16 %v3049, %v3041
  %v4682 = vpack.c.b16 %v3050, %v3042
  %v4683 = vpack.c.b16 %v3051, %v3043
  %v4684 = vpack.c.b16 %v3052, %v3044
  %v4685 = vpack.c.b16 %v3053, %v3045
  %v4686 = vpack.c.b16 %v3054, %v3046
  %v4687 = vpack.c.b16 %v3055, %v3047
  %v4688 = vpack.c.b16 %v3056, %v3048
  %v4689 = vpack.c.b16 %v3065, %v3057
  %v4690 = vpack.c.b16 %v3066, %v3058
  %v4691 = vpack.c.b16 %v3067, %v3059
  %v4692 = vpack.c.b16 %v3068, %v3060
  %v4693 = vpack.c.b16 %v3069, %v3061
  %v4694 = vpack.c.b16 %v3070, %v3062
  %v4695 = vpack.c.b16 %v3071, %v3063
  %v4696 = vpack.c.b16 %v3072, %v3064
  %v4697 = vpack.c.b16 %v3081, %v3073
  %v4698 = vpack.c.b16 %v3082, %v3074
  %v4699 = vpack.c.b16 %v3083, %v3075
  %v4700 = vpack.c.b16 %v3084, %v3076
  %v4701 = vpack.c.b16 %v3085, %v3077
  %v4702 = vpack.c.b16 %v3086, %v3078
  %v4703 = vpack.c.b16 %v3087, %v3079
  %v4704 = vpack.c.b16 %v3088, %v3080
  %v4705 = vpack.c.b16 %v3097, %v3089
  %v4706 = vpack.c.b16 %v3098, %v3090
  %v4707 = vpack.c.b16 %v3099, %v3091
  %v4708 = vpack.c.b16 %v3100, %v3092
  %v4709 = vpack.c.b16 %v3101, %v3093
  %v4710 = vpack.c.b16 %v3102, %v3094
  %v4711 = vpack.c.b16 %v3103, %v3095
  %v4712 = vpack.c.b16 %v3104, %v3096
  %v4713 = vpack.c.b16 %v3113, %v3105
  %v4714 = vpack.c.b16 %v3114, %v3106
  %v4715 = vpack.c.b16 %v3115, %v3107
  %v4716 = vpack.c.b16 %v3116, %v3108
  %v4717 = vpack.c.b16 %v3117, %v3109
  %v4718 = vpack.c.b16 %v3118, %v3110
  %v4719 = vpack.c.b16 %v3119, %v3111
  %v4720 = vpack.c.b16 %v3120, %v3112
  %v4721 = vpack.c.b16 %v3129, %v3121
  %v4722 = vpack.c.b16 %v3130, %v3122
  %v4723 = vpack.c.b16 %v3131, %v3123
  %v4724 = vpack.c.b16 %v3132, %v3124
  %v4725 = vpack.c.b16 %v3133, %v3125
  %v4726 = vpack.c.b16 %v3134, %v3126
  %v4727 = vpack.c.b16 %v3135, %v3127
  %v4728 = vpack.c.b16 %v3136, %v3128
  %v4729 = vpack.c.b16 %v3145, %v3137
  %v4730 = vpack.c.b16 %v3146, %v3138
  %v4731 = vpack.c.b16 %v3147, %v3139
  %v4732 = vpack.c.b16 %v3148, %v3140
  %v4733 = vpack.c.b16 %v3149, %v3141
  %v4734 = vpack.c.b16 %v3150, %v3142
  %v4735 = vpack.c.b16 %v3151, %v3143
  %v4736 = vpack.c.b16 %v3152, %v3144
  %v4737 = vpack.c.b16 %v3161, %v3153
  %v4738 = vpack.c.b16 %v3162, %v3154
  %v4739 = vpack.c.b16 %v3163, %v3155
  %v4740 = vpack.c.b16 %v3164, %v3156
  %v4741 = vpack.c.b16 %v3165, %v3157
  %v4742 = vpack.c.b16 %v3166, %v3158
  %v4743 = vpack.c.b16 %v3167, %v3159
  %v4744 = vpack.c.b16 %v3168, %v3160
  %v4745 = vpack.c.b16 %v3177, %v3169
  %v4746 = vpack.c.b16 %v3178, %v3170
  %v4747 = vpack.c.b16 %v3179, %v3171
  %v4748 = vpack.c.b16 %v3180, %v3172
  %v4749 = vpack.c.b16 %v3181, %v3173
  %v4750 = vpack.c.b16 %v3182, %v3174
  %v4751 = vpack.c.b16 %v3183, %v3175
  %v4752 = vpack.c.b16 %v3184, %v3176
  %v4753 = vpack.c.b16 %v3193, %v3185
  %v4754 = vpack.c.b16 %v3194, %v3186
  %v4755 = vpack.c.b16 %v3195, %v3187
  %v4756 = vpack.c.b16 %v3196, %v3188
  %v4757 = vpack.c.b16 %v3197, %v3189
  %v4758 = vpack.c.b16 %v3198, %v3190
  %v4759 = vpack.c.b16 %v3199, %v3191
  %v4760 = vpack.c.b16 %v3200, %v3192
  %v4761 = vpack.c.b16 %v3209, %v3201
  %v4762 = vpack.c.b16 %v3210, %v3202
  %v4763 = vpack.c.b16 %v3211, %v3203
  %v4764 = vpack.c.b16 %v3212, %v3204
  %v4765 = vpack.c.b16 %v3213, %v3205
  %v4766 = vpack.c.b16 %v3214, %v3206
  %v4767 = vpack.c.b16 %v3215, %v3207
  %v4768 = vpack.c.b16 %v3216, %v3208
  %v4769 = vpack.c.b16 %v3225, %v3217
  %v4770 = vpack.c.b16 %v3226, %v3218
  %v4771 = vpack.c.b16 %v3227, %v3219
  %v4772 = vpack.c.b16 %v3228, %v3220
  %v4773 = vpack.c.b16 %v3229, %v3221
  %v4774 = vpack.c.b16 %v3230, %v3222
  %v4775 = vpack.c.b16 %v3231, %v3223
  %v4776 = vpack.c.b16 %v3232, %v3224
  %v4777 = vpack.c.b16 %v3241, %v3233
  %v4778 = vpack.c.b16 %v3242, %v3234
  %v4779 = vpack.c.b16 %v3243, %v3235
  %v4780 = vpack.c.b16 %v3244, %v3236
  %v4781 = vpack.c.b16 %v3245, %v3237
  %v4782 = vpack.c.b16 %v3246, %v3238
  %v4783 = vpack.c.b16 %v3247, %v3239
  %v4784 = vpack.c.b16 %v3248, %v3240
  %v4785 = vpack.c.b16 %v3257, %v3249
  %v4786 = vpack.c.b16 %v3258, %v3250
  %v4787 = vpack.c.b16 %v3259, %v3251
  %v4788 = vpack.c.b16 %v3260, %v3252
  %v4789 = vpack.c.b16 %v3261, %v3253
  %v4790 = vpack.c.b16 %v3262, %v3254
  %v4791 = vpack.c.b16 %v3263, %v3255
  %v4792 = vpack.c.b16 %v3264, %v3256
  %v4793 = vpack.c.b16 %v3273, %v3265
  %v4794 = vpack.c.b16 %v3274, %v3266
  %v4795 = vpack.c.b16 %v3275, %v3267
  %v4796 = vpack.c.b16 %v3276, %v3268
  %v4797 = vpack.c.b16 %v3277, %v3269
  %v4798 = vpack.c.b16 %v3278, %v3270
  %v4799 = vpack.c.b16 %v3279, %v3271
  %v4800 = vpack.c.b16 %v3280, %v3272
  %v4801 = vpack.c.b16 %v3289, %v3281
  %v4802 = vpack.c.b16 %v3290, %v3282
  %v4803 = vpack.c.b16 %v3291, %v3283
  %v4804 = vpack.c.b16 %v3292, %v3284
  %v4805 = vpack.c.b16 %v3293, %v3285
  %v4806 = vpack.c.b16 %v3294, %v3286
  %v4807 = vpack.c.b16 %v3295, %v3287
  %v4808 = vpack.c.b16 %v3296, %v3288
  %v4809 = vpack.c.b16 %v3305, %v3297
  %v4810 = vpack.c.b16 %v3306, %v3298
  %v4811 = vpack.c.b16 %v3307, %v3299
  %v4812 = vpack.c.b16 %v3308, %v3300
  %v4813 = vpack.c.b16 %v3309, %v3301
  %v4814 = vpack.c.b16 %v3310, %v3302
  %v4815 = vpack.c.b16 %v3311, %v3303
  %v4816 = vpack.c.b16 %v3312, %v3304
  %v4817 = vpack.c.b16 %v3321, %v3313
  %v4818 = vpack.c.b16 %v3322, %v3314
  %v4819 = vpack.c.b16 %v3323, %v3315
  %v4820 = vpack.c.b16 %v3324, %v3316
  %v4821 = vpack.c.b16 %v3325, %v3317
  %v4822 = vpack.c.b16 %v3326, %v3318
  %v4823 = vpack.c.b16 %v3327, %v3319
  %v4824 = vpack.c.b16 %v3328, %v3320
  %v4825 = vpack.c.b16 %v3337, %v3329
  %v4826 = vpack.c.b16 %v3338, %v3330
  %v4827 = vpack.c.b16 %v3339, %v3331
  %v4828 = vpack.c.b16 %v3340, %v3332
  %v4829 = vpack.c.b16 %v3341, %v3333
  %v4830 = vpack.c.b16 %v3342, %v3334
  %v4831 = vpack.c.b16 %v3343, %v3335
  %v4832 = vpack.c.b16 %v3344, %v3336
  %v4833 = vpack.c.b16 %v3353, %v3345
  %v4834 = vpack.c.b16 %v3354, %v3346
  %v4835 = vpack.c.b16 %v3355, %v3347
  %v4836 = vpack.c.b16 %v3356, %v3348
  %v4837 = vpack.c.b16 %v3357, %v3349
  %v4838 = vpack.c.b16 %v3358, %v3350
  %v4839 = vpack.c.b16 %v3359, %v3351
  %v4840 = vpack.c.b16 %v3360, %v3352
  %v4841 = vpack.c.b16 %v3369, %v3361
  %v4842 = vpack.c.b16 %v3370, %v3362
  %v4843 = vpack.c.b16 %v3371, %v3363
  %v4844 = vpack.c.b16 %v3372, %v3364
  %v4845 = vpack.c.b16 %v3373, %v3365
  %v4846 = vpack.c.b16 %v3374, %v3366
  %v4847 = vpack.c.b16 %v3375, %v3367
  %v4848 = vpack.c.b16 %v3376, %v3368
  %v4849 = vpack.c.b16 %v3385, %v3377
  %v4850 = vpack.c.b16 %v3386, %v3378
  %v4851 = vpack.c.b16 %v3387, %v3379
  %v4852 = vpack.c.b16 %v3388, %v3380
  %v4853 = vpack.c.b16 %v3389, %v3381
  %v4854 = vpack.c.b16 %v3390, %v3382
  %v4855 = vpack.c.b16 %v3391, %v3383
  %v4856 = vpack.c.b16 %v3392, %v3384
  %v4857 = vpack.c.b16 %v3401, %v3393
  %v4858 = vpack.c.b16 %v3402, %v3394
  %v4859 = vpack.c.b16 %v3403, %v3395
  %v4860 = vpack.c.b16 %v3404, %v3396
  %v4861 = vpack.c.b16 %v3405, %v3397
  %v4862 = vpack.c.b16 %v3406, %v3398
  %v4863 = vpack.c.b16 %v3407, %v3399
  %v4864 = vpack.c.b16 %v3408, %v3400
  %v4865 = vpack.c.b16 %v3417, %v3409
  %v4866 = vpack.c.b16 %v3418, %v3410
  %v4867 = vpack.c.b16 %v3419, %v3411
  %v4868 = vpack.c.b16 %v3420, %v3412
  %v4869 = vpack.c.b16 %v3421, %v3413
  %v4870 = vpack.c.b16 %v3422, %v3414
  %v4871 = vpack.c.b16 %v3423, %v3415
  %v4872 = vpack.c.b16 %v3424, %v3416
  %v4873 = vpack.c.b16 %v3433, %v3425
  %v4874 = vpack.c.b16 %v3434, %v3426
  %v4875 = vpack.c.b16 %v3435, %v3427
  %v4876 = vpack.c.b16 %v3436, %v3428
  %v4877 = vpack.c.b16 %v3437, %v3429
  %v4878 = vpack.c.b16 %v3438, %v3430
  %v4879 = vpack.c.b16 %v3439, %v3431
  %v4880 = vpack.c.b16 %v3440, %v3432
  %v4881 = vpack.c.b16 %v3449, %v3441
  %v4882 = vpack.c.b16 %v3450, %v3442
  %v4883 = vpack.c.b16 %v3451, %v3443
  %v4884 = vpack.c.b16 %v3452, %v3444
  %v4885 = vpack.c.b16 %v3453, %v3445
  %v4886 = vpack.c.b16 %v3454, %v3446
  %v4887 = vpack.c.b16 %v3455, %v3447
  %v4888 = vpack.c.b16 %v3456, %v3448
  %v4889 = vpack.c.b16 %v3465, %v3457
  %v4890 = vpack.c.b16 %v3466, %v3458
  %v4891 = vpack.c.b16 %v3467, %v3459
  %v4892 = vpack.c.b16 %v3468, %v3460
  %v4893 = vpack.c.b16 %v3469, %v3461
  %v4894 = vpack.c.b16 %v3470, %v3462
  %v4895 = vpack.c.b16 %v3471, %v3463
  %v4896 = vpack.c.b16 %v3472, %v3464
  %v4897 = vpack.c.b16 %v3481, %v3473
  %v4898 = vpack.c.b16 %v3482, %v3474
  %v4899 = vpack.c.b16 %v3483, %v3475
  %v4900 = vpack.c.b16 %v3484, %v3476
  %v4901 = vpack.c.b16 %v3485, %v3477
  %v4902 = vpack.c.b16 %v3486, %v3478
  %v4903 = vpack.c.b16 %v3487, %v3479
  %v4904 = vpack.c.b16 %v3488, %v3480
  %v4905 = vpack.c.b16 %v3497, %v3489
  %v4906 = vpack.c.b16 %v3498, %v3490
  %v4907 = vpack.c.b16 %v3499, %v3491
  %v4908 = vpack.c.b16 %v3500, %v3492
  %v4909 = vpack.c.b16 %v3501, %v3493
  %v4910 = vpack.c.b16 %v3502, %v3494
  %v4911 = vpack.c.b16 %v3503, %v3495
  %v4912 = vpack.c.b16 %v3504, %v3496
  %v4913 = vpack.c.b16 %v3513, %v3505
  %v4914 = vpack.c.b16 %v3514, %v3506
  %v4915 = vpack.c.b16 %v3515, %v3507
  %v4916 = vpack.c.b16 %v3516, %v3508
  %v4917 = vpack.c.b16 %v3517, %v3509
  %v4918 = vpack.c.b16 %v3518, %v3510
  %v4919 = vpack.c.b16 %v3519, %v3511
  %v4920 = vpack.c.b16 %v3520, %v3512
  %v4921 = vpack.c.b16 %v3529, %v3521
  %v4922 = vpack.c.b16 %v3530, %v3522
  %v4923 = vpack.c.b16 %v3531, %v3523
  %v4924 = vpack.c.b16 %v3532, %v3524
  %v4925 = vpack.c.b16 %v3533, %v3525
  %v4926 = vpack.c.b16 %v3534, %v3526
  %v4927 = vpack.c.b16 %v3535, %v3527
  %v4928 = vpack.c.b16 %v3536, %v3528
  %v4929 = vpack.c.b16 %v3545, %v3537
  %v4930 = vpack.c.b16 %v3546, %v3538
  %v4931 = vpack.c.b16 %v3547, %v3539
  %v4932 = vpack.c.b16 %v3548, %v3540
  %v4933 = vpack.c.b16 %v3549, %v3541
  %v4934 = vpack.c.b16 %v3550, %v3542
  %v4935 = vpack.c.b16 %v3551, %v3543
  %v4936 = vpack.c.b16 %v3552, %v3544
  %v4937 = vpack.c.b16 %v3561, %v3553
  %v4938 = vpack.c.b16 %v3562, %v3554
  %v4939 = vpack.c.b16 %v3563, %v3555
  %v4940 = vpack.c.b16 %v3564, %v3556
  %v4941 = vpack.c.b16 %v3565, %v3557
  %v4942 = vpack.c.b16 %v3566, %v3558
  %v4943 = vpack.c.b16 %v3567, %v3559
  %v4944 = vpack.c.b16 %v3568, %v3560
  %v4945 = vpack.c.b16 %v3577, %v3569
  %v4946 = vpack.c.b16 %v3578, %v3570
  %v4947 = vpack.c.b16 %v3579, %v3571
  %v4948 = vpack.c.b16 %v3580, %v3572
  %v4949 = vpack.c.b16 %v3581, %v3573
  %v4950 = vpack.c.b16 %v3582, %v3574
  %v4951 = vpack.c.b16 %v3583, %v3575
  %v4952 = vpack.c.b16 %v3584, %v3576
  %v4953 = vpack.c.b16 %v3593, %v3585
  %v4954 = vpack.c.b16 %v3594, %v3586
  %v4955 = vpack.c.b16 %v3595, %v3587
  %v4956 = vpack.c.b16 %v3596, %v3588
  %v4957 = vpack.c.b16 %v3597, %v3589
  %v4958 = vpack.c.b16 %v3598, %v3590
  %v4959 = vpack.c.b16 %v3599, %v3591
  %v4960 = vpack.c.b16 %v3600, %v3592
  %v4961 = vpack.c.b16 %v3609, %v3601
  %v4962 = vpack.c.b16 %v3610, %v3602
  %v4963 = vpack.c.b16 %v3611, %v3603
  %v4964 = vpack.c.b16 %v3612, %v3604
  %v4965 = vpack.c.b16 %v3613, %v3605
  %v4966 = vpack.c.b16 %v3614, %v3606
  %v4967 = vpack.c.b16 %v3615, %v3607
  %v4968 = vpack.c.b16 %v3616, %v3608
  %v4969 = vpack.c.b16 %v3625, %v3617
  %v4970 = vpack.c.b16 %v3626, %v3618
  %v4971 = vpack.c.b16 %v3627, %v3619
  %v4972 = vpack.c.b16 %v3628, %v3620
  %v4973 = vpack.c.b16 %v3629, %v3621
  %v4974 = vpack.c.b16 %v3630, %v3622
  %v4975 = vpack.c.b16 %v3631, %v3623
  %v4976 = vpack.c.b16 %v3632, %v3624
  %v4977 = vpack.c.b16 %v3641, %v3633
  %v4978 = vpack.c.b16 %v3642, %v3634
  %v4979 = vpack.c.b16 %v3643, %v3635
  %v4980 = vpack.c.b16 %v3644, %v3636
  %v4981 = vpack.c.b16 %v3645, %v3637
  %v4982 = vpack.c.b16 %v3646, %v3638
  %v4983 = vpack.c.b16 %v3647, %v3639
  %v4984 = vpack.c.b16 %v3648, %v3640
  %v4985 = vpack.c.b16 %v3657, %v3649
  %v4986 = vpack.c.b16 %v3658, %v3650
  %v4987 = vpack.c.b16 %v3659, %v3651
  %v4988 = vpack.c.b16 %v3660, %v3652
  %v4989 = vpack.c.b16 %v3661, %v3653
  %v4990 = vpack.c.b16 %v3662, %v3654
  %v4991 = vpack.c.b16 %v3663, %v3655
  %v4992 = vpack.c.b16 %v3664, %v3656
  %v4993 = vpack.c.b16 %v3673, %v3665
  %v4994 = vpack.c.b16 %v3674, %v3666
  %v4995 = vpack.c.b16 %v3675, %v3667
  %v4996 = vpack.c.b16 %v3676, %v3668
  %v4997 = vpack.c.b16 %v3677, %v3669
  %v4998 = vpack.c.b16 %v3678, %v3670
  %v4999 = vpack.c.b16 %v3679, %v3671
  %v5000 = vpack.c.b16 %v3680, %v3672
  %v5001 = vpack.c.b16 %v3689, %v3681
  %v5002 = vpack.c.b16 %v3690, %v3682
  %v5003 = vpack.c.b16 %v3691, %v3683
  %v5004 = vpack.c.b16 %v3692, %v3684
  %v5005 = vpack.c.b16 %v3693, %v3685
  %v5006 = vpack.c.b16 %v3694, %v3686
  %v5007 = vpack.c.b16 %v3695, %v3687
  %v5008 = vpack.c.b16 %v3696, %v3688
  %v5009 = vpack.c.b16 %v3705, %v3697
  %v5010 = vpack.c.b16 %v3706, %v3698
  %v5011 = vpack.c.b16 %v3707, %v3699
  %v5012 = vpack.c.b16 %v3708, %v3700
  %v5013 = vpack.c.b16 %v3709, %v3701
  %v5014 = vpack.c.b16 %v3710, %v3702
  %v5015 = vpack.c.b16 %v3711, %v3703
  %v5016 = vpack.c.b16 %v3712, %v3704
  %v5017 = vpack.c.b16 %v3721, %v3713
  %v5018 = vpack.c.b16 %v3722, %v3714
  %v5019 = vpack.c.b16 %v3723, %v3715
  %v5020 = vpack.c.b16 %v3724, %v3716
  %v5021 = vpack.c.b16 %v3725, %v3717
  %v5022 = vpack.c.b16 %v3726, %v3718
  %v5023 = vpack.c.b16 %v3727, %v3719
  %v5024 = vpack.c.b16 %v3728, %v3720
  %v5025 = vpack.c.b16 %v3737, %v3729
  %v5026 = vpack.c.b16 %v3738, %v3730
  %v5027 = vpack.c.b16 %v3739, %v3731
  %v5028 = vpack.c.b16 %v3740, %v3732
  %v5029 = vpack.c.b16 %v3741, %v3733
  %v5030 = vpack.c.b16 %v3742, %v3734
  %v5031 = vpack.c.b16 %v3743, %v3735
  %v5032 = vpack.c.b16 %v3744, %v3736
  %v5033 = vpack.c.b16 %v3753, %v3745
  %v5034 = vpack.c.b16 %v3754, %v3746
  %v5035 = vpack.c.b16 %v3755, %v3747
  %v5036 = vpack.c.b16 %v3756, %v3748
  %v5037 = vpack.c.b16 %v3757, %v3749
  %v5038 = vpack.c.b16 %v3758, %v3750
  %v5039 = vpack.c.b16 %v3759, %v3751
  %v5040 = vpack.c.b16 %v3760, %v3752
  %v5041 = vpack.c.b16 %v3769, %v3761
  %v5042 = vpack.c.b16 %v3770, %v3762
  %v5043 = vpack.c.b16 %v3771, %v3763
  %v5044 = vpack.c.b16 %v3772, %v3764
  %v5045 = vpack.c.b16 %v3773, %v3765
  %v5046 = vpack.c.b16 %v3774, %v3766
  %v5047 = vpack.c.b16 %v3775, %v3767
  %v5048 = vpack.c.b16 %v3776, %v3768
  %v5049 = vpack.c.b16 %v3785, %v3777
  %v5050 = vpack.c.b16 %v3786, %v3778
  %v5051 = vpack.c.b16 %v3787, %v3779
  %v5052 = vpack.c.b16 %v3788, %v3780
  %v5053 = vpack.c.b16 %v3789, %v3781
  %v5054 = vpack.c.b16 %v3790, %v3782
  %v5055 = vpack.c.b16 %v3791, %v3783
  %v5056 = vpack.c.b16 %v3792, %v3784
  %v5057 = vpack.c.b16 %v3801, %v3793
  %v5058 = vpack.c.b16 %v3802, %v3794
  %v5059 = vpack.c.b16 %v3803, %v3795
  %v5060 = vpack.c.b16 %v3804, %v3796
  %v5061 = vpack.c.b16 %v3805, %v3797
  %v5062 = vpack.c.b16 %v3806, %v3798
  %v5063 = vpack.c.b16 %v3807, %v3799
  %v5064 = vpack.c.b16 %v3808, %v3800
  %v5065 = vpack.c.b16 %v3817, %v3809
  %v5066 = vpack.c.b16 %v3818, %v3810
  %v5067 = vpack.c.b16 %v3819, %v3811
  %v5068 = vpack.c.b16 %v3820, %v3812
  %v5069 = vpack.c.b16 %v3821, %v3813
  %v5070 = vpack.c.b16 %v3822, %v3814
  %v5071 = vpack.c.b16 %v3823, %v3815
  %v5072 = vpack.c.b16 %v3824, %v3816
  %v5073 = vpack.c.b16 %v3833, %v3825
  %v5074 = vpack.c.b16 %v3834, %v3826
  %v5075 = vpack.c.b16 %v3835, %v3827
  %v5076 = vpack.c.b16 %v3836, %v3828
  %v5077 = vpack.c.b16 %v3837, %v3829
  %v5078 = vpack.c.b16 %v3838, %v3830
  %v5079 = vpack.c.b16 %v3839, %v3831
  %v5080 = vpack.c.b16 %v3840, %v3832
  %v5081 = vpack.c.b16 %v3849, %v3841
  %v5082 = vpack.c.b16 %v3850, %v3842
  %v5083 = vpack.c.b16 %v3851, %v3843
  %v5084 = vpack.c.b16 %v3852, %v3844
  %v5085 = vpack.c.b16 %v3853, %v3845
  %v5086 = vpack.c.b16 %v3854, %v3846
  %v5087 = vpack.c.b16 %v3855, %v3847
  %v5088 = vpack.c.b16 %v3856, %v3848
  %v5089 = vpack.c.b16 %v3865, %v3857
  %v5090 = vpack.c.b16 %v3866, %v3858
  %v5091 = vpack.c.b16 %v3867, %v3859
  %v5092 = vpack.c.b16 %v3868, %v3860
  %v5093 = vpack.c.b16 %v3869, %v3861
  %v5094 = vpack.c.b16 %v3870, %v3862
  %v5095 = vpack.c.b16 %v3871, %v3863
  %v5096 = vpack.c.b16 %v3872, %v3864
  %v5097 = vpack.c.b16 %v3881, %v3873
  %v5098 = vpack.c.b16 %v3882, %v3874
  %v5099 = vpack.c.b16 %v3883, %v3875
  %v5100 = vpack.c.b16 %v3884, %v3876
  %v5101 = vpack.c.b16 %v3885, %v3877
  %v5102 = vpack.c.b16 %v3886, %v3878
  %v5103 = vpack.c.b16 %v3887, %v3879
  %v5104 = vpack.c.b16 %v3888, %v3880
  %v5105 = vpack.c.b16 %v3897, %v3889
  %v5106 = vpack.c.b16 %v3898, %v3890
  %v5107 = vpack.c.b16 %v3899, %v3891
  %v5108 = vpack.c.b16 %v3900, %v3892
  %v5109 = vpack.c.b16 %v3901, %v3893
  %v5110 = vpack.c.b16 %v3902, %v3894
  %v5111 = vpack.c.b16 %v3903, %v3895
  %v5112 = vpack.c.b16 %v3904, %v3896
  %v5113 = vpack.c.b16 %v3913, %v3905
  %v5114 = vpack.c.b16 %v3914, %v3906
  %v5115 = vpack.c.b16 %v3915, %v3907
  %v5116 = vpack.c.b16 %v3916, %v3908
  %v5117 = vpack.c.b16 %v3917, %v3909
  %v5118 = vpack.c.b16 %v3918, %v3910
  %v5119 = vpack.c.b16 %v3919, %v3911
  %v5120 = vpack.c.b16 %v3920, %v3912
  %v5121 = vpack.c.b16 %v3929, %v3921
  %v5122 = vpack.c.b16 %v3930, %v3922
  %v5123 = vpack.c.b16 %v3931, %v3923
  %v5124 = vpack.c.b16 %v3932, %v3924
  %v5125 = vpack.c.b16 %v3933, %v3925
  %v5126 = vpack.c.b16 %v3934, %v3926
  %v5127 = vpack.c.b16 %v3935, %v3927
  %v5128 = vpack.c.b16 %v3936, %v3928
  %v5129 = vpack.c.b16 %v3945, %v3937
  %v5130 = vpack.c.b16 %v3946, %v3938
  %v5131 = vpack.c.b16 %v3947, %v3939
  %v5132 = vpack.c.b16 %v3948, %v3940
  %v5133 = vpack.c.b16 %v3949, %v3941
  %v5134 = vpack.c.b16 %v3950, %v3942
  %v5135 = vpack.c.b16 %v3951, %v3943
  %v5136 = vpack.c.b16 %v3952, %v3944
  %v5137 = vpack.c.b16 %v3961, %v3953
  %v5138 = vpack.c.b16 %v3962, %v3954
  %v5139 = vpack.c.b16 %v3963, %v3955
  %v5140 = vpack.c.b16 %v3964, %v3956
  %v5141 = vpack.c.b16 %v3965, %v3957
  %v5142 = vpack.c.b16 %v3966, %v3958
  %v5143 = vpack.c.b16 %v3967, %v3959
  %v5144 = vpack.c.b16 %v3968, %v3960
  %v5145 = vpack.c.b16 %v3977, %v3969
  %v5146 = vpack.c.b16 %v3978, %v3970
  %v5147 = vpack.c.b16 %v3979, %v3971
  %v5148 = vpack.c.b16 %v3980, %v3972
  %v5149 = vpack.c.b16 %v3981, %v3973
  %v5150 = vpack.c.b16 %v3982, %v3974
  %v5151 = vpack.c.b16 %v3983, %v3975
  %v5152 = vpack.c.b16 %v3984, %v3976
  %v5153 = vpack.c.b16 %v3993, %v3985
  %v5154 = vpack.c.b16 %v3994, %v3986
  %v5155 = vpack.c.b16 %v3995, %v3987
  %v5156 = vpack.c.b16 %v3996, %v3988
  %v5157 = vpack.c.b16 %v3997, %v3989
  %v5158 = vpack.c.b16 %v3998, %v3990
  %v5159 = vpack.c.b16 %v3999, %v3991
  %v5160 = vpack.c.b16 %v4000, %v3992
  %v5161 = vpack.c.b16 %v4009, %v4001
  %v5162 = vpack.c.b16 %v4010, %v4002
  %v5163 = vpack.c.b16 %v4011, %v4003
  %v5164 = vpack.c.b16 %v4012, %v4004
  %v5165 = vpack.c.b16 %v4013, %v4005
  %v5166 = vpack.c.b16 %v4014, %v4006
  %v5167 = vpack.c.b16 %v4015, %v4007
  %v5168 = vpack.c.b16 %v4016, %v4008
  %v5169 = vpack.c.b16 %v4025, %v4017
  %v5170 = vpack.c.b16 %v4026, %v4018
  %v5171 = vpack.c.b16 %v4027, %v4019
  %v5172 = vpack.c.b16 %v4028, %v4020
  %v5173 = vpack.c.b16 %v4029, %v4021
  %v5174 = vpack.c.b16 %v4030, %v4022
  %v5175 = vpack.c.b16 %v4031, %v4023
  %v5176 = vpack.c.b16 %v4032, %v4024
  %v5177 = vpack.c.b16 %v4041, %v4033
  %v5178 = vpack.c.b16 %v4042, %v4034
  %v5179 = vpack.c.b16 %v4043, %v4035
  %v5180 = vpack.c.b16 %v4044, %v4036
  %v5181 = vpack.c.b16 %v4045, %v4037
  %v5182 = vpack.c.b16 %v4046, %v4038
  %v5183 = vpack.c.b16 %v4047, %v4039
  %v5184 = vpack.c.b16 %v4048, %v4040
  %v5185 = vpack.c.b16 %v4057, %v4049
  %v5186 = vpack.c.b16 %v4058, %v4050
  %v5187 = vpack.c.b16 %v4059, %v4051
  %v5188 = vpack.c.b16 %v4060, %v4052
  %v5189 = vpack.c.b16 %v4061, %v4053
  %v5190 = vpack.c.b16 %v4062, %v4054
  %v5191 = vpack.c.b16 %v4063, %v4055
  %v5192 = vpack.c.b16 %v4064, %v4056
  %v5193 = vpack.c.b16 %v4073, %v4065
  %v5194 = vpack.c.b16 %v4074, %v4066
  %v5195 = vpack.c.b16 %v4075, %v4067
  %v5196 = vpack.c.b16 %v4076, %v4068
  %v5197 = vpack.c.b16 %v4077, %v4069
  %v5198 = vpack.c.b16 %v4078, %v4070
  %v5199 = vpack.c.b16 %v4079, %v4071
  %v5200 = vpack.c.b16 %v4080, %v4072
  %v5201 = vpack.c.b16 %v4089, %v4081
  %v5202 = vpack.c.b16 %v4090, %v4082
  %v5203 = vpack.c.b16 %v4091, %v4083
  %v5204 = vpack.c.b16 %v4092, %v4084
  %v5205 = vpack.c.b16 %v4093, %v4085
  %v5206 = vpack.c.b16 %v4094, %v4086
  %v5207 = vpack.c.b16 %v4095, %v4087
  %v5208 = vpack.c.b16 %v4096, %v4088
  %v5209 = vpack.c.b16 %v4105, %v4097
  %v5210 = vpack.c.b16 %v4106, %v4098
  %v5211 = vpack.c.b16 %v4107, %v4099
  %v5212 = vpack.c.b16 %v4108, %v4100
  %v5213 = vpack.c.b16 %v4109, %v4101
  %v5214 = vpack.c.b16 %v4110, %v4102
  %v5215 = vpack.c.b16 %v4111, %v4103
  %v5216 = vpack.c.b16 %v4112, %v4104
  %v5217 = vpack.c.b16 %v4121, %v4113
  %v5218 = vpack.c.b16 %v4122, %v4114
  %v5219 = vpack.c.b16 %v4123, %v4115
  %v5220 = vpack.c.b16 %v4124, %v4116
  %v5221 = vpack.c.b16 %v4125, %v4117
  %v5222 = vpack.c.b16 %v4126, %v4118
  %v5223 = vpack.c.b16 %v4127, %v4119
  %v5224 = vpack.c.b16 %v4128, %v4120
  %v5225 = vpack.c.b16 %v4137, %v4129
  %v5226 = vpack.c.b16 %v4138, %v4130
  %v5227 = vpack.c.b16 %v4139, %v4131
  %v5228 = vpack.c.b16 %v4140, %v4132
  %v5229 = vpack.c.b16 %v4141, %v4133
  %v5230 = vpack.c.b16 %v4142, %v4134
  %v5231 = vpack.c.b16 %v4143, %v4135
  %v5232 = vpack.c.b16 %v4144, %v4136
  %v5233 = vpack.c.b16 %v4153, %v4145
  %v5234 = vpack.c.b16 %v4154, %v4146
  %v5235 = vpack.c.b16 %v4155, %v4147
  %v5236 = vpack.c.b16 %v4156, %v4148
  %v5237 = vpack.c.b16 %v4157, %v4149
  %v5238 = vpack.c.b16 %v4158, %v4150
  %v5239 = vpack.c.b16 %v4159, %v4151
  %v5240 = vpack.c.b16 %v4160, %v4152
  %v5241 = vpack.c.b16 %v4169, %v4161
  %v5242 = vpack.c.b16 %v4170, %v4162
  %v5243 = vpack.c.b16 %v4171, %v4163
  %v5244 = vpack.c.b16 %v4172, %v4164
  %v5245 = vpack.c.b16 %v4173, %v4165
  %v5246 = vpack.c.b16 %v4174, %v4166
  %v5247 = vpack.c.b16 %v4175, %v4167
  %v5248 = vpack.c.b16 %v4176, %v4168
  %v5249 = vpack.c.b16 %v4185, %v4177
  %v5250 = vpack.c.b16 %v4186, %v4178
  %v5251 = vpack.c.b16 %v4187, %v4179
  %v5252 = vpack.c.b16 %v4188, %v4180
  %v5253 = vpack.c.b16 %v4189, %v4181
  %v5254 = vpack.c.b16 %v4190, %v4182
  %v5255 = vpack.c.b16 %v4191, %v4183
  %v5256 = vpack.c.b16 %v4192, %v4184
  %v5257 = vpack.c.b16 %v4201, %v4193
  %v5258 = vpack.c.b16 %v4202, %v4194
  %v5259 = vpack.c.b16 %v4203, %v4195
  %v5260 = vpack.c.b16 %v4204, %v4196
  %v5261 = vpack.c.b16 %v4205, %v4197
  %v5262 = vpack.c.b16 %v4206, %v4198
  %v5263 = vpack.c.b16 %v4207, %v4199
  %v5264 = vpack.c.b16 %v4208, %v4200
  %v5265 = vpack.c.b16 %v4217, %v4209
  %v5266 = vpack.c.b16 %v4218, %v4210
  %v5267 = vpack.c.b16 %v4219, %v4211
  %v5268 = vpack.c.b16 %v4220, %v4212
  %v5269 = vpack.c.b16 %v4221, %v4213
  %v5270 = vpack.c.b16 %v4222, %v4214
  %v5271 = vpack.c.b16 %v4223, %v4215
  %v5272 = vpack.c.b16 %v4224, %v4216
  %v5273 = vpack.c.b16 %v4233, %v4225
  %v5274 = vpack.c.b16 %v4234, %v4226
  %v5275 = vpack.c.b16 %v4235, %v4227
  %v5276 = vpack.c.b16 %v4236, %v4228
  %v5277 = vpack.c.b16 %v4237, %v4229
  %v5278 = vpack.c.b16 %v4238, %v4230
  %v5279 = vpack.c.b16 %v4239, %v4231
  %v5280 = vpack.c.b16 %v4240, %v4232
  %v5281 = vpack.c.b16 %v4249, %v4241
  %v5282 = vpack.c.b16 %v4250, %v4242
  %v5283 = vpack.c.b16 %v4251, %v4243
  %v5284 = vpack.c.b16 %v4252, %v4244
  %v5285 = vpack.c.b16 %v4253, %v4245
  %v5286 = vpack.c.b16 %v4254, %v4246
  %v5287 = vpack.c.b16 %v4255, %v4247
  %v5288 = vpack.c.b16 %v4256, %v4248
  %v5289 = vpack.c.b16 %v4265, %v4257
  %v5290 = vpack.c.b16 %v4266, %v4258
  %v5291 = vpack.c.b16 %v4267, %v4259
  %v5292 = vpack.c.b16 %v4268, %v4260
  %v5293 = vpack.c.b16 %v4269, %v4261
  %v5294 = vpack.c.b16 %v4270, %v4262
  %v5295 = vpack.c.b16 %v4271, %v4263
  %v5296 = vpack.c.b16 %v4272, %v4264
  %6321 = vmatprep.subr.bf16.mxu0 %v4274
  %6322 = vmatpush1.bf16.msra.mxu0 %v4273
  %6323 = vmatprep.subr.bf16.mxu0 %v4282
  %6324 = vmatpush1.bf16.msra.mxu0 %v4281
  %6325 = vmatprep.subr.bf16.mxu0 %v4290
  %6326 = vmatpush1.bf16.msra.mxu0 %v4289
  %6327 = vmatprep.subr.bf16.mxu0 %v4298
  %6328 = vmatpush1.bf16.msra.mxu0 %v4297
  %6329 = vmatprep.subr.bf16.mxu0 %v4306
  %6330 = vmatpush1.bf16.msra.mxu0 %v4305
  %6331 = vmatprep.subr.bf16.mxu0 %v4314
  %6332 = vmatpush1.bf16.msra.mxu0 %v4313
  %6333 = vmatprep.subr.bf16.mxu0 %v4322
  %6334 = vmatpush1.bf16.msra.mxu0 %v4321
  %6335 = vmatprep.subr.bf16.mxu0 %v4330
  %6336 = vmatpush1.bf16.msra.mxu0 %v4329
  %6337 = vmatprep.subr.bf16.mxu0 %v4338
  %6338 = vmatpush1.bf16.msra.mxu0 %v4337
  %6339 = vmatprep.subr.bf16.mxu0 %v4346
  %6340 = vmatpush1.bf16.msra.mxu0 %v4345
  %6341 = vmatprep.subr.bf16.mxu0 %v4354
  %6342 = vmatpush1.bf16.msra.mxu0 %v4353
  %6343 = vmatprep.subr.bf16.mxu0 %v4362
  %6344 = vmatpush1.bf16.msra.mxu0 %v4361
  %6345 = vmatprep.subr.bf16.mxu0 %v4370
  %6346 = vmatpush1.bf16.msra.mxu0 %v4369
  %6347 = vmatprep.subr.bf16.mxu0 %v4378
  %6348 = vmatpush1.bf16.msra.mxu0 %v4377
  %6349 = vmatprep.subr.bf16.mxu0 %v4386
  %6350 = vmatpush1.bf16.msra.mxu0 %v4385
  %6351 = vmatprep.subr.bf16.mxu0 %v4394
  %6352 = vmatpush1.bf16.msra.mxu0 %v4393
  %6353 = vmatprep.mubr.bf16.mxu0 %v120
  %6354 = vmatmul.mubr.bf16.gmra.mrb[0].mxu0 %v119
  %v6355 = vpop.f32.mrb[0].mxu0
  %v6356 = vadd.f32 %v1164, %v6355
  %v6357 = vpop.f32.mrb[0].mxu0
  %v6358 = vadd.f32 %v1168, %v6357
  %v6359 = vpop.f32.mrb[0].mxu0
  %v6360 = vpop.f32.mrb[0].mxu0
  %6361 = vdwg.mxu0
  %6362 = vmatprep.subr.bf16.mxu0 %v4402
  %6363 = vmatpush1.bf16.msra.mxu0 %v4401
  %6364 = vmatprep.subr.bf16.mxu0 %v4410
  %6365 = vmatpush1.bf16.msra.mxu0 %v4409
  %6366 = vmatprep.subr.bf16.mxu0 %v4418
  %6367 = vmatpush1.bf16.msra.mxu0 %v4417
  %6368 = vmatprep.subr.bf16.mxu0 %v4426
  %6369 = vmatpush1.bf16.msra.mxu0 %v4425
  %6370 = vmatprep.subr.bf16.mxu0 %v4434
  %6371 = vmatpush1.bf16.msra.mxu0 %v4433
  %6372 = vmatprep.subr.bf16.mxu0 %v4442
  %6373 = vmatpush1.bf16.msra.mxu0 %v4441
  %6374 = vmatprep.subr.bf16.mxu0 %v4450
  %6375 = vmatpush1.bf16.msra.mxu0 %v4449
  %6376 = vmatprep.subr.bf16.mxu0 %v4458
  %6377 = vmatpush1.bf16.msra.mxu0 %v4457
  %6378 = vmatprep.subr.bf16.mxu0 %v4466
  %6379 = vmatpush1.bf16.msra.mxu0 %v4465
  %6380 = vmatprep.subr.bf16.mxu0 %v4474
  %6381 = vmatpush1.bf16.msra.mxu0 %v4473
  %6382 = vmatprep.subr.bf16.mxu0 %v4482
  %6383 = vmatpush1.bf16.msra.mxu0 %v4481
  %6384 = vmatprep.subr.bf16.mxu0 %v4490
  %6385 = vmatpush1.bf16.msra.mxu0 %v4489
  %6386 = vmatprep.subr.bf16.mxu0 %v4498
  %6387 = vmatpush1.bf16.msra.mxu0 %v4497
  %6388 = vmatprep.subr.bf16.mxu0 %v4506
  %6389 = vmatpush1.bf16.msra.mxu0 %v4505
  %6390 = vmatprep.subr.bf16.mxu0 %v4514
  %6391 = vmatpush1.bf16.msra.mxu0 %v4513
  %6392 = vmatprep.subr.bf16.mxu0 %v4522
  %6393 = vmatpush1.bf16.msra.mxu0 %v4521
  %6394 = vmatprep.mubr.bf16.mxu0 %v122
  %6395 = vmatmul.mubr.bf16.gmra.mrb[0].mxu0 %v121
  %v6396 = vpop.f32.mrb[0].mxu0
  %v6397 = vadd.f32 %v6356, %v6396
  %v6398 = vpop.f32.mrb[0].mxu0
  %v6399 = vadd.f32 %v6358, %v6398
  %v6400 = vpop.f32.mrb[0].mxu0
  %v6401 = vpop.f32.mrb[0].mxu0
  %6402 = vdwg.mxu0
  %6403 = vmatprep.subr.bf16.mxu0 %v4530
  %6404 = vmatpush1.bf16.msra.mxu0 %v4529
  %6405 = vmatprep.subr.bf16.mxu0 %v4538
  %6406 = vmatpush1.bf16.msra.mxu0 %v4537
  %6407 = vmatprep.subr.bf16.mxu0 %v4546
  %6408 = vmatpush1.bf16.msra.mxu0 %v4545
  %6409 = vmatprep.subr.bf16.mxu0 %v4554
  %6410 = vmatpush1.bf16.msra.mxu0 %v4553
  %6411 = vmatprep.subr.bf16.mxu0 %v4562
  %6412 = vmatpush1.bf16.msra.mxu0 %v4561
  %6413 = vmatprep.subr.bf16.mxu0 %v4570
  %6414 = vmatpush1.bf16.msra.mxu0 %v4569
  %6415 = vmatprep.subr.bf16.mxu0 %v4578
  %6416 = vmatpush1.bf16.msra.mxu0 %v4577
  %6417 = vmatprep.subr.bf16.mxu0 %v4586
  %6418 = vmatpush1.bf16.msra.mxu0 %v4585
  %6419 = vmatprep.subr.bf16.mxu0 %v4594
  %6420 = vmatpush1.bf16.msra.mxu0 %v4593
  %6421 = vmatprep.subr.bf16.mxu0 %v4602
  %6422 = vmatpush1.bf16.msra.mxu0 %v4601
  %6423 = vmatprep.subr.bf16.mxu0 %v4610
  %6424 = vmatpush1.bf16.msra.mxu0 %v4609
  %6425 = vmatprep.subr.bf16.mxu0 %v4618
  %6426 = vmatpush1.bf16.msra.mxu0 %v4617
  %6427 = vmatprep.subr.bf16.mxu0 %v4626
  %6428 = vmatpush1.bf16.msra.mxu0 %v4625
  %6429 = vmatprep.subr.bf16.mxu0 %v4634
  %6430 = vmatpush1.bf16.msra.mxu0 %v4633
  %6431 = vmatprep.subr.bf16.mxu0 %v4642
  %6432 = vmatpush1.bf16.msra.mxu0 %v4641
  %6433 = vmatprep.subr.bf16.mxu0 %v4650
  %6434 = vmatpush1.bf16.msra.mxu0 %v4649
  %6435 = vmatprep.mubr.bf16.mxu0 %v124
  %6436 = vmatmul.mubr.bf16.gmra.mrb[0].mxu0 %v123
  %v6437 = vpop.f32.mrb[0].mxu0
  %v6438 = vadd.f32 %v6397, %v6437
  %v6439 = vpop.f32.mrb[0].mxu0
  %v6440 = vadd.f32 %v6399, %v6439
  %v6441 = vpop.f32.mrb[0].mxu0
  %v6442 = vpop.f32.mrb[0].mxu0
  %6443 = vdwg.mxu0
  %6444 = vmatprep.subr.bf16.mxu0 %v4658
  %6445 = vmatpush1.bf16.msra.mxu0 %v4657
  %6446 = vmatprep.subr.bf16.mxu0 %v4666
  %6447 = vmatpush1.bf16.msra.mxu0 %v4665
  %6448 = vmatprep.subr.bf16.mxu0 %v4674
  %6449 = vmatpush1.bf16.msra.mxu0 %v4673
  %6450 = vmatprep.subr.bf16.mxu0 %v4682
  %6451 = vmatpush1.bf16.msra.mxu0 %v4681
  %6452 = vmatprep.subr.bf16.mxu0 %v4690
  %6453 = vmatpush1.bf16.msra.mxu0 %v4689
  %6454 = vmatprep.subr.bf16.mxu0 %v4698
  %6455 = vmatpush1.bf16.msra.mxu0 %v4697
  %6456 = vmatprep.subr.bf16.mxu0 %v4706
  %6457 = vmatpush1.bf16.msra.mxu0 %v4705
  %6458 = vmatprep.subr.bf16.mxu0 %v4714
  %6459 = vmatpush1.bf16.msra.mxu0 %v4713
  %6460 = vmatprep.subr.bf16.mxu0 %v4722
  %6461 = vmatpush1.bf16.msra.mxu0 %v4721
  %6462 = vmatprep.subr.bf16.mxu0 %v4730
  %6463 = vmatpush1.bf16.msra.mxu0 %v4729
  %6464 = vmatprep.subr.bf16.mxu0 %v4738
  %6465 = vmatpush1.bf16.msra.mxu0 %v4737
  %6466 = vmatprep.subr.bf16.mxu0 %v4746
  %6467 = vmatpush1.bf16.msra.mxu0 %v4745
  %6468 = vmatprep.subr.bf16.mxu0 %v4754
  %6469 = vmatpush1.bf16.msra.mxu0 %v4753
  %6470 = vmatprep.subr.bf16.mxu0 %v4762
  %6471 = vmatpush1.bf16.msra.mxu0 %v4761
  %6472 = vmatprep.subr.bf16.mxu0 %v4770
  %6473 = vmatpush1.bf16.msra.mxu0 %v4769
  %6474 = vmatprep.subr.bf16.mxu0 %v4778
  %6475 = vmatpush1.bf16.msra.mxu0 %v4777
  %6476 = vmatprep.mubr.bf16.mxu0 %v126
  %6477 = vmatmul.mubr.bf16.gmra.mrb[0].mxu0 %v125
  %v6478 = vpop.f32.mrb[0].mxu0
  %v6479 = vadd.f32 %v6438, %v6478
  %v6480 = vpop.f32.mrb[0].mxu0
  %v6481 = vadd.f32 %v6440, %v6480
  %v6482 = vpop.f32.mrb[0].mxu0
  %v6483 = vpop.f32.mrb[0].mxu0
  %6484 = vdwg.mxu0
  %6485 = vmatprep.subr.bf16.mxu0 %v4786
  %6486 = vmatpush1.bf16.msra.mxu0 %v4785
  %6487 = vmatprep.subr.bf16.mxu0 %v4794
  %6488 = vmatpush1.bf16.msra.mxu0 %v4793
  %6489 = vmatprep.subr.bf16.mxu0 %v4802
  %6490 = vmatpush1.bf16.msra.mxu0 %v4801
  %6491 = vmatprep.subr.bf16.mxu0 %v4810
  %6492 = vmatpush1.bf16.msra.mxu0 %v4809
  %6493 = vmatprep.subr.bf16.mxu0 %v4818
  %6494 = vmatpush1.bf16.msra.mxu0 %v4817
  %6495 = vmatprep.subr.bf16.mxu0 %v4826
  %6496 = vmatpush1.bf16.msra.mxu0 %v4825
  %6497 = vmatprep.subr.bf16.mxu0 %v4834
  %6498 = vmatpush1.bf16.msra.mxu0 %v4833
  %6499 = vmatprep.subr.bf16.mxu0 %v4842
  %6500 = vmatpush1.bf16.msra.mxu0 %v4841
  %6501 = vmatprep.subr.bf16.mxu0 %v4850
  %6502 = vmatpush1.bf16.msra.mxu0 %v4849
  %6503 = vmatprep.subr.bf16.mxu0 %v4858
  %6504 = vmatpush1.bf16.msra.mxu0 %v4857
  %6505 = vmatprep.subr.bf16.mxu0 %v4866
  %6506 = vmatpush1.bf16.msra.mxu0 %v4865
  %6507 = vmatprep.subr.bf16.mxu0 %v4874
  %6508 = vmatpush1.bf16.msra.mxu0 %v4873
  %6509 = vmatprep.subr.bf16.mxu0 %v4882
  %6510 = vmatpush1.bf16.msra.mxu0 %v4881
  %6511 = vmatprep.subr.bf16.mxu0 %v4890
  %6512 = vmatpush1.bf16.msra.mxu0 %v4889
  %6513 = vmatprep.subr.bf16.mxu0 %v4898
  %6514 = vmatpush1.bf16.msra.mxu0 %v4897
  %6515 = vmatprep.subr.bf16.mxu0 %v4906
  %6516 = vmatpush1.bf16.msra.mxu0 %v4905
  %6517 = vmatprep.mubr.bf16.mxu0 %v128
  %6518 = vmatmul.mubr.bf16.gmra.mrb[0].mxu0 %v127
  %v6519 = vpop.f32.mrb[0].mxu0
  %v6520 = vadd.f32 %v6479, %v6519
  %v6521 = vpop.f32.mrb[0].mxu0
  %v6522 = vadd.f32 %v6481, %v6521
  %v6523 = vpop.f32.mrb[0].mxu0
  %v6524 = vpop.f32.mrb[0].mxu0
  %6525 = vdwg.mxu0
  %6526 = vmatprep.subr.bf16.mxu0 %v4914
  %6527 = vmatpush1.bf16.msra.mxu0 %v4913
  %6528 = vmatprep.subr.bf16.mxu0 %v4922
  %6529 = vmatpush1.bf16.msra.mxu0 %v4921
  %6530 = vmatprep.subr.bf16.mxu0 %v4930
  %6531 = vmatpush1.bf16.msra.mxu0 %v4929
  %6532 = vmatprep.subr.bf16.mxu0 %v4938
  %6533 = vmatpush1.bf16.msra.mxu0 %v4937
  %6534 = vmatprep.subr.bf16.mxu0 %v4946
  %6535 = vmatpush1.bf16.msra.mxu0 %v4945
  %6536 = vmatprep.subr.bf16.mxu0 %v4954
  %6537 = vmatpush1.bf16.msra.mxu0 %v4953
  %6538 = vmatprep.subr.bf16.mxu0 %v4962
  %6539 = vmatpush1.bf16.msra.mxu0 %v4961
  %6540 = vmatprep.subr.bf16.mxu0 %v4970
  %6541 = vmatpush1.bf16.msra.mxu0 %v4969
  %6542 = vmatprep.subr.bf16.mxu0 %v4978
  %6543 = vmatpush1.bf16.msra.mxu0 %v4977
  %6544 = vmatprep.subr.bf16.mxu0 %v4986
  %6545 = vmatpush1.bf16.msra.mxu0 %v4985
  %6546 = vmatprep.subr.bf16.mxu0 %v4994
  %6547 = vmatpush1.bf16.msra.mxu0 %v4993
  %6548 = vmatprep.subr.bf16.mxu0 %v5002
  %6549 = vmatpush1.bf16.msra.mxu0 %v5001
  %6550 = vmatprep.subr.bf16.mxu0 %v5010
  %6551 = vmatpush1.bf16.msra.mxu0 %v5009
  %6552 = vmatprep.subr.bf16.mxu0 %v5018
  %6553 = vmatpush1.bf16.msra.mxu0 %v5017
  %6554 = vmatprep.subr.bf16.mxu0 %v5026
  %6555 = vmatpush1.bf16.msra.mxu0 %v5025
  %6556 = vmatprep.subr.bf16.mxu0 %v5034
  %6557 = vmatpush1.bf16.msra.mxu0 %v5033
  %6558 = vmatprep.mubr.bf16.mxu0 %v130
  %6559 = vmatmul.mubr.bf16.gmra.mrb[0].mxu0 %v129
  %v6560 = vpop.f32.mrb[0].mxu0
  %v6561 = vadd.f32 %v6520, %v6560
  %v6562 = vpop.f32.mrb[0].mxu0
  %v6563 = vadd.f32 %v6522, %v6562
  %v6564 = vpop.f32.mrb[0].mxu0
  %v6565 = vpop.f32.mrb[0].mxu0
  %6566 = vdwg.mxu0
  %6567 = vmatprep.subr.bf16.mxu0 %v5042
  %6568 = vmatpush1.bf16.msra.mxu0 %v5041
  %6569 = vmatprep.subr.bf16.mxu0 %v5050
  %6570 = vmatpush1.bf16.msra.mxu0 %v5049
  %6571 = vmatprep.subr.bf16.mxu0 %v5058
  %6572 = vmatpush1.bf16.msra.mxu0 %v5057
  %6573 = vmatprep.subr.bf16.mxu0 %v5066
  %6574 = vmatpush1.bf16.msra.mxu0 %v5065
  %6575 = vmatprep.subr.bf16.mxu0 %v5074
  %6576 = vmatpush1.bf16.msra.mxu0 %v5073
  %6577 = vmatprep.subr.bf16.mxu0 %v5082
  %6578 = vmatpush1.bf16.msra.mxu0 %v5081
  %6579 = vmatprep.subr.bf16.mxu0 %v5090
  %6580 = vmatpush1.bf16.msra.mxu0 %v5089
  %6581 = vmatprep.subr.bf16.mxu0 %v5098
  %6582 = vmatpush1.bf16.msra.mxu0 %v5097
  %6583 = vmatprep.subr.bf16.mxu0 %v5106
  %6584 = vmatpush1.bf16.msra.mxu0 %v5105
  %6585 = vmatprep.subr.bf16.mxu0 %v5114
  %6586 = vmatpush1.bf16.msra.mxu0 %v5113
  %6587 = vmatprep.subr.bf16.mxu0 %v5122
  %6588 = vmatpush1.bf16.msra.mxu0 %v5121
  %6589 = vmatprep.subr.bf16.mxu0 %v5130
  %6590 = vmatpush1.bf16.msra.mxu0 %v5129
  %6591 = vmatprep.subr.bf16.mxu0 %v5138
  %6592 = vmatpush1.bf16.msra.mxu0 %v5137
  %6593 = vmatprep.subr.bf16.mxu0 %v5146
  %6594 = vmatpush1.bf16.msra.mxu0 %v5145
  %6595 = vmatprep.subr.bf16.mxu0 %v5154
  %6596 = vmatpush1.bf16.msra.mxu0 %v5153
  %6597 = vmatprep.subr.bf16.mxu0 %v5162
  %6598 = vmatpush1.bf16.msra.mxu0 %v5161
  %6599 = vmatprep.mubr.bf16.mxu0 %v132
  %6600 = vmatmul.mubr.bf16.gmra.mrb[0].mxu0 %v131
  %v6601 = vpop.f32.mrb[0].mxu0
  %v6602 = vadd.f32 %v6561, %v6601
  %v6603 = vpop.f32.mrb[0].mxu0
  %v6604 = vadd.f32 %v6563, %v6603
  %v6605 = vpop.f32.mrb[0].mxu0
  %v6606 = vpop.f32.mrb[0].mxu0
  %6607 = vdwg.mxu0
  %6608 = vmatprep.subr.bf16.mxu0 %v5170
  %6609 = vmatpush1.bf16.msra.mxu0 %v5169
  %6610 = vmatprep.subr.bf16.mxu0 %v5178
  %6611 = vmatpush1.bf16.msra.mxu0 %v5177
  %6612 = vmatprep.subr.bf16.mxu0 %v5186
  %6613 = vmatpush1.bf16.msra.mxu0 %v5185
  %6614 = vmatprep.subr.bf16.mxu0 %v5194
  %6615 = vmatpush1.bf16.msra.mxu0 %v5193
  %6616 = vmatprep.subr.bf16.mxu0 %v5202
  %6617 = vmatpush1.bf16.msra.mxu0 %v5201
  %6618 = vmatprep.subr.bf16.mxu0 %v5210
  %6619 = vmatpush1.bf16.msra.mxu0 %v5209
  %6620 = vmatprep.subr.bf16.mxu0 %v5218
  %6621 = vmatpush1.bf16.msra.mxu0 %v5217
  %6622 = vmatprep.subr.bf16.mxu0 %v5226
  %6623 = vmatpush1.bf16.msra.mxu0 %v5225
  %6624 = vmatprep.subr.bf16.mxu0 %v5234
  %6625 = vmatpush1.bf16.msra.mxu0 %v5233
  %6626 = vmatprep.subr.bf16.mxu0 %v5242
  %6627 = vmatpush1.bf16.msra.mxu0 %v5241
  %6628 = vmatprep.subr.bf16.mxu0 %v5250
  %6629 = vmatpush1.bf16.msra.mxu0 %v5249
  %6630 = vmatprep.subr.bf16.mxu0 %v5258
  %6631 = vmatpush1.bf16.msra.mxu0 %v5257
  %6632 = vmatprep.subr.bf16.mxu0 %v5266
  %6633 = vmatpush1.bf16.msra.mxu0 %v5265
  %6634 = vmatprep.subr.bf16.mxu0 %v5274
  %6635 = vmatpush1.bf16.msra.mxu0 %v5273
  %6636 = vmatprep.subr.bf16.mxu0 %v5282
  %6637 = vmatpush1.bf16.msra.mxu0 %v5281
  %6638 = vmatprep.subr.bf16.mxu0 %v5290
  %6639 = vmatpush1.bf16.msra.mxu0 %v5289
  %6640 = vmatprep.mubr.bf16.mxu0 %v134
  %6641 = vmatmul.mubr.bf16.gmra.mrb[0].mxu0 %v133
  %v6642 = vpop.f32.mrb[0].mxu0
  %v6643 = vadd.f32 %v6602, %v6642
  %v6644 = vpop.f32.mrb[0].mxu0
  %v6645 = vadd.f32 %v6604, %v6644
  %v6646 = vpop.f32.mrb[0].mxu0
  %v6647 = vpop.f32.mrb[0].mxu0
  %6648 = vdwg.mxu0
  %6649 = vmatprep.subr.bf16.mxu0 %v4276
  %6650 = vmatpush1.bf16.msra.mxu0 %v4275
  %6651 = vmatprep.subr.bf16.mxu0 %v4284
  %6652 = vmatpush1.bf16.msra.mxu0 %v4283
  %6653 = vmatprep.subr.bf16.mxu0 %v4292
  %6654 = vmatpush1.bf16.msra.mxu0 %v4291
  %6655 = vmatprep.subr.bf16.mxu0 %v4300
  %6656 = vmatpush1.bf16.msra.mxu0 %v4299
  %6657 = vmatprep.subr.bf16.mxu0 %v4308
  %6658 = vmatpush1.bf16.msra.mxu0 %v4307
  %6659 = vmatprep.subr.bf16.mxu0 %v4316
  %6660 = vmatpush1.bf16.msra.mxu0 %v4315
  %6661 = vmatprep.subr.bf16.mxu0 %v4324
  %6662 = vmatpush1.bf16.msra.mxu0 %v4323
  %6663 = vmatprep.subr.bf16.mxu0 %v4332
  %6664 = vmatpush1.bf16.msra.mxu0 %v4331
  %6665 = vmatprep.subr.bf16.mxu0 %v4340
  %6666 = vmatpush1.bf16.msra.mxu0 %v4339
  %6667 = vmatprep.subr.bf16.mxu0 %v4348
  %6668 = vmatpush1.bf16.msra.mxu0 %v4347
  %6669 = vmatprep.subr.bf16.mxu0 %v4356
  %6670 = vmatpush1.bf16.msra.mxu0 %v4355
  %6671 = vmatprep.subr.bf16.mxu0 %v4364
  %6672 = vmatpush1.bf16.msra.mxu0 %v4363
  %6673 = vmatprep.subr.bf16.mxu0 %v4372
  %6674 = vmatpush1.bf16.msra.mxu0 %v4371
  %6675 = vmatprep.subr.bf16.mxu0 %v4380
  %6676 = vmatpush1.bf16.msra.mxu0 %v4379
  %6677 = vmatprep.subr.bf16.mxu0 %v4388
  %6678 = vmatpush1.bf16.msra.mxu0 %v4387
  %6679 = vmatprep.subr.bf16.mxu0 %v4396
  %6680 = vmatpush1.bf16.msra.mxu0 %v4395
  %6681 = vmatprep.mubr.bf16.mxu0 %v120
  %6682 = vmatmul.mubr.bf16.gmra.mrb[0].mxu0 %v119
  %v6683 = vpop.f32.mrb[0].mxu0
  %v6684 = vadd.f32 %v1172, %v6683
  %v6685 = vpop.f32.mrb[0].mxu0
  %v6686 = vadd.f32 %v1176, %v6685
  %v6687 = vpop.f32.mrb[0].mxu0
  %v6688 = vpop.f32.mrb[0].mxu0
  %6689 = vdwg.mxu0
  %6690 = vmatprep.subr.bf16.mxu0 %v4404
  %6691 = vmatpush1.bf16.msra.mxu0 %v4403
  %6692 = vmatprep.subr.bf16.mxu0 %v4412
  %6693 = vmatpush1.bf16.msra.mxu0 %v4411
  %6694 = vmatprep.subr.bf16.mxu0 %v4420
  %6695 = vmatpush1.bf16.msra.mxu0 %v4419
  %6696 = vmatprep.subr.bf16.mxu0 %v4428
  %6697 = vmatpush1.bf16.msra.mxu0 %v4427
  %6698 = vmatprep.subr.bf16.mxu0 %v4436
  %6699 = vmatpush1.bf16.msra.mxu0 %v4435
  %6700 = vmatprep.subr.bf16.mxu0 %v4444
  %6701 = vmatpush1.bf16.msra.mxu0 %v4443
  %6702 = vmatprep.subr.bf16.mxu0 %v4452
  %6703 = vmatpush1.bf16.msra.mxu0 %v4451
  %6704 = vmatprep.subr.bf16.mxu0 %v4460
  %6705 = vmatpush1.bf16.msra.mxu0 %v4459
  %6706 = vmatprep.subr.bf16.mxu0 %v4468
  %6707 = vmatpush1.bf16.msra.mxu0 %v4467
  %6708 = vmatprep.subr.bf16.mxu0 %v4476
  %6709 = vmatpush1.bf16.msra.mxu0 %v4475
  %6710 = vmatprep.subr.bf16.mxu0 %v4484
  %6711 = vmatpush1.bf16.msra.mxu0 %v4483
  %6712 = vmatprep.subr.bf16.mxu0 %v4492
  %6713 = vmatpush1.bf16.msra.mxu0 %v4491
  %6714 = vmatprep.subr.bf16.mxu0 %v4500
  %6715 = vmatpush1.bf16.msra.mxu0 %v4499
  %6716 = vmatprep.subr.bf16.mxu0 %v4508
  %6717 = vmatpush1.bf16.msra.mxu0 %v4507
  %6718 = vmatprep.subr.bf16.mxu0 %v4516
  %6719 = vmatpush1.bf16.msra.mxu0 %v4515
  %6720 = vmatprep.subr.bf16.mxu0 %v4524
  %6721 = vmatpush1.bf16.msra.mxu0 %v4523
  %6722 = vmatprep.mubr.bf16.mxu0 %v122
  %6723 = vmatmul.mubr.bf16.gmra.mrb[0].mxu0 %v121
  %v6724 = vpop.f32.mrb[0].mxu0
  %v6725 = vadd.f32 %v6684, %v6724
  %v6726 = vpop.f32.mrb[0].mxu0
  %v6727 = vadd.f32 %v6686, %v6726
  %v6728 = vpop.f32.mrb[0].mxu0
  %v6729 = vpop.f32.mrb[0].mxu0
  %6730 = vdwg.mxu0
  %6731 = vmatprep.subr.bf16.mxu0 %v4532
  %6732 = vmatpush1.bf16.msra.mxu0 %v4531
  %6733 = vmatprep.subr.bf16.mxu0 %v4540
  %6734 = vmatpush1.bf16.msra.mxu0 %v4539
  %6735 = vmatprep.subr.bf16.mxu0 %v4548
  %6736 = vmatpush1.bf16.msra.mxu0 %v4547
  %6737 = vmatprep.subr.bf16.mxu0 %v4556
  %6738 = vmatpush1.bf16.msra.mxu0 %v4555
  %6739 = vmatprep.subr.bf16.mxu0 %v4564
  %6740 = vmatpush1.bf16.msra.mxu0 %v4563
  %6741 = vmatprep.subr.bf16.mxu0 %v4572
  %6742 = vmatpush1.bf16.msra.mxu0 %v4571
  %6743 = vmatprep.subr.bf16.mxu0 %v4580
  %6744 = vmatpush1.bf16.msra.mxu0 %v4579
  %6745 = vmatprep.subr.bf16.mxu0 %v4588
  %6746 = vmatpush1.bf16.msra.mxu0 %v4587
  %6747 = vmatprep.subr.bf16.mxu0 %v4596
  %6748 = vmatpush1.bf16.msra.mxu0 %v4595
  %6749 = vmatprep.subr.bf16.mxu0 %v4604
  %6750 = vmatpush1.bf16.msra.mxu0 %v4603
  %6751 = vmatprep.subr.bf16.mxu0 %v4612
  %6752 = vmatpush1.bf16.msra.mxu0 %v4611
  %6753 = vmatprep.subr.bf16.mxu0 %v4620
  %6754 = vmatpush1.bf16.msra.mxu0 %v4619
  %6755 = vmatprep.subr.bf16.mxu0 %v4628
  %6756 = vmatpush1.bf16.msra.mxu0 %v4627
  %6757 = vmatprep.subr.bf16.mxu0 %v4636
  %6758 = vmatpush1.bf16.msra.mxu0 %v4635
  %6759 = vmatprep.subr.bf16.mxu0 %v4644
  %6760 = vmatpush1.bf16.msra.mxu0 %v4643
  %6761 = vmatprep.subr.bf16.mxu0 %v4652
  %6762 = vmatpush1.bf16.msra.mxu0 %v4651
  %6763 = vmatprep.mubr.bf16.mxu0 %v124
  %6764 = vmatmul.mubr.bf16.gmra.mrb[0].mxu0 %v123
  %v6765 = vpop.f32.mrb[0].mxu0
  %v6766 = vadd.f32 %v6725, %v6765
  %v6767 = vpop.f32.mrb[0].mxu0
  %v6768 = vadd.f32 %v6727, %v6767
  %v6769 = vpop.f32.mrb[0].mxu0
  %v6770 = vpop.f32.mrb[0].mxu0
  %6771 = vdwg.mxu0
  %6772 = vmatprep.subr.bf16.mxu0 %v4660
  %6773 = vmatpush1.bf16.msra.mxu0 %v4659
  %6774 = vmatprep.subr.bf16.mxu0 %v4668
  %6775 = vmatpush1.bf16.msra.mxu0 %v4667
  %6776 = vmatprep.subr.bf16.mxu0 %v4676
  %6777 = vmatpush1.bf16.msra.mxu0 %v4675
  %6778 = vmatprep.subr.bf16.mxu0 %v4684
  %6779 = vmatpush1.bf16.msra.mxu0 %v4683
  %6780 = vmatprep.subr.bf16.mxu0 %v4692
  %6781 = vmatpush1.bf16.msra.mxu0 %v4691
  %6782 = vmatprep.subr.bf16.mxu0 %v4700
  %6783 = vmatpush1.bf16.msra.mxu0 %v4699
  %6784 = vmatprep.subr.bf16.mxu0 %v4708
  %6785 = vmatpush1.bf16.msra.mxu0 %v4707
  %6786 = vmatprep.subr.bf16.mxu0 %v4716
  %6787 = vmatpush1.bf16.msra.mxu0 %v4715
  %6788 = vmatprep.subr.bf16.mxu0 %v4724
  %6789 = vmatpush1.bf16.msra.mxu0 %v4723
  %6790 = vmatprep.subr.bf16.mxu0 %v4732
  %6791 = vmatpush1.bf16.msra.mxu0 %v4731
  %6792 = vmatprep.subr.bf16.mxu0 %v4740
  %6793 = vmatpush1.bf16.msra.mxu0 %v4739
  %6794 = vmatprep.subr.bf16.mxu0 %v4748
  %6795 = vmatpush1.bf16.msra.mxu0 %v4747
  %6796 = vmatprep.subr.bf16.mxu0 %v4756
  %6797 = vmatpush1.bf16.msra.mxu0 %v4755
  %6798 = vmatprep.subr.bf16.mxu0 %v4764
  %6799 = vmatpush1.bf16.msra.mxu0 %v4763
  %6800 = vmatprep.subr.bf16.mxu0 %v4772
  %6801 = vmatpush1.bf16.msra.mxu0 %v4771
  %6802 = vmatprep.subr.bf16.mxu0 %v4780
  %6803 = vmatpush1.bf16.msra.mxu0 %v4779
  %6804 = vmatprep.mubr.bf16.mxu0 %v126
  %6805 = vmatmul.mubr.bf16.gmra.mrb[0].mxu0 %v125
  %v6806 = vpop.f32.mrb[0].mxu0
  %v6807 = vadd.f32 %v6766, %v6806
  %v6808 = vpop.f32.mrb[0].mxu0
  %v6809 = vadd.f32 %v6768, %v6808
  %v6810 = vpop.f32.mrb[0].mxu0
  %v6811 = vpop.f32.mrb[0].mxu0
  %6812 = vdwg.mxu0
  %6813 = vmatprep.subr.bf16.mxu0 %v4788
  %6814 = vmatpush1.bf16.msra.mxu0 %v4787
  %6815 = vmatprep.subr.bf16.mxu0 %v4796
  %6816 = vmatpush1.bf16.msra.mxu0 %v4795
  %6817 = vmatprep.subr.bf16.mxu0 %v4804
  %6818 = vmatpush1.bf16.msra.mxu0 %v4803
  %6819 = vmatprep.subr.bf16.mxu0 %v4812
  %6820 = vmatpush1.bf16.msra.mxu0 %v4811
  %6821 = vmatprep.subr.bf16.mxu0 %v4820
  %6822 = vmatpush1.bf16.msra.mxu0 %v4819
  %6823 = vmatprep.subr.bf16.mxu0 %v4828
  %6824 = vmatpush1.bf16.msra.mxu0 %v4827
  %6825 = vmatprep.subr.bf16.mxu0 %v4836
  %6826 = vmatpush1.bf16.msra.mxu0 %v4835
  %6827 = vmatprep.subr.bf16.mxu0 %v4844
  %6828 = vmatpush1.bf16.msra.mxu0 %v4843
  %6829 = vmatprep.subr.bf16.mxu0 %v4852
  %6830 = vmatpush1.bf16.msra.mxu0 %v4851
  %6831 = vmatprep.subr.bf16.mxu0 %v4860
  %6832 = vmatpush1.bf16.msra.mxu0 %v4859
  %6833 = vmatprep.subr.bf16.mxu0 %v4868
  %6834 = vmatpush1.bf16.msra.mxu0 %v4867
  %6835 = vmatprep.subr.bf16.mxu0 %v4876
  %6836 = vmatpush1.bf16.msra.mxu0 %v4875
  %6837 = vmatprep.subr.bf16.mxu0 %v4884
  %6838 = vmatpush1.bf16.msra.mxu0 %v4883
  %6839 = vmatprep.subr.bf16.mxu0 %v4892
  %6840 = vmatpush1.bf16.msra.mxu0 %v4891
  %6841 = vmatprep.subr.bf16.mxu0 %v4900
  %6842 = vmatpush1.bf16.msra.mxu0 %v4899
  %6843 = vmatprep.subr.bf16.mxu0 %v4908
  %6844 = vmatpush1.bf16.msra.mxu0 %v4907
  %6845 = vmatprep.mubr.bf16.mxu0 %v128
  %6846 = vmatmul.mubr.bf16.gmra.mrb[0].mxu0 %v127
  %v6847 = vpop.f32.mrb[0].mxu0
  %v6848 = vadd.f32 %v6807, %v6847
  %v6849 = vpop.f32.mrb[0].mxu0
  %v6850 = vadd.f32 %v6809, %v6849
  %v6851 = vpop.f32.mrb[0].mxu0
  %v6852 = vpop.f32.mrb[0].mxu0
  %6853 = vdwg.mxu0
  %6854 = vmatprep.subr.bf16.mxu0 %v4916
  %6855 = vmatpush1.bf16.msra.mxu0 %v4915
  %6856 = vmatprep.subr.bf16.mxu0 %v4924
  %6857 = vmatpush1.bf16.msra.mxu0 %v4923
  %6858 = vmatprep.subr.bf16.mxu0 %v4932
  %6859 = vmatpush1.bf16.msra.mxu0 %v4931
  %6860 = vmatprep.subr.bf16.mxu0 %v4940
  %6861 = vmatpush1.bf16.msra.mxu0 %v4939
  %6862 = vmatprep.subr.bf16.mxu0 %v4948
  %6863 = vmatpush1.bf16.msra.mxu0 %v4947
  %6864 = vmatprep.subr.bf16.mxu0 %v4956
  %6865 = vmatpush1.bf16.msra.mxu0 %v4955
  %6866 = vmatprep.subr.bf16.mxu0 %v4964
  %6867 = vmatpush1.bf16.msra.mxu0 %v4963
  %6868 = vmatprep.subr.bf16.mxu0 %v4972
  %6869 = vmatpush1.bf16.msra.mxu0 %v4971
  %6870 = vmatprep.subr.bf16.mxu0 %v4980
  %6871 = vmatpush1.bf16.msra.mxu0 %v4979
  %6872 = vmatprep.subr.bf16.mxu0 %v4988
  %6873 = vmatpush1.bf16.msra.mxu0 %v4987
  %6874 = vmatprep.subr.bf16.mxu0 %v4996
  %6875 = vmatpush1.bf16.msra.mxu0 %v4995
  %6876 = vmatprep.subr.bf16.mxu0 %v5004
  %6877 = vmatpush1.bf16.msra.mxu0 %v5003
  %6878 = vmatprep.subr.bf16.mxu0 %v5012
  %6879 = vmatpush1.bf16.msra.mxu0 %v5011
  %6880 = vmatprep.subr.bf16.mxu0 %v5020
  %6881 = vmatpush1.bf16.msra.mxu0 %v5019
  %6882 = vmatprep.subr.bf16.mxu0 %v5028
  %6883 = vmatpush1.bf16.msra.mxu0 %v5027
  %6884 = vmatprep.subr.bf16.mxu0 %v5036
  %6885 = vmatpush1.bf16.msra.mxu0 %v5035
  %6886 = vmatprep.mubr.bf16.mxu0 %v130
  %6887 = vmatmul.mubr.bf16.gmra.mrb[0].mxu0 %v129
  %v6888 = vpop.f32.mrb[0].mxu0
  %v6889 = vadd.f32 %v6848, %v6888
  %v6890 = vpop.f32.mrb[0].mxu0
  %v6891 = vadd.f32 %v6850, %v6890
  %v6892 = vpop.f32.mrb[0].mxu0
  %v6893 = vpop.f32.mrb[0].mxu0
  %6894 = vdwg.mxu0
  %6895 = vmatprep.subr.bf16.mxu0 %v5044
  %6896 = vmatpush1.bf16.msra.mxu0 %v5043
  %6897 = vmatprep.subr.bf16.mxu0 %v5052
  %6898 = vmatpush1.bf16.msra.mxu0 %v5051
  %6899 = vmatprep.subr.bf16.mxu0 %v5060
  %6900 = vmatpush1.bf16.msra.mxu0 %v5059
  %6901 = vmatprep.subr.bf16.mxu0 %v5068
  %6902 = vmatpush1.bf16.msra.mxu0 %v5067
  %6903 = vmatprep.subr.bf16.mxu0 %v5076
  %6904 = vmatpush1.bf16.msra.mxu0 %v5075
  %6905 = vmatprep.subr.bf16.mxu0 %v5084
  %6906 = vmatpush1.bf16.msra.mxu0 %v5083
  %6907 = vmatprep.subr.bf16.mxu0 %v5092
  %6908 = vmatpush1.bf16.msra.mxu0 %v5091
  %6909 = vmatprep.subr.bf16.mxu0 %v5100
  %6910 = vmatpush1.bf16.msra.mxu0 %v5099
  %6911 = vmatprep.subr.bf16.mxu0 %v5108
  %6912 = vmatpush1.bf16.msra.mxu0 %v5107
  %6913 = vmatprep.subr.bf16.mxu0 %v5116
  %6914 = vmatpush1.bf16.msra.mxu0 %v5115
  %6915 = vmatprep.subr.bf16.mxu0 %v5124
  %6916 = vmatpush1.bf16.msra.mxu0 %v5123
  %6917 = vmatprep.subr.bf16.mxu0 %v5132
  %6918 = vmatpush1.bf16.msra.mxu0 %v5131
  %6919 = vmatprep.subr.bf16.mxu0 %v5140
  %6920 = vmatpush1.bf16.msra.mxu0 %v5139
  %6921 = vmatprep.subr.bf16.mxu0 %v5148
  %6922 = vmatpush1.bf16.msra.mxu0 %v5147
  %6923 = vmatprep.subr.bf16.mxu0 %v5156
  %6924 = vmatpush1.bf16.msra.mxu0 %v5155
  %6925 = vmatprep.subr.bf16.mxu0 %v5164
  %6926 = vmatpush1.bf16.msra.mxu0 %v5163
  %6927 = vmatprep.mubr.bf16.mxu0 %v132
  %6928 = vmatmul.mubr.bf16.gmra.mrb[0].mxu0 %v131
  %v6929 = vpop.f32.mrb[0].mxu0
  %v6930 = vadd.f32 %v6889, %v6929
  %v6931 = vpop.f32.mrb[0].mxu0
  %v6932 = vadd.f32 %v6891, %v6931
  %v6933 = vpop.f32.mrb[0].mxu0
  %v6934 = vpop.f32.mrb[0].mxu0
  %6935 = vdwg.mxu0
  %6936 = vmatprep.subr.bf16.mxu0 %v5172
  %6937 = vmatpush1.bf16.msra.mxu0 %v5171
  %6938 = vmatprep.subr.bf16.mxu0 %v5180
  %6939 = vmatpush1.bf16.msra.mxu0 %v5179
  %6940 = vmatprep.subr.bf16.mxu0 %v5188
  %6941 = vmatpush1.bf16.msra.mxu0 %v5187
  %6942 = vmatprep.subr.bf16.mxu0 %v5196
  %6943 = vmatpush1.bf16.msra.mxu0 %v5195
  %6944 = vmatprep.subr.bf16.mxu0 %v5204
  %6945 = vmatpush1.bf16.msra.mxu0 %v5203
  %6946 = vmatprep.subr.bf16.mxu0 %v5212
  %6947 = vmatpush1.bf16.msra.mxu0 %v5211
  %6948 = vmatprep.subr.bf16.mxu0 %v5220
  %6949 = vmatpush1.bf16.msra.mxu0 %v5219
  %6950 = vmatprep.subr.bf16.mxu0 %v5228
  %6951 = vmatpush1.bf16.msra.mxu0 %v5227
  %6952 = vmatprep.subr.bf16.mxu0 %v5236
  %6953 = vmatpush1.bf16.msra.mxu0 %v5235
  %6954 = vmatprep.subr.bf16.mxu0 %v5244
  %6955 = vmatpush1.bf16.msra.mxu0 %v5243
  %6956 = vmatprep.subr.bf16.mxu0 %v5252
  %6957 = vmatpush1.bf16.msra.mxu0 %v5251
  %6958 = vmatprep.subr.bf16.mxu0 %v5260
  %6959 = vmatpush1.bf16.msra.mxu0 %v5259
  %6960 = vmatprep.subr.bf16.mxu0 %v5268
  %6961 = vmatpush1.bf16.msra.mxu0 %v5267
  %6962 = vmatprep.subr.bf16.mxu0 %v5276
  %6963 = vmatpush1.bf16.msra.mxu0 %v5275
  %6964 = vmatprep.subr.bf16.mxu0 %v5284
  %6965 = vmatpush1.bf16.msra.mxu0 %v5283
  %6966 = vmatprep.subr.bf16.mxu0 %v5292
  %6967 = vmatpush1.bf16.msra.mxu0 %v5291
  %6968 = vmatprep.mubr.bf16.mxu0 %v134
  %6969 = vmatmul.mubr.bf16.gmra.mrb[0].mxu0 %v133
  %v6970 = vpop.f32.mrb[0].mxu0
  %v6971 = vadd.f32 %v6930, %v6970
  %v6972 = vpop.f32.mrb[0].mxu0
  %v6973 = vadd.f32 %v6932, %v6972
  %v6974 = vpop.f32.mrb[0].mxu0
  %v6975 = vpop.f32.mrb[0].mxu0
  %6976 = vdwg.mxu0
  %6977 = vmatprep.subr.bf16.mxu0 %v4278
  %6978 = vmatpush1.bf16.msra.mxu0 %v4277
  %6979 = vmatprep.subr.bf16.mxu0 %v4286
  %6980 = vmatpush1.bf16.msra.mxu0 %v4285
  %6981 = vmatprep.subr.bf16.mxu0 %v4294
  %6982 = vmatpush1.bf16.msra.mxu0 %v4293
  %6983 = vmatprep.subr.bf16.mxu0 %v4302
  %6984 = vmatpush1.bf16.msra.mxu0 %v4301
  %6985 = vmatprep.subr.bf16.mxu0 %v4310
  %6986 = vmatpush1.bf16.msra.mxu0 %v4309
  %6987 = vmatprep.subr.bf16.mxu0 %v4318
  %6988 = vmatpush1.bf16.msra.mxu0 %v4317
  %6989 = vmatprep.subr.bf16.mxu0 %v4326
  %6990 = vmatpush1.bf16.msra.mxu0 %v4325
  %6991 = vmatprep.subr.bf16.mxu0 %v4334
  %6992 = vmatpush1.bf16.msra.mxu0 %v4333
  %6993 = vmatprep.subr.bf16.mxu0 %v4342
  %6994 = vmatpush1.bf16.msra.mxu0 %v4341
  %6995 = vmatprep.subr.bf16.mxu0 %v4350
  %6996 = vmatpush1.bf16.msra.mxu0 %v4349
  %6997 = vmatprep.subr.bf16.mxu0 %v4358
  %6998 = vmatpush1.bf16.msra.mxu0 %v4357
  %6999 = vmatprep.subr.bf16.mxu0 %v4366
  %7000 = vmatpush1.bf16.msra.mxu0 %v4365
  %7001 = vmatprep.subr.bf16.mxu0 %v4374
  %7002 = vmatpush1.bf16.msra.mxu0 %v4373
  %7003 = vmatprep.subr.bf16.mxu0 %v4382
  %7004 = vmatpush1.bf16.msra.mxu0 %v4381
  %7005 = vmatprep.subr.bf16.mxu0 %v4390
  %7006 = vmatpush1.bf16.msra.mxu0 %v4389
  %7007 = vmatprep.subr.bf16.mxu0 %v4398
  %7008 = vmatpush1.bf16.msra.mxu0 %v4397
  %7009 = vmatprep.mubr.bf16.mxu0 %v120
  %7010 = vmatmul.mubr.bf16.gmra.mrb[0].mxu0 %v119
  %v7011 = vpop.f32.mrb[0].mxu0
  %v7012 = vadd.f32 %v1180, %v7011
  %v7013 = vpop.f32.mrb[0].mxu0
  %v7014 = vadd.f32 %v1184, %v7013
  %v7015 = vpop.f32.mrb[0].mxu0
  %v7016 = vpop.f32.mrb[0].mxu0
  %7017 = vdwg.mxu0
  %7018 = vmatprep.subr.bf16.mxu0 %v4406
  %7019 = vmatpush1.bf16.msra.mxu0 %v4405
  %7020 = vmatprep.subr.bf16.mxu0 %v4414
  %7021 = vmatpush1.bf16.msra.mxu0 %v4413
  %7022 = vmatprep.subr.bf16.mxu0 %v4422
  %7023 = vmatpush1.bf16.msra.mxu0 %v4421
  %7024 = vmatprep.subr.bf16.mxu0 %v4430
  %7025 = vmatpush1.bf16.msra.mxu0 %v4429
  %7026 = vmatprep.subr.bf16.mxu0 %v4438
  %7027 = vmatpush1.bf16.msra.mxu0 %v4437
  %7028 = vmatprep.subr.bf16.mxu0 %v4446
  %7029 = vmatpush1.bf16.msra.mxu0 %v4445
  %7030 = vmatprep.subr.bf16.mxu0 %v4454
  %7031 = vmatpush1.bf16.msra.mxu0 %v4453
  %7032 = vmatprep.subr.bf16.mxu0 %v4462
  %7033 = vmatpush1.bf16.msra.mxu0 %v4461
  %7034 = vmatprep.subr.bf16.mxu0 %v4470
  %7035 = vmatpush1.bf16.msra.mxu0 %v4469
  %7036 = vmatprep.subr.bf16.mxu0 %v4478
  %7037 = vmatpush1.bf16.msra.mxu0 %v4477
  %7038 = vmatprep.subr.bf16.mxu0 %v4486
  %7039 = vmatpush1.bf16.msra.mxu0 %v4485
  %7040 = vmatprep.subr.bf16.mxu0 %v4494
  %7041 = vmatpush1.bf16.msra.mxu0 %v4493
  %7042 = vmatprep.subr.bf16.mxu0 %v4502
  %7043 = vmatpush1.bf16.msra.mxu0 %v4501
  %7044 = vmatprep.subr.bf16.mxu0 %v4510
  %7045 = vmatpush1.bf16.msra.mxu0 %v4509
  %7046 = vmatprep.subr.bf16.mxu0 %v4518
  %7047 = vmatpush1.bf16.msra.mxu0 %v4517
  %7048 = vmatprep.subr.bf16.mxu0 %v4526
  %7049 = vmatpush1.bf16.msra.mxu0 %v4525
  %7050 = vmatprep.mubr.bf16.mxu0 %v122
  %7051 = vmatmul.mubr.bf16.gmra.mrb[0].mxu0 %v121
  %v7052 = vpop.f32.mrb[0].mxu0
  %v7053 = vadd.f32 %v7012, %v7052
  %v7054 = vpop.f32.mrb[0].mxu0
  %v7055 = vadd.f32 %v7014, %v7054
  %v7056 = vpop.f32.mrb[0].mxu0
  %v7057 = vpop.f32.mrb[0].mxu0
  %7058 = vdwg.mxu0
  %7059 = vmatprep.subr.bf16.mxu0 %v4534
  %7060 = vmatpush1.bf16.msra.mxu0 %v4533
  %7061 = vmatprep.subr.bf16.mxu0 %v4542
  %7062 = vmatpush1.bf16.msra.mxu0 %v4541
  %7063 = vmatprep.subr.bf16.mxu0 %v4550
  %7064 = vmatpush1.bf16.msra.mxu0 %v4549
  %7065 = vmatprep.subr.bf16.mxu0 %v4558
  %7066 = vmatpush1.bf16.msra.mxu0 %v4557
  %7067 = vmatprep.subr.bf16.mxu0 %v4566
  %7068 = vmatpush1.bf16.msra.mxu0 %v4565
  %7069 = vmatprep.subr.bf16.mxu0 %v4574
  %7070 = vmatpush1.bf16.msra.mxu0 %v4573
  %7071 = vmatprep.subr.bf16.mxu0 %v4582
  %7072 = vmatpush1.bf16.msra.mxu0 %v4581
  %7073 = vmatprep.subr.bf16.mxu0 %v4590
  %7074 = vmatpush1.bf16.msra.mxu0 %v4589
  %7075 = vmatprep.subr.bf16.mxu0 %v4598
  %7076 = vmatpush1.bf16.msra.mxu0 %v4597
  %7077 = vmatprep.subr.bf16.mxu0 %v4606
  %7078 = vmatpush1.bf16.msra.mxu0 %v4605
  %7079 = vmatprep.subr.bf16.mxu0 %v4614
  %7080 = vmatpush1.bf16.msra.mxu0 %v4613
  %7081 = vmatprep.subr.bf16.mxu0 %v4622
  %7082 = vmatpush1.bf16.msra.mxu0 %v4621
  %7083 = vmatprep.subr.bf16.mxu0 %v4630
  %7084 = vmatpush1.bf16.msra.mxu0 %v4629
  %7085 = vmatprep.subr.bf16.mxu0 %v4638
  %7086 = vmatpush1.bf16.msra.mxu0 %v4637
  %7087 = vmatprep.subr.bf16.mxu0 %v4646
  %7088 = vmatpush1.bf16.msra.mxu0 %v4645
  %7089 = vmatprep.subr.bf16.mxu0 %v4654
  %7090 = vmatpush1.bf16.msra.mxu0 %v4653
  %7091 = vmatprep.mubr.bf16.mxu0 %v124
  %7092 = vmatmul.mubr.bf16.gmra.mrb[0].mxu0 %v123
  %v7093 = vpop.f32.mrb[0].mxu0
  %v7094 = vadd.f32 %v7053, %v7093
  %v7095 = vpop.f32.mrb[0].mxu0
  %v7096 = vadd.f32 %v7055, %v7095
  %v7097 = vpop.f32.mrb[0].mxu0
  %v7098 = vpop.f32.mrb[0].mxu0
  %7099 = vdwg.mxu0
  %7100 = vmatprep.subr.bf16.mxu0 %v4662
  %7101 = vmatpush1.bf16.msra.mxu0 %v4661
  %7102 = vmatprep.subr.bf16.mxu0 %v4670
  %7103 = vmatpush1.bf16.msra.mxu0 %v4669
  %7104 = vmatprep.subr.bf16.mxu0 %v4678
  %7105 = vmatpush1.bf16.msra.mxu0 %v4677
  %7106 = vmatprep.subr.bf16.mxu0 %v4686
  %7107 = vmatpush1.bf16.msra.mxu0 %v4685
  %7108 = vmatprep.subr.bf16.mxu0 %v4694
  %7109 = vmatpush1.bf16.msra.mxu0 %v4693
  %7110 = vmatprep.subr.bf16.mxu0 %v4702
  %7111 = vmatpush1.bf16.msra.mxu0 %v4701
  %7112 = vmatprep.subr.bf16.mxu0 %v4710
  %7113 = vmatpush1.bf16.msra.mxu0 %v4709
  %7114 = vmatprep.subr.bf16.mxu0 %v4718
  %7115 = vmatpush1.bf16.msra.mxu0 %v4717
  %7116 = vmatprep.subr.bf16.mxu0 %v4726
  %7117 = vmatpush1.bf16.msra.mxu0 %v4725
  %7118 = vmatprep.subr.bf16.mxu0 %v4734
  %7119 = vmatpush1.bf16.msra.mxu0 %v4733
  %7120 = vmatprep.subr.bf16.mxu0 %v4742
  %7121 = vmatpush1.bf16.msra.mxu0 %v4741
  %7122 = vmatprep.subr.bf16.mxu0 %v4750
  %7123 = vmatpush1.bf16.msra.mxu0 %v4749
  %7124 = vmatprep.subr.bf16.mxu0 %v4758
  %7125 = vmatpush1.bf16.msra.mxu0 %v4757
  %7126 = vmatprep.subr.bf16.mxu0 %v4766
  %7127 = vmatpush1.bf16.msra.mxu0 %v4765
  %7128 = vmatprep.subr.bf16.mxu0 %v4774
  %7129 = vmatpush1.bf16.msra.mxu0 %v4773
  %7130 = vmatprep.subr.bf16.mxu0 %v4782
  %7131 = vmatpush1.bf16.msra.mxu0 %v4781
  %7132 = vmatprep.mubr.bf16.mxu0 %v126
  %7133 = vmatmul.mubr.bf16.gmra.mrb[0].mxu0 %v125
  %v7134 = vpop.f32.mrb[0].mxu0
  %v7135 = vadd.f32 %v7094, %v7134
  %v7136 = vpop.f32.mrb[0].mxu0
  %v7137 = vadd.f32 %v7096, %v7136
  %v7138 = vpop.f32.mrb[0].mxu0
  %v7139 = vpop.f32.mrb[0].mxu0
  %7140 = vdwg.mxu0
  %7141 = vmatprep.subr.bf16.mxu0 %v4790
  %7142 = vmatpush1.bf16.msra.mxu0 %v4789
  %7143 = vmatprep.subr.bf16.mxu0 %v4798
  %7144 = vmatpush1.bf16.msra.mxu0 %v4797
  %7145 = vmatprep.subr.bf16.mxu0 %v4806
  %7146 = vmatpush1.bf16.msra.mxu0 %v4805
  %7147 = vmatprep.subr.bf16.mxu0 %v4814
  %7148 = vmatpush1.bf16.msra.mxu0 %v4813
  %7149 = vmatprep.subr.bf16.mxu0 %v4822
  %7150 = vmatpush1.bf16.msra.mxu0 %v4821
  %7151 = vmatprep.subr.bf16.mxu0 %v4830
  %7152 = vmatpush1.bf16.msra.mxu0 %v4829
  %7153 = vmatprep.subr.bf16.mxu0 %v4838
  %7154 = vmatpush1.bf16.msra.mxu0 %v4837
  %7155 = vmatprep.subr.bf16.mxu0 %v4846
  %7156 = vmatpush1.bf16.msra.mxu0 %v4845
  %7157 = vmatprep.subr.bf16.mxu0 %v4854
  %7158 = vmatpush1.bf16.msra.mxu0 %v4853
  %7159 = vmatprep.subr.bf16.mxu0 %v4862
  %7160 = vmatpush1.bf16.msra.mxu0 %v4861
  %7161 = vmatprep.subr.bf16.mxu0 %v4870
  %7162 = vmatpush1.bf16.msra.mxu0 %v4869
  %7163 = vmatprep.subr.bf16.mxu0 %v4878
  %7164 = vmatpush1.bf16.msra.mxu0 %v4877
  %7165 = vmatprep.subr.bf16.mxu0 %v4886
  %7166 = vmatpush1.bf16.msra.mxu0 %v4885
  %7167 = vmatprep.subr.bf16.mxu0 %v4894
  %7168 = vmatpush1.bf16.msra.mxu0 %v4893
  %7169 = vmatprep.subr.bf16.mxu0 %v4902
  %7170 = vmatpush1.bf16.msra.mxu0 %v4901
  %7171 = vmatprep.subr.bf16.mxu0 %v4910
  %7172 = vmatpush1.bf16.msra.mxu0 %v4909
  %7173 = vmatprep.mubr.bf16.mxu0 %v128
  %7174 = vmatmul.mubr.bf16.gmra.mrb[0].mxu0 %v127
  %v7175 = vpop.f32.mrb[0].mxu0
  %v7176 = vadd.f32 %v7135, %v7175
  %v7177 = vpop.f32.mrb[0].mxu0
  %v7178 = vadd.f32 %v7137, %v7177
  %v7179 = vpop.f32.mrb[0].mxu0
  %v7180 = vpop.f32.mrb[0].mxu0
  %7181 = vdwg.mxu0
  %7182 = vmatprep.subr.bf16.mxu0 %v4918
  %7183 = vmatpush1.bf16.msra.mxu0 %v4917
  %7184 = vmatprep.subr.bf16.mxu0 %v4926
  %7185 = vmatpush1.bf16.msra.mxu0 %v4925
  %7186 = vmatprep.subr.bf16.mxu0 %v4934
  %7187 = vmatpush1.bf16.msra.mxu0 %v4933
  %7188 = vmatprep.subr.bf16.mxu0 %v4942
  %7189 = vmatpush1.bf16.msra.mxu0 %v4941
  %7190 = vmatprep.subr.bf16.mxu0 %v4950
  %7191 = vmatpush1.bf16.msra.mxu0 %v4949
  %7192 = vmatprep.subr.bf16.mxu0 %v4958
  %7193 = vmatpush1.bf16.msra.mxu0 %v4957
  %7194 = vmatprep.subr.bf16.mxu0 %v4966
  %7195 = vmatpush1.bf16.msra.mxu0 %v4965
  %7196 = vmatprep.subr.bf16.mxu0 %v4974
  %7197 = vmatpush1.bf16.msra.mxu0 %v4973
  %7198 = vmatprep.subr.bf16.mxu0 %v4982
  %7199 = vmatpush1.bf16.msra.mxu0 %v4981
  %7200 = vmatprep.subr.bf16.mxu0 %v4990
  %7201 = vmatpush1.bf16.msra.mxu0 %v4989
  %7202 = vmatprep.subr.bf16.mxu0 %v4998
  %7203 = vmatpush1.bf16.msra.mxu0 %v4997
  %7204 = vmatprep.subr.bf16.mxu0 %v5006
  %7205 = vmatpush1.bf16.msra.mxu0 %v5005
  %7206 = vmatprep.subr.bf16.mxu0 %v5014
  %7207 = vmatpush1.bf16.msra.mxu0 %v5013
  %7208 = vmatprep.subr.bf16.mxu0 %v5022
  %7209 = vmatpush1.bf16.msra.mxu0 %v5021
  %7210 = vmatprep.subr.bf16.mxu0 %v5030
  %7211 = vmatpush1.bf16.msra.mxu0 %v5029
  %7212 = vmatprep.subr.bf16.mxu0 %v5038
  %7213 = vmatpush1.bf16.msra.mxu0 %v5037
  %7214 = vmatprep.mubr.bf16.mxu0 %v130
  %7215 = vmatmul.mubr.bf16.gmra.mrb[0].mxu0 %v129
  %v7216 = vpop.f32.mrb[0].mxu0
  %v7217 = vadd.f32 %v7176, %v7216
  %v7218 = vpop.f32.mrb[0].mxu0
  %v7219 = vadd.f32 %v7178, %v7218
  %v7220 = vpop.f32.mrb[0].mxu0
  %v7221 = vpop.f32.mrb[0].mxu0
  %7222 = vdwg.mxu0
  %7223 = vmatprep.subr.bf16.mxu0 %v5046
  %7224 = vmatpush1.bf16.msra.mxu0 %v5045
  %7225 = vmatprep.subr.bf16.mxu0 %v5054
  %7226 = vmatpush1.bf16.msra.mxu0 %v5053
  %7227 = vmatprep.subr.bf16.mxu0 %v5062
  %7228 = vmatpush1.bf16.msra.mxu0 %v5061
  %7229 = vmatprep.subr.bf16.mxu0 %v5070
  %7230 = vmatpush1.bf16.msra.mxu0 %v5069
  %7231 = vmatprep.subr.bf16.mxu0 %v5078
  %7232 = vmatpush1.bf16.msra.mxu0 %v5077
  %7233 = vmatprep.subr.bf16.mxu0 %v5086
  %7234 = vmatpush1.bf16.msra.mxu0 %v5085
  %7235 = vmatprep.subr.bf16.mxu0 %v5094
  %7236 = vmatpush1.bf16.msra.mxu0 %v5093
  %7237 = vmatprep.subr.bf16.mxu0 %v5102
  %7238 = vmatpush1.bf16.msra.mxu0 %v5101
  %7239 = vmatprep.subr.bf16.mxu0 %v5110
  %7240 = vmatpush1.bf16.msra.mxu0 %v5109
  %7241 = vmatprep.subr.bf16.mxu0 %v5118
  %7242 = vmatpush1.bf16.msra.mxu0 %v5117
  %7243 = vmatprep.subr.bf16.mxu0 %v5126
  %7244 = vmatpush1.bf16.msra.mxu0 %v5125
  %7245 = vmatprep.subr.bf16.mxu0 %v5134
  %7246 = vmatpush1.bf16.msra.mxu0 %v5133
  %7247 = vmatprep.subr.bf16.mxu0 %v5142
  %7248 = vmatpush1.bf16.msra.mxu0 %v5141
  %7249 = vmatprep.subr.bf16.mxu0 %v5150
  %7250 = vmatpush1.bf16.msra.mxu0 %v5149
  %7251 = vmatprep.subr.bf16.mxu0 %v5158
  %7252 = vmatpush1.bf16.msra.mxu0 %v5157
  %7253 = vmatprep.subr.bf16.mxu0 %v5166
  %7254 = vmatpush1.bf16.msra.mxu0 %v5165
  %7255 = vmatprep.mubr.bf16.mxu0 %v132
  %7256 = vmatmul.mubr.bf16.gmra.mrb[0].mxu0 %v131
  %v7257 = vpop.f32.mrb[0].mxu0
  %v7258 = vadd.f32 %v7217, %v7257
  %v7259 = vpop.f32.mrb[0].mxu0
  %v7260 = vadd.f32 %v7219, %v7259
  %v7261 = vpop.f32.mrb[0].mxu0
  %v7262 = vpop.f32.mrb[0].mxu0
  %7263 = vdwg.mxu0
  %7264 = vmatprep.subr.bf16.mxu0 %v5174
  %7265 = vmatpush1.bf16.msra.mxu0 %v5173
  %7266 = vmatprep.subr.bf16.mxu0 %v5182
  %7267 = vmatpush1.bf16.msra.mxu0 %v5181
  %7268 = vmatprep.subr.bf16.mxu0 %v5190
  %7269 = vmatpush1.bf16.msra.mxu0 %v5189
  %7270 = vmatprep.subr.bf16.mxu0 %v5198
  %7271 = vmatpush1.bf16.msra.mxu0 %v5197
  %7272 = vmatprep.subr.bf16.mxu0 %v5206
  %7273 = vmatpush1.bf16.msra.mxu0 %v5205
  %7274 = vmatprep.subr.bf16.mxu0 %v5214
  %7275 = vmatpush1.bf16.msra.mxu0 %v5213
  %7276 = vmatprep.subr.bf16.mxu0 %v5222
  %7277 = vmatpush1.bf16.msra.mxu0 %v5221
  %7278 = vmatprep.subr.bf16.mxu0 %v5230
  %7279 = vmatpush1.bf16.msra.mxu0 %v5229
  %7280 = vmatprep.subr.bf16.mxu0 %v5238
  %7281 = vmatpush1.bf16.msra.mxu0 %v5237
  %7282 = vmatprep.subr.bf16.mxu0 %v5246
  %7283 = vmatpush1.bf16.msra.mxu0 %v5245
  %7284 = vmatprep.subr.bf16.mxu0 %v5254
  %7285 = vmatpush1.bf16.msra.mxu0 %v5253
  %7286 = vmatprep.subr.bf16.mxu0 %v5262
  %7287 = vmatpush1.bf16.msra.mxu0 %v5261
  %7288 = vmatprep.subr.bf16.mxu0 %v5270
  %7289 = vmatpush1.bf16.msra.mxu0 %v5269
  %7290 = vmatprep.subr.bf16.mxu0 %v5278
  %7291 = vmatpush1.bf16.msra.mxu0 %v5277
  %7292 = vmatprep.subr.bf16.mxu0 %v5286
  %7293 = vmatpush1.bf16.msra.mxu0 %v5285
  %7294 = vmatprep.subr.bf16.mxu0 %v5294
  %7295 = vmatpush1.bf16.msra.mxu0 %v5293
  %7296 = vmatprep.mubr.bf16.mxu0 %v134
  %7297 = vmatmul.mubr.bf16.gmra.mrb[0].mxu0 %v133
  %v7298 = vpop.f32.mrb[0].mxu0
  %v7299 = vadd.f32 %v7258, %v7298
  %v7300 = vpop.f32.mrb[0].mxu0
  %v7301 = vadd.f32 %v7260, %v7300
  %v7302 = vpop.f32.mrb[0].mxu0
  %v7303 = vpop.f32.mrb[0].mxu0
  %7304 = vdwg.mxu0
  %7305 = vmatprep.subr.bf16.mxu0 %v4280
  %7306 = vmatpush1.bf16.msra.mxu0 %v4279
  %7307 = vmatprep.subr.bf16.mxu0 %v4288
  %7308 = vmatpush1.bf16.msra.mxu0 %v4287
  %7309 = vmatprep.subr.bf16.mxu0 %v4296
  %7310 = vmatpush1.bf16.msra.mxu0 %v4295
  %7311 = vmatprep.subr.bf16.mxu0 %v4304
  %7312 = vmatpush1.bf16.msra.mxu0 %v4303
  %7313 = vmatprep.subr.bf16.mxu0 %v4312
  %7314 = vmatpush1.bf16.msra.mxu0 %v4311
  %7315 = vmatprep.subr.bf16.mxu0 %v4320
  %7316 = vmatpush1.bf16.msra.mxu0 %v4319
  %7317 = vmatprep.subr.bf16.mxu0 %v4328
  %7318 = vmatpush1.bf16.msra.mxu0 %v4327
  %7319 = vmatprep.subr.bf16.mxu0 %v4336
  %7320 = vmatpush1.bf16.msra.mxu0 %v4335
  %7321 = vmatprep.subr.bf16.mxu0 %v4344
  %7322 = vmatpush1.bf16.msra.mxu0 %v4343
  %7323 = vmatprep.subr.bf16.mxu0 %v4352
  %7324 = vmatpush1.bf16.msra.mxu0 %v4351
  %7325 = vmatprep.subr.bf16.mxu0 %v4360
  %7326 = vmatpush1.bf16.msra.mxu0 %v4359
  %7327 = vmatprep.subr.bf16.mxu0 %v4368
  %7328 = vmatpush1.bf16.msra.mxu0 %v4367
  %7329 = vmatprep.subr.bf16.mxu0 %v4376
  %7330 = vmatpush1.bf16.msra.mxu0 %v4375
  %7331 = vmatprep.subr.bf16.mxu0 %v4384
  %7332 = vmatpush1.bf16.msra.mxu0 %v4383
  %7333 = vmatprep.subr.bf16.mxu0 %v4392
  %7334 = vmatpush1.bf16.msra.mxu0 %v4391
  %7335 = vmatprep.subr.bf16.mxu0 %v4400
  %7336 = vmatpush1.bf16.msra.mxu0 %v4399
  %7337 = vmatprep.mubr.bf16.mxu0 %v120
  %7338 = vmatmul.mubr.bf16.gmra.mrb[0].mxu0 %v119
  %v7339 = vpop.f32.mrb[0].mxu0
  %v7340 = vadd.f32 %v1188, %v7339
  %v7341 = vpop.f32.mrb[0].mxu0
  %v7342 = vadd.f32 %v1192, %v7341
  %v7343 = vpop.f32.mrb[0].mxu0
  %v7344 = vpop.f32.mrb[0].mxu0
  %7345 = vdwg.mxu0
  %7346 = vmatprep.subr.bf16.mxu0 %v4408
  %7347 = vmatpush1.bf16.msra.mxu0 %v4407
  %7348 = vmatprep.subr.bf16.mxu0 %v4416
  %7349 = vmatpush1.bf16.msra.mxu0 %v4415
  %7350 = vmatprep.subr.bf16.mxu0 %v4424
  %7351 = vmatpush1.bf16.msra.mxu0 %v4423
  %7352 = vmatprep.subr.bf16.mxu0 %v4432
  %7353 = vmatpush1.bf16.msra.mxu0 %v4431
  %7354 = vmatprep.subr.bf16.mxu0 %v4440
  %7355 = vmatpush1.bf16.msra.mxu0 %v4439
  %7356 = vmatprep.subr.bf16.mxu0 %v4448
  %7357 = vmatpush1.bf16.msra.mxu0 %v4447
  %7358 = vmatprep.subr.bf16.mxu0 %v4456
  %7359 = vmatpush1.bf16.msra.mxu0 %v4455
  %7360 = vmatprep.subr.bf16.mxu0 %v4464
  %7361 = vmatpush1.bf16.msra.mxu0 %v4463
  %7362 = vmatprep.subr.bf16.mxu0 %v4472
  %7363 = vmatpush1.bf16.msra.mxu0 %v4471
  %7364 = vmatprep.subr.bf16.mxu0 %v4480
  %7365 = vmatpush1.bf16.msra.mxu0 %v4479
  %7366 = vmatprep.subr.bf16.mxu0 %v4488
  %7367 = vmatpush1.bf16.msra.mxu0 %v4487
  %7368 = vmatprep.subr.bf16.mxu0 %v4496
  %7369 = vmatpush1.bf16.msra.mxu0 %v4495
  %7370 = vmatprep.subr.bf16.mxu0 %v4504
  %7371 = vmatpush1.bf16.msra.mxu0 %v4503
  %7372 = vmatprep.subr.bf16.mxu0 %v4512
  %7373 = vmatpush1.bf16.msra.mxu0 %v4511
  %7374 = vmatprep.subr.bf16.mxu0 %v4520
  %7375 = vmatpush1.bf16.msra.mxu0 %v4519
  %7376 = vmatprep.subr.bf16.mxu0 %v4528
  %7377 = vmatpush1.bf16.msra.mxu0 %v4527
  %7378 = vmatprep.mubr.bf16.mxu0 %v122
  %7379 = vmatmul.mubr.bf16.gmra.mrb[0].mxu0 %v121
  %v7380 = vpop.f32.mrb[0].mxu0
  %v7381 = vadd.f32 %v7340, %v7380
  %v7382 = vpop.f32.mrb[0].mxu0
  %v7383 = vadd.f32 %v7342, %v7382
  %v7384 = vpop.f32.mrb[0].mxu0
  %v7385 = vpop.f32.mrb[0].mxu0
  %7386 = vdwg.mxu0
  %7387 = vmatprep.subr.bf16.mxu0 %v4536
  %7388 = vmatpush1.bf16.msra.mxu0 %v4535
  %7389 = vmatprep.subr.bf16.mxu0 %v4544
  %7390 = vmatpush1.bf16.msra.mxu0 %v4543
  %7391 = vmatprep.subr.bf16.mxu0 %v4552
  %7392 = vmatpush1.bf16.msra.mxu0 %v4551
  %7393 = vmatprep.subr.bf16.mxu0 %v4560
  %7394 = vmatpush1.bf16.msra.mxu0 %v4559
  %7395 = vmatprep.subr.bf16.mxu0 %v4568
  %7396 = vmatpush1.bf16.msra.mxu0 %v4567
  %7397 = vmatprep.subr.bf16.mxu0 %v4576
  %7398 = vmatpush1.bf16.msra.mxu0 %v4575
  %7399 = vmatprep.subr.bf16.mxu0 %v4584
  %7400 = vmatpush1.bf16.msra.mxu0 %v4583
  %7401 = vmatprep.subr.bf16.mxu0 %v4592
  %7402 = vmatpush1.bf16.msra.mxu0 %v4591
  %7403 = vmatprep.subr.bf16.mxu0 %v4600
  %7404 = vmatpush1.bf16.msra.mxu0 %v4599
  %7405 = vmatprep.subr.bf16.mxu0 %v4608
  %7406 = vmatpush1.bf16.msra.mxu0 %v4607
  %7407 = vmatprep.subr.bf16.mxu0 %v4616
  %7408 = vmatpush1.bf16.msra.mxu0 %v4615
  %7409 = vmatprep.subr.bf16.mxu0 %v4624
  %7410 = vmatpush1.bf16.msra.mxu0 %v4623
  %7411 = vmatprep.subr.bf16.mxu0 %v4632
  %7412 = vmatpush1.bf16.msra.mxu0 %v4631
  %7413 = vmatprep.subr.bf16.mxu0 %v4640
  %7414 = vmatpush1.bf16.msra.mxu0 %v4639
  %7415 = vmatprep.subr.bf16.mxu0 %v4648
  %7416 = vmatpush1.bf16.msra.mxu0 %v4647
  %7417 = vmatprep.subr.bf16.mxu0 %v4656
  %7418 = vmatpush1.bf16.msra.mxu0 %v4655
  %7419 = vmatprep.mubr.bf16.mxu0 %v124
  %7420 = vmatmul.mubr.bf16.gmra.mrb[0].mxu0 %v123
  %v7421 = vpop.f32.mrb[0].mxu0
  %v7422 = vadd.f32 %v7381, %v7421
  %v7423 = vpop.f32.mrb[0].mxu0
  %v7424 = vadd.f32 %v7383, %v7423
  %v7425 = vpop.f32.mrb[0].mxu0
  %v7426 = vpop.f32.mrb[0].mxu0
  %7427 = vdwg.mxu0
  %7428 = vmatprep.subr.bf16.mxu0 %v4664
  %7429 = vmatpush1.bf16.msra.mxu0 %v4663
  %7430 = vmatprep.subr.bf16.mxu0 %v4672
  %7431 = vmatpush1.bf16.msra.mxu0 %v4671
  %7432 = vmatprep.subr.bf16.mxu0 %v4680
  %7433 = vmatpush1.bf16.msra.mxu0 %v4679
  %7434 = vmatprep.subr.bf16.mxu0 %v4688
  %7435 = vmatpush1.bf16.msra.mxu0 %v4687
  %7436 = vmatprep.subr.bf16.mxu0 %v4696
  %7437 = vmatpush1.bf16.msra.mxu0 %v4695
  %7438 = vmatprep.subr.bf16.mxu0 %v4704
  %7439 = vmatpush1.bf16.msra.mxu0 %v4703
  %7440 = vmatprep.subr.bf16.mxu0 %v4712
  %7441 = vmatpush1.bf16.msra.mxu0 %v4711
  %7442 = vmatprep.subr.bf16.mxu0 %v4720
  %7443 = vmatpush1.bf16.msra.mxu0 %v4719
  %7444 = vmatprep.subr.bf16.mxu0 %v4728
  %7445 = vmatpush1.bf16.msra.mxu0 %v4727
  %7446 = vmatprep.subr.bf16.mxu0 %v4736
  %7447 = vmatpush1.bf16.msra.mxu0 %v4735
  %7448 = vmatprep.subr.bf16.mxu0 %v4744
  %7449 = vmatpush1.bf16.msra.mxu0 %v4743
  %7450 = vmatprep.subr.bf16.mxu0 %v4752
  %7451 = vmatpush1.bf16.msra.mxu0 %v4751
  %7452 = vmatprep.subr.bf16.mxu0 %v4760
  %7453 = vmatpush1.bf16.msra.mxu0 %v4759
  %7454 = vmatprep.subr.bf16.mxu0 %v4768
  %7455 = vmatpush1.bf16.msra.mxu0 %v4767
  %7456 = vmatprep.subr.bf16.mxu0 %v4776
  %7457 = vmatpush1.bf16.msra.mxu0 %v4775
  %7458 = vmatprep.subr.bf16.mxu0 %v4784
  %7459 = vmatpush1.bf16.msra.mxu0 %v4783
  %7460 = vmatprep.mubr.bf16.mxu0 %v126
  %7461 = vmatmul.mubr.bf16.gmra.mrb[0].mxu0 %v125
  %v7462 = vpop.f32.mrb[0].mxu0
  %v7463 = vadd.f32 %v7422, %v7462
  %v7464 = vpop.f32.mrb[0].mxu0
  %v7465 = vadd.f32 %v7424, %v7464
  %v7466 = vpop.f32.mrb[0].mxu0
  %v7467 = vpop.f32.mrb[0].mxu0
  %7468 = vdwg.mxu0
  %7469 = vmatprep.subr.bf16.mxu0 %v4792
  %7470 = vmatpush1.bf16.msra.mxu0 %v4791
  %7471 = vmatprep.subr.bf16.mxu0 %v4800
  %7472 = vmatpush1.bf16.msra.mxu0 %v4799
  %7473 = vmatprep.subr.bf16.mxu0 %v4808
  %7474 = vmatpush1.bf16.msra.mxu0 %v4807
  %7475 = vmatprep.subr.bf16.mxu0 %v4816
  %7476 = vmatpush1.bf16.msra.mxu0 %v4815
  %7477 = vmatprep.subr.bf16.mxu0 %v4824
  %7478 = vmatpush1.bf16.msra.mxu0 %v4823
  %7479 = vmatprep.subr.bf16.mxu0 %v4832
  %7480 = vmatpush1.bf16.msra.mxu0 %v4831
  %7481 = vmatprep.subr.bf16.mxu0 %v4840
  %7482 = vmatpush1.bf16.msra.mxu0 %v4839
  %7483 = vmatprep.subr.bf16.mxu0 %v4848
  %7484 = vmatpush1.bf16.msra.mxu0 %v4847
  %7485 = vmatprep.subr.bf16.mxu0 %v4856
  %7486 = vmatpush1.bf16.msra.mxu0 %v4855
  %7487 = vmatprep.subr.bf16.mxu0 %v4864
  %7488 = vmatpush1.bf16.msra.mxu0 %v4863
  %7489 = vmatprep.subr.bf16.mxu0 %v4872
  %7490 = vmatpush1.bf16.msra.mxu0 %v4871
  %7491 = vmatprep.subr.bf16.mxu0 %v4880
  %7492 = vmatpush1.bf16.msra.mxu0 %v4879
  %7493 = vmatprep.subr.bf16.mxu0 %v4888
  %7494 = vmatpush1.bf16.msra.mxu0 %v4887
  %7495 = vmatprep.subr.bf16.mxu0 %v4896
  %7496 = vmatpush1.bf16.msra.mxu0 %v4895
  %7497 = vmatprep.subr.bf16.mxu0 %v4904
  %7498 = vmatpush1.bf16.msra.mxu0 %v4903
  %7499 = vmatprep.subr.bf16.mxu0 %v4912
  %7500 = vmatpush1.bf16.msra.mxu0 %v4911
  %7501 = vmatprep.mubr.bf16.mxu0 %v128
  %7502 = vmatmul.mubr.bf16.gmra.mrb[0].mxu0 %v127
  %v7503 = vpop.f32.mrb[0].mxu0
  %v7504 = vadd.f32 %v7463, %v7503
  %v7505 = vpop.f32.mrb[0].mxu0
  %v7506 = vadd.f32 %v7465, %v7505
  %v7507 = vpop.f32.mrb[0].mxu0
  %v7508 = vpop.f32.mrb[0].mxu0
  %7509 = vdwg.mxu0
  %7510 = vmatprep.subr.bf16.mxu0 %v4920
  %7511 = vmatpush1.bf16.msra.mxu0 %v4919
  %7512 = vmatprep.subr.bf16.mxu0 %v4928
  %7513 = vmatpush1.bf16.msra.mxu0 %v4927
  %7514 = vmatprep.subr.bf16.mxu0 %v4936
  %7515 = vmatpush1.bf16.msra.mxu0 %v4935
  %7516 = vmatprep.subr.bf16.mxu0 %v4944
  %7517 = vmatpush1.bf16.msra.mxu0 %v4943
  %7518 = vmatprep.subr.bf16.mxu0 %v4952
  %7519 = vmatpush1.bf16.msra.mxu0 %v4951
  %7520 = vmatprep.subr.bf16.mxu0 %v4960
  %7521 = vmatpush1.bf16.msra.mxu0 %v4959
  %7522 = vmatprep.subr.bf16.mxu0 %v4968
  %7523 = vmatpush1.bf16.msra.mxu0 %v4967
  %7524 = vmatprep.subr.bf16.mxu0 %v4976
  %7525 = vmatpush1.bf16.msra.mxu0 %v4975
  %7526 = vmatprep.subr.bf16.mxu0 %v4984
  %7527 = vmatpush1.bf16.msra.mxu0 %v4983
  %7528 = vmatprep.subr.bf16.mxu0 %v4992
  %7529 = vmatpush1.bf16.msra.mxu0 %v4991
  %7530 = vmatprep.subr.bf16.mxu0 %v5000
  %7531 = vmatpush1.bf16.msra.mxu0 %v4999
  %7532 = vmatprep.subr.bf16.mxu0 %v5008
  %7533 = vmatpush1.bf16.msra.mxu0 %v5007
  %7534 = vmatprep.subr.bf16.mxu0 %v5016
  %7535 = vmatpush1.bf16.msra.mxu0 %v5015
  %7536 = vmatprep.subr.bf16.mxu0 %v5024
  %7537 = vmatpush1.bf16.msra.mxu0 %v5023
  %7538 = vmatprep.subr.bf16.mxu0 %v5032
  %7539 = vmatpush1.bf16.msra.mxu0 %v5031
  %7540 = vmatprep.subr.bf16.mxu0 %v5040
  %7541 = vmatpush1.bf16.msra.mxu0 %v5039
  %7542 = vmatprep.mubr.bf16.mxu0 %v130
  %7543 = vmatmul.mubr.bf16.gmra.mrb[0].mxu0 %v129
  %v7544 = vpop.f32.mrb[0].mxu0
  %v7545 = vadd.f32 %v7504, %v7544
  %v7546 = vpop.f32.mrb[0].mxu0
  %v7547 = vadd.f32 %v7506, %v7546
  %v7548 = vpop.f32.mrb[0].mxu0
  %v7549 = vpop.f32.mrb[0].mxu0
  %7550 = vdwg.mxu0
  %7551 = vmatprep.subr.bf16.mxu0 %v5048
  %7552 = vmatpush1.bf16.msra.mxu0 %v5047
  %7553 = vmatprep.subr.bf16.mxu0 %v5056
  %7554 = vmatpush1.bf16.msra.mxu0 %v5055
  %7555 = vmatprep.subr.bf16.mxu0 %v5064
  %7556 = vmatpush1.bf16.msra.mxu0 %v5063
  %7557 = vmatprep.subr.bf16.mxu0 %v5072
  %7558 = vmatpush1.bf16.msra.mxu0 %v5071
  %7559 = vmatprep.subr.bf16.mxu0 %v5080
  %7560 = vmatpush1.bf16.msra.mxu0 %v5079
  %7561 = vmatprep.subr.bf16.mxu0 %v5088
  %7562 = vmatpush1.bf16.msra.mxu0 %v5087
  %7563 = vmatprep.subr.bf16.mxu0 %v5096
  %7564 = vmatpush1.bf16.msra.mxu0 %v5095
  %7565 = vmatprep.subr.bf16.mxu0 %v5104
  %7566 = vmatpush1.bf16.msra.mxu0 %v5103
  %7567 = vmatprep.subr.bf16.mxu0 %v5112
  %7568 = vmatpush1.bf16.msra.mxu0 %v5111
  %7569 = vmatprep.subr.bf16.mxu0 %v5120
  %7570 = vmatpush1.bf16.msra.mxu0 %v5119
  %7571 = vmatprep.subr.bf16.mxu0 %v5128
  %7572 = vmatpush1.bf16.msra.mxu0 %v5127
  %7573 = vmatprep.subr.bf16.mxu0 %v5136
  %7574 = vmatpush1.bf16.msra.mxu0 %v5135
  %7575 = vmatprep.subr.bf16.mxu0 %v5144
  %7576 = vmatpush1.bf16.msra.mxu0 %v5143
  %7577 = vmatprep.subr.bf16.mxu0 %v5152
  %7578 = vmatpush1.bf16.msra.mxu0 %v5151
  %7579 = vmatprep.subr.bf16.mxu0 %v5160
  %7580 = vmatpush1.bf16.msra.mxu0 %v5159
  %7581 = vmatprep.subr.bf16.mxu0 %v5168
  %7582 = vmatpush1.bf16.msra.mxu0 %v5167
  %7583 = vmatprep.mubr.bf16.mxu0 %v132
  %7584 = vmatmul.mubr.bf16.gmra.mrb[0].mxu0 %v131
  %v7585 = vpop.f32.mrb[0].mxu0
  %v7586 = vadd.f32 %v7545, %v7585
  %v7587 = vpop.f32.mrb[0].mxu0
  %v7588 = vadd.f32 %v7547, %v7587
  %v7589 = vpop.f32.mrb[0].mxu0
  %v7590 = vpop.f32.mrb[0].mxu0
  %7591 = vdwg.mxu0
  %7592 = vmatprep.subr.bf16.mxu0 %v5176
  %7593 = vmatpush1.bf16.msra.mxu0 %v5175
  %7594 = vmatprep.subr.bf16.mxu0 %v5184
  %7595 = vmatpush1.bf16.msra.mxu0 %v5183
  %7596 = vmatprep.subr.bf16.mxu0 %v5192
  %7597 = vmatpush1.bf16.msra.mxu0 %v5191
  %7598 = vmatprep.subr.bf16.mxu0 %v5200
  %7599 = vmatpush1.bf16.msra.mxu0 %v5199
  %7600 = vmatprep.subr.bf16.mxu0 %v5208
  %7601 = vmatpush1.bf16.msra.mxu0 %v5207
  %7602 = vmatprep.subr.bf16.mxu0 %v5216
  %7603 = vmatpush1.bf16.msra.mxu0 %v5215
  %7604 = vmatprep.subr.bf16.mxu0 %v5224
  %7605 = vmatpush1.bf16.msra.mxu0 %v5223
  %7606 = vmatprep.subr.bf16.mxu0 %v5232
  %7607 = vmatpush1.bf16.msra.mxu0 %v5231
  %7608 = vmatprep.subr.bf16.mxu0 %v5240
  %7609 = vmatpush1.bf16.msra.mxu0 %v5239
  %7610 = vmatprep.subr.bf16.mxu0 %v5248
  %7611 = vmatpush1.bf16.msra.mxu0 %v5247
  %7612 = vmatprep.subr.bf16.mxu0 %v5256
  %7613 = vmatpush1.bf16.msra.mxu0 %v5255
  %7614 = vmatprep.subr.bf16.mxu0 %v5264
  %7615 = vmatpush1.bf16.msra.mxu0 %v5263
  %7616 = vmatprep.subr.bf16.mxu0 %v5272
  %7617 = vmatpush1.bf16.msra.mxu0 %v5271
  %7618 = vmatprep.subr.bf16.mxu0 %v5280
  %7619 = vmatpush1.bf16.msra.mxu0 %v5279
  %7620 = vmatprep.subr.bf16.mxu0 %v5288
  %7621 = vmatpush1.bf16.msra.mxu0 %v5287
  %7622 = vmatprep.subr.bf16.mxu0 %v5296
  %7623 = vmatpush1.bf16.msra.mxu0 %v5295
  %7624 = vmatprep.mubr.bf16.mxu0 %v134
  %7625 = vmatmul.mubr.bf16.gmra.mrb[0].mxu0 %v133
  %v7626 = vpop.f32.mrb[0].mxu0
  %v7627 = vadd.f32 %v7586, %v7626
  %v7628 = vpop.f32.mrb[0].mxu0
  %v7629 = vadd.f32 %v7588, %v7628
  %v7630 = vpop.f32.mrb[0].mxu0
  %v7631 = vpop.f32.mrb[0].mxu0
  %7632 = vdwg.mxu0
  %vm7633 = vcmask 1041408
  %v7634 = vsel %vm7633, %v6643, 0.0
  %v7635 = vrot.slane %v7634, 4
  %v7636 = vadd.f32 %v7634, %v7635
  %v7637 = vrot.slane %v7636, 2
  %v7638 = vadd.f32 %v7636, %v7637
  %v7639 = vrot.slane %v7638, 1
  %v7640 = vadd.f32 %v7638, %v7639
  %v7641 = vsel %vm7633, %v6645, 0.0
  %v7642 = vrot.slane %v7641, 4
  %v7643 = vadd.f32 %v7641, %v7642
  %v7644 = vrot.slane %v7643, 2
  %v7645 = vadd.f32 %v7643, %v7644
  %v7646 = vrot.slane %v7645, 1
  %v7647 = vadd.f32 %v7645, %v7646
  %v7648 = vsel %vm7633, %v6971, 0.0
  %v7649 = vrot.slane %v7648, 4
  %v7650 = vadd.f32 %v7648, %v7649
  %v7651 = vrot.slane %v7650, 2
  %v7652 = vadd.f32 %v7650, %v7651
  %v7653 = vrot.slane %v7652, 1
  %v7654 = vadd.f32 %v7652, %v7653
  %v7655 = vsel %vm7633, %v6973, 0.0
  %v7656 = vrot.slane %v7655, 4
  %v7657 = vadd.f32 %v7655, %v7656
  %v7658 = vrot.slane %v7657, 2
  %v7659 = vadd.f32 %v7657, %v7658
  %v7660 = vrot.slane %v7659, 1
  %v7661 = vadd.f32 %v7659, %v7660
  %v7662 = vsel %vm7633, %v7299, 0.0
  %v7663 = vrot.slane %v7662, 4
  %v7664 = vadd.f32 %v7662, %v7663
  %v7665 = vrot.slane %v7664, 2
  %v7666 = vadd.f32 %v7664, %v7665
  %v7667 = vrot.slane %v7666, 1
  %v7668 = vadd.f32 %v7666, %v7667
  %v7669 = vsel %vm7633, %v7301, 0.0
  %v7670 = vrot.slane %v7669, 4
  %v7671 = vadd.f32 %v7669, %v7670
  %v7672 = vrot.slane %v7671, 2
  %v7673 = vadd.f32 %v7671, %v7672
  %v7674 = vrot.slane %v7673, 1
  %v7675 = vadd.f32 %v7673, %v7674
  %v7676 = vsel %vm7633, %v7627, 0.0
  %v7677 = vrot.slane %v7676, 4
  %v7678 = vadd.f32 %v7676, %v7677
  %v7679 = vrot.slane %v7678, 2
  %v7680 = vadd.f32 %v7678, %v7679
  %v7681 = vrot.slane %v7680, 1
  %v7682 = vadd.f32 %v7680, %v7681
  %v7683 = vsel %vm7633, %v7629, 0.0
  %v7684 = vrot.slane %v7683, 4
  %v7685 = vadd.f32 %v7683, %v7684
  %v7686 = vrot.slane %v7685, 2
  %v7687 = vadd.f32 %v7685, %v7686
  %v7688 = vrot.slane %v7687, 1
  %v7689 = vadd.f32 %v7687, %v7688
  %v7690 = vrcp.pop 2.0
  %v7691 = vmul.f32 %v7640, %v7690
  %v7692 = vmul.f32 %v7647, %v7690
  %v7693 = vmul.f32 %v7654, %v7690
  %v7694 = vmul.f32 %v7661, %v7690
  %v7695 = vmul.f32 %v7668, %v7690
  %v7696 = vmul.f32 %v7675, %v7690
  %v7697 = vmul.f32 %v7682, %v7690
  %v7698 = vmul.f32 %v7689, %v7690
  %v7699 = vsub.f32 %v6643, %v7691
  %v7700 = vsub.f32 %v6645, %v7692
  %v7701 = vsub.f32 %v6971, %v7693
  %v7702 = vsub.f32 %v6973, %v7694
  %v7703 = vsub.f32 %v7299, %v7695
  %v7704 = vsub.f32 %v7301, %v7696
  %v7705 = vsub.f32 %v7627, %v7697
  %v7706 = vsub.f32 %v7629, %v7698
  %v7707 = vmul.f32 %v7699, %v7699
  %v7708 = vmul.f32 %v7700, %v7700
  %v7709 = vmul.f32 %v7701, %v7701
  %v7710 = vmul.f32 %v7702, %v7702
  %v7711 = vmul.f32 %v7703, %v7703
  %v7712 = vmul.f32 %v7704, %v7704
  %v7713 = vmul.f32 %v7705, %v7705
  %v7714 = vmul.f32 %v7706, %v7706
  %v7715 = vsel %vm7633, %v7707, 0.0
  %v7716 = vrot.slane %v7715, 4
  %v7717 = vadd.f32 %v7715, %v7716
  %v7718 = vrot.slane %v7717, 2
  %v7719 = vadd.f32 %v7717, %v7718
  %v7720 = vrot.slane %v7719, 1
  %v7721 = vadd.f32 %v7719, %v7720
  %v7722 = vsel %vm7633, %v7708, 0.0
  %v7723 = vrot.slane %v7722, 4
  %v7724 = vadd.f32 %v7722, %v7723
  %v7725 = vrot.slane %v7724, 2
  %v7726 = vadd.f32 %v7724, %v7725
  %v7727 = vrot.slane %v7726, 1
  %v7728 = vadd.f32 %v7726, %v7727
  %v7729 = vsel %vm7633, %v7709, 0.0
  %v7730 = vrot.slane %v7729, 4
  %v7731 = vadd.f32 %v7729, %v7730
  %v7732 = vrot.slane %v7731, 2
  %v7733 = vadd.f32 %v7731, %v7732
  %v7734 = vrot.slane %v7733, 1
  %v7735 = vadd.f32 %v7733, %v7734
  %v7736 = vsel %vm7633, %v7710, 0.0
  %v7737 = vrot.slane %v7736, 4
  %v7738 = vadd.f32 %v7736, %v7737
  %v7739 = vrot.slane %v7738, 2
  %v7740 = vadd.f32 %v7738, %v7739
  %v7741 = vrot.slane %v7740, 1
  %v7742 = vadd.f32 %v7740, %v7741
  %v7743 = vsel %vm7633, %v7711, 0.0
  %v7744 = vrot.slane %v7743, 4
  %v7745 = vadd.f32 %v7743, %v7744
  %v7746 = vrot.slane %v7745, 2
  %v7747 = vadd.f32 %v7745, %v7746
  %v7748 = vrot.slane %v7747, 1
  %v7749 = vadd.f32 %v7747, %v7748
  %v7750 = vsel %vm7633, %v7712, 0.0
  %v7751 = vrot.slane %v7750, 4
  %v7752 = vadd.f32 %v7750, %v7751
  %v7753 = vrot.slane %v7752, 2
  %v7754 = vadd.f32 %v7752, %v7753
  %v7755 = vrot.slane %v7754, 1
  %v7756 = vadd.f32 %v7754, %v7755
  %v7757 = vsel %vm7633, %v7713, 0.0
  %v7758 = vrot.slane %v7757, 4
  %v7759 = vadd.f32 %v7757, %v7758
  %v7760 = vrot.slane %v7759, 2
  %v7761 = vadd.f32 %v7759, %v7760
  %v7762 = vrot.slane %v7761, 1
  %v7763 = vadd.f32 %v7761, %v7762
  %v7764 = vsel %vm7633, %v7714, 0.0
  %v7765 = vrot.slane %v7764, 4
  %v7766 = vadd.f32 %v7764, %v7765
  %v7767 = vrot.slane %v7766, 2
  %v7768 = vadd.f32 %v7766, %v7767
  %v7769 = vrot.slane %v7768, 1
  %v7770 = vadd.f32 %v7768, %v7769
  %v7771 = vmul.f32 %v7721, %v7690
  %v7772 = vmul.f32 %v7728, %v7690
  %v7773 = vmul.f32 %v7735, %v7690
  %v7774 = vmul.f32 %v7742, %v7690
  %v7775 = vmul.f32 %v7749, %v7690
  %v7776 = vmul.f32 %v7756, %v7690
  %v7777 = vmul.f32 %v7763, %v7690
  %v7778 = vmul.f32 %v7770, %v7690
  %v7779 = vld [vmem:[%s3] sm:$0xff]
  %v7781 = vlaneseq
  %v7782 = vshrl.u32 %v7781, 7
  %v7783 = vsub.s32 0, %v7782
  %v7784 = vrot.slane %v7779, %v7783
  %v7785 = vlaneseq
  %v7786 = vshrl.u32 %v7785, 7
  %v7787 = vsub.s32 1, %v7786
  %v7788 = vrot.slane %v7779, %v7787
  %v7789 = vlaneseq
  %v7790 = vshrl.u32 %v7789, 7
  %v7791 = vsub.s32 2, %v7790
  %v7792 = vrot.slane %v7779, %v7791
  %v7793 = vlaneseq
  %v7794 = vshrl.u32 %v7793, 7
  %v7795 = vsub.s32 3, %v7794
  %v7796 = vrot.slane %v7779, %v7795
  %v7797 = vlaneseq
  %v7798 = vshrl.u32 %v7797, 7
  %v7799 = vsub.s32 4, %v7798
  %v7800 = vrot.slane %v7779, %v7799
  %v7801 = vlaneseq
  %v7802 = vshrl.u32 %v7801, 7
  %v7803 = vsub.s32 5, %v7802
  %v7804 = vrot.slane %v7779, %v7803
  %v7805 = vlaneseq
  %v7806 = vshrl.u32 %v7805, 7
  %v7807 = vsub.s32 6, %v7806
  %v7808 = vrot.slane %v7779, %v7807
  %v7809 = vlaneseq
  %v7810 = vshrl.u32 %v7809, 7
  %v7811 = vsub.s32 7, %v7810
  %v7812 = vrot.slane %v7779, %v7811
  %v7821 = vmul.f32 %v7784, %v7699
  %v7822 = vmul.f32 %v7788, %v7700
  %v7823 = vmul.f32 %v7792, %v7701
  %v7824 = vmul.f32 %v7796, %v7702
  %v7825 = vmul.f32 %v7800, %v7703
  %v7826 = vmul.f32 %v7804, %v7704
  %v7827 = vmul.f32 %v7808, %v7705
  %v7828 = vmul.f32 %v7812, %v7706
  %v7829 = vadd.f32 %v7771, 1e-05
  %v7830 = vadd.f32 %v7772, 1e-05
  %v7831 = vadd.f32 %v7773, 1e-05
  %v7832 = vadd.f32 %v7774, 1e-05
  %v7833 = vadd.f32 %v7775, 1e-05
  %v7834 = vadd.f32 %v7776, 1e-05
  %v7835 = vadd.f32 %v7777, 1e-05
  %v7836 = vadd.f32 %v7778, 1e-05
  %v7837 = vrsqrt.pop %v7829
  %v7838 = vrsqrt.pop %v7830
  %v7839 = vrsqrt.pop %v7831
  %v7840 = vrsqrt.pop %v7832
  %v7841 = vrsqrt.pop %v7833
  %v7842 = vrsqrt.pop %v7834
  %v7843 = vrsqrt.pop %v7835
  %v7844 = vrsqrt.pop %v7836
  %v7845 = vmul.f32 %v7821, %v7837
  %v7846 = vmul.f32 %v7822, %v7838
  %v7847 = vmul.f32 %v7823, %v7839
  %v7848 = vmul.f32 %v7824, %v7840
  %v7849 = vmul.f32 %v7825, %v7841
  %v7850 = vmul.f32 %v7826, %v7842
  %v7851 = vmul.f32 %v7827, %v7843
  %v7852 = vmul.f32 %v7828, %v7844
  %v7853 = vld [vmem:[%s4] sm:$0xff]
  %v7855 = vlaneseq
  %v7856 = vshrl.u32 %v7855, 7
  %v7857 = vsub.s32 0, %v7856
  %v7858 = vrot.slane %v7853, %v7857
  %v7859 = vlaneseq
  %v7860 = vshrl.u32 %v7859, 7
  %v7861 = vsub.s32 1, %v7860
  %v7862 = vrot.slane %v7853, %v7861
  %v7863 = vlaneseq
  %v7864 = vshrl.u32 %v7863, 7
  %v7865 = vsub.s32 2, %v7864
  %v7866 = vrot.slane %v7853, %v7865
  %v7867 = vlaneseq
  %v7868 = vshrl.u32 %v7867, 7
  %v7869 = vsub.s32 3, %v7868
  %v7870 = vrot.slane %v7853, %v7869
  %v7871 = vlaneseq
  %v7872 = vshrl.u32 %v7871, 7
  %v7873 = vsub.s32 4, %v7872
  %v7874 = vrot.slane %v7853, %v7873
  %v7875 = vlaneseq
  %v7876 = vshrl.u32 %v7875, 7
  %v7877 = vsub.s32 5, %v7876
  %v7878 = vrot.slane %v7853, %v7877
  %v7879 = vlaneseq
  %v7880 = vshrl.u32 %v7879, 7
  %v7881 = vsub.s32 6, %v7880
  %v7882 = vrot.slane %v7853, %v7881
  %v7883 = vlaneseq
  %v7884 = vshrl.u32 %v7883, 7
  %v7885 = vsub.s32 7, %v7884
  %v7886 = vrot.slane %v7853, %v7885
  %v7895 = vadd.f32 %v7845, %v7858
  %v7896 = vadd.f32 %v7846, %v7862
  %v7897 = vadd.f32 %v7847, %v7866
  %v7898 = vadd.f32 %v7848, %v7870
  %v7899 = vadd.f32 %v7849, %v7874
  %v7900 = vadd.f32 %v7850, %v7878
  %v7901 = vadd.f32 %v7851, %v7882
  %v7902 = vadd.f32 %v7852, %v7886
  %vm7903 = vcmp.gt.f32.partialorder %v7895, 0.0
  %vm7904 = vcmp.gt.f32.partialorder %v7896, 0.0
  %vm7905 = vcmp.gt.f32.partialorder %v7897, 0.0
  %vm7906 = vcmp.gt.f32.partialorder %v7898, 0.0
  %vm7907 = vcmp.gt.f32.partialorder %v7899, 0.0
  %vm7908 = vcmp.gt.f32.partialorder %v7900, 0.0
  %vm7909 = vcmp.gt.f32.partialorder %v7901, 0.0
  %vm7910 = vcmp.gt.f32.partialorder %v7902, 0.0
  %v7911 = vmul.f32 %v7895, 0.2
  %v7912 = vmul.f32 %v7896, 0.2
  %v7913 = vmul.f32 %v7897, 0.2
  %v7914 = vmul.f32 %v7898, 0.2
  %v7915 = vmul.f32 %v7899, 0.2
  %v7916 = vmul.f32 %v7900, 0.2
  %v7917 = vmul.f32 %v7901, 0.2
  %v7918 = vmul.f32 %v7902, 0.2
  %v7919 = vsel %vm7903, %v7895, %v7911
  %v7920 = vsel %vm7904, %v7896, %v7912
  %v7921 = vsel %vm7905, %v7897, %v7913
  %v7922 = vsel %vm7906, %v7898, %v7914
  %v7923 = vsel %vm7907, %v7899, %v7915
  %v7924 = vsel %vm7908, %v7900, %v7916
  %v7925 = vsel %vm7909, %v7901, %v7917
  %v7926 = vsel %vm7910, %v7902, %v7918
  %v7927 = vpack.c.bf16 %v7919, %v7919
  %v7928 = vpack.c.bf16 %v7920, %v7920
  %v7929 = vpack.c.bf16 %v7921, %v7921
  %v7930 = vpack.c.bf16 %v7922, %v7922
  %v7931 = vpack.c.bf16 %v7923, %v7923
  %v7932 = vpack.c.bf16 %v7924, %v7924
  %v7933 = vpack.c.bf16 %v7925, %v7925
  %v7934 = vpack.c.bf16 %v7926, %v7926
  %v7935 = vld [vmem:[%s5] sm:$0xf]
  %v7936 = vld [vmem:[%s5 + $0x4] sm:$0xf]
  %v7937 = vld [vmem:[%s5 + $0x8] sm:$0xf]
  %v7938 = vld [vmem:[%s5 + $0xc] sm:$0xf]
  %v7939 = vld [vmem:[%s5 + $0x10] sm:$0xf]
  %v7940 = vld [vmem:[%s5 + $0x14] sm:$0xf]
  %v7941 = vld [vmem:[%s5 + $0x18] sm:$0xf]
  %v7942 = vld [vmem:[%s5 + $0x1c] sm:$0xf]
  %v7943 = vld [vmem:[%s5 + $0x20] sm:$0xf]
  %v7944 = vld [vmem:[%s5 + $0x24] sm:$0xf]
  %v7945 = vld [vmem:[%s5 + $0x28] sm:$0xf]
  %v7946 = vld [vmem:[%s5 + $0x2c] sm:$0xf]
  %v7947 = vld [vmem:[%s5 + $0x30] sm:$0xf]
  %v7948 = vld [vmem:[%s5 + $0x34] sm:$0xf]
  %v7949 = vld [vmem:[%s5 + $0x38] sm:$0xf]
  %v7950 = vld [vmem:[%s5 + $0x3c] sm:$0xf]
  %v7951 = vld [vmem:[%s5 + $0x40] sm:$0xf]
  %v7952 = vld [vmem:[%s5 + $0x44] sm:$0xf]
  %v7953 = vld [vmem:[%s5 + $0x48] sm:$0xf]
  %v7954 = vld [vmem:[%s5 + $0x4c] sm:$0xf]
  %v7955 = vld [vmem:[%s5 + $0x50] sm:$0xf]
  %v7956 = vld [vmem:[%s5 + $0x54] sm:$0xf]
  %v7957 = vld [vmem:[%s5 + $0x58] sm:$0xf]
  %v7958 = vld [vmem:[%s5 + $0x5c] sm:$0xf]
  %v7959 = vld [vmem:[%s5 + $0x60] sm:$0xf]
  %v7960 = vld [vmem:[%s5 + $0x64] sm:$0xf]
  %v7961 = vld [vmem:[%s5 + $0x68] sm:$0xf]
  %v7962 = vld [vmem:[%s5 + $0x6c] sm:$0xf]
  %v7963 = vld [vmem:[%s5 + $0x70] sm:$0xf]
  %v7964 = vld [vmem:[%s5 + $0x74] sm:$0xf]
  %v7965 = vld [vmem:[%s5 + $0x78] sm:$0xf]
  %v7966 = vld [vmem:[%s5 + $0x7c] sm:$0xf]
  %v7967 = vld [vmem:[%s5 + $0x80] sm:$0xf]
  %v7968 = vld [vmem:[%s5 + $0x84] sm:$0xf]
  %v7969 = vld [vmem:[%s5 + $0x88] sm:$0xf]
  %v7970 = vld [vmem:[%s5 + $0x8c] sm:$0xf]
  %v7971 = vld [vmem:[%s5 + $0x90] sm:$0xf]
  %v7972 = vld [vmem:[%s5 + $0x94] sm:$0xf]
  %v7973 = vld [vmem:[%s5 + $0x98] sm:$0xf]
  %v7974 = vld [vmem:[%s5 + $0x9c] sm:$0xf]
  %v7975 = vld [vmem:[%s5 + $0xa0] sm:$0xf]
  %v7976 = vld [vmem:[%s5 + $0xa4] sm:$0xf]
  %v7977 = vld [vmem:[%s5 + $0xa8] sm:$0xf]
  %v7978 = vld [vmem:[%s5 + $0xac] sm:$0xf]
  %v7979 = vld [vmem:[%s5 + $0xb0] sm:$0xf]
  %v7980 = vld [vmem:[%s5 + $0xb4] sm:$0xf]
  %v7981 = vld [vmem:[%s5 + $0xb8] sm:$0xf]
  %v7982 = vld [vmem:[%s5 + $0xbc] sm:$0xf]
  %v7983 = vld [vmem:[%s5 + $0xc0] sm:$0xf]
  %v7984 = vld [vmem:[%s5 + $0xc4] sm:$0xf]
  %v7985 = vld [vmem:[%s5 + $0xc8] sm:$0xf]
  %v7986 = vld [vmem:[%s5 + $0xcc] sm:$0xf]
  %v7987 = vld [vmem:[%s5 + $0xd0] sm:$0xf]
  %v7988 = vld [vmem:[%s5 + $0xd4] sm:$0xf]
  %v7989 = vld [vmem:[%s5 + $0xd8] sm:$0xf]
  %v7990 = vld [vmem:[%s5 + $0xdc] sm:$0xf]
  %v7991 = vld [vmem:[%s5 + $0xe0] sm:$0xf]
  %v7992 = vld [vmem:[%s5 + $0xe4] sm:$0xf]
  %v7993 = vld [vmem:[%s5 + $0xe8] sm:$0xf]
  %v7994 = vld [vmem:[%s5 + $0xec] sm:$0xf]
  %v7995 = vld [vmem:[%s5 + $0xf0] sm:$0xf]
  %v7996 = vld [vmem:[%s5 + $0xf4] sm:$0xf]
  %v7997 = vld [vmem:[%s5 + $0xf8] sm:$0xf]
  %v7998 = vld [vmem:[%s5 + $0xfc] sm:$0xf]
  %v7999 = vld [vmem:[%s5 + $0x100] sm:$0xf]
  %v8000 = vld [vmem:[%s5 + $0x104] sm:$0xf]
  %v8001 = vld [vmem:[%s5 + $0x108] sm:$0xf]
  %v8002 = vld [vmem:[%s5 + $0x10c] sm:$0xf]
  %v8003 = vld [vmem:[%s5 + $0x110] sm:$0xf]
  %v8004 = vld [vmem:[%s5 + $0x114] sm:$0xf]
  %v8005 = vld [vmem:[%s5 + $0x118] sm:$0xf]
  %v8006 = vld [vmem:[%s5 + $0x11c] sm:$0xf]
  %v8007 = vld [vmem:[%s5 + $0x120] sm:$0xf]
  %v8008 = vld [vmem:[%s5 + $0x124] sm:$0xf]
  %v8009 = vld [vmem:[%s5 + $0x128] sm:$0xf]
  %v8010 = vld [vmem:[%s5 + $0x12c] sm:$0xf]
  %v8011 = vld [vmem:[%s5 + $0x130] sm:$0xf]
  %v8012 = vld [vmem:[%s5 + $0x134] sm:$0xf]
  %v8013 = vld [vmem:[%s5 + $0x138] sm:$0xf]
  %v8014 = vld [vmem:[%s5 + $0x13c] sm:$0xf]
  %v8015 = vld [vmem:[%s5 + $0x140] sm:$0xf]
  %v8016 = vld [vmem:[%s5 + $0x144] sm:$0xf]
  %v8017 = vld [vmem:[%s5 + $0x148] sm:$0xf]
  %v8018 = vld [vmem:[%s5 + $0x14c] sm:$0xf]
  %v8019 = vld [vmem:[%s5 + $0x150] sm:$0xf]
  %v8020 = vld [vmem:[%s5 + $0x154] sm:$0xf]
  %v8021 = vld [vmem:[%s5 + $0x158] sm:$0xf]
  %v8022 = vld [vmem:[%s5 + $0x15c] sm:$0xf]
  %v8023 = vld [vmem:[%s5 + $0x160] sm:$0xf]
  %v8024 = vld [vmem:[%s5 + $0x164] sm:$0xf]
  %v8025 = vld [vmem:[%s5 + $0x168] sm:$0xf]
  %v8026 = vld [vmem:[%s5 + $0x16c] sm:$0xf]
  %v8027 = vld [vmem:[%s5 + $0x170] sm:$0xf]
  %v8028 = vld [vmem:[%s5 + $0x174] sm:$0xf]
  %v8029 = vld [vmem:[%s5 + $0x178] sm:$0xf]
  %v8030 = vld [vmem:[%s5 + $0x17c] sm:$0xf]
  %v8031 = vld [vmem:[%s5 + $0x180] sm:$0xf]
  %v8032 = vld [vmem:[%s5 + $0x184] sm:$0xf]
  %v8033 = vld [vmem:[%s5 + $0x188] sm:$0xf]
  %v8034 = vld [vmem:[%s5 + $0x18c] sm:$0xf]
  %v8035 = vld [vmem:[%s5 + $0x190] sm:$0xf]
  %v8036 = vld [vmem:[%s5 + $0x194] sm:$0xf]
  %v8037 = vld [vmem:[%s5 + $0x198] sm:$0xf]
  %v8038 = vld [vmem:[%s5 + $0x19c] sm:$0xf]
  %v8039 = vld [vmem:[%s5 + $0x1a0] sm:$0xf]
  %v8040 = vld [vmem:[%s5 + $0x1a4] sm:$0xf]
  %v8041 = vld [vmem:[%s5 + $0x1a8] sm:$0xf]
  %v8042 = vld [vmem:[%s5 + $0x1ac] sm:$0xf]
  %v8043 = vld [vmem:[%s5 + $0x1b0] sm:$0xf]
  %v8044 = vld [vmem:[%s5 + $0x1b4] sm:$0xf]
  %v8045 = vld [vmem:[%s5 + $0x1b8] sm:$0xf]
  %v8046 = vld [vmem:[%s5 + $0x1bc] sm:$0xf]
  %v8047 = vld [vmem:[%s5 + $0x1c0] sm:$0xf]
  %v8048 = vld [vmem:[%s5 + $0x1c4] sm:$0xf]
  %v8049 = vld [vmem:[%s5 + $0x1c8] sm:$0xf]
  %v8050 = vld [vmem:[%s5 + $0x1cc] sm:$0xf]
  %v8051 = vld [vmem:[%s5 + $0x1d0] sm:$0xf]
  %v8052 = vld [vmem:[%s5 + $0x1d4] sm:$0xf]
  %v8053 = vld [vmem:[%s5 + $0x1d8] sm:$0xf]
  %v8054 = vld [vmem:[%s5 + $0x1dc] sm:$0xf]
  %v8055 = vld [vmem:[%s5 + $0x1e0] sm:$0xf]
  %v8056 = vld [vmem:[%s5 + $0x1e4] sm:$0xf]
  %v8057 = vld [vmem:[%s5 + $0x1e8] sm:$0xf]
  %v8058 = vld [vmem:[%s5 + $0x1ec] sm:$0xf]
  %v8059 = vld [vmem:[%s5 + $0x1f0] sm:$0xf]
  %v8060 = vld [vmem:[%s5 + $0x1f4] sm:$0xf]
  %v8061 = vld [vmem:[%s5 + $0x1f8] sm:$0xf]
  %v8062 = vld [vmem:[%s5 + $0x1fc] sm:$0xf]
  %v8063 = vld [vmem:[%s6] sm:$0x1]
  %v8065 = vlaneseq
  %v8066 = vshrl.u32 %v8065, 7
  %v8067 = vsub.s32 0, %v8066
  %v8068 = vrot.slane %v8063, %v8067
  %v8198 = vunpack.c.l.b16 %v7935
  %v8199 = vunpack.c.l.b16 %v7936
  %v8200 = vunpack.c.l.b16 %v7937
  %v8201 = vunpack.c.l.b16 %v7938
  %v8202 = vunpack.c.l.b16 %v7939
  %v8203 = vunpack.c.l.b16 %v7940
  %v8204 = vunpack.c.l.b16 %v7941
  %v8205 = vunpack.c.l.b16 %v7942
  %v8206 = vunpack.c.l.b16 %v7943
  %v8207 = vunpack.c.l.b16 %v7944
  %v8208 = vunpack.c.l.b16 %v7945
  %v8209 = vunpack.c.l.b16 %v7946
  %v8210 = vunpack.c.l.b16 %v7947
  %v8211 = vunpack.c.l.b16 %v7948
  %v8212 = vunpack.c.l.b16 %v7949
  %v8213 = vunpack.c.l.b16 %v7950
  %v8214 = vunpack.c.l.b16 %v7951
  %v8215 = vunpack.c.l.b16 %v7952
  %v8216 = vunpack.c.l.b16 %v7953
  %v8217 = vunpack.c.l.b16 %v7954
  %v8218 = vunpack.c.l.b16 %v7955
  %v8219 = vunpack.c.l.b16 %v7956
  %v8220 = vunpack.c.l.b16 %v7957
  %v8221 = vunpack.c.l.b16 %v7958
  %v8222 = vunpack.c.l.b16 %v7959
  %v8223 = vunpack.c.l.b16 %v7960
  %v8224 = vunpack.c.l.b16 %v7961
  %v8225 = vunpack.c.l.b16 %v7962
  %v8226 = vunpack.c.l.b16 %v7963
  %v8227 = vunpack.c.l.b16 %v7964
  %v8228 = vunpack.c.l.b16 %v7965
  %v8229 = vunpack.c.l.b16 %v7966
  %v8230 = vunpack.c.l.b16 %v7967
  %v8231 = vunpack.c.l.b16 %v7968
  %v8232 = vunpack.c.l.b16 %v7969
  %v8233 = vunpack.c.l.b16 %v7970
  %v8234 = vunpack.c.l.b16 %v7971
  %v8235 = vunpack.c.l.b16 %v7972
  %v8236 = vunpack.c.l.b16 %v7973
  %v8237 = vunpack.c.l.b16 %v7974
  %v8238 = vunpack.c.l.b16 %v7975
  %v8239 = vunpack.c.l.b16 %v7976
  %v8240 = vunpack.c.l.b16 %v7977
  %v8241 = vunpack.c.l.b16 %v7978
  %v8242 = vunpack.c.l.b16 %v7979
  %v8243 = vunpack.c.l.b16 %v7980
  %v8244 = vunpack.c.l.b16 %v7981
  %v8245 = vunpack.c.l.b16 %v7982
  %v8246 = vunpack.c.l.b16 %v7983
  %v8247 = vunpack.c.l.b16 %v7984
  %v8248 = vunpack.c.l.b16 %v7985
  %v8249 = vunpack.c.l.b16 %v7986
  %v8250 = vunpack.c.l.b16 %v7987
  %v8251 = vunpack.c.l.b16 %v7988
  %v8252 = vunpack.c.l.b16 %v7989
  %v8253 = vunpack.c.l.b16 %v7990
  %v8254 = vunpack.c.l.b16 %v7991
  %v8255 = vunpack.c.l.b16 %v7992
  %v8256 = vunpack.c.l.b16 %v7993
  %v8257 = vunpack.c.l.b16 %v7994
  %v8258 = vunpack.c.l.b16 %v7995
  %v8259 = vunpack.c.l.b16 %v7996
  %v8260 = vunpack.c.l.b16 %v7997
  %v8261 = vunpack.c.l.b16 %v7998
  %v8262 = vunpack.c.l.b16 %v7999
  %v8263 = vunpack.c.l.b16 %v8000
  %v8264 = vunpack.c.l.b16 %v8001
  %v8265 = vunpack.c.l.b16 %v8002
  %v8266 = vunpack.c.l.b16 %v8003
  %v8267 = vunpack.c.l.b16 %v8004
  %v8268 = vunpack.c.l.b16 %v8005
  %v8269 = vunpack.c.l.b16 %v8006
  %v8270 = vunpack.c.l.b16 %v8007
  %v8271 = vunpack.c.l.b16 %v8008
  %v8272 = vunpack.c.l.b16 %v8009
  %v8273 = vunpack.c.l.b16 %v8010
  %v8274 = vunpack.c.l.b16 %v8011
  %v8275 = vunpack.c.l.b16 %v8012
  %v8276 = vunpack.c.l.b16 %v8013
  %v8277 = vunpack.c.l.b16 %v8014
  %v8278 = vunpack.c.l.b16 %v8015
  %v8279 = vunpack.c.l.b16 %v8016
  %v8280 = vunpack.c.l.b16 %v8017
  %v8281 = vunpack.c.l.b16 %v8018
  %v8282 = vunpack.c.l.b16 %v8019
  %v8283 = vunpack.c.l.b16 %v8020
  %v8284 = vunpack.c.l.b16 %v8021
  %v8285 = vunpack.c.l.b16 %v8022
  %v8286 = vunpack.c.l.b16 %v8023
  %v8287 = vunpack.c.l.b16 %v8024
  %v8288 = vunpack.c.l.b16 %v8025
  %v8289 = vunpack.c.l.b16 %v8026
  %v8290 = vunpack.c.l.b16 %v8027
  %v8291 = vunpack.c.l.b16 %v8028
  %v8292 = vunpack.c.l.b16 %v8029
  %v8293 = vunpack.c.l.b16 %v8030
  %v8294 = vunpack.c.l.b16 %v8031
  %v8295 = vunpack.c.l.b16 %v8032
  %v8296 = vunpack.c.l.b16 %v8033
  %v8297 = vunpack.c.l.b16 %v8034
  %v8298 = vunpack.c.l.b16 %v8035
  %v8299 = vunpack.c.l.b16 %v8036
  %v8300 = vunpack.c.l.b16 %v8037
  %v8301 = vunpack.c.l.b16 %v8038
  %v8302 = vunpack.c.l.b16 %v8039
  %v8303 = vunpack.c.l.b16 %v8040
  %v8304 = vunpack.c.l.b16 %v8041
  %v8305 = vunpack.c.l.b16 %v8042
  %v8306 = vunpack.c.l.b16 %v8043
  %v8307 = vunpack.c.l.b16 %v8044
  %v8308 = vunpack.c.l.b16 %v8045
  %v8309 = vunpack.c.l.b16 %v8046
  %v8310 = vunpack.c.l.b16 %v8047
  %v8311 = vunpack.c.l.b16 %v8048
  %v8312 = vunpack.c.l.b16 %v8049
  %v8313 = vunpack.c.l.b16 %v8050
  %v8314 = vunpack.c.l.b16 %v8051
  %v8315 = vunpack.c.l.b16 %v8052
  %v8316 = vunpack.c.l.b16 %v8053
  %v8317 = vunpack.c.l.b16 %v8054
  %v8318 = vunpack.c.l.b16 %v8055
  %v8319 = vunpack.c.l.b16 %v8056
  %v8320 = vunpack.c.l.b16 %v8057
  %v8321 = vunpack.c.l.b16 %v8058
  %v8322 = vunpack.c.l.b16 %v8059
  %v8323 = vunpack.c.l.b16 %v8060
  %v8324 = vunpack.c.l.b16 %v8061
  %v8325 = vunpack.c.l.b16 %v8062
  %v8326 = vpack.c.b16 %v8199, %v8198
  %v8327 = vpack.c.b16 %v8201, %v8200
  %v8328 = vpack.c.b16 %v8203, %v8202
  %v8329 = vpack.c.b16 %v8205, %v8204
  %v8330 = vpack.c.b16 %v8207, %v8206
  %v8331 = vpack.c.b16 %v8209, %v8208
  %v8332 = vpack.c.b16 %v8211, %v8210
  %v8333 = vpack.c.b16 %v8213, %v8212
  %v8334 = vpack.c.b16 %v8215, %v8214
  %v8335 = vpack.c.b16 %v8217, %v8216
  %v8336 = vpack.c.b16 %v8219, %v8218
  %v8337 = vpack.c.b16 %v8221, %v8220
  %v8338 = vpack.c.b16 %v8223, %v8222
  %v8339 = vpack.c.b16 %v8225, %v8224
  %v8340 = vpack.c.b16 %v8227, %v8226
  %v8341 = vpack.c.b16 %v8229, %v8228
  %v8342 = vpack.c.b16 %v8231, %v8230
  %v8343 = vpack.c.b16 %v8233, %v8232
  %v8344 = vpack.c.b16 %v8235, %v8234
  %v8345 = vpack.c.b16 %v8237, %v8236
  %v8346 = vpack.c.b16 %v8239, %v8238
  %v8347 = vpack.c.b16 %v8241, %v8240
  %v8348 = vpack.c.b16 %v8243, %v8242
  %v8349 = vpack.c.b16 %v8245, %v8244
  %v8350 = vpack.c.b16 %v8247, %v8246
  %v8351 = vpack.c.b16 %v8249, %v8248
  %v8352 = vpack.c.b16 %v8251, %v8250
  %v8353 = vpack.c.b16 %v8253, %v8252
  %v8354 = vpack.c.b16 %v8255, %v8254
  %v8355 = vpack.c.b16 %v8257, %v8256
  %v8356 = vpack.c.b16 %v8259, %v8258
  %v8357 = vpack.c.b16 %v8261, %v8260
  %v8358 = vpack.c.b16 %v8263, %v8262
  %v8359 = vpack.c.b16 %v8265, %v8264
  %v8360 = vpack.c.b16 %v8267, %v8266
  %v8361 = vpack.c.b16 %v8269, %v8268
  %v8362 = vpack.c.b16 %v8271, %v8270
  %v8363 = vpack.c.b16 %v8273, %v8272
  %v8364 = vpack.c.b16 %v8275, %v8274
  %v8365 = vpack.c.b16 %v8277, %v8276
  %v8366 = vpack.c.b16 %v8279, %v8278
  %v8367 = vpack.c.b16 %v8281, %v8280
  %v8368 = vpack.c.b16 %v8283, %v8282
  %v8369 = vpack.c.b16 %v8285, %v8284
  %v8370 = vpack.c.b16 %v8287, %v8286
  %v8371 = vpack.c.b16 %v8289, %v8288
  %v8372 = vpack.c.b16 %v8291, %v8290
  %v8373 = vpack.c.b16 %v8293, %v8292
  %v8374 = vpack.c.b16 %v8295, %v8294
  %v8375 = vpack.c.b16 %v8297, %v8296
  %v8376 = vpack.c.b16 %v8299, %v8298
  %v8377 = vpack.c.b16 %v8301, %v8300
  %v8378 = vpack.c.b16 %v8303, %v8302
  %v8379 = vpack.c.b16 %v8305, %v8304
  %v8380 = vpack.c.b16 %v8307, %v8306
  %v8381 = vpack.c.b16 %v8309, %v8308
  %v8382 = vpack.c.b16 %v8311, %v8310
  %v8383 = vpack.c.b16 %v8313, %v8312
  %v8384 = vpack.c.b16 %v8315, %v8314
  %v8385 = vpack.c.b16 %v8317, %v8316
  %v8386 = vpack.c.b16 %v8319, %v8318
  %v8387 = vpack.c.b16 %v8321, %v8320
  %v8388 = vpack.c.b16 %v8323, %v8322
  %v8389 = vpack.c.b16 %v8325, %v8324
  %8454 = vmatprep.subr.bf16.mxu0 0
  %8455 = vmatpush1.bf16.msra.mxu0 %v8326
  %8456 = vmatprep.subr.bf16.mxu0 0
  %8457 = vmatpush1.bf16.msra.mxu0 %v8327
  %8458 = vmatprep.subr.bf16.mxu0 0
  %8459 = vmatpush1.bf16.msra.mxu0 %v8328
  %8460 = vmatprep.subr.bf16.mxu0 0
  %8461 = vmatpush1.bf16.msra.mxu0 %v8329
  %8462 = vmatprep.subr.bf16.mxu0 0
  %8463 = vmatpush1.bf16.msra.mxu0 %v8330
  %8464 = vmatprep.subr.bf16.mxu0 0
  %8465 = vmatpush1.bf16.msra.mxu0 %v8331
  %8466 = vmatprep.subr.bf16.mxu0 0
  %8467 = vmatpush1.bf16.msra.mxu0 %v8332
  %8468 = vmatprep.subr.bf16.mxu0 0
  %8469 = vmatpush1.bf16.msra.mxu0 %v8333
  %8470 = vmatprep.subr.bf16.mxu0 0
  %8471 = vmatpush1.bf16.msra.mxu0 %v8334
  %8472 = vmatprep.subr.bf16.mxu0 0
  %8473 = vmatpush1.bf16.msra.mxu0 %v8335
  %8474 = vmatprep.subr.bf16.mxu0 0
  %8475 = vmatpush1.bf16.msra.mxu0 %v8336
  %8476 = vmatprep.subr.bf16.mxu0 0
  %8477 = vmatpush1.bf16.msra.mxu0 %v8337
  %8478 = vmatprep.subr.bf16.mxu0 0
  %8479 = vmatpush1.bf16.msra.mxu0 %v8338
  %8480 = vmatprep.subr.bf16.mxu0 0
  %8481 = vmatpush1.bf16.msra.mxu0 %v8339
  %8482 = vmatprep.subr.bf16.mxu0 0
  %8483 = vmatpush1.bf16.msra.mxu0 %v8340
  %8484 = vmatprep.subr.bf16.mxu0 0
  %8485 = vmatpush1.bf16.msra.mxu0 %v8341
  %8486 = vmatprep.mubr.bf16.mxu0 %v7928
  %8487 = vmatmul.mubr.bf16.gmra.mrb[0].mxu0 %v7927
  %v8488 = vpop.f32.mrb[0].mxu0
  %v8489 = vadd.f32 %v8068, %v8488
  %v8490 = vpop.f32.mrb[0].mxu0
  %v8491 = vpop.f32.mrb[0].mxu0
  %v8492 = vpop.f32.mrb[0].mxu0
  %8493 = vdwg.mxu0
  %8494 = vmatprep.subr.bf16.mxu0 0
  %8495 = vmatpush1.bf16.msra.mxu0 %v8342
  %8496 = vmatprep.subr.bf16.mxu0 0
  %8497 = vmatpush1.bf16.msra.mxu0 %v8343
  %8498 = vmatprep.subr.bf16.mxu0 0
  %8499 = vmatpush1.bf16.msra.mxu0 %v8344
  %8500 = vmatprep.subr.bf16.mxu0 0
  %8501 = vmatpush1.bf16.msra.mxu0 %v8345
  %8502 = vmatprep.subr.bf16.mxu0 0
  %8503 = vmatpush1.bf16.msra.mxu0 %v8346
  %8504 = vmatprep.subr.bf16.mxu0 0
  %8505 = vmatpush1.bf16.msra.mxu0 %v8347
  %8506 = vmatprep.subr.bf16.mxu0 0
  %8507 = vmatpush1.bf16.msra.mxu0 %v8348
  %8508 = vmatprep.subr.bf16.mxu0 0
  %8509 = vmatpush1.bf16.msra.mxu0 %v8349
  %8510 = vmatprep.subr.bf16.mxu0 0
  %8511 = vmatpush1.bf16.msra.mxu0 %v8350
  %8512 = vmatprep.subr.bf16.mxu0 0
  %8513 = vmatpush1.bf16.msra.mxu0 %v8351
  %8514 = vmatprep.subr.bf16.mxu0 0
  %8515 = vmatpush1.bf16.msra.mxu0 %v8352
  %8516 = vmatprep.subr.bf16.mxu0 0
  %8517 = vmatpush1.bf16.msra.mxu0 %v8353
  %8518 = vmatprep.subr.bf16.mxu0 0
  %8519 = vmatpush1.bf16.msra.mxu0 %v8354
  %8520 = vmatprep.subr.bf16.mxu0 0
  %8521 = vmatpush1.bf16.msra.mxu0 %v8355
  %8522 = vmatprep.subr.bf16.mxu0 0
  %8523 = vmatpush1.bf16.msra.mxu0 %v8356
  %8524 = vmatprep.subr.bf16.mxu0 0
  %8525 = vmatpush1.bf16.msra.mxu0 %v8357
  %8526 = vmatprep.mubr.bf16.mxu0 %v7930
  %8527 = vmatmul.mubr.bf16.gmra.mrb[0].mxu0 %v7929
  %v8528 = vpop.f32.mrb[0].mxu0
  %v8529 = vadd.f32 %v8489, %v8528
  %v8530 = vpop.f32.mrb[0].mxu0
  %v8531 = vpop.f32.mrb[0].mxu0
  %v8532 = vpop.f32.mrb[0].mxu0
  %8533 = vdwg.mxu0
  %8534 = vmatprep.subr.bf16.mxu0 0
  %8535 = vmatpush1.bf16.msra.mxu0 %v8358
  %8536 = vmatprep.subr.bf16.mxu0 0
  %8537 = vmatpush1.bf16.msra.mxu0 %v8359
  %8538 = vmatprep.subr.bf16.mxu0 0
  %8539 = vmatpush1.bf16.msra.mxu0 %v8360
  %8540 = vmatprep.subr.bf16.mxu0 0
  %8541 = vmatpush1.bf16.msra.mxu0 %v8361
  %8542 = vmatprep.subr.bf16.mxu0 0
  %8543 = vmatpush1.bf16.msra.mxu0 %v8362
  %8544 = vmatprep.subr.bf16.mxu0 0
  %8545 = vmatpush1.bf16.msra.mxu0 %v8363
  %8546 = vmatprep.subr.bf16.mxu0 0
  %8547 = vmatpush1.bf16.msra.mxu0 %v8364
  %8548 = vmatprep.subr.bf16.mxu0 0
  %8549 = vmatpush1.bf16.msra.mxu0 %v8365
  %8550 = vmatprep.subr.bf16.mxu0 0
  %8551 = vmatpush1.bf16.msra.mxu0 %v8366
  %8552 = vmatprep.subr.bf16.mxu0 0
  %8553 = vmatpush1.bf16.msra.mxu0 %v8367
  %8554 = vmatprep.subr.bf16.mxu0 0
  %8555 = vmatpush1.bf16.msra.mxu0 %v8368
  %8556 = vmatprep.subr.bf16.mxu0 0
  %8557 = vmatpush1.bf16.msra.mxu0 %v8369
  %8558 = vmatprep.subr.bf16.mxu0 0
  %8559 = vmatpush1.bf16.msra.mxu0 %v8370
  %8560 = vmatprep.subr.bf16.mxu0 0
  %8561 = vmatpush1.bf16.msra.mxu0 %v8371
  %8562 = vmatprep.subr.bf16.mxu0 0
  %8563 = vmatpush1.bf16.msra.mxu0 %v8372
  %8564 = vmatprep.subr.bf16.mxu0 0
  %8565 = vmatpush1.bf16.msra.mxu0 %v8373
  %8566 = vmatprep.mubr.bf16.mxu0 %v7932
  %8567 = vmatmul.mubr.bf16.gmra.mrb[0].mxu0 %v7931
  %v8568 = vpop.f32.mrb[0].mxu0
  %v8569 = vadd.f32 %v8529, %v8568
  %v8570 = vpop.f32.mrb[0].mxu0
  %v8571 = vpop.f32.mrb[0].mxu0
  %v8572 = vpop.f32.mrb[0].mxu0
  %8573 = vdwg.mxu0
  %8574 = vmatprep.subr.bf16.mxu0 0
  %8575 = vmatpush1.bf16.msra.mxu0 %v8374
  %8576 = vmatprep.subr.bf16.mxu0 0
  %8577 = vmatpush1.bf16.msra.mxu0 %v8375
  %8578 = vmatprep.subr.bf16.mxu0 0
  %8579 = vmatpush1.bf16.msra.mxu0 %v8376
  %8580 = vmatprep.subr.bf16.mxu0 0
  %8581 = vmatpush1.bf16.msra.mxu0 %v8377
  %8582 = vmatprep.subr.bf16.mxu0 0
  %8583 = vmatpush1.bf16.msra.mxu0 %v8378
  %8584 = vmatprep.subr.bf16.mxu0 0
  %8585 = vmatpush1.bf16.msra.mxu0 %v8379
  %8586 = vmatprep.subr.bf16.mxu0 0
  %8587 = vmatpush1.bf16.msra.mxu0 %v8380
  %8588 = vmatprep.subr.bf16.mxu0 0
  %8589 = vmatpush1.bf16.msra.mxu0 %v8381
  %8590 = vmatprep.subr.bf16.mxu0 0
  %8591 = vmatpush1.bf16.msra.mxu0 %v8382
  %8592 = vmatprep.subr.bf16.mxu0 0
  %8593 = vmatpush1.bf16.msra.mxu0 %v8383
  %8594 = vmatprep.subr.bf16.mxu0 0
  %8595 = vmatpush1.bf16.msra.mxu0 %v8384
  %8596 = vmatprep.subr.bf16.mxu0 0
  %8597 = vmatpush1.bf16.msra.mxu0 %v8385
  %8598 = vmatprep.subr.bf16.mxu0 0
  %8599 = vmatpush1.bf16.msra.mxu0 %v8386
  %8600 = vmatprep.subr.bf16.mxu0 0
  %8601 = vmatpush1.bf16.msra.mxu0 %v8387
  %8602 = vmatprep.subr.bf16.mxu0 0
  %8603 = vmatpush1.bf16.msra.mxu0 %v8388
  %8604 = vmatprep.subr.bf16.mxu0 0
  %8605 = vmatpush1.bf16.msra.mxu0 %v8389
  %8606 = vmatprep.mubr.bf16.mxu0 %v7934
  %8607 = vmatmul.mubr.bf16.gmra.mrb[0].mxu0 %v7933
  %v8608 = vpop.f32.mrb[0].mxu0
  %v8609 = vadd.f32 %v8569, %v8608
  %v8610 = vpop.f32.mrb[0].mxu0
  %v8611 = vpop.f32.mrb[0].mxu0
  %v8612 = vpop.f32.mrb[0].mxu0
  %8613 = vdwg.mxu0
  %v8614 = vsub.f32 0.0, %v8609
  %v8615 = vmul.f32 %v8614, 1.442695
  %v8616 = vpow.pop %v8615
  %v8617 = vadd.f32 %v8616, 1.0
  %v8618 = vrcp.pop %v8617
  %v8619 = vlaneseq
  %v8620 = vand.u32 %v8619, 127
  %vm8621 = vcmp.eq.s32.totalorder %v8620, 0
  %v8622 = vsel %vm8621, %v8618, %v8609
  %8623 = vst [vmem:[%s7] sm:$0x3] %v8622
  // Predicated region
  $region30: #{discriminator_forward.7} parent=0 // pred_check
    _
  $region31: #{discriminator_forward.7} parent=0 // pred_check_branch
    %8625 = sbr.rel (0) target = $region33
  $region32: #{discriminator_forward.7} parent=0 // pred_region
    _
  $region33: #{discriminator_forward.7} parent=0 // pred_fallthru
    _
  // Predicated region
  $region34: #{discriminator_forward.7} parent=0 // pred_check
    _
  $region35: #{discriminator_forward.7} parent=0 // pred_check_branch
    %8627 = sbr.rel (0) target = $region37
  $region36: #{discriminator_forward.7} parent=0 // pred_region
    _
  $region37: #{discriminator_forward.7} parent=0 // pred_fallthru
    _

</llo_original>
